<compile_context>
chip_gen: v6e
topology: v6e:2x2x1
jax: 0.10.0
libtpu: 0.0.40
codegen_flags: <defaults>
</compile_context>

<pallas_src>
import jax
import jax.numpy as jnp
from jax.experimental import pallas as pl
from jax.experimental.pallas import tpu as pltpu


def _round_up(x, m):
    return (x + m - 1) // m * m


def _cdiv(a, b):
    return (a + b - 1) // b


# ---------------------------------------------------------------------------
# Fused kernel factory
# ---------------------------------------------------------------------------
def _make_rdb_kernel(L, G, base, c_pad, TH, H, W):
    """Fused ResidualDenseBlock kernel for one (batch, row-tile) grid step."""
    WP = W + 2                    # padded column extent (one zero col each side)
    ROWS = TH + 2 * L             # row extent incl. the fused-conv-chain halo
    FLAT = (ROWS + 1) * WP        # +1 spare row keeps the flat taps in range

    def kernel(*refs):
        x_ref = refs[0]                       # (1, 1, ROWS*WP, base)   bf16
        colm_ref = refs[1]                    # (FLATMAX, 1) int32, 1 = real column
        rowid_ref = refs[2]                   # (FLATMAX, 1) int32, f // WP
        conv_refs = refs[3:3 + 2 * L]         # L x [(c_pad, 9G) bf16, (1, G) f32]
        w1_ref = refs[3 + 2 * L]              # (c_pad, base)           bf16
        b1_ref = refs[4 + 2 * L]              # (1, base)               f32
        o_ref = refs[5 + 2 * L]               # (1, TH*WP, base)
        feat = refs[6 + 2 * L]                # (FLAT, c_pad)           bf16 scratch

        t = pl.program_id(1)
        row0 = t * TH - L                     # image row of scratch row 0

        # Refresh only the conv-output + channel-pad lanes; the x lanes are
        # fully rewritten below (including their zero 'same' padding).
        feat[:, base:c_pad] = jnp.zeros((FLAT, c_pad - base), jnp.bfloat16)
        feat[0:ROWS * WP, 0:base] = x_ref[0, 0]

        ch = base
        for k in range(L):
            n_out = TH + 2 * (L - 1 - k)      # rows this layer must produce
            M = n_out * WP
            Mbig = M + 2 * WP + 2             # rows touched by the 9 shifted taps
            src0 = k * WP
            w_ref = conv_refs[2 * k]
            b_ref = conv_refs[2 * k + 1]

            # 3x3 conv = ONE lane-dense MXU matmul (K = c_pad, N = 9*G), then
            # the tap sums are recovered with shifted contiguous slice adds.
            res = jnp.dot(feat[src0:src0 + Mbig, :], w_ref[...],
                          preferred_element_type=jnp.float32)      # (Mbig, 9G)
            acc = res[0:M, 0:G]
            for dy in range(3):
                for dx in range(3):
                    tap = dy * 3 + dx
                    if tap == 0:
                        continue
                    off = dy * WP + dx
                    acc = acc + res[off:off + M, tap * G:(tap + 1) * G]

            y = jnp.maximum(acc + b_ref[...], 0.0)

            # Zero wrap-around columns and out-of-image rows so later layers
            # see true zero 'same' padding.  Masks come from resident iota
            # tables -> no per-layer div/mod by WP on the VPU.
            grow = rowid_ref[0:M, :] + (row0 + k + 1)
            keep = (colm_ref[0:M, :] > 0) & (grow >= 0) & (grow < H)
            y = jnp.where(keep, y, 0.0).astype(feat.dtype)

            # One contiguous flat store drops the layer output into its
            # channel slot at rows k+1 .. ROWS-2-k, cols 1..W.
            dst = (k + 1) * WP + 1
            feat[dst:dst + M, ch:ch + G] = y
            ch += G

        # Final 1x1 conv + bias + residual over the TH real output rows; flat
        # reshape/slice-free store (pad columns/rows are trimmed in XLA).
        M1 = TH * WP
        xs = feat[L * WP:L * WP + M1, :]
        y = jnp.dot(xs, w1_ref[...], preferred_element_type=jnp.float32)
        y = y + b1_ref[...] + xs[:, 0:base].astype(jnp.float32)   # residual = x chans
        o_ref[0] = y.astype(o_ref.dtype)

    return kernel


# ---------------------------------------------------------------------------
# VMEM budgeting + row-tile selection
# ---------------------------------------------------------------------------
def _vmem_need_bytes(TH, W, L, base, G, c_pad):
    WP = W + 2
    ROWS = TH + 2 * L
    FLAT = (ROWS + 1) * WP
    M0 = (TH + 2 * (L - 1)) * WP
    Mbig = M0 + 2 * WP + 2
    need = FLAT * c_pad * 2                        # feat scratch (bf16)
    need += 2 * ROWS * WP * base * 2               # double-buffered input block
    need += 2 * TH * WP * base * 4                 # double-buffered output block
    need += Mbig * 9 * G * 4 + 4 * M0 * G * 4      # res + acc/y temporaries
    need += M0 * c_pad * 2                         # 1x1 LHS staging
    need += 2 * M0 * 4                             # colmask / rowid tables
    need += L * c_pad * 9 * G * 2 + c_pad * base * 2 + (2 << 20)   # weights + slack
    return need


def _pick_row_tile(N, H, W, L, base, G, c_pad, budget, row_tile=None):
    H8 = _round_up(max(H, 8), 8)
    cap = H8 if row_tile is None else min(H8, _round_up(max(row_tile, 8), 8))
    TH = 8
    th = 8
    while th <= cap:
        if _vmem_need_bytes(th, W, L, base, G, c_pad) <= budget:
            TH = th
        th += 8
    # Re-balance so bottom-padding waste stays small.
    num_tiles = _cdiv(H, TH)
    TH = min(cap, _round_up(_cdiv(H, num_tiles), 8))
    num_tiles = _cdiv(H, TH)
    # Dual-TensorCore occupancy (v7x): only split when the halo overhead of a
    # smaller tile is clearly cheap (large H), so v5e/v6e are not penalized.
    if N * num_tiles < 2 and H >= 64:
        num_tiles = 2
        TH = _round_up(_cdiv(H, 2), 8)
    return TH, num_tiles


# ---------------------------------------------------------------------------
# Wrapper
# ---------------------------------------------------------------------------
def residual_dense_block_nchw(x_nchw, params, *, row_tile=None):
    """ResidualDenseBlock forward. x_nchw: (N, 64, H, W) -> (N, 64, H, W)."""
    N, base, H, W = x_nchw.shape
    convs = params["convs"]
    L = len(convs)                            # = C - 1 dense 3x3 + ReLU layers
    G = convs[0][0].shape[-1]
    cin_last = base + G * L
    c_pad = _round_up(max(cin_last, 128), 128)
    WP = W + 2

    try:
        cap_bytes = int(getattr(pltpu.get_tpu_info(), "vmem_capacity_bytes", 64 << 20))
    except Exception:
        cap_bytes = 64 << 20
    if cap_bytes <= 0:
        cap_bytes = 64 << 20
    budget = int(cap_bytes * 0.70)            # headroom for compiler temporaries

    TH, num_tiles = _pick_row_tile(N, H, W, L, base, G, c_pad, budget, row_tile)
    H_pad = num_tiles * TH
    ROWS = TH + 2 * L
    FLAT = (ROWS + 1) * WP
    FLATMAX = (TH + 2 * (L - 1)) * WP

    need = _vmem_need_bytes(TH, W, L, base, G, c_pad)
    vmem_limit = min(int(cap_bytes * 0.85), max(2 * need, 48 << 20))

    # NCHW -> NHWC, bf16 activations for the MXU; zero 'same' column padding,
    # L halo rows each side and bottom row padding up to H_pad.
    x = jnp.transpose(x_nchw, (0, 2, 3, 1)).astype(jnp.bfloat16)
    x_pad = jnp.pad(x, ((0, 0), (L, L + H_pad - H), (1, 1), (0, 0)))
    if num_tiles == 1:
        x_tiles = x_pad.reshape(N, 1, ROWS * WP, base)     # no gather needed
    else:
        row_idx = (jnp.arange(num_tiles) * TH)[:, None] + jnp.arange(ROWS)[None, :]
        x_tiles = x_pad[:, row_idx].reshape(N, num_tiles, ROWS * WP, base)

    # Resident flat-index tables (replace per-layer integer div/mod masks).
    fidx = jnp.arange(FLATMAX, dtype=jnp.int32)
    colm = (fidx % WP < W).astype(jnp.int32).reshape(FLATMAX, 1)
    rowid = (fidx // WP).astype(jnp.int32).reshape(FLATMAX, 1)

    operands = [x_tiles, colm, rowid]
    in_specs = [
        pl.BlockSpec((1, 1, ROWS * WP, base), lambda n, t: (n, t, 0, 0)),
        pl.BlockSpec((FLATMAX, 1), lambda n, t: (0, 0)),
        pl.BlockSpec((FLATMAX, 1), lambda n, t: (0, 0)),
    ]

    # Pack each 3x3 layer into a single lane-dense (c_pad, 9*G) RHS with the
    # input channels zero-padded to c_pad; biases stay f32.
    for (w, b) in convs:
        cin = w.shape[2]
        wflat = jnp.transpose(w, (2, 0, 1, 3)).reshape(cin, 9 * G)
        wpk = jnp.zeros((c_pad, 9 * G), w.dtype).at[0:cin].set(wflat)
        wpk = wpk.astype(jnp.bfloat16)
        bk = b.reshape(1, G).astype(jnp.float32)
        operands += [wpk, bk]
        in_specs += [pl.BlockSpec((c_pad, 9 * G), lambda n, t: (0, 0)),
                     pl.BlockSpec((1, G), lambda n, t: (0, 0))]

    w1 = jnp.zeros((c_pad, base), params["conv1d_w"].dtype)
    w1 = w1.at[0:cin_last].set(params["conv1d_w"]).astype(jnp.bfloat16)
    b1 = params["conv1d_b"].reshape(1, base).astype(jnp.float32)
    operands += [w1, b1]
    in_specs += [pl.BlockSpec((c_pad, base), lambda n, t: (0, 0)),
                 pl.BlockSpec((1, base), lambda n, t: (0, 0))]

    kernel = _make_rdb_kernel(L, G, base, c_pad, TH, H, W)

    out = pl.pallas_call(
        kernel,
        out_shape=jax.ShapeDtypeStruct((N, H_pad * WP, base), x_nchw.dtype),
        grid=(N, num_tiles),
        in_specs=in_specs,
        out_specs=pl.BlockSpec((1, TH * WP, base), lambda n, t: (n, t, 0)),
        scratch_shapes=[pltpu.VMEM((FLAT, c_pad), jnp.bfloat16)],
        compiler_params=pltpu.CompilerParams(
            dimension_semantics=("parallel", "parallel"),
            vmem_limit_bytes=vmem_limit),
    )(*operands)

    out = out.reshape(N, H_pad, WP, base)[:, :H, 1:W + 1, :]   # trim pads in XLA
    return jnp.transpose(out, (0, 3, 1, 2))                    # NHWC -> NCHW


# ---------------------------------------------------------------------------
# Parameters + pure-JAX reference (same bf16-operand / f32-accumulate recipe)
# ---------------------------------------------------------------------------
def init_rdb_params(key, C, G, base=64, dtype=jnp.float32):
    """Deterministic synthetic parameters; shapes match the PyTorch module."""
    params = {"convs": []}
    for cin in [base + G * i for i in range(C - 1)]:
        key, kw, kb = jax.random.split(key, 3)
        scale = 1.0 / jnp.sqrt(jnp.float32(cin * 9))
        w = (jax.random.normal(kw, (3, 3, cin, G)) * scale).astype(dtype)
        b = (jax.random.normal(kb, (G,)) * scale).astype(dtype)
        params["convs"].append((w, b))
    cin_last = base + G * (C - 1)
    key, kw, kb = jax.random.split(key, 3)
    scale = 1.0 / jnp.sqrt(jnp.float32(cin_last))
    params["conv1d_w"] = (jax.random.normal(kw, (cin_last, base)) * scale).astype(dtype)
    params["conv1d_b"] = (jax.random.normal(kb, (base,)) * scale).astype(dtype)
    return params


def rdb_reference(x_nchw, params):
    x = jnp.transpose(x_nchw, (0, 2, 3, 1)).astype(jnp.bfloat16)
    feats = [x]
    for (w, b) in params["convs"]:
        cat = jnp.concatenate(feats, axis=-1)
        y = jax.lax.conv_general_dilated(
            cat, w.astype(jnp.bfloat16), (1, 1), "SAME",
            dimension_numbers=("NHWC", "HWIO", "NHWC"),
            preferred_element_type=jnp.float32)
        y = jnp.maximum(y + b.astype(jnp.float32), 0.0)
        feats.append(y.astype(jnp.bfloat16))
    cat = jnp.concatenate(feats, axis=-1)
    cin_last, base = params["conv1d_w"].shape
    w1 = params["conv1d_w"].astype(jnp.bfloat16).reshape(1, 1, cin_last, base)
    y = jax.lax.conv_general_dilated(
        cat, w1, (1, 1), "SAME",
        dimension_numbers=("NHWC", "HWIO", "NHWC"),
        preferred_element_type=jnp.float32)
    y = y + params["conv1d_b"].astype(jnp.float32) + x.astype(jnp.float32)
    return jnp.transpose(y, (0, 3, 1, 2)).astype(x_nchw.dtype)


if __name__ == "__main__":
    # The module hard-codes 64 input channels; keep batch/spatial small.
    N, base, H, W = 2, 64, 16, 16
    C, G = 4, 16            # 3 dense 3x3+ReLU layers (growth 16), 1x1 fuse to 64

    key = jax.random.PRNGKey(0)
    kx, kp = jax.random.split(key)
    x = jax.random.normal(kx, (N, base, H, W), jnp.float32)
    params = init_rdb_params(kp, C, G, base=base)

    fwd = jax.jit(residual_dense_block_nchw)
    out = jax.block_until_ready(fwd(x, params))
    assert out.shape == (N, base, H, W), out.shape
    assert bool(jnp.all(jnp.isfinite(out)))

    ref = jax.block_until_ready(jax.jit(rdb_reference)(x, params))
    max_err = float(jnp.max(jnp.abs(out - ref)))
    assert max_err < 3e-2, f"max abs err vs reference: {max_err}"
    print("KERNEL_OK")
</pallas_src>

<mosaic_0001>
module attributes {stable_mosaic.version = 11 : i64} {
  func.func @kernel(%arg0: i32, %arg1: i32, %arg2: memref<1x1x396x64xbf16, #tpu.memory_space<vmem>>, %arg3: memref<360x1xi32, #tpu.memory_space<vmem>>, %arg4: memref<360x1xi32, #tpu.memory_space<vmem>>, %arg5: memref<128x144xbf16, #tpu.memory_space<vmem>>, %arg6: memref<1x16xf32, #tpu.memory_space<vmem>>, %arg7: memref<128x144xbf16, #tpu.memory_space<vmem>>, %arg8: memref<1x16xf32, #tpu.memory_space<vmem>>, %arg9: memref<128x144xbf16, #tpu.memory_space<vmem>>, %arg10: memref<1x16xf32, #tpu.memory_space<vmem>>, %arg11: memref<128x64xbf16, #tpu.memory_space<vmem>>, %arg12: memref<1x64xf32, #tpu.memory_space<vmem>>, %arg13: memref<1x288x64xf32, #tpu.memory_space<vmem>>, %arg14: memref<414x128xbf16, #tpu.memory_space<vmem>>) attributes {dimension_semantics = [#tpu.dimension_semantics<parallel>, #tpu.dimension_semantics<parallel>], iteration_bounds = array<i64: 2, 1>, scalar_prefetch = 0 : i64, scratch_operands = 1 : i64, tpu.core_type = #tpu.core_type<tc>, window_params = [{transform_indices = @transform_0, window_bounds = array<i64: 1, 1, 396, 64>}, {pipeline_mode = #tpu.pipeline_mode<synchronous>, transform_indices = @transform_1, window_bounds = array<i64: 360, 1>}, {pipeline_mode = #tpu.pipeline_mode<synchronous>, transform_indices = @transform_2, window_bounds = array<i64: 360, 1>}, {pipeline_mode = #tpu.pipeline_mode<synchronous>, transform_indices = @transform_3, window_bounds = array<i64: 128, 144>}, {pipeline_mode = #tpu.pipeline_mode<synchronous>, transform_indices = @transform_4, window_bounds = array<i64: 1, 16>}, {pipeline_mode = #tpu.pipeline_mode<synchronous>, transform_indices = @transform_5, window_bounds = array<i64: 128, 144>}, {pipeline_mode = #tpu.pipeline_mode<synchronous>, transform_indices = @transform_6, window_bounds = array<i64: 1, 16>}, {pipeline_mode = #tpu.pipeline_mode<synchronous>, transform_indices = @transform_7, window_bounds = array<i64: 128, 144>}, {pipeline_mode = #tpu.pipeline_mode<synchronous>, transform_indices = @transform_8, window_bounds = array<i64: 1, 16>}, {pipeline_mode = #tpu.pipeline_mode<synchronous>, transform_indices = @transform_9, window_bounds = array<i64: 128, 64>}, {pipeline_mode = #tpu.pipeline_mode<synchronous>, transform_indices = @transform_10, window_bounds = array<i64: 1, 64>}, {transform_indices = @transform_11, window_bounds = array<i64: 1, 288, 64>}]} {
    %c16_i32 = arith.constant 16 : i32
    %0 = arith.muli %arg1, %c16_i32 : i32
    %c3_i32 = arith.constant 3 : i32
    %1 = arith.subi %0, %c3_i32 : i32
    %cst = arith.constant 0.000000e+00 : bf16
    %2 = vector.broadcast %cst : bf16 to vector<414x64xbf16>
    %c0 = arith.constant 0 : index
    %c64 = arith.constant 64 : index
    %3 = vector.load %arg14[%c0, %c64] : memref<414x128xbf16, #tpu.memory_space<vmem>>, vector<414x64xbf16>
    tpu.vector_store %arg14[%c0, %c64], %2 {strides = array<i32>} : memref<414x128xbf16, #tpu.memory_space<vmem>>, vector<414x64xbf16>,
    %c0_0 = arith.constant 0 : index
    %c0_1 = arith.constant 0 : index
    %c0_2 = arith.constant 0 : index
    %c0_3 = arith.constant 0 : index
    %4 = vector.load %arg2[%c0_0, %c0_1, %c0_2, %c0_3] : memref<1x1x396x64xbf16, #tpu.memory_space<vmem>>, vector<1x1x396x64xbf16>
    %5 = vector.shape_cast %4 : vector<1x1x396x64xbf16> to vector<396x64xbf16>
    %c0_4 = arith.constant 0 : index
    %c0_5 = arith.constant 0 : index
    %6 = vector.load %arg14[%c0_4, %c0_5] : memref<414x128xbf16, #tpu.memory_space<vmem>>, vector<396x64xbf16>
    tpu.vector_store %arg14[%c0_4, %c0_5], %5 {strides = array<i32>} : memref<414x128xbf16, #tpu.memory_space<vmem>>, vector<396x64xbf16>,
    %c0_6 = arith.constant 0 : index
    %c0_7 = arith.constant 0 : index
    %7 = vector.load %arg14[%c0_6, %c0_7] : memref<414x128xbf16, #tpu.memory_space<vmem>>, vector<398x128xbf16>
    %c0_8 = arith.constant 0 : index
    %c0_9 = arith.constant 0 : index
    %8 = vector.load %arg5[%c0_8, %c0_9] : memref<128x144xbf16, #tpu.memory_space<vmem>>, vector<128x144xbf16>
    %cst_10 = arith.constant dense<0.000000e+00> : vector<398x144xf32>
    %9 = tpu.matmul %7, %8, %cst_10 {dimension_numbers = #tpu.dot_dimension_numbers<[1], [0], [0], [1], [0, 0, 1, 1], [], []>} : vector<398x128xbf16>, vector<128x144xbf16>, vector<398x144xf32> -> vector<398x144xf32>
    %10 = vector.extract_strided_slice %9 {offsets = [0, 0], sizes = [360, 16], strides = [1, 1]} : vector<398x144xf32> to vector<360x16xf32>
    %11 = vector.extract_strided_slice %9 {offsets = [1, 16], sizes = [360, 16], strides = [1, 1]} : vector<398x144xf32> to vector<360x16xf32>
    %12 = arith.addf %10, %11 : vector<360x16xf32>
    %13 = vector.extract_strided_slice %9 {offsets = [2, 32], sizes = [360, 16], strides = [1, 1]} : vector<398x144xf32> to vector<360x16xf32>
    %14 = arith.addf %12, %13 : vector<360x16xf32>
    %15 = vector.extract_strided_slice %9 {offsets = [18, 48], sizes = [360, 16], strides = [1, 1]} : vector<398x144xf32> to vector<360x16xf32>
    %16 = arith.addf %14, %15 : vector<360x16xf32>
    %17 = vector.extract_strided_slice %9 {offsets = [19, 64], sizes = [360, 16], strides = [1, 1]} : vector<398x144xf32> to vector<360x16xf32>
    %18 = arith.addf %16, %17 : vector<360x16xf32>
    %19 = vector.extract_strided_slice %9 {offsets = [20, 80], sizes = [360, 16], strides = [1, 1]} : vector<398x144xf32> to vector<360x16xf32>
    %20 = arith.addf %18, %19 : vector<360x16xf32>
    %21 = vector.extract_strided_slice %9 {offsets = [36, 96], sizes = [360, 16], strides = [1, 1]} : vector<398x144xf32> to vector<360x16xf32>
    %22 = arith.addf %20, %21 : vector<360x16xf32>
    %23 = vector.extract_strided_slice %9 {offsets = [37, 112], sizes = [360, 16], strides = [1, 1]} : vector<398x144xf32> to vector<360x16xf32>
    %24 = arith.addf %22, %23 : vector<360x16xf32>
    %25 = vector.extract_strided_slice %9 {offsets = [38, 128], sizes = [360, 16], strides = [1, 1]} : vector<398x144xf32> to vector<360x16xf32>
    %26 = arith.addf %24, %25 : vector<360x16xf32>
    %c0_11 = arith.constant 0 : index
    %c0_12 = arith.constant 0 : index
    %27 = vector.load %arg6[%c0_11, %c0_12] : memref<1x16xf32, #tpu.memory_space<vmem>>, vector<1x16xf32>
    %28 = vector.broadcast %27 : vector<1x16xf32> to vector<360x16xf32>
    %29 = arith.addf %26, %28 : vector<360x16xf32>
    %cst_13 = arith.constant 0.000000e+00 : f32
    %30 = vector.broadcast %cst_13 : f32 to vector<360x16xf32>
    %31 = arith.maximumf %29, %30 : vector<360x16xf32>
    %c0_14 = arith.constant 0 : index
    %c0_15 = arith.constant 0 : index
    %32 = vector.load %arg4[%c0_14, %c0_15] : memref<360x1xi32, #tpu.memory_space<vmem>>, vector<360x1xi32>
    %c0_i32 = arith.constant 0 : i32
    %33 = arith.addi %1, %c0_i32 : i32
    %c1_i32 = arith.constant 1 : i32
    %34 = arith.addi %33, %c1_i32 : i32
    %35 = vector.broadcast %34 : i32 to vector<360x1xi32>
    %36 = arith.addi %32, %35 : vector<360x1xi32>
    %c0_16 = arith.constant 0 : index
    %c0_17 = arith.constant 0 : index
    %37 = vector.load %arg3[%c0_16, %c0_17] : memref<360x1xi32, #tpu.memory_space<vmem>>, vector<360x1xi32>
    %c0_i32_18 = arith.constant 0 : i32
    %38 = vector.broadcast %c0_i32_18 : i32 to vector<360x1xi32>
    %39 = arith.cmpi sgt, %37, %38 : vector<360x1xi32>
    %c0_i32_19 = arith.constant 0 : i32
    %40 = vector.broadcast %c0_i32_19 : i32 to vector<360x1xi32>
    %41 = arith.cmpi sge, %36, %40 : vector<360x1xi32>
    %42 = arith.andi %39, %41 : vector<360x1xi1>
    %c16_i32_20 = arith.constant 16 : i32
    %43 = vector.broadcast %c16_i32_20 : i32 to vector<360x1xi32>
    %44 = arith.cmpi slt, %36, %43 : vector<360x1xi32>
    %45 = arith.andi %42, %44 : vector<360x1xi1>
    %cst_21 = arith.constant 0.000000e+00 : f32
    %46 = vector.shape_cast %45 : vector<360x1xi1> to vector<360x1xi1>
    %47 = vector.broadcast %46 : vector<360x1xi1> to vector<360x16xi1>
    %48 = vector.broadcast %cst_21 : f32 to vector<360x16xf32>
    %49 = arith.select %47, %31, %48 : vector<360x16xi1>, vector<360x16xf32>
    %50 = arith.truncf %49 : vector<360x16xf32> to vector<360x16xbf16>
    %c19 = arith.constant 19 : index
    %c64_22 = arith.constant 64 : index
    %51 = vector.load %arg14[%c19, %c64_22] : memref<414x128xbf16, #tpu.memory_space<vmem>>, vector<360x16xbf16>
    tpu.vector_store %arg14[%c19, %c64_22], %50 {strides = array<i32>} : memref<414x128xbf16, #tpu.memory_space<vmem>>, vector<360x16xbf16>,
    %c18 = arith.constant 18 : index
    %c0_23 = arith.constant 0 : index
    %52 = vector.load %arg14[%c18, %c0_23] : memref<414x128xbf16, #tpu.memory_space<vmem>>, vector<362x128xbf16>
    %c0_24 = arith.constant 0 : index
    %c0_25 = arith.constant 0 : index
    %53 = vector.load %arg7[%c0_24, %c0_25] : memref<128x144xbf16, #tpu.memory_space<vmem>>, vector<128x144xbf16>
    %cst_26 = arith.constant dense<0.000000e+00> : vector<362x144xf32>
    %54 = tpu.matmul %52, %53, %cst_26 {dimension_numbers = #tpu.dot_dimension_numbers<[1], [0], [0], [1], [0, 0, 1, 1], [], []>} : vector<362x128xbf16>, vector<128x144xbf16>, vector<362x144xf32> -> vector<362x144xf32>
    %55 = vector.extract_strided_slice %54 {offsets = [0, 0], sizes = [324, 16], strides = [1, 1]} : vector<362x144xf32> to vector<324x16xf32>
    %56 = vector.extract_strided_slice %54 {offsets = [1, 16], sizes = [324, 16], strides = [1, 1]} : vector<362x144xf32> to vector<324x16xf32>
    %57 = arith.addf %55, %56 : vector<324x16xf32>
    %58 = vector.extract_strided_slice %54 {offsets = [2, 32], sizes = [324, 16], strides = [1, 1]} : vector<362x144xf32> to vector<324x16xf32>
    %59 = arith.addf %57, %58 : vector<324x16xf32>
    %60 = vector.extract_strided_slice %54 {offsets = [18, 48], sizes = [324, 16], strides = [1, 1]} : vector<362x144xf32> to vector<324x16xf32>
    %61 = arith.addf %59, %60 : vector<324x16xf32>
    %62 = vector.extract_strided_slice %54 {offsets = [19, 64], sizes = [324, 16], strides = [1, 1]} : vector<362x144xf32> to vector<324x16xf32>
    %63 = arith.addf %61, %62 : vector<324x16xf32>
    %64 = vector.extract_strided_slice %54 {offsets = [20, 80], sizes = [324, 16], strides = [1, 1]} : vector<362x144xf32> to vector<324x16xf32>
    %65 = arith.addf %63, %64 : vector<324x16xf32>
    %66 = vector.extract_strided_slice %54 {offsets = [36, 96], sizes = [324, 16], strides = [1, 1]} : vector<362x144xf32> to vector<324x16xf32>
    %67 = arith.addf %65, %66 : vector<324x16xf32>
    %68 = vector.extract_strided_slice %54 {offsets = [37, 112], sizes = [324, 16], strides = [1, 1]} : vector<362x144xf32> to vector<324x16xf32>
    %69 = arith.addf %67, %68 : vector<324x16xf32>
    %70 = vector.extract_strided_slice %54 {offsets = [38, 128], sizes = [324, 16], strides = [1, 1]} : vector<362x144xf32> to vector<324x16xf32>
    %71 = arith.addf %69, %70 : vector<324x16xf32>
    %c0_27 = arith.constant 0 : index
    %c0_28 = arith.constant 0 : index
    %72 = vector.load %arg8[%c0_27, %c0_28] : memref<1x16xf32, #tpu.memory_space<vmem>>, vector<1x16xf32>
    %73 = vector.broadcast %72 : vector<1x16xf32> to vector<324x16xf32>
    %74 = arith.addf %71, %73 : vector<324x16xf32>
    %cst_29 = arith.constant 0.000000e+00 : f32
    %75 = vector.broadcast %cst_29 : f32 to vector<324x16xf32>
    %76 = arith.maximumf %74, %75 : vector<324x16xf32>
    %c0_30 = arith.constant 0 : index
    %c0_31 = arith.constant 0 : index
    %77 = vector.load %arg4[%c0_30, %c0_31] : memref<360x1xi32, #tpu.memory_space<vmem>>, vector<324x1xi32>
    %c1_i32_32 = arith.constant 1 : i32
    %78 = arith.addi %1, %c1_i32_32 : i32
    %c1_i32_33 = arith.constant 1 : i32
    %79 = arith.addi %78, %c1_i32_33 : i32
    %80 = vector.broadcast %79 : i32 to vector<324x1xi32>
    %81 = arith.addi %77, %80 : vector<324x1xi32>
    %c0_34 = arith.constant 0 : index
    %c0_35 = arith.constant 0 : index
    %82 = vector.load %arg3[%c0_34, %c0_35] : memref<360x1xi32, #tpu.memory_space<vmem>>, vector<324x1xi32>
    %c0_i32_36 = arith.constant 0 : i32
    %83 = vector.broadcast %c0_i32_36 : i32 to vector<324x1xi32>
    %84 = arith.cmpi sgt, %82, %83 : vector<324x1xi32>
    %c0_i32_37 = arith.constant 0 : i32
    %85 = vector.broadcast %c0_i32_37 : i32 to vector<324x1xi32>
    %86 = arith.cmpi sge, %81, %85 : vector<324x1xi32>
    %87 = arith.andi %84, %86 : vector<324x1xi1>
    %c16_i32_38 = arith.constant 16 : i32
    %88 = vector.broadcast %c16_i32_38 : i32 to vector<324x1xi32>
    %89 = arith.cmpi slt, %81, %88 : vector<324x1xi32>
    %90 = arith.andi %87, %89 : vector<324x1xi1>
    %cst_39 = arith.constant 0.000000e+00 : f32
    %91 = vector.shape_cast %90 : vector<324x1xi1> to vector<324x1xi1>
    %92 = vector.broadcast %91 : vector<324x1xi1> to vector<324x16xi1>
    %93 = vector.broadcast %cst_39 : f32 to vector<324x16xf32>
    %94 = arith.select %92, %76, %93 : vector<324x16xi1>, vector<324x16xf32>
    %95 = arith.truncf %94 : vector<324x16xf32> to vector<324x16xbf16>
    %c37 = arith.constant 37 : index
    %c80 = arith.constant 80 : index
    %96 = vector.load %arg14[%c37, %c80] : memref<414x128xbf16, #tpu.memory_space<vmem>>, vector<324x16xbf16>
    tpu.vector_store %arg14[%c37, %c80], %95 {strides = array<i32>} : memref<414x128xbf16, #tpu.memory_space<vmem>>, vector<324x16xbf16>,
    %c36 = arith.constant 36 : index
    %c0_40 = arith.constant 0 : index
    %97 = vector.load %arg14[%c36, %c0_40] : memref<414x128xbf16, #tpu.memory_space<vmem>>, vector<326x128xbf16>
    %c0_41 = arith.constant 0 : index
    %c0_42 = arith.constant 0 : index
    %98 = vector.load %arg9[%c0_41, %c0_42] : memref<128x144xbf16, #tpu.memory_space<vmem>>, vector<128x144xbf16>
    %cst_43 = arith.constant dense<0.000000e+00> : vector<326x144xf32>
    %99 = tpu.matmul %97, %98, %cst_43 {dimension_numbers = #tpu.dot_dimension_numbers<[1], [0], [0], [1], [0, 0, 1, 1], [], []>} : vector<326x128xbf16>, vector<128x144xbf16>, vector<326x144xf32> -> vector<326x144xf32>
    %100 = vector.extract_strided_slice %99 {offsets = [0, 0], sizes = [288, 16], strides = [1, 1]} : vector<326x144xf32> to vector<288x16xf32>
    %101 = vector.extract_strided_slice %99 {offsets = [1, 16], sizes = [288, 16], strides = [1, 1]} : vector<326x144xf32> to vector<288x16xf32>
    %102 = arith.addf %100, %101 : vector<288x16xf32>
    %103 = vector.extract_strided_slice %99 {offsets = [2, 32], sizes = [288, 16], strides = [1, 1]} : vector<326x144xf32> to vector<288x16xf32>
    %104 = arith.addf %102, %103 : vector<288x16xf32>
    %105 = vector.extract_strided_slice %99 {offsets = [18, 48], sizes = [288, 16], strides = [1, 1]} : vector<326x144xf32> to vector<288x16xf32>
    %106 = arith.addf %104, %105 : vector<288x16xf32>
    %107 = vector.extract_strided_slice %99 {offsets = [19, 64], sizes = [288, 16], strides = [1, 1]} : vector<326x144xf32> to vector<288x16xf32>
    %108 = arith.addf %106, %107 : vector<288x16xf32>
    %109 = vector.extract_strided_slice %99 {offsets = [20, 80], sizes = [288, 16], strides = [1, 1]} : vector<326x144xf32> to vector<288x16xf32>
    %110 = arith.addf %108, %109 : vector<288x16xf32>
    %111 = vector.extract_strided_slice %99 {offsets = [36, 96], sizes = [288, 16], strides = [1, 1]} : vector<326x144xf32> to vector<288x16xf32>
    %112 = arith.addf %110, %111 : vector<288x16xf32>
    %113 = vector.extract_strided_slice %99 {offsets = [37, 112], sizes = [288, 16], strides = [1, 1]} : vector<326x144xf32> to vector<288x16xf32>
    %114 = arith.addf %112, %113 : vector<288x16xf32>
    %115 = vector.extract_strided_slice %99 {offsets = [38, 128], sizes = [288, 16], strides = [1, 1]} : vector<326x144xf32> to vector<288x16xf32>
    %116 = arith.addf %114, %115 : vector<288x16xf32>
    %c0_44 = arith.constant 0 : index
    %c0_45 = arith.constant 0 : index
    %117 = vector.load %arg10[%c0_44, %c0_45] : memref<1x16xf32, #tpu.memory_space<vmem>>, vector<1x16xf32>
    %118 = vector.broadcast %117 : vector<1x16xf32> to vector<288x16xf32>
    %119 = arith.addf %116, %118 : vector<288x16xf32>
    %cst_46 = arith.constant 0.000000e+00 : f32
    %120 = vector.broadcast %cst_46 : f32 to vector<288x16xf32>
    %121 = arith.maximumf %119, %120 : vector<288x16xf32>
    %c0_47 = arith.constant 0 : index
    %c0_48 = arith.constant 0 : index
    %122 = vector.load %arg4[%c0_47, %c0_48] : memref<360x1xi32, #tpu.memory_space<vmem>>, vector<288x1xi32>
    %c2_i32 = arith.constant 2 : i32
    %123 = arith.addi %1, %c2_i32 : i32
    %c1_i32_49 = arith.constant 1 : i32
    %124 = arith.addi %123, %c1_i32_49 : i32
    %125 = vector.broadcast %124 : i32 to vector<288x1xi32>
    %126 = arith.addi %122, %125 : vector<288x1xi32>
    %c0_50 = arith.constant 0 : index
    %c0_51 = arith.constant 0 : index
    %127 = vector.load %arg3[%c0_50, %c0_51] : memref<360x1xi32, #tpu.memory_space<vmem>>, vector<288x1xi32>
    %c0_i32_52 = arith.constant 0 : i32
    %128 = vector.broadcast %c0_i32_52 : i32 to vector<288x1xi32>
    %129 = arith.cmpi sgt, %127, %128 : vector<288x1xi32>
    %c0_i32_53 = arith.constant 0 : i32
    %130 = vector.broadcast %c0_i32_53 : i32 to vector<288x1xi32>
    %131 = arith.cmpi sge, %126, %130 : vector<288x1xi32>
    %132 = arith.andi %129, %131 : vector<288x1xi1>
    %c16_i32_54 = arith.constant 16 : i32
    %133 = vector.broadcast %c16_i32_54 : i32 to vector<288x1xi32>
    %134 = arith.cmpi slt, %126, %133 : vector<288x1xi32>
    %135 = arith.andi %132, %134 : vector<288x1xi1>
    %cst_55 = arith.constant 0.000000e+00 : f32
    %136 = vector.shape_cast %135 : vector<288x1xi1> to vector<288x1xi1>
    %137 = vector.broadcast %136 : vector<288x1xi1> to vector<288x16xi1>
    %138 = vector.broadcast %cst_55 : f32 to vector<288x16xf32>
    %139 = arith.select %137, %121, %138 : vector<288x16xi1>, vector<288x16xf32>
    %140 = arith.truncf %139 : vector<288x16xf32> to vector<288x16xbf16>
    %c55 = arith.constant 55 : index
    %c96 = arith.constant 96 : index
    %141 = vector.load %arg14[%c55, %c96] : memref<414x128xbf16, #tpu.memory_space<vmem>>, vector<288x16xbf16>
    tpu.vector_store %arg14[%c55, %c96], %140 {strides = array<i32>} : memref<414x128xbf16, #tpu.memory_space<vmem>>, vector<288x16xbf16>,
    %c54 = arith.constant 54 : index
    %c0_56 = arith.constant 0 : index
    %142 = vector.load %arg14[%c54, %c0_56] : memref<414x128xbf16, #tpu.memory_space<vmem>>, vector<288x128xbf16>
    %c0_57 = arith.constant 0 : index
    %c0_58 = arith.constant 0 : index
    %143 = vector.load %arg11[%c0_57, %c0_58] : memref<128x64xbf16, #tpu.memory_space<vmem>>, vector<128x64xbf16>
    %cst_59 = arith.constant dense<0.000000e+00> : vector<288x64xf32>
    %144 = tpu.matmul %142, %143, %cst_59 {dimension_numbers = #tpu.dot_dimension_numbers<[1], [0], [0], [1], [0, 0, 1, 1], [], []>} : vector<288x128xbf16>, vector<128x64xbf16>, vector<288x64xf32> -> vector<288x64xf32>
    %c0_60 = arith.constant 0 : index
    %c0_61 = arith.constant 0 : index
    %145 = vector.load %arg12[%c0_60, %c0_61] : memref<1x64xf32, #tpu.memory_space<vmem>>, vector<1x64xf32>
    %146 = vector.broadcast %145 : vector<1x64xf32> to vector<288x64xf32>
    %147 = arith.addf %144, %146 : vector<288x64xf32>
    %148 = vector.extract_strided_slice %142 {offsets = [0, 0], sizes = [288, 64], strides = [1, 1]} : vector<288x128xbf16> to vector<288x64xbf16>
    %149 = arith.extf %148 : vector<288x64xbf16> to vector<288x64xf32>
    %150 = arith.addf %147, %149 : vector<288x64xf32>
    %c0_62 = arith.constant 0 : index
    %c0_63 = arith.constant 0 : index
    %c0_64 = arith.constant 0 : index
    %151 = vector.load %arg13[%c0_62, %c0_63, %c0_64] : memref<1x288x64xf32, #tpu.memory_space<vmem>>, vector<1x288x64xf32>
    %152 = vector.shape_cast %151 : vector<1x288x64xf32> to vector<288x64xf32>
    %153 = vector.shape_cast %150 : vector<288x64xf32> to vector<1x288x64xf32>
    tpu.vector_store %arg13[%c0_62, %c0_63, %c0_64], %153 {strides = array<i32>} : memref<1x288x64xf32, #tpu.memory_space<vmem>>, vector<1x288x64xf32>,
    return
  }
  func.func @transform_0(%arg0: i32, %arg1: i32) -> (i32, i32, i32, i32) {
    %c0_i32 = arith.constant 0 : i32
    %c0_i32_0 = arith.constant 0 : i32
    %c0_i32_1 = arith.constant 0 : i32
    return %arg0, %arg1, %c0_i32, %c0_i32_0 : i32, i32, i32, i32
  }
  func.func @transform_1(%arg0: i32, %arg1: i32) -> (i32, i32) {
    %c0_i32 = arith.constant 0 : i32
    %c0_i32_0 = arith.constant 0 : i32
    %c0_i32_1 = arith.constant 0 : i32
    return %c0_i32, %c0_i32_0 : i32, i32
  }
  func.func @transform_2(%arg0: i32, %arg1: i32) -> (i32, i32) {
    %c0_i32 = arith.constant 0 : i32
    %c0_i32_0 = arith.constant 0 : i32
    %c0_i32_1 = arith.constant 0 : i32
    return %c0_i32, %c0_i32_0 : i32, i32
  }
  func.func @transform_3(%arg0: i32, %arg1: i32) -> (i32, i32) {
    %c0_i32 = arith.constant 0 : i32
    %c0_i32_0 = arith.constant 0 : i32
    %c0_i32_1 = arith.constant 0 : i32
    return %c0_i32, %c0_i32_0 : i32, i32
  }
  func.func @transform_4(%arg0: i32, %arg1: i32) -> (i32, i32) {
    %c0_i32 = arith.constant 0 : i32
    %c0_i32_0 = arith.constant 0 : i32
    %c0_i32_1 = arith.constant 0 : i32
    return %c0_i32, %c0_i32_0 : i32, i32
  }
  func.func @transform_5(%arg0: i32, %arg1: i32) -> (i32, i32) {
    %c0_i32 = arith.constant 0 : i32
    %c0_i32_0 = arith.constant 0 : i32
    %c0_i32_1 = arith.constant 0 : i32
    return %c0_i32, %c0_i32_0 : i32, i32
  }
  func.func @transform_6(%arg0: i32, %arg1: i32) -> (i32, i32) {
    %c0_i32 = arith.constant 0 : i32
    %c0_i32_0 = arith.constant 0 : i32
    %c0_i32_1 = arith.constant 0 : i32
    return %c0_i32, %c0_i32_0 : i32, i32
  }
  func.func @transform_7(%arg0: i32, %arg1: i32) -> (i32, i32) {
    %c0_i32 = arith.constant 0 : i32
    %c0_i32_0 = arith.constant 0 : i32
    %c0_i32_1 = arith.constant 0 : i32
    return %c0_i32, %c0_i32_0 : i32, i32
  }
  func.func @transform_8(%arg0: i32, %arg1: i32) -> (i32, i32) {
    %c0_i32 = arith.constant 0 : i32
    %c0_i32_0 = arith.constant 0 : i32
    %c0_i32_1 = arith.constant 0 : i32
    return %c0_i32, %c0_i32_0 : i32, i32
  }
  func.func @transform_9(%arg0: i32, %arg1: i32) -> (i32, i32) {
    %c0_i32 = arith.constant 0 : i32
    %c0_i32_0 = arith.constant 0 : i32
    %c0_i32_1 = arith.constant 0 : i32
    return %c0_i32, %c0_i32_0 : i32, i32
  }
  func.func @transform_10(%arg0: i32, %arg1: i32) -> (i32, i32) {
    %c0_i32 = arith.constant 0 : i32
    %c0_i32_0 = arith.constant 0 : i32
    %c0_i32_1 = arith.constant 0 : i32
    return %c0_i32, %c0_i32_0 : i32, i32
  }
  func.func @transform_11(%arg0: i32, %arg1: i32) -> (i32, i32, i32) {
    %c0_i32 = arith.constant 0 : i32
    %c0_i32_0 = arith.constant 0 : i32
    return %arg0, %arg1, %c0_i32 : i32, i32, i32
  }
}

</mosaic_0001>

<llo_original>
// kernel: residual_dense_block_nchw.1
$region0: #{residual_dense_block_nchw.1}
  #allocation0 [shape = 'u32[]', space=smem, size = 0x4, offset = 0x4, fixed_abs, tag = 'smem constant byte address 0x4 - core index']
  #allocation1 [shape = 'u32[144,128]{1,0:T(1,128)}', space=vmem, size = 0x12000, scoped, tag = 'internal scratch']
  #allocation2 [shape = 'bf16[414,128]{1,0:T(8,128)(2,1)}', space=vmem, size = 0x1a000, scoped, tag = 'scratch operand']
  %s0 = inlined_call_operand.vmem [shape: bf16[2,1,396,64], index: 0, kind: input, shape index: {}]
  %s1 = inlined_call_operand.vmem [shape: s32[360,1], index: 1, kind: input, shape index: {}]
  %s2 = inlined_call_operand.vmem [shape: s32[360,1], index: 2, kind: input, shape index: {}]
  %s3 = inlined_call_operand.vmem [shape: bf16[128,144], index: 3, kind: input, shape index: {}]
  %s4 = inlined_call_operand.vmem [shape: f32[1,16], index: 4, kind: input, shape index: {}]
  %s5 = inlined_call_operand.vmem [shape: bf16[128,144], index: 5, kind: input, shape index: {}]
  %s6 = inlined_call_operand.vmem [shape: f32[1,16], index: 6, kind: input, shape index: {}]
  %s7 = inlined_call_operand.vmem [shape: bf16[128,144], index: 7, kind: input, shape index: {}]
  %s8 = inlined_call_operand.vmem [shape: f32[1,16], index: 8, kind: input, shape index: {}]
  %s9 = inlined_call_operand.vmem [shape: bf16[128,64], index: 9, kind: input, shape index: {}]
  %s10 = inlined_call_operand.vmem [shape: f32[1,64], index: 10, kind: input, shape index: {}]
  %s11 = inlined_call_operand.vmem [shape: f32[2,288,64], index: 11, kind: output, shape index: {}]
  %s12 = sld [smem:[#allocation0]]
  $region77: #{residual_dense_block_nchw.1} parent=0
    _
  %s14 = ssub.s32 1, %s12
  %s15 = scalar_select 0, %s14, %s12
  loop: start=0, step=1, limit=4
  $region2: #{residual_dense_block_nchw.1} parent=0 // loop_pre_header
    _
  $region3: #{residual_dense_block_nchw.1} parent=0 // loop_header
    %s17 = sphi 0, %s21
    %p18 = scmp.ge.s32.totalorder %s17, 4
    %s24 = sphi 0, %s36
    %s25 = sphi 0, %s32
    %s26 = sphi 0, %s24
    %s27 = sphi 0, %s25
    %s28 = sphi 0, %s26
    %s29 = sphi 0, %s27
    %s41 = sphi 0, %s43
    %s44 = sphi 0, %s41
    %s45 = sphi 0, %s44
    %s61 = sphi 0, %s45
    %s65 = sphi 0, %s65
    %s67 = sphi 0, %s65
    %s68 = sphi 0, %s67
    %s82 = sphi 0, %s68
    %s86 = sphi 0, %s86
    %s88 = sphi 0, %s86
    %s89 = sphi 0, %s88
    %s103 = sphi 0, %s89
    %s107 = sphi 0, %s107
    %s109 = sphi 0, %s107
    %s110 = sphi 0, %s109
    %s124 = sphi 0, %s110
    %s128 = sphi 0, %s128
    %s130 = sphi 0, %s128
    %s131 = sphi 0, %s130
    %s145 = sphi 0, %s131
    %s149 = sphi 0, %s149
    %s151 = sphi 0, %s149
    %s152 = sphi 0, %s151
    %s166 = sphi 0, %s152
    %s170 = sphi 0, %s170
    %s172 = sphi 0, %s170
    %s173 = sphi 0, %s172
    %s187 = sphi 0, %s173
    %s191 = sphi 0, %s191
    %s193 = sphi 0, %s191
    %s194 = sphi 0, %s193
    %s208 = sphi 0, %s194
    %s212 = sphi 0, %s212
    %s214 = sphi 0, %s212
    %s215 = sphi 0, %s214
    %s229 = sphi 0, %s215
    %s233 = sphi 0, %s233
    %s235 = sphi 0, %s233
    %s236 = sphi 0, %s235
    %s250 = sphi 0, %s236
    %s254 = sphi 0, %s254
    %s256 = sphi 0, %s254
    %s257 = sphi 0, %s256
    %s271 = sphi 0, %s257
    %s279 = sphi 0, %s281
    %s282 = sphi 0, %s279
    %s283 = sphi 0, %s282
    %s299 = sphi 0, %s283
  $region4: #{residual_dense_block_nchw.1} parent=0 // loop_header_branch
    %20 = sbr.rel (%p18) target = $region8
  $region5: #{residual_dense_block_nchw.1} parent=0 // loop_body
    %s22 = ssub.s32 %s17, 1
    %s23 = ssub.s32 %s17, 2
    %s30 = sadd.s32 1, %s25
    %p31 = scmp.ge.s32.totalorder %s30, 1
    %s32 = scalar_select %p31, 0, %s30
    %s33 = sadd.s32 1, %s24
    %s34 = scalar_select %p31, %s33, %s24
    %p35 = scmp.ge.s32.totalorder %s34, 2
    %s36 = scalar_select %p35, 0, %s34
    %s37 = ssub.s32 %s24, %s36
    %s38 = ssub.s32 %s25, %s32
    %s39 = sor.u32 %s37, %s38
    %p40 = scmp.eq.s32.totalorder %s39, 0
    %s42 = sadd.s32 %s41, 1
    %s43 = scalar_select %p40, %s41, %s42
    %p46 = pneg %p40
    %p47 = scmp.eq.s32.totalorder %s17, 1
    %p48 = por %p46, %p47
    %p49 = scmp.ne.s32.totalorder %s41, %s44
    %p50 = scmp.eq.s32.totalorder %s17, 0
    %p51 = por %p49, %p50
    %p52 = scmp.ne.s32.totalorder %s41, %s44
    %p53 = scmp.eq.s32.totalorder %s22, 1
    %p54 = por %p52, %p53
    %p55 = scmp.ne.s32.totalorder %s44, %s45
    %p56 = scmp.eq.s32.totalorder %s22, 0
    %p57 = por %p55, %p56
    %p58 = scmp.ne.s32.totalorder %s44, %s45
    %p59 = scmp.eq.s32.totalorder %s23, 1
    %p60 = por %p58, %p59
    %p62 = scmp.ne.s32.totalorder %s45, %s61
    %p63 = scmp.eq.s32.totalorder %s23, 0
    %p64 = por %p62, %p63
    %s66 = sadd.s32 %s65, 1
    %p69 = scmp.eq.s32.totalorder %s17, 1
    %p70 = scmp.ne.s32.totalorder %s65, %s67
    %p71 = scmp.eq.s32.totalorder %s17, 0
    %p72 = por %p70, %p71
    %p73 = scmp.ne.s32.totalorder %s65, %s67
    %p74 = scmp.eq.s32.totalorder %s22, 1
    %p75 = por %p73, %p74
    %p76 = scmp.ne.s32.totalorder %s67, %s68
    %p77 = scmp.eq.s32.totalorder %s22, 0
    %p78 = por %p76, %p77
    %p79 = scmp.ne.s32.totalorder %s67, %s68
    %p80 = scmp.eq.s32.totalorder %s23, 1
    %p81 = por %p79, %p80
    %p83 = scmp.ne.s32.totalorder %s68, %s82
    %p84 = scmp.eq.s32.totalorder %s23, 0
    %p85 = por %p83, %p84
    %s87 = sadd.s32 %s86, 1
    %p90 = scmp.eq.s32.totalorder %s17, 1
    %p91 = scmp.ne.s32.totalorder %s86, %s88
    %p92 = scmp.eq.s32.totalorder %s17, 0
    %p93 = por %p91, %p92
    %p94 = scmp.ne.s32.totalorder %s86, %s88
    %p95 = scmp.eq.s32.totalorder %s22, 1
    %p96 = por %p94, %p95
    %p97 = scmp.ne.s32.totalorder %s88, %s89
    %p98 = scmp.eq.s32.totalorder %s22, 0
    %p99 = por %p97, %p98
    %p100 = scmp.ne.s32.totalorder %s88, %s89
    %p101 = scmp.eq.s32.totalorder %s23, 1
    %p102 = por %p100, %p101
    %p104 = scmp.ne.s32.totalorder %s89, %s103
    %p105 = scmp.eq.s32.totalorder %s23, 0
    %p106 = por %p104, %p105
    %s108 = sadd.s32 %s107, 1
    %p111 = scmp.eq.s32.totalorder %s17, 1
    %p112 = scmp.ne.s32.totalorder %s107, %s109
    %p113 = scmp.eq.s32.totalorder %s17, 0
    %p114 = por %p112, %p113
    %p115 = scmp.ne.s32.totalorder %s107, %s109
    %p116 = scmp.eq.s32.totalorder %s22, 1
    %p117 = por %p115, %p116
    %p118 = scmp.ne.s32.totalorder %s109, %s110
    %p119 = scmp.eq.s32.totalorder %s22, 0
    %p120 = por %p118, %p119
    %p121 = scmp.ne.s32.totalorder %s109, %s110
    %p122 = scmp.eq.s32.totalorder %s23, 1
    %p123 = por %p121, %p122
    %p125 = scmp.ne.s32.totalorder %s110, %s124
    %p126 = scmp.eq.s32.totalorder %s23, 0
    %p127 = por %p125, %p126
    %s129 = sadd.s32 %s128, 1
    %p132 = scmp.eq.s32.totalorder %s17, 1
    %p133 = scmp.ne.s32.totalorder %s128, %s130
    %p134 = scmp.eq.s32.totalorder %s17, 0
    %p135 = por %p133, %p134
    %p136 = scmp.ne.s32.totalorder %s128, %s130
    %p137 = scmp.eq.s32.totalorder %s22, 1
    %p138 = por %p136, %p137
    %p139 = scmp.ne.s32.totalorder %s130, %s131
    %p140 = scmp.eq.s32.totalorder %s22, 0
    %p141 = por %p139, %p140
    %p142 = scmp.ne.s32.totalorder %s130, %s131
    %p143 = scmp.eq.s32.totalorder %s23, 1
    %p144 = por %p142, %p143
    %p146 = scmp.ne.s32.totalorder %s131, %s145
    %p147 = scmp.eq.s32.totalorder %s23, 0
    %p148 = por %p146, %p147
    %s150 = sadd.s32 %s149, 1
    %p153 = scmp.eq.s32.totalorder %s17, 1
    %p154 = scmp.ne.s32.totalorder %s149, %s151
    %p155 = scmp.eq.s32.totalorder %s17, 0
    %p156 = por %p154, %p155
    %p157 = scmp.ne.s32.totalorder %s149, %s151
    %p158 = scmp.eq.s32.totalorder %s22, 1
    %p159 = por %p157, %p158
    %p160 = scmp.ne.s32.totalorder %s151, %s152
    %p161 = scmp.eq.s32.totalorder %s22, 0
    %p162 = por %p160, %p161
    %p163 = scmp.ne.s32.totalorder %s151, %s152
    %p164 = scmp.eq.s32.totalorder %s23, 1
    %p165 = por %p163, %p164
    %p167 = scmp.ne.s32.totalorder %s152, %s166
    %p168 = scmp.eq.s32.totalorder %s23, 0
    %p169 = por %p167, %p168
    %s171 = sadd.s32 %s170, 1
    %p174 = scmp.eq.s32.totalorder %s17, 1
    %p175 = scmp.ne.s32.totalorder %s170, %s172
    %p176 = scmp.eq.s32.totalorder %s17, 0
    %p177 = por %p175, %p176
    %p178 = scmp.ne.s32.totalorder %s170, %s172
    %p179 = scmp.eq.s32.totalorder %s22, 1
    %p180 = por %p178, %p179
    %p181 = scmp.ne.s32.totalorder %s172, %s173
    %p182 = scmp.eq.s32.totalorder %s22, 0
    %p183 = por %p181, %p182
    %p184 = scmp.ne.s32.totalorder %s172, %s173
    %p185 = scmp.eq.s32.totalorder %s23, 1
    %p186 = por %p184, %p185
    %p188 = scmp.ne.s32.totalorder %s173, %s187
    %p189 = scmp.eq.s32.totalorder %s23, 0
    %p190 = por %p188, %p189
    %s192 = sadd.s32 %s191, 1
    %p195 = scmp.eq.s32.totalorder %s17, 1
    %p196 = scmp.ne.s32.totalorder %s191, %s193
    %p197 = scmp.eq.s32.totalorder %s17, 0
    %p198 = por %p196, %p197
    %p199 = scmp.ne.s32.totalorder %s191, %s193
    %p200 = scmp.eq.s32.totalorder %s22, 1
    %p201 = por %p199, %p200
    %p202 = scmp.ne.s32.totalorder %s193, %s194
    %p203 = scmp.eq.s32.totalorder %s22, 0
    %p204 = por %p202, %p203
    %p205 = scmp.ne.s32.totalorder %s193, %s194
    %p206 = scmp.eq.s32.totalorder %s23, 1
    %p207 = por %p205, %p206
    %p209 = scmp.ne.s32.totalorder %s194, %s208
    %p210 = scmp.eq.s32.totalorder %s23, 0
    %p211 = por %p209, %p210
    %s213 = sadd.s32 %s212, 1
    %p216 = scmp.eq.s32.totalorder %s17, 1
    %p217 = scmp.ne.s32.totalorder %s212, %s214
    %p218 = scmp.eq.s32.totalorder %s17, 0
    %p219 = por %p217, %p218
    %p220 = scmp.ne.s32.totalorder %s212, %s214
    %p221 = scmp.eq.s32.totalorder %s22, 1
    %p222 = por %p220, %p221
    %p223 = scmp.ne.s32.totalorder %s214, %s215
    %p224 = scmp.eq.s32.totalorder %s22, 0
    %p225 = por %p223, %p224
    %p226 = scmp.ne.s32.totalorder %s214, %s215
    %p227 = scmp.eq.s32.totalorder %s23, 1
    %p228 = por %p226, %p227
    %p230 = scmp.ne.s32.totalorder %s215, %s229
    %p231 = scmp.eq.s32.totalorder %s23, 0
    %p232 = por %p230, %p231
    %s234 = sadd.s32 %s233, 1
    %p237 = scmp.eq.s32.totalorder %s17, 1
    %p238 = scmp.ne.s32.totalorder %s233, %s235
    %p239 = scmp.eq.s32.totalorder %s17, 0
    %p240 = por %p238, %p239
    %p241 = scmp.ne.s32.totalorder %s233, %s235
    %p242 = scmp.eq.s32.totalorder %s22, 1
    %p243 = por %p241, %p242
    %p244 = scmp.ne.s32.totalorder %s235, %s236
    %p245 = scmp.eq.s32.totalorder %s22, 0
    %p246 = por %p244, %p245
    %p247 = scmp.ne.s32.totalorder %s235, %s236
    %p248 = scmp.eq.s32.totalorder %s23, 1
    %p249 = por %p247, %p248
    %p251 = scmp.ne.s32.totalorder %s236, %s250
    %p252 = scmp.eq.s32.totalorder %s23, 0
    %p253 = por %p251, %p252
    %s255 = sadd.s32 %s254, 1
    %p258 = scmp.eq.s32.totalorder %s17, 1
    %p259 = scmp.ne.s32.totalorder %s254, %s256
    %p260 = scmp.eq.s32.totalorder %s17, 0
    %p261 = por %p259, %p260
    %p262 = scmp.ne.s32.totalorder %s254, %s256
    %p263 = scmp.eq.s32.totalorder %s22, 1
    %p264 = por %p262, %p263
    %p265 = scmp.ne.s32.totalorder %s256, %s257
    %p266 = scmp.eq.s32.totalorder %s22, 0
    %p267 = por %p265, %p266
    %p268 = scmp.ne.s32.totalorder %s256, %s257
    %p269 = scmp.eq.s32.totalorder %s23, 1
    %p270 = por %p268, %p269
    %p272 = scmp.ne.s32.totalorder %s257, %s271
    %p273 = scmp.eq.s32.totalorder %s23, 0
    %p274 = por %p272, %p273
    %s275 = ssub.s32 %s24, %s36
    %s276 = ssub.s32 %s25, %s32
    %s277 = sor.u32 %s275, %s276
    %p278 = scmp.eq.s32.totalorder %s277, 0
    %s280 = sadd.s32 %s279, 1
    %s281 = scalar_select %p278, %s279, %s280
    %p284 = pneg %p278
    %p285 = scmp.eq.s32.totalorder %s17, 1
    %p286 = por %p284, %p285
    %p287 = scmp.ne.s32.totalorder %s279, %s282
    %p288 = scmp.eq.s32.totalorder %s17, 0
    %p289 = por %p287, %p288
    %p290 = scmp.ne.s32.totalorder %s279, %s282
    %p291 = scmp.eq.s32.totalorder %s22, 1
    %p292 = por %p290, %p291
    %p293 = scmp.ne.s32.totalorder %s282, %s283
    %p294 = scmp.eq.s32.totalorder %s22, 0
    %p295 = por %p293, %p294
    %p296 = scmp.ne.s32.totalorder %s282, %s283
    %p297 = scmp.eq.s32.totalorder %s23, 1
    %p298 = por %p296, %p297
    %p300 = scmp.ne.s32.totalorder %s283, %s299
    %p301 = scmp.eq.s32.totalorder %s23, 0
    %p302 = por %p300, %p301
    %p303 = scmp.le.s32.totalorder 1, %s17
    %p304 = scmp.lt.s32.totalorder %s17, 3
    %p305 = pnand %p303, %p304
    %p306 = pneg %p305
    // Predicated region
    $region9: #{residual_dense_block_nchw.1} parent=5 // pred_check
      _
    $region10: #{residual_dense_block_nchw.1} parent=5 // pred_check_branch
      %308 = sbr.rel (%p305) target = $region12
    $region11: #{residual_dense_block_nchw.1} parent=5 // pred_region
      %s309 = ssub.s32 %s17, 1
      // Predicated region
      $region13: #{residual_dense_block_nchw.1} parent=11 // pred_check
        %p310 = pneg %p78
      $region14: #{residual_dense_block_nchw.1} parent=11 // pred_check_branch
        %312 = sbr.rel (%p310) target = $region16
      $region15: #{residual_dense_block_nchw.1} parent=11 // pred_region
        _
      $region16: #{residual_dense_block_nchw.1} parent=11 // pred_fallthru
        _
      // Predicated region
      $region17: #{residual_dense_block_nchw.1} parent=11 // pred_check
        %p313 = pneg %p99
      $region18: #{residual_dense_block_nchw.1} parent=11 // pred_check_branch
        %315 = sbr.rel (%p313) target = $region20
      $region19: #{residual_dense_block_nchw.1} parent=11 // pred_region
        _
      $region20: #{residual_dense_block_nchw.1} parent=11 // pred_fallthru
        _
      // Predicated region
      $region21: #{residual_dense_block_nchw.1} parent=11 // pred_check
        %p316 = pneg %p120
      $region22: #{residual_dense_block_nchw.1} parent=11 // pred_check_branch
        %318 = sbr.rel (%p316) target = $region24
      $region23: #{residual_dense_block_nchw.1} parent=11 // pred_region
        _
      $region24: #{residual_dense_block_nchw.1} parent=11 // pred_fallthru
        _
      // Predicated region
      $region25: #{residual_dense_block_nchw.1} parent=11 // pred_check
        %p319 = pneg %p141
      $region26: #{residual_dense_block_nchw.1} parent=11 // pred_check_branch
        %321 = sbr.rel (%p319) target = $region28
      $region27: #{residual_dense_block_nchw.1} parent=11 // pred_region
        _
      $region28: #{residual_dense_block_nchw.1} parent=11 // pred_fallthru
        _
      // Predicated region
      $region29: #{residual_dense_block_nchw.1} parent=11 // pred_check
        %p322 = pneg %p162
      $region30: #{residual_dense_block_nchw.1} parent=11 // pred_check_branch
        %324 = sbr.rel (%p322) target = $region32
      $region31: #{residual_dense_block_nchw.1} parent=11 // pred_region
        _
      $region32: #{residual_dense_block_nchw.1} parent=11 // pred_fallthru
        _
      // Predicated region
      $region33: #{residual_dense_block_nchw.1} parent=11 // pred_check
        %p325 = pneg %p183
      $region34: #{residual_dense_block_nchw.1} parent=11 // pred_check_branch
        %327 = sbr.rel (%p325) target = $region36
      $region35: #{residual_dense_block_nchw.1} parent=11 // pred_region
        _
      $region36: #{residual_dense_block_nchw.1} parent=11 // pred_fallthru
        _
      // Predicated region
      $region37: #{residual_dense_block_nchw.1} parent=11 // pred_check
        %p328 = pneg %p204
      $region38: #{residual_dense_block_nchw.1} parent=11 // pred_check_branch
        %330 = sbr.rel (%p328) target = $region40
      $region39: #{residual_dense_block_nchw.1} parent=11 // pred_region
        _
      $region40: #{residual_dense_block_nchw.1} parent=11 // pred_fallthru
        _
      // Predicated region
      $region41: #{residual_dense_block_nchw.1} parent=11 // pred_check
        %p331 = pneg %p225
      $region42: #{residual_dense_block_nchw.1} parent=11 // pred_check_branch
        %333 = sbr.rel (%p331) target = $region44
      $region43: #{residual_dense_block_nchw.1} parent=11 // pred_region
        _
      $region44: #{residual_dense_block_nchw.1} parent=11 // pred_fallthru
        _
      // Predicated region
      $region45: #{residual_dense_block_nchw.1} parent=11 // pred_check
        %p334 = pneg %p246
      $region46: #{residual_dense_block_nchw.1} parent=11 // pred_check_branch
        %336 = sbr.rel (%p334) target = $region48
      $region47: #{residual_dense_block_nchw.1} parent=11 // pred_region
        _
      $region48: #{residual_dense_block_nchw.1} parent=11 // pred_fallthru
        _
      // Predicated region
      $region49: #{residual_dense_block_nchw.1} parent=11 // pred_check
        %p337 = pneg %p267
      $region50: #{residual_dense_block_nchw.1} parent=11 // pred_check_branch
        %339 = sbr.rel (%p337) target = $region52
      $region51: #{residual_dense_block_nchw.1} parent=11 // pred_region
        _
      $region52: #{residual_dense_block_nchw.1} parent=11 // pred_fallthru
        _
    $region12: #{residual_dense_block_nchw.1} parent=5 // pred_fallthru
      _
    %p340 = scmp.lt.s32.totalorder %s17, 2
    // Predicated region
    $region53: #{residual_dense_block_nchw.1} parent=5 // pred_check
      %p341 = pneg %p340
    $region54: #{residual_dense_block_nchw.1} parent=5 // pred_check_branch
      %343 = sbr.rel (%p341) target = $region56
    $region55: #{residual_dense_block_nchw.1} parent=5 // pred_region
      // Predicated region
      $region57: #{residual_dense_block_nchw.1} parent=55 // pred_check
        %p344 = pneg %p51
      $region58: #{residual_dense_block_nchw.1} parent=55 // pred_check_branch
        %346 = sbr.rel (%p344) target = $region60
      $region59: #{residual_dense_block_nchw.1} parent=55 // pred_region
        %p347 = scmp.lt.s32.totalorder %s24, 1
        %s348 = scalar_select %p347, %s24, 1
        %p349 = scmp.lt.s32.totalorder %s25, 0
        %s350 = scalar_select %p349, %s25, 0
        %s351 = smul.addr %s350, 50
        %s352 = smul.addr %s348, 50
        %s353 = sadd.s32 %s351, %s352
        %s354 = smul.addr %s353, 4
        %s355 = scalar_lea.vmem %s0, %s354
      $region60: #{residual_dense_block_nchw.1} parent=55 // pred_fallthru
        _
    $region56: #{residual_dense_block_nchw.1} parent=5 // pred_fallthru
      _
    %p356 = scmp.le.s32.totalorder 1, %s17
    %p357 = scmp.lt.s32.totalorder %s17, 3
    %p358 = pnand %p356, %p357
    %p359 = pneg %p358
    // Predicated region
    $region61: #{residual_dense_block_nchw.1} parent=5 // pred_check
      _
    $region62: #{residual_dense_block_nchw.1} parent=5 // pred_check_branch
      %361 = sbr.rel (%p358) target = $region64
    $region63: #{residual_dense_block_nchw.1} parent=5 // pred_region
      %s362 = ssub.s32 %s17, 1
      %p363 = scmp.lt.s32.totalorder %s26, 1
      %s364 = scalar_select %p363, %s26, 1
      %p365 = scmp.lt.s32.totalorder %s27, 0
      %s366 = scalar_select %p365, %s27, 0
      %s367 = smul.addr %s366, 50
      %s368 = smul.addr %s364, 50
      %s369 = sadd.s32 %s367, %s368
      %s370 = smul.addr %s369, 4
      %s371 = scalar_lea.vmem %s0, %s370
      %p372 = pneg %p57
      %p373 = pneg %p54
      %p374 = pneg %p78
      %p375 = pneg %p75
      %p376 = pneg %p99
      %p377 = pneg %p96
      %p378 = pneg %p120
      %p379 = pneg %p117
      %p380 = pneg %p141
      %p381 = pneg %p138
      %p382 = pneg %p162
      %p383 = pneg %p159
      %p384 = pneg %p183
      %p385 = pneg %p180
      %p386 = pneg %p204
      %p387 = pneg %p201
      %p388 = pneg %p225
      %p389 = pneg %p222
      %p390 = pneg %p246
      %p391 = pneg %p243
      %p392 = pneg %p267
      %p393 = pneg %p264
      %p394 = pneg %p295
      %p395 = pneg %p292
      %s396 = smul.u32 36, %s27
      %p397 = scmp.lt.s32.totalorder %s26, 1
      %s398 = scalar_select %p397, %s26, 1
      %p399 = scmp.lt.s32.totalorder %s396, 35
      %s400 = scalar_select %p399, %s396, 35
      %s401 = smul.addr %s398, 36
      %s402 = sadd.s32 %s400, %s401
      %s403 = smul.addr %s402, 8
      %s404 = scalar_lea.vmem %s11, %s403
      %p405 = scmp.lt.s32.totalorder %s26, 1
      %s406 = scalar_select %p405, %s26, 1
      %p407 = scmp.lt.s32.totalorder %s27, 0
      %s408 = scalar_select %p407, %s27, 0
      %s409 = smul.addr %s408, 50
      %s410 = smul.addr %s406, 50
      %s411 = sadd.s32 %s409, %s410
      %s412 = smul.addr %s411, 4
      %s413 = scalar_lea.vmem %s0, %s412
      %s414 = smul.u32 36, %s27
      %p415 = scmp.lt.s32.totalorder %s26, 1
      %s416 = scalar_select %p415, %s26, 1
      %p417 = scmp.lt.s32.totalorder %s414, 35
      %s418 = scalar_select %p417, %s414, 35
      %s419 = smul.addr %s416, 36
      %s420 = sadd.s32 %s418, %s419
      %s421 = smul.addr %s420, 8
      %s422 = scalar_lea.vmem %s11, %s421
      %s423 = smul.u32 36, %s27
      %s425 = smul.u32 %s27, 16
      %vm426 = vcmask 1043968
      %427 = vst.msk [vmem:[#allocation2] sm:$0xf] %vm426, 0
      %428 = vst.msk [vmem:[#allocation2 + $0x4] sm:$0xf] %vm426, 0
      %429 = vst.msk [vmem:[#allocation2 + $0x8] sm:$0xf] %vm426, 0
      %430 = vst.msk [vmem:[#allocation2 + $0xc] sm:$0xf] %vm426, 0
      %431 = vst.msk [vmem:[#allocation2 + $0x10] sm:$0xf] %vm426, 0
      %432 = vst.msk [vmem:[#allocation2 + $0x14] sm:$0xf] %vm426, 0
      %433 = vst.msk [vmem:[#allocation2 + $0x18] sm:$0xf] %vm426, 0
      %434 = vst.msk [vmem:[#allocation2 + $0x1c] sm:$0xf] %vm426, 0
      %435 = vst.msk [vmem:[#allocation2 + $0x20] sm:$0xf] %vm426, 0
      %436 = vst.msk [vmem:[#allocation2 + $0x24] sm:$0xf] %vm426, 0
      %437 = vst.msk [vmem:[#allocation2 + $0x28] sm:$0xf] %vm426, 0
      %438 = vst.msk [vmem:[#allocation2 + $0x2c] sm:$0xf] %vm426, 0
      %439 = vst.msk [vmem:[#allocation2 + $0x30] sm:$0xf] %vm426, 0
      %440 = vst.msk [vmem:[#allocation2 + $0x34] sm:$0xf] %vm426, 0
      %441 = vst.msk [vmem:[#allocation2 + $0x38] sm:$0xf] %vm426, 0
      %442 = vst.msk [vmem:[#allocation2 + $0x3c] sm:$0xf] %vm426, 0
      %443 = vst.msk [vmem:[#allocation2 + $0x40] sm:$0xf] %vm426, 0
      %444 = vst.msk [vmem:[#allocation2 + $0x44] sm:$0xf] %vm426, 0
      %445 = vst.msk [vmem:[#allocation2 + $0x48] sm:$0xf] %vm426, 0
      %446 = vst.msk [vmem:[#allocation2 + $0x4c] sm:$0xf] %vm426, 0
      %447 = vst.msk [vmem:[#allocation2 + $0x50] sm:$0xf] %vm426, 0
      %448 = vst.msk [vmem:[#allocation2 + $0x54] sm:$0xf] %vm426, 0
      %449 = vst.msk [vmem:[#allocation2 + $0x58] sm:$0xf] %vm426, 0
      %450 = vst.msk [vmem:[#allocation2 + $0x5c] sm:$0xf] %vm426, 0
      %451 = vst.msk [vmem:[#allocation2 + $0x60] sm:$0xf] %vm426, 0
      %452 = vst.msk [vmem:[#allocation2 + $0x64] sm:$0xf] %vm426, 0
      %453 = vst.msk [vmem:[#allocation2 + $0x68] sm:$0xf] %vm426, 0
      %454 = vst.msk [vmem:[#allocation2 + $0x6c] sm:$0xf] %vm426, 0
      %455 = vst.msk [vmem:[#allocation2 + $0x70] sm:$0xf] %vm426, 0
      %456 = vst.msk [vmem:[#allocation2 + $0x74] sm:$0xf] %vm426, 0
      %457 = vst.msk [vmem:[#allocation2 + $0x78] sm:$0xf] %vm426, 0
      %458 = vst.msk [vmem:[#allocation2 + $0x7c] sm:$0xf] %vm426, 0
      %459 = vst.msk [vmem:[#allocation2 + $0x80] sm:$0xf] %vm426, 0
      %460 = vst.msk [vmem:[#allocation2 + $0x84] sm:$0xf] %vm426, 0
      %461 = vst.msk [vmem:[#allocation2 + $0x88] sm:$0xf] %vm426, 0
      %462 = vst.msk [vmem:[#allocation2 + $0x8c] sm:$0xf] %vm426, 0
      %463 = vst.msk [vmem:[#allocation2 + $0x90] sm:$0xf] %vm426, 0
      %464 = vst.msk [vmem:[#allocation2 + $0x94] sm:$0xf] %vm426, 0
      %465 = vst.msk [vmem:[#allocation2 + $0x98] sm:$0xf] %vm426, 0
      %466 = vst.msk [vmem:[#allocation2 + $0x9c] sm:$0xf] %vm426, 0
      %467 = vst.msk [vmem:[#allocation2 + $0xa0] sm:$0xf] %vm426, 0
      %468 = vst.msk [vmem:[#allocation2 + $0xa4] sm:$0xf] %vm426, 0
      %469 = vst.msk [vmem:[#allocation2 + $0xa8] sm:$0xf] %vm426, 0
      %470 = vst.msk [vmem:[#allocation2 + $0xac] sm:$0xf] %vm426, 0
      %471 = vst.msk [vmem:[#allocation2 + $0xb0] sm:$0xf] %vm426, 0
      %472 = vst.msk [vmem:[#allocation2 + $0xb4] sm:$0xf] %vm426, 0
      %473 = vst.msk [vmem:[#allocation2 + $0xb8] sm:$0xf] %vm426, 0
      %474 = vst.msk [vmem:[#allocation2 + $0xbc] sm:$0xf] %vm426, 0
      %475 = vst.msk [vmem:[#allocation2 + $0xc0] sm:$0xf] %vm426, 0
      %476 = vst.msk [vmem:[#allocation2 + $0xc4] sm:$0xf] %vm426, 0
      %477 = vst.msk [vmem:[#allocation2 + $0xc8] sm:$0xf] %vm426, 0
      %vm478 = vcmask 1042944
      %479 = vst.msk [vmem:[#allocation2 + $0xcc] sm:$0x7] %vm478, 0
      %v480 = vld [vmem:[%s413] sm:$0xf]
      %v481 = vld [vmem:[%s413 + $0x4] sm:$0xf]
      %v482 = vld [vmem:[%s413 + $0x8] sm:$0xf]
      %v483 = vld [vmem:[%s413 + $0xc] sm:$0xf]
      %v484 = vld [vmem:[%s413 + $0x10] sm:$0xf]
      %v485 = vld [vmem:[%s413 + $0x14] sm:$0xf]
      %v486 = vld [vmem:[%s413 + $0x18] sm:$0xf]
      %v487 = vld [vmem:[%s413 + $0x1c] sm:$0xf]
      %v488 = vld [vmem:[%s413 + $0x20] sm:$0xf]
      %v489 = vld [vmem:[%s413 + $0x24] sm:$0xf]
      %v490 = vld [vmem:[%s413 + $0x28] sm:$0xf]
      %v491 = vld [vmem:[%s413 + $0x2c] sm:$0xf]
      %v492 = vld [vmem:[%s413 + $0x30] sm:$0xf]
      %v493 = vld [vmem:[%s413 + $0x34] sm:$0xf]
      %v494 = vld [vmem:[%s413 + $0x38] sm:$0xf]
      %v495 = vld [vmem:[%s413 + $0x3c] sm:$0xf]
      %v496 = vld [vmem:[%s413 + $0x40] sm:$0xf]
      %v497 = vld [vmem:[%s413 + $0x44] sm:$0xf]
      %v498 = vld [vmem:[%s413 + $0x48] sm:$0xf]
      %v499 = vld [vmem:[%s413 + $0x4c] sm:$0xf]
      %v500 = vld [vmem:[%s413 + $0x50] sm:$0xf]
      %v501 = vld [vmem:[%s413 + $0x54] sm:$0xf]
      %v502 = vld [vmem:[%s413 + $0x58] sm:$0xf]
      %v503 = vld [vmem:[%s413 + $0x5c] sm:$0xf]
      %v504 = vld [vmem:[%s413 + $0x60] sm:$0xf]
      %v505 = vld [vmem:[%s413 + $0x64] sm:$0xf]
      %v506 = vld [vmem:[%s413 + $0x68] sm:$0xf]
      %v507 = vld [vmem:[%s413 + $0x6c] sm:$0xf]
      %v508 = vld [vmem:[%s413 + $0x70] sm:$0xf]
      %v509 = vld [vmem:[%s413 + $0x74] sm:$0xf]
      %v510 = vld [vmem:[%s413 + $0x78] sm:$0xf]
      %v511 = vld [vmem:[%s413 + $0x7c] sm:$0xf]
      %v512 = vld [vmem:[%s413 + $0x80] sm:$0xf]
      %v513 = vld [vmem:[%s413 + $0x84] sm:$0xf]
      %v514 = vld [vmem:[%s413 + $0x88] sm:$0xf]
      %v515 = vld [vmem:[%s413 + $0x8c] sm:$0xf]
      %v516 = vld [vmem:[%s413 + $0x90] sm:$0xf]
      %v517 = vld [vmem:[%s413 + $0x94] sm:$0xf]
      %v518 = vld [vmem:[%s413 + $0x98] sm:$0xf]
      %v519 = vld [vmem:[%s413 + $0x9c] sm:$0xf]
      %v520 = vld [vmem:[%s413 + $0xa0] sm:$0xf]
      %v521 = vld [vmem:[%s413 + $0xa4] sm:$0xf]
      %v522 = vld [vmem:[%s413 + $0xa8] sm:$0xf]
      %v523 = vld [vmem:[%s413 + $0xac] sm:$0xf]
      %v524 = vld [vmem:[%s413 + $0xb0] sm:$0xf]
      %v525 = vld [vmem:[%s413 + $0xb4] sm:$0xf]
      %v526 = vld [vmem:[%s413 + $0xb8] sm:$0xf]
      %v527 = vld [vmem:[%s413 + $0xbc] sm:$0xf]
      %v528 = vld [vmem:[%s413 + $0xc0] sm:$0xf]
      %v529 = vld [vmem:[%s413 + $0xc4] sm:$0x3]
      %vm530 = vcmask 519168
      %531 = vst.msk [vmem:[#allocation2] sm:$0xf] %vm530, %v480
      %532 = vst.msk [vmem:[#allocation2 + $0x4] sm:$0xf] %vm530, %v481
      %533 = vst.msk [vmem:[#allocation2 + $0x8] sm:$0xf] %vm530, %v482
      %534 = vst.msk [vmem:[#allocation2 + $0xc] sm:$0xf] %vm530, %v483
      %535 = vst.msk [vmem:[#allocation2 + $0x10] sm:$0xf] %vm530, %v484
      %536 = vst.msk [vmem:[#allocation2 + $0x14] sm:$0xf] %vm530, %v485
      %537 = vst.msk [vmem:[#allocation2 + $0x18] sm:$0xf] %vm530, %v486
      %538 = vst.msk [vmem:[#allocation2 + $0x1c] sm:$0xf] %vm530, %v487
      %539 = vst.msk [vmem:[#allocation2 + $0x20] sm:$0xf] %vm530, %v488
      %540 = vst.msk [vmem:[#allocation2 + $0x24] sm:$0xf] %vm530, %v489
      %541 = vst.msk [vmem:[#allocation2 + $0x28] sm:$0xf] %vm530, %v490
      %542 = vst.msk [vmem:[#allocation2 + $0x2c] sm:$0xf] %vm530, %v491
      %543 = vst.msk [vmem:[#allocation2 + $0x30] sm:$0xf] %vm530, %v492
      %544 = vst.msk [vmem:[#allocation2 + $0x34] sm:$0xf] %vm530, %v493
      %545 = vst.msk [vmem:[#allocation2 + $0x38] sm:$0xf] %vm530, %v494
      %546 = vst.msk [vmem:[#allocation2 + $0x3c] sm:$0xf] %vm530, %v495
      %547 = vst.msk [vmem:[#allocation2 + $0x40] sm:$0xf] %vm530, %v496
      %548 = vst.msk [vmem:[#allocation2 + $0x44] sm:$0xf] %vm530, %v497
      %549 = vst.msk [vmem:[#allocation2 + $0x48] sm:$0xf] %vm530, %v498
      %550 = vst.msk [vmem:[#allocation2 + $0x4c] sm:$0xf] %vm530, %v499
      %551 = vst.msk [vmem:[#allocation2 + $0x50] sm:$0xf] %vm530, %v500
      %552 = vst.msk [vmem:[#allocation2 + $0x54] sm:$0xf] %vm530, %v501
      %553 = vst.msk [vmem:[#allocation2 + $0x58] sm:$0xf] %vm530, %v502
      %554 = vst.msk [vmem:[#allocation2 + $0x5c] sm:$0xf] %vm530, %v503
      %555 = vst.msk [vmem:[#allocation2 + $0x60] sm:$0xf] %vm530, %v504
      %556 = vst.msk [vmem:[#allocation2 + $0x64] sm:$0xf] %vm530, %v505
      %557 = vst.msk [vmem:[#allocation2 + $0x68] sm:$0xf] %vm530, %v506
      %558 = vst.msk [vmem:[#allocation2 + $0x6c] sm:$0xf] %vm530, %v507
      %559 = vst.msk [vmem:[#allocation2 + $0x70] sm:$0xf] %vm530, %v508
      %560 = vst.msk [vmem:[#allocation2 + $0x74] sm:$0xf] %vm530, %v509
      %561 = vst.msk [vmem:[#allocation2 + $0x78] sm:$0xf] %vm530, %v510
      %562 = vst.msk [vmem:[#allocation2 + $0x7c] sm:$0xf] %vm530, %v511
      %563 = vst.msk [vmem:[#allocation2 + $0x80] sm:$0xf] %vm530, %v512
      %564 = vst.msk [vmem:[#allocation2 + $0x84] sm:$0xf] %vm530, %v513
      %565 = vst.msk [vmem:[#allocation2 + $0x88] sm:$0xf] %vm530, %v514
      %566 = vst.msk [vmem:[#allocation2 + $0x8c] sm:$0xf] %vm530, %v515
      %567 = vst.msk [vmem:[#allocation2 + $0x90] sm:$0xf] %vm530, %v516
      %568 = vst.msk [vmem:[#allocation2 + $0x94] sm:$0xf] %vm530, %v517
      %569 = vst.msk [vmem:[#allocation2 + $0x98] sm:$0xf] %vm530, %v518
      %570 = vst.msk [vmem:[#allocation2 + $0x9c] sm:$0xf] %vm530, %v519
      %571 = vst.msk [vmem:[#allocation2 + $0xa0] sm:$0xf] %vm530, %v520
      %572 = vst.msk [vmem:[#allocation2 + $0xa4] sm:$0xf] %vm530, %v521
      %573 = vst.msk [vmem:[#allocation2 + $0xa8] sm:$0xf] %vm530, %v522
      %574 = vst.msk [vmem:[#allocation2 + $0xac] sm:$0xf] %vm530, %v523
      %575 = vst.msk [vmem:[#allocation2 + $0xb0] sm:$0xf] %vm530, %v524
      %576 = vst.msk [vmem:[#allocation2 + $0xb4] sm:$0xf] %vm530, %v525
      %577 = vst.msk [vmem:[#allocation2 + $0xb8] sm:$0xf] %vm530, %v526
      %578 = vst.msk [vmem:[#allocation2 + $0xbc] sm:$0xf] %vm530, %v527
      %579 = vst.msk [vmem:[#allocation2 + $0xc0] sm:$0xf] %vm530, %v528
      %vm580 = vcmask 517120
      %581 = vst.msk [vmem:[#allocation2 + $0xc4] sm:$0x3] %vm580, %v529
      %v582 = vld [vmem:[#allocation2] sm:$0xf]
      %v583 = vld [vmem:[#allocation2 + $0x4] sm:$0xf]
      %v584 = vld [vmem:[#allocation2 + $0x8] sm:$0xf]
      %v585 = vld [vmem:[#allocation2 + $0xc] sm:$0xf]
      %v586 = vld [vmem:[#allocation2 + $0x10] sm:$0xf]
      %v587 = vld [vmem:[#allocation2 + $0x14] sm:$0xf]
      %v588 = vld [vmem:[#allocation2 + $0x18] sm:$0xf]
      %v589 = vld [vmem:[#allocation2 + $0x1c] sm:$0xf]
      %v590 = vld [vmem:[#allocation2 + $0x20] sm:$0xf]
      %v591 = vld [vmem:[#allocation2 + $0x24] sm:$0xf]
      %v592 = vld [vmem:[#allocation2 + $0x28] sm:$0xf]
      %v593 = vld [vmem:[#allocation2 + $0x2c] sm:$0xf]
      %v594 = vld [vmem:[#allocation2 + $0x30] sm:$0xf]
      %v595 = vld [vmem:[#allocation2 + $0x34] sm:$0xf]
      %v596 = vld [vmem:[#allocation2 + $0x38] sm:$0xf]
      %v597 = vld [vmem:[#allocation2 + $0x3c] sm:$0xf]
      %v598 = vld [vmem:[#allocation2 + $0x40] sm:$0xf]
      %v599 = vld [vmem:[#allocation2 + $0x44] sm:$0xf]
      %v600 = vld [vmem:[#allocation2 + $0x48] sm:$0xf]
      %v601 = vld [vmem:[#allocation2 + $0x4c] sm:$0xf]
      %v602 = vld [vmem:[#allocation2 + $0x50] sm:$0xf]
      %v603 = vld [vmem:[#allocation2 + $0x54] sm:$0xf]
      %v604 = vld [vmem:[#allocation2 + $0x58] sm:$0xf]
      %v605 = vld [vmem:[#allocation2 + $0x5c] sm:$0xf]
      %v606 = vld [vmem:[#allocation2 + $0x60] sm:$0xf]
      %v607 = vld [vmem:[#allocation2 + $0x64] sm:$0xf]
      %v608 = vld [vmem:[#allocation2 + $0x68] sm:$0xf]
      %v609 = vld [vmem:[#allocation2 + $0x6c] sm:$0xf]
      %v610 = vld [vmem:[#allocation2 + $0x70] sm:$0xf]
      %v611 = vld [vmem:[#allocation2 + $0x74] sm:$0xf]
      %v612 = vld [vmem:[#allocation2 + $0x78] sm:$0xf]
      %v613 = vld [vmem:[#allocation2 + $0x7c] sm:$0xf]
      %v614 = vld [vmem:[#allocation2 + $0x80] sm:$0xf]
      %v615 = vld [vmem:[#allocation2 + $0x84] sm:$0xf]
      %v616 = vld [vmem:[#allocation2 + $0x88] sm:$0xf]
      %v617 = vld [vmem:[#allocation2 + $0x8c] sm:$0xf]
      %v618 = vld [vmem:[#allocation2 + $0x90] sm:$0xf]
      %v619 = vld [vmem:[#allocation2 + $0x94] sm:$0xf]
      %v620 = vld [vmem:[#allocation2 + $0x98] sm:$0xf]
      %v621 = vld [vmem:[#allocation2 + $0x9c] sm:$0xf]
      %v622 = vld [vmem:[#allocation2 + $0xa0] sm:$0xf]
      %v623 = vld [vmem:[#allocation2 + $0xa4] sm:$0xf]
      %v624 = vld [vmem:[#allocation2 + $0xa8] sm:$0xf]
      %v625 = vld [vmem:[#allocation2 + $0xac] sm:$0xf]
      %v626 = vld [vmem:[#allocation2 + $0xb0] sm:$0xf]
      %v627 = vld [vmem:[#allocation2 + $0xb4] sm:$0xf]
      %v628 = vld [vmem:[#allocation2 + $0xb8] sm:$0xf]
      %v629 = vld [vmem:[#allocation2 + $0xbc] sm:$0xf]
      %v630 = vld [vmem:[#allocation2 + $0xc0] sm:$0xf]
      %v631 = vld [vmem:[#allocation2 + $0xc4] sm:$0x7]
      %v632 = vld [vmem:[%s3] sm:$0xff]
      %v633 = vld [vmem:[%s3 + $0x8] sm:$0xff]
      %v634 = vld [vmem:[%s3 + $0x10] sm:$0xff]
      %v635 = vld [vmem:[%s3 + $0x18] sm:$0xff]
      %v636 = vld [vmem:[%s3 + $0x20] sm:$0xff]
      %v637 = vld [vmem:[%s3 + $0x28] sm:$0xff]
      %v638 = vld [vmem:[%s3 + $0x30] sm:$0xff]
      %v639 = vld [vmem:[%s3 + $0x38] sm:$0xff]
      %v640 = vld [vmem:[%s3 + $0x40] sm:$0xff]
      %v641 = vld [vmem:[%s3 + $0x48] sm:$0xff]
      %v642 = vld [vmem:[%s3 + $0x50] sm:$0xff]
      %v643 = vld [vmem:[%s3 + $0x58] sm:$0xff]
      %v644 = vld [vmem:[%s3 + $0x60] sm:$0xff]
      %v645 = vld [vmem:[%s3 + $0x68] sm:$0xff]
      %v646 = vld [vmem:[%s3 + $0x70] sm:$0xff]
      %v647 = vld [vmem:[%s3 + $0x78] sm:$0xff]
      %v698 = vunpack.c.l.b16 %v582
      %v699 = vunpack.c.l.b16 %v583
      %v700 = vunpack.c.l.b16 %v584
      %v701 = vunpack.c.l.b16 %v585
      %v702 = vunpack.c.l.b16 %v586
      %v703 = vunpack.c.l.b16 %v587
      %v704 = vunpack.c.l.b16 %v588
      %v705 = vunpack.c.l.b16 %v589
      %v706 = vunpack.c.l.b16 %v590
      %v707 = vunpack.c.l.b16 %v591
      %v708 = vunpack.c.l.b16 %v592
      %v709 = vunpack.c.l.b16 %v593
      %v710 = vunpack.c.l.b16 %v594
      %v711 = vunpack.c.l.b16 %v595
      %v712 = vunpack.c.l.b16 %v596
      %v713 = vunpack.c.l.b16 %v597
      %v714 = vunpack.c.l.b16 %v598
      %v715 = vunpack.c.l.b16 %v599
      %v716 = vunpack.c.l.b16 %v600
      %v717 = vunpack.c.l.b16 %v601
      %v718 = vunpack.c.l.b16 %v602
      %v719 = vunpack.c.l.b16 %v603
      %v720 = vunpack.c.l.b16 %v604
      %v721 = vunpack.c.l.b16 %v605
      %v722 = vunpack.c.l.b16 %v606
      %v723 = vunpack.c.l.b16 %v607
      %v724 = vunpack.c.l.b16 %v608
      %v725 = vunpack.c.l.b16 %v609
      %v726 = vunpack.c.l.b16 %v610
      %v727 = vunpack.c.l.b16 %v611
      %v728 = vunpack.c.l.b16 %v612
      %v729 = vunpack.c.l.b16 %v613
      %v730 = vunpack.c.l.b16 %v614
      %v731 = vunpack.c.l.b16 %v615
      %v732 = vunpack.c.l.b16 %v616
      %v733 = vunpack.c.l.b16 %v617
      %v734 = vunpack.c.l.b16 %v618
      %v735 = vunpack.c.l.b16 %v619
      %v736 = vunpack.c.l.b16 %v620
      %v737 = vunpack.c.l.b16 %v621
      %v738 = vunpack.c.l.b16 %v622
      %v739 = vunpack.c.l.b16 %v623
      %v740 = vunpack.c.l.b16 %v624
      %v741 = vunpack.c.l.b16 %v625
      %v742 = vunpack.c.l.b16 %v626
      %v743 = vunpack.c.l.b16 %v627
      %v744 = vunpack.c.l.b16 %v628
      %v745 = vunpack.c.l.b16 %v629
      %v746 = vunpack.c.l.b16 %v630
      %v747 = vunpack.c.l.b16 %v631
      %v748 = vpack.c.b16 %v699, %v698
      %v749 = vpack.c.b16 %v701, %v700
      %v750 = vpack.c.b16 %v703, %v702
      %v751 = vpack.c.b16 %v705, %v704
      %v752 = vpack.c.b16 %v707, %v706
      %v753 = vpack.c.b16 %v709, %v708
      %v754 = vpack.c.b16 %v711, %v710
      %v755 = vpack.c.b16 %v713, %v712
      %v756 = vpack.c.b16 %v715, %v714
      %v757 = vpack.c.b16 %v717, %v716
      %v758 = vpack.c.b16 %v719, %v718
      %v759 = vpack.c.b16 %v721, %v720
      %v760 = vpack.c.b16 %v723, %v722
      %v761 = vpack.c.b16 %v725, %v724
      %v762 = vpack.c.b16 %v727, %v726
      %v763 = vpack.c.b16 %v729, %v728
      %v764 = vpack.c.b16 %v731, %v730
      %v765 = vpack.c.b16 %v733, %v732
      %v766 = vpack.c.b16 %v735, %v734
      %v767 = vpack.c.b16 %v737, %v736
      %v768 = vpack.c.b16 %v739, %v738
      %v769 = vpack.c.b16 %v741, %v740
      %v770 = vpack.c.b16 %v743, %v742
      %v771 = vpack.c.b16 %v745, %v744
      %v772 = vpack.c.b16 %v747, %v746
      %v814 = vunpack.c.l.b16 %v632
      %v815 = vunpack.c.h.b16 %v632
      %v816 = vunpack.c.l.b16 %v633
      %v817 = vunpack.c.h.b16 %v633
      %v818 = vunpack.c.l.b16 %v634
      %v819 = vunpack.c.h.b16 %v634
      %v820 = vunpack.c.l.b16 %v635
      %v821 = vunpack.c.h.b16 %v635
      %v822 = vunpack.c.l.b16 %v636
      %v823 = vunpack.c.h.b16 %v636
      %v824 = vunpack.c.l.b16 %v637
      %v825 = vunpack.c.h.b16 %v637
      %v826 = vunpack.c.l.b16 %v638
      %v827 = vunpack.c.h.b16 %v638
      %v828 = vunpack.c.l.b16 %v639
      %v829 = vunpack.c.h.b16 %v639
      %v830 = vunpack.c.l.b16 %v640
      %v831 = vunpack.c.h.b16 %v640
      %v832 = vunpack.c.l.b16 %v641
      %v833 = vunpack.c.h.b16 %v641
      %v834 = vunpack.c.l.b16 %v642
      %v835 = vunpack.c.h.b16 %v642
      %v836 = vunpack.c.l.b16 %v643
      %v837 = vunpack.c.h.b16 %v643
      %v838 = vunpack.c.l.b16 %v644
      %v839 = vunpack.c.h.b16 %v644
      %v840 = vunpack.c.l.b16 %v645
      %v841 = vunpack.c.h.b16 %v645
      %v842 = vunpack.c.l.b16 %v646
      %v843 = vunpack.c.h.b16 %v646
      %v844 = vunpack.c.l.b16 %v647
      %v845 = vunpack.c.h.b16 %v647
      %v846 = vpack.c.b16 %v816, %v814
      %v847 = vpack.c.b16 %v817, %v815
      %v848 = vpack.c.b16 %v820, %v818
      %v849 = vpack.c.b16 %v821, %v819
      %v850 = vpack.c.b16 %v824, %v822
      %v851 = vpack.c.b16 %v825, %v823
      %v852 = vpack.c.b16 %v828, %v826
      %v853 = vpack.c.b16 %v829, %v827
      %v854 = vpack.c.b16 %v832, %v830
      %v855 = vpack.c.b16 %v833, %v831
      %v856 = vpack.c.b16 %v836, %v834
      %v857 = vpack.c.b16 %v837, %v835
      %v858 = vpack.c.b16 %v840, %v838
      %v859 = vpack.c.b16 %v841, %v839
      %v860 = vpack.c.b16 %v844, %v842
      %v861 = vpack.c.b16 %v845, %v843
      %878 = vmatprep.subr.bf16.mxu0 %v861
      %879 = vmatpush1.bf16.msra.mxu0 %v860
      %880 = vmatprep.subr.bf16.mxu0 %v859
      %881 = vmatpush1.bf16.msra.mxu0 %v858
      %882 = vmatprep.subr.bf16.mxu0 %v857
      %883 = vmatpush1.bf16.msra.mxu0 %v856
      %884 = vmatprep.subr.bf16.mxu0 %v855
      %885 = vmatpush1.bf16.msra.mxu0 %v854
      %886 = vmatprep.subr.bf16.mxu0 %v853
      %887 = vmatpush1.bf16.msra.mxu0 %v852
      %888 = vmatprep.subr.bf16.mxu0 %v851
      %889 = vmatpush1.bf16.msra.mxu0 %v850
      %890 = vmatprep.subr.bf16.mxu0 %v849
      %891 = vmatpush1.bf16.msra.mxu0 %v848
      %892 = vmatprep.subr.bf16.mxu0 %v847
      %893 = vmatpush1.bf16.msra.mxu0 %v846
      %894 = vmatprep.subr.bf16.mxu0 0
      %895 = vmatpush2.bf16.msra.mxu0 0
      %896 = vmatprep.subr.bf16.mxu0 0
      %897 = vmatpush2.bf16.msra.mxu0 0
      %898 = vmatprep.subr.bf16.mxu0 0
      %899 = vmatpush2.bf16.msra.mxu0 0
      %900 = vmatprep.subr.bf16.mxu0 0
      %901 = vmatpush2.bf16.msra.mxu0 0
      %902 = vmatprep.subr.bf16.mxu0 0
      %903 = vmatpush2.bf16.msra.mxu0 0
      %904 = vmatprep.subr.bf16.mxu0 0
      %905 = vmatpush2.bf16.msra.mxu0 0
      %906 = vmatprep.subr.bf16.mxu0 0
      %907 = vmatpush2.bf16.msra.mxu0 0
      %908 = vmatprep.subr.bf16.mxu0 0
      %909 = vmatpush2.bf16.msra.mxu0 0
      %910 = vmatprep.mubr.bf16.mxu0 0
      %911 = vmatmul.mubr.bf16.gmra.mxu0 %v748
      %v912 = vpop.f32.mrf.mxu0
      %v913 = vadd.f32 0.0, %v912
      %v914 = vpop.f32.mrf.mxu0
      %v915 = vpop.f32.mrf.mxu0
      %v916 = vadd.f32 0.0, %v915
      %v917 = vpop.f32.mrf.mxu0
      %918 = vmatprep.mubr.bf16.mxu0 0
      %919 = vmatmul.mubr.bf16.gmra.mxu0 %v749
      %v920 = vpop.f32.mrf.mxu0
      %v921 = vadd.f32 0.0, %v920
      %v922 = vpop.f32.mrf.mxu0
      %v923 = vpop.f32.mrf.mxu0
      %v924 = vadd.f32 0.0, %v923
      %v925 = vpop.f32.mrf.mxu0
      %926 = vmatprep.mubr.bf16.mxu0 0
      %927 = vmatmul.mubr.bf16.gmra.mxu0 %v750
      %v928 = vpop.f32.mrf.mxu0
      %v929 = vadd.f32 0.0, %v928
      %v930 = vpop.f32.mrf.mxu0
      %v931 = vadd.f32 0.0, %v930
      %v932 = vpop.f32.mrf.mxu0
      %v933 = vadd.f32 0.0, %v932
      %v934 = vpop.f32.mrf.mxu0
      %v935 = vadd.f32 0.0, %v934
      %936 = vmatprep.mubr.bf16.mxu0 0
      %937 = vmatmul.mubr.bf16.gmra.mxu0 %v751
      %v938 = vpop.f32.mrf.mxu0
      %v939 = vadd.f32 0.0, %v938
      %v940 = vpop.f32.mrf.mxu0
      %v941 = vadd.f32 0.0, %v940
      %v942 = vpop.f32.mrf.mxu0
      %v943 = vadd.f32 0.0, %v942
      %v944 = vpop.f32.mrf.mxu0
      %v945 = vadd.f32 0.0, %v944
      %946 = vmatprep.mubr.bf16.mxu0 0
      %947 = vmatmul.mubr.bf16.gmra.mxu0 %v752
      %v948 = vpop.f32.mrf.mxu0
      %v949 = vadd.f32 0.0, %v948
      %v950 = vpop.f32.mrf.mxu0
      %v951 = vadd.f32 0.0, %v950
      %v952 = vpop.f32.mrf.mxu0
      %v953 = vadd.f32 0.0, %v952
      %v954 = vpop.f32.mrf.mxu0
      %v955 = vadd.f32 0.0, %v954
      %956 = vmatprep.mubr.bf16.mxu0 0
      %957 = vmatmul.mubr.bf16.gmra.mxu0 %v753
      %v958 = vpop.f32.mrf.mxu0
      %v959 = vadd.f32 0.0, %v958
      %v960 = vpop.f32.mrf.mxu0
      %v961 = vadd.f32 0.0, %v960
      %v962 = vpop.f32.mrf.mxu0
      %v963 = vadd.f32 0.0, %v962
      %v964 = vpop.f32.mrf.mxu0
      %v965 = vadd.f32 0.0, %v964
      %966 = vmatprep.mubr.bf16.mxu0 0
      %967 = vmatmul.mubr.bf16.gmra.mxu0 %v754
      %v968 = vpop.f32.mrf.mxu0
      %v969 = vadd.f32 0.0, %v968
      %v970 = vpop.f32.mrf.mxu0
      %v971 = vadd.f32 0.0, %v970
      %v972 = vpop.f32.mrf.mxu0
      %v973 = vadd.f32 0.0, %v972
      %v974 = vpop.f32.mrf.mxu0
      %v975 = vadd.f32 0.0, %v974
      %976 = vmatprep.mubr.bf16.mxu0 0
      %977 = vmatmul.mubr.bf16.gmra.mxu0 %v755
      %v978 = vpop.f32.mrf.mxu0
      %v979 = vadd.f32 0.0, %v978
      %v980 = vpop.f32.mrf.mxu0
      %v981 = vadd.f32 0.0, %v980
      %v982 = vpop.f32.mrf.mxu0
      %v983 = vadd.f32 0.0, %v982
      %v984 = vpop.f32.mrf.mxu0
      %v985 = vadd.f32 0.0, %v984
      %986 = vmatprep.mubr.bf16.mxu0 0
      %987 = vmatmul.mubr.bf16.gmra.mxu0 %v756
      %v988 = vpop.f32.mrf.mxu0
      %v989 = vadd.f32 0.0, %v988
      %v990 = vpop.f32.mrf.mxu0
      %v991 = vadd.f32 0.0, %v990
      %v992 = vpop.f32.mrf.mxu0
      %v993 = vadd.f32 0.0, %v992
      %v994 = vpop.f32.mrf.mxu0
      %v995 = vadd.f32 0.0, %v994
      %996 = vmatprep.mubr.bf16.mxu0 0
      %997 = vmatmul.mubr.bf16.gmra.mxu0 %v757
      %v998 = vpop.f32.mrf.mxu0
      %v999 = vadd.f32 0.0, %v998
      %v1000 = vpop.f32.mrf.mxu0
      %v1001 = vadd.f32 0.0, %v1000
      %v1002 = vpop.f32.mrf.mxu0
      %v1003 = vadd.f32 0.0, %v1002
      %v1004 = vpop.f32.mrf.mxu0
      %v1005 = vadd.f32 0.0, %v1004
      %1006 = vmatprep.mubr.bf16.mxu0 0
      %1007 = vmatmul.mubr.bf16.gmra.mxu0 %v758
      %v1008 = vpop.f32.mrf.mxu0
      %v1009 = vadd.f32 0.0, %v1008
      %v1010 = vpop.f32.mrf.mxu0
      %v1011 = vadd.f32 0.0, %v1010
      %v1012 = vpop.f32.mrf.mxu0
      %v1013 = vadd.f32 0.0, %v1012
      %v1014 = vpop.f32.mrf.mxu0
      %v1015 = vadd.f32 0.0, %v1014
      %1016 = vmatprep.mubr.bf16.mxu0 0
      %1017 = vmatmul.mubr.bf16.gmra.mxu0 %v759
      %v1018 = vpop.f32.mrf.mxu0
      %v1019 = vadd.f32 0.0, %v1018
      %v1020 = vpop.f32.mrf.mxu0
      %v1021 = vadd.f32 0.0, %v1020
      %v1022 = vpop.f32.mrf.mxu0
      %v1023 = vadd.f32 0.0, %v1022
      %v1024 = vpop.f32.mrf.mxu0
      %v1025 = vadd.f32 0.0, %v1024
      %1026 = vmatprep.mubr.bf16.mxu0 0
      %1027 = vmatmul.mubr.bf16.gmra.mxu0 %v760
      %v1028 = vpop.f32.mrf.mxu0
      %v1029 = vadd.f32 0.0, %v1028
      %v1030 = vpop.f32.mrf.mxu0
      %v1031 = vadd.f32 0.0, %v1030
      %v1032 = vpop.f32.mrf.mxu0
      %v1033 = vadd.f32 0.0, %v1032
      %v1034 = vpop.f32.mrf.mxu0
      %v1035 = vadd.f32 0.0, %v1034
      %1036 = vmatprep.mubr.bf16.mxu0 0
      %1037 = vmatmul.mubr.bf16.gmra.mxu0 %v761
      %v1038 = vpop.f32.mrf.mxu0
      %v1039 = vadd.f32 0.0, %v1038
      %v1040 = vpop.f32.mrf.mxu0
      %v1041 = vadd.f32 0.0, %v1040
      %v1042 = vpop.f32.mrf.mxu0
      %v1043 = vadd.f32 0.0, %v1042
      %v1044 = vpop.f32.mrf.mxu0
      %v1045 = vadd.f32 0.0, %v1044
      %1046 = vmatprep.mubr.bf16.mxu0 0
      %1047 = vmatmul.mubr.bf16.gmra.mxu0 %v762
      %v1048 = vpop.f32.mrf.mxu0
      %v1049 = vadd.f32 0.0, %v1048
      %v1050 = vpop.f32.mrf.mxu0
      %v1051 = vadd.f32 0.0, %v1050
      %v1052 = vpop.f32.mrf.mxu0
      %v1053 = vadd.f32 0.0, %v1052
      %v1054 = vpop.f32.mrf.mxu0
      %v1055 = vadd.f32 0.0, %v1054
      %1056 = vmatprep.mubr.bf16.mxu0 0
      %1057 = vmatmul.mubr.bf16.gmra.mxu0 %v763
      %v1058 = vpop.f32.mrf.mxu0
      %v1059 = vadd.f32 0.0, %v1058
      %v1060 = vpop.f32.mrf.mxu0
      %v1061 = vadd.f32 0.0, %v1060
      %v1062 = vpop.f32.mrf.mxu0
      %v1063 = vadd.f32 0.0, %v1062
      %v1064 = vpop.f32.mrf.mxu0
      %v1065 = vadd.f32 0.0, %v1064
      %1066 = vmatprep.mubr.bf16.mxu0 0
      %1067 = vmatmul.mubr.bf16.gmra.mxu0 %v764
      %v1068 = vpop.f32.mrf.mxu0
      %v1069 = vadd.f32 0.0, %v1068
      %v1070 = vpop.f32.mrf.mxu0
      %v1071 = vadd.f32 0.0, %v1070
      %v1072 = vpop.f32.mrf.mxu0
      %v1073 = vadd.f32 0.0, %v1072
      %v1074 = vpop.f32.mrf.mxu0
      %v1075 = vadd.f32 0.0, %v1074
      %1076 = vmatprep.mubr.bf16.mxu0 0
      %1077 = vmatmul.mubr.bf16.gmra.mxu0 %v765
      %v1078 = vpop.f32.mrf.mxu0
      %v1079 = vadd.f32 0.0, %v1078
      %v1080 = vpop.f32.mrf.mxu0
      %v1081 = vadd.f32 0.0, %v1080
      %v1082 = vpop.f32.mrf.mxu0
      %v1083 = vadd.f32 0.0, %v1082
      %v1084 = vpop.f32.mrf.mxu0
      %v1085 = vadd.f32 0.0, %v1084
      %1086 = vmatprep.mubr.bf16.mxu0 0
      %1087 = vmatmul.mubr.bf16.gmra.mxu0 %v766
      %v1088 = vpop.f32.mrf.mxu0
      %v1089 = vadd.f32 0.0, %v1088
      %v1090 = vpop.f32.mrf.mxu0
      %v1091 = vadd.f32 0.0, %v1090
      %v1092 = vpop.f32.mrf.mxu0
      %v1093 = vadd.f32 0.0, %v1092
      %v1094 = vpop.f32.mrf.mxu0
      %v1095 = vadd.f32 0.0, %v1094
      %1096 = vmatprep.mubr.bf16.mxu0 0
      %1097 = vmatmul.mubr.bf16.gmra.mxu0 %v767
      %v1098 = vpop.f32.mrf.mxu0
      %v1099 = vadd.f32 0.0, %v1098
      %v1100 = vpop.f32.mrf.mxu0
      %v1101 = vadd.f32 0.0, %v1100
      %v1102 = vpop.f32.mrf.mxu0
      %v1103 = vadd.f32 0.0, %v1102
      %v1104 = vpop.f32.mrf.mxu0
      %v1105 = vadd.f32 0.0, %v1104
      %1106 = vmatprep.mubr.bf16.mxu0 0
      %1107 = vmatmul.mubr.bf16.gmra.mxu0 %v768
      %v1108 = vpop.f32.mrf.mxu0
      %v1109 = vadd.f32 0.0, %v1108
      %v1110 = vpop.f32.mrf.mxu0
      %v1111 = vadd.f32 0.0, %v1110
      %v1112 = vpop.f32.mrf.mxu0
      %v1113 = vadd.f32 0.0, %v1112
      %v1114 = vpop.f32.mrf.mxu0
      %v1115 = vadd.f32 0.0, %v1114
      %1116 = vmatprep.mubr.bf16.mxu0 0
      %1117 = vmatmul.mubr.bf16.gmra.mxu0 %v769
      %v1118 = vpop.f32.mrf.mxu0
      %v1119 = vadd.f32 0.0, %v1118
      %v1120 = vpop.f32.mrf.mxu0
      %v1121 = vadd.f32 0.0, %v1120
      %v1122 = vpop.f32.mrf.mxu0
      %v1123 = vadd.f32 0.0, %v1122
      %v1124 = vpop.f32.mrf.mxu0
      %v1125 = vadd.f32 0.0, %v1124
      %1126 = vmatprep.mubr.bf16.mxu0 0
      %1127 = vmatmul.mubr.bf16.gmra.mxu0 %v770
      %v1128 = vpop.f32.mrf.mxu0
      %v1129 = vadd.f32 0.0, %v1128
      %v1130 = vpop.f32.mrf.mxu0
      %v1131 = vadd.f32 0.0, %v1130
      %v1132 = vpop.f32.mrf.mxu0
      %v1133 = vadd.f32 0.0, %v1132
      %v1134 = vpop.f32.mrf.mxu0
      %v1135 = vadd.f32 0.0, %v1134
      %1136 = vmatprep.mubr.bf16.mxu0 0
      %1137 = vmatmul.mubr.bf16.gmra.mxu0 %v771
      %v1138 = vpop.f32.mrf.mxu0
      %v1139 = vadd.f32 0.0, %v1138
      %v1140 = vpop.f32.mrf.mxu0
      %v1141 = vadd.f32 0.0, %v1140
      %v1142 = vpop.f32.mrf.mxu0
      %v1143 = vadd.f32 0.0, %v1142
      %v1144 = vpop.f32.mrf.mxu0
      %v1145 = vadd.f32 0.0, %v1144
      %1146 = vmatprep.mubr.bf16.mxu0 0
      %1147 = vmatmul.mubr.bf16.gmra.mxu0 %v772
      %v1148 = vpop.f32.mrf.mxu0
      %v1149 = vadd.f32 0.0, %v1148
      %v1150 = vpop.f32.mrf.mxu0
      %v1151 = vadd.f32 0.0, %v1150
      %v1152 = vpop.f32.mrf.mxu0
      %v1153 = vadd.f32 0.0, %v1152
      %v1154 = vpop.f32.mrf.mxu0
      %v1155 = vadd.f32 0.0, %v1154
      %1156 = vdwg.mxu0
      %vm1203 = vcmask 1046528
      %v1204 = vrot.slane %v913, 1
      %v1205 = vrot.slane %v916, 1
      %v1206 = vsel %vm1203, %v1204, %v1205
      %v1207 = vrot.slane %v921, 1
      %v1208 = vsel %vm1203, %v1205, %v1207
      %v1209 = vrot.slane %v924, 1
      %v1210 = vsel %vm1203, %v1207, %v1209
      %v1211 = vrot.slane %v929, 1
      %v1212 = vsel %vm1203, %v1209, %v1211
      %v1213 = vrot.slane %v933, 1
      %v1214 = vsel %vm1203, %v1211, %v1213
      %v1215 = vrot.slane %v939, 1
      %v1216 = vsel %vm1203, %v1213, %v1215
      %v1217 = vrot.slane %v943, 1
      %v1218 = vsel %vm1203, %v1215, %v1217
      %v1219 = vrot.slane %v949, 1
      %v1220 = vsel %vm1203, %v1217, %v1219
      %v1221 = vrot.slane %v953, 1
      %v1222 = vsel %vm1203, %v1219, %v1221
      %v1223 = vrot.slane %v959, 1
      %v1224 = vsel %vm1203, %v1221, %v1223
      %v1225 = vrot.slane %v963, 1
      %v1226 = vsel %vm1203, %v1223, %v1225
      %v1227 = vrot.slane %v969, 1
      %v1228 = vsel %vm1203, %v1225, %v1227
      %v1229 = vrot.slane %v973, 1
      %v1230 = vsel %vm1203, %v1227, %v1229
      %v1231 = vrot.slane %v979, 1
      %v1232 = vsel %vm1203, %v1229, %v1231
      %v1233 = vrot.slane %v983, 1
      %v1234 = vsel %vm1203, %v1231, %v1233
      %v1235 = vrot.slane %v989, 1
      %v1236 = vsel %vm1203, %v1233, %v1235
      %v1237 = vrot.slane %v993, 1
      %v1238 = vsel %vm1203, %v1235, %v1237
      %v1239 = vrot.slane %v999, 1
      %v1240 = vsel %vm1203, %v1237, %v1239
      %v1241 = vrot.slane %v1003, 1
      %v1242 = vsel %vm1203, %v1239, %v1241
      %v1243 = vrot.slane %v1009, 1
      %v1244 = vsel %vm1203, %v1241, %v1243
      %v1245 = vrot.slane %v1013, 1
      %v1246 = vsel %vm1203, %v1243, %v1245
      %v1247 = vrot.slane %v1019, 1
      %v1248 = vsel %vm1203, %v1245, %v1247
      %v1249 = vrot.slane %v1023, 1
      %v1250 = vsel %vm1203, %v1247, %v1249
      %v1251 = vrot.slane %v1029, 1
      %v1252 = vsel %vm1203, %v1249, %v1251
      %v1253 = vrot.slane %v1033, 1
      %v1254 = vsel %vm1203, %v1251, %v1253
      %v1255 = vrot.slane %v1039, 1
      %v1256 = vsel %vm1203, %v1253, %v1255
      %v1257 = vrot.slane %v1043, 1
      %v1258 = vsel %vm1203, %v1255, %v1257
      %v1259 = vrot.slane %v1049, 1
      %v1260 = vsel %vm1203, %v1257, %v1259
      %v1261 = vrot.slane %v1053, 1
      %v1262 = vsel %vm1203, %v1259, %v1261
      %v1263 = vrot.slane %v1059, 1
      %v1264 = vsel %vm1203, %v1261, %v1263
      %v1265 = vrot.slane %v1063, 1
      %v1266 = vsel %vm1203, %v1263, %v1265
      %v1267 = vrot.slane %v1069, 1
      %v1268 = vsel %vm1203, %v1265, %v1267
      %v1269 = vrot.slane %v1073, 1
      %v1270 = vsel %vm1203, %v1267, %v1269
      %v1271 = vrot.slane %v1079, 1
      %v1272 = vsel %vm1203, %v1269, %v1271
      %v1273 = vrot.slane %v1083, 1
      %v1274 = vsel %vm1203, %v1271, %v1273
      %v1275 = vrot.slane %v1089, 1
      %v1276 = vsel %vm1203, %v1273, %v1275
      %v1277 = vrot.slane %v1093, 1
      %v1278 = vsel %vm1203, %v1275, %v1277
      %v1279 = vrot.slane %v1099, 1
      %v1280 = vsel %vm1203, %v1277, %v1279
      %v1281 = vrot.slane %v1103, 1
      %v1282 = vsel %vm1203, %v1279, %v1281
      %v1283 = vrot.slane %v1109, 1
      %v1284 = vsel %vm1203, %v1281, %v1283
      %v1285 = vrot.slane %v1113, 1
      %v1286 = vsel %vm1203, %v1283, %v1285
      %v1287 = vrot.slane %v1119, 1
      %v1288 = vsel %vm1203, %v1285, %v1287
      %v1289 = vrot.slane %v1123, 1
      %v1290 = vsel %vm1203, %v1287, %v1289
      %v1291 = vrot.slane %v1129, 1
      %v1292 = vsel %vm1203, %v1289, %v1291
      %v1293 = vrot.slane %v1133, 1
      %v1294 = vsel %vm1203, %v1291, %v1293
      %1295 = vrot.lane.b32.xlu0 %v1206, 112
      %v1296 = vpop.permute.xlu0 %1295
      %1297 = vrot.lane.b32.xlu0 %v1208, 112
      %v1298 = vpop.permute.xlu0 %1297
      %1299 = vrot.lane.b32.xlu0 %v1210, 112
      %v1300 = vpop.permute.xlu0 %1299
      %1301 = vrot.lane.b32.xlu0 %v1212, 112
      %v1302 = vpop.permute.xlu0 %1301
      %1303 = vrot.lane.b32.xlu0 %v1214, 112
      %v1304 = vpop.permute.xlu0 %1303
      %1305 = vrot.lane.b32.xlu0 %v1216, 112
      %v1306 = vpop.permute.xlu0 %1305
      %1307 = vrot.lane.b32.xlu0 %v1218, 112
      %v1308 = vpop.permute.xlu0 %1307
      %1309 = vrot.lane.b32.xlu0 %v1220, 112
      %v1310 = vpop.permute.xlu0 %1309
      %1311 = vrot.lane.b32.xlu0 %v1222, 112
      %v1312 = vpop.permute.xlu0 %1311
      %1313 = vrot.lane.b32.xlu0 %v1224, 112
      %v1314 = vpop.permute.xlu0 %1313
      %1315 = vrot.lane.b32.xlu0 %v1226, 112
      %v1316 = vpop.permute.xlu0 %1315
      %1317 = vrot.lane.b32.xlu0 %v1228, 112
      %v1318 = vpop.permute.xlu0 %1317
      %1319 = vrot.lane.b32.xlu0 %v1230, 112
      %v1320 = vpop.permute.xlu0 %1319
      %1321 = vrot.lane.b32.xlu0 %v1232, 112
      %v1322 = vpop.permute.xlu0 %1321
      %1323 = vrot.lane.b32.xlu0 %v1234, 112
      %v1324 = vpop.permute.xlu0 %1323
      %1325 = vrot.lane.b32.xlu0 %v1236, 112
      %v1326 = vpop.permute.xlu0 %1325
      %1327 = vrot.lane.b32.xlu0 %v1238, 112
      %v1328 = vpop.permute.xlu0 %1327
      %1329 = vrot.lane.b32.xlu0 %v1240, 112
      %v1330 = vpop.permute.xlu0 %1329
      %1331 = vrot.lane.b32.xlu0 %v1242, 112
      %v1332 = vpop.permute.xlu0 %1331
      %1333 = vrot.lane.b32.xlu0 %v1244, 112
      %v1334 = vpop.permute.xlu0 %1333
      %1335 = vrot.lane.b32.xlu0 %v1246, 112
      %v1336 = vpop.permute.xlu0 %1335
      %1337 = vrot.lane.b32.xlu0 %v1248, 112
      %v1338 = vpop.permute.xlu0 %1337
      %1339 = vrot.lane.b32.xlu0 %v1250, 112
      %v1340 = vpop.permute.xlu0 %1339
      %1341 = vrot.lane.b32.xlu0 %v1252, 112
      %v1342 = vpop.permute.xlu0 %1341
      %1343 = vrot.lane.b32.xlu0 %v1254, 112
      %v1344 = vpop.permute.xlu0 %1343
      %1345 = vrot.lane.b32.xlu0 %v1256, 112
      %v1346 = vpop.permute.xlu0 %1345
      %1347 = vrot.lane.b32.xlu0 %v1258, 112
      %v1348 = vpop.permute.xlu0 %1347
      %1349 = vrot.lane.b32.xlu0 %v1260, 112
      %v1350 = vpop.permute.xlu0 %1349
      %1351 = vrot.lane.b32.xlu0 %v1262, 112
      %v1352 = vpop.permute.xlu0 %1351
      %1353 = vrot.lane.b32.xlu0 %v1264, 112
      %v1354 = vpop.permute.xlu0 %1353
      %1355 = vrot.lane.b32.xlu0 %v1266, 112
      %v1356 = vpop.permute.xlu0 %1355
      %1357 = vrot.lane.b32.xlu0 %v1268, 112
      %v1358 = vpop.permute.xlu0 %1357
      %1359 = vrot.lane.b32.xlu0 %v1270, 112
      %v1360 = vpop.permute.xlu0 %1359
      %1361 = vrot.lane.b32.xlu0 %v1272, 112
      %v1362 = vpop.permute.xlu0 %1361
      %1363 = vrot.lane.b32.xlu0 %v1274, 112
      %v1364 = vpop.permute.xlu0 %1363
      %1365 = vrot.lane.b32.xlu0 %v1276, 112
      %v1366 = vpop.permute.xlu0 %1365
      %1367 = vrot.lane.b32.xlu0 %v1278, 112
      %v1368 = vpop.permute.xlu0 %1367
      %1369 = vrot.lane.b32.xlu0 %v1280, 112
      %v1370 = vpop.permute.xlu0 %1369
      %1371 = vrot.lane.b32.xlu0 %v1282, 112
      %v1372 = vpop.permute.xlu0 %1371
      %1373 = vrot.lane.b32.xlu0 %v1284, 112
      %v1374 = vpop.permute.xlu0 %1373
      %1375 = vrot.lane.b32.xlu0 %v1286, 112
      %v1376 = vpop.permute.xlu0 %1375
      %1377 = vrot.lane.b32.xlu0 %v1288, 112
      %v1378 = vpop.permute.xlu0 %1377
      %1379 = vrot.lane.b32.xlu0 %v1290, 112
      %v1380 = vpop.permute.xlu0 %1379
      %1381 = vrot.lane.b32.xlu0 %v1292, 112
      %v1382 = vpop.permute.xlu0 %1381
      %1383 = vrot.lane.b32.xlu0 %v1294, 112
      %v1384 = vpop.permute.xlu0 %1383
      %v1430 = vadd.f32 %v913, %v1296
      %v1431 = vadd.f32 %v916, %v1298
      %v1432 = vadd.f32 %v921, %v1300
      %v1433 = vadd.f32 %v924, %v1302
      %v1434 = vadd.f32 %v929, %v1304
      %v1435 = vadd.f32 %v933, %v1306
      %v1436 = vadd.f32 %v939, %v1308
      %v1437 = vadd.f32 %v943, %v1310
      %v1438 = vadd.f32 %v949, %v1312
      %v1439 = vadd.f32 %v953, %v1314
      %v1440 = vadd.f32 %v959, %v1316
      %v1441 = vadd.f32 %v963, %v1318
      %v1442 = vadd.f32 %v969, %v1320
      %v1443 = vadd.f32 %v973, %v1322
      %v1444 = vadd.f32 %v979, %v1324
      %v1445 = vadd.f32 %v983, %v1326
      %v1446 = vadd.f32 %v989, %v1328
      %v1447 = vadd.f32 %v993, %v1330
      %v1448 = vadd.f32 %v999, %v1332
      %v1449 = vadd.f32 %v1003, %v1334
      %v1450 = vadd.f32 %v1009, %v1336
      %v1451 = vadd.f32 %v1013, %v1338
      %v1452 = vadd.f32 %v1019, %v1340
      %v1453 = vadd.f32 %v1023, %v1342
      %v1454 = vadd.f32 %v1029, %v1344
      %v1455 = vadd.f32 %v1033, %v1346
      %v1456 = vadd.f32 %v1039, %v1348
      %v1457 = vadd.f32 %v1043, %v1350
      %v1458 = vadd.f32 %v1049, %v1352
      %v1459 = vadd.f32 %v1053, %v1354
      %v1460 = vadd.f32 %v1059, %v1356
      %v1461 = vadd.f32 %v1063, %v1358
      %v1462 = vadd.f32 %v1069, %v1360
      %v1463 = vadd.f32 %v1073, %v1362
      %v1464 = vadd.f32 %v1079, %v1364
      %v1465 = vadd.f32 %v1083, %v1366
      %v1466 = vadd.f32 %v1089, %v1368
      %v1467 = vadd.f32 %v1093, %v1370
      %v1468 = vadd.f32 %v1099, %v1372
      %v1469 = vadd.f32 %v1103, %v1374
      %v1470 = vadd.f32 %v1109, %v1376
      %v1471 = vadd.f32 %v1113, %v1378
      %v1472 = vadd.f32 %v1119, %v1380
      %v1473 = vadd.f32 %v1123, %v1382
      %v1474 = vadd.f32 %v1129, %v1384
      %vm1475 = vcmask 1045504
      %v1476 = vrot.slane %v913, 2
      %v1477 = vrot.slane %v916, 2
      %v1478 = vsel %vm1475, %v1476, %v1477
      %v1479 = vrot.slane %v921, 2
      %v1480 = vsel %vm1475, %v1477, %v1479
      %v1481 = vrot.slane %v924, 2
      %v1482 = vsel %vm1475, %v1479, %v1481
      %v1483 = vrot.slane %v929, 2
      %v1484 = vsel %vm1475, %v1481, %v1483
      %v1485 = vrot.slane %v933, 2
      %v1486 = vsel %vm1475, %v1483, %v1485
      %v1487 = vrot.slane %v939, 2
      %v1488 = vsel %vm1475, %v1485, %v1487
      %v1489 = vrot.slane %v943, 2
      %v1490 = vsel %vm1475, %v1487, %v1489
      %v1491 = vrot.slane %v949, 2
      %v1492 = vsel %vm1475, %v1489, %v1491
      %v1493 = vrot.slane %v953, 2
      %v1494 = vsel %vm1475, %v1491, %v1493
      %v1495 = vrot.slane %v959, 2
      %v1496 = vsel %vm1475, %v1493, %v1495
      %v1497 = vrot.slane %v963, 2
      %v1498 = vsel %vm1475, %v1495, %v1497
      %v1499 = vrot.slane %v969, 2
      %v1500 = vsel %vm1475, %v1497, %v1499
      %v1501 = vrot.slane %v973, 2
      %v1502 = vsel %vm1475, %v1499, %v1501
      %v1503 = vrot.slane %v979, 2
      %v1504 = vsel %vm1475, %v1501, %v1503
      %v1505 = vrot.slane %v983, 2
      %v1506 = vsel %vm1475, %v1503, %v1505
      %v1507 = vrot.slane %v989, 2
      %v1508 = vsel %vm1475, %v1505, %v1507
      %v1509 = vrot.slane %v993, 2
      %v1510 = vsel %vm1475, %v1507, %v1509
      %v1511 = vrot.slane %v999, 2
      %v1512 = vsel %vm1475, %v1509, %v1511
      %v1513 = vrot.slane %v1003, 2
      %v1514 = vsel %vm1475, %v1511, %v1513
      %v1515 = vrot.slane %v1009, 2
      %v1516 = vsel %vm1475, %v1513, %v1515
      %v1517 = vrot.slane %v1013, 2
      %v1518 = vsel %vm1475, %v1515, %v1517
      %v1519 = vrot.slane %v1019, 2
      %v1520 = vsel %vm1475, %v1517, %v1519
      %v1521 = vrot.slane %v1023, 2
      %v1522 = vsel %vm1475, %v1519, %v1521
      %v1523 = vrot.slane %v1029, 2
      %v1524 = vsel %vm1475, %v1521, %v1523
      %v1525 = vrot.slane %v1033, 2
      %v1526 = vsel %vm1475, %v1523, %v1525
      %v1527 = vrot.slane %v1039, 2
      %v1528 = vsel %vm1475, %v1525, %v1527
      %v1529 = vrot.slane %v1043, 2
      %v1530 = vsel %vm1475, %v1527, %v1529
      %v1531 = vrot.slane %v1049, 2
      %v1532 = vsel %vm1475, %v1529, %v1531
      %v1533 = vrot.slane %v1053, 2
      %v1534 = vsel %vm1475, %v1531, %v1533
      %v1535 = vrot.slane %v1059, 2
      %v1536 = vsel %vm1475, %v1533, %v1535
      %v1537 = vrot.slane %v1063, 2
      %v1538 = vsel %vm1475, %v1535, %v1537
      %v1539 = vrot.slane %v1069, 2
      %v1540 = vsel %vm1475, %v1537, %v1539
      %v1541 = vrot.slane %v1073, 2
      %v1542 = vsel %vm1475, %v1539, %v1541
      %v1543 = vrot.slane %v1079, 2
      %v1544 = vsel %vm1475, %v1541, %v1543
      %v1545 = vrot.slane %v1083, 2
      %v1546 = vsel %vm1475, %v1543, %v1545
      %v1547 = vrot.slane %v1089, 2
      %v1548 = vsel %vm1475, %v1545, %v1547
      %v1549 = vrot.slane %v1093, 2
      %v1550 = vsel %vm1475, %v1547, %v1549
      %v1551 = vrot.slane %v1099, 2
      %v1552 = vsel %vm1475, %v1549, %v1551
      %v1553 = vrot.slane %v1103, 2
      %v1554 = vsel %vm1475, %v1551, %v1553
      %v1555 = vrot.slane %v1109, 2
      %v1556 = vsel %vm1475, %v1553, %v1555
      %v1557 = vrot.slane %v1113, 2
      %v1558 = vsel %vm1475, %v1555, %v1557
      %v1559 = vrot.slane %v1119, 2
      %v1560 = vsel %vm1475, %v1557, %v1559
      %v1561 = vrot.slane %v1123, 2
      %v1562 = vsel %vm1475, %v1559, %v1561
      %v1563 = vrot.slane %v1129, 2
      %v1564 = vsel %vm1475, %v1561, %v1563
      %v1565 = vrot.slane %v1133, 2
      %v1566 = vsel %vm1475, %v1563, %v1565
      %1567 = vrot.lane.b32.xlu0 %v1478, 96
      %v1568 = vpop.permute.xlu0 %1567
      %1569 = vrot.lane.b32.xlu0 %v1480, 96
      %v1570 = vpop.permute.xlu0 %1569
      %1571 = vrot.lane.b32.xlu0 %v1482, 96
      %v1572 = vpop.permute.xlu0 %1571
      %1573 = vrot.lane.b32.xlu0 %v1484, 96
      %v1574 = vpop.permute.xlu0 %1573
      %1575 = vrot.lane.b32.xlu0 %v1486, 96
      %v1576 = vpop.permute.xlu0 %1575
      %1577 = vrot.lane.b32.xlu0 %v1488, 96
      %v1578 = vpop.permute.xlu0 %1577
      %1579 = vrot.lane.b32.xlu0 %v1490, 96
      %v1580 = vpop.permute.xlu0 %1579
      %1581 = vrot.lane.b32.xlu0 %v1492, 96
      %v1582 = vpop.permute.xlu0 %1581
      %1583 = vrot.lane.b32.xlu0 %v1494, 96
      %v1584 = vpop.permute.xlu0 %1583
      %1585 = vrot.lane.b32.xlu0 %v1496, 96
      %v1586 = vpop.permute.xlu0 %1585
      %1587 = vrot.lane.b32.xlu0 %v1498, 96
      %v1588 = vpop.permute.xlu0 %1587
      %1589 = vrot.lane.b32.xlu0 %v1500, 96
      %v1590 = vpop.permute.xlu0 %1589
      %1591 = vrot.lane.b32.xlu0 %v1502, 96
      %v1592 = vpop.permute.xlu0 %1591
      %1593 = vrot.lane.b32.xlu0 %v1504, 96
      %v1594 = vpop.permute.xlu0 %1593
      %1595 = vrot.lane.b32.xlu0 %v1506, 96
      %v1596 = vpop.permute.xlu0 %1595
      %1597 = vrot.lane.b32.xlu0 %v1508, 96
      %v1598 = vpop.permute.xlu0 %1597
      %1599 = vrot.lane.b32.xlu0 %v1510, 96
      %v1600 = vpop.permute.xlu0 %1599
      %1601 = vrot.lane.b32.xlu0 %v1512, 96
      %v1602 = vpop.permute.xlu0 %1601
      %1603 = vrot.lane.b32.xlu0 %v1514, 96
      %v1604 = vpop.permute.xlu0 %1603
      %1605 = vrot.lane.b32.xlu0 %v1516, 96
      %v1606 = vpop.permute.xlu0 %1605
      %1607 = vrot.lane.b32.xlu0 %v1518, 96
      %v1608 = vpop.permute.xlu0 %1607
      %1609 = vrot.lane.b32.xlu0 %v1520, 96
      %v1610 = vpop.permute.xlu0 %1609
      %1611 = vrot.lane.b32.xlu0 %v1522, 96
      %v1612 = vpop.permute.xlu0 %1611
      %1613 = vrot.lane.b32.xlu0 %v1524, 96
      %v1614 = vpop.permute.xlu0 %1613
      %1615 = vrot.lane.b32.xlu0 %v1526, 96
      %v1616 = vpop.permute.xlu0 %1615
      %1617 = vrot.lane.b32.xlu0 %v1528, 96
      %v1618 = vpop.permute.xlu0 %1617
      %1619 = vrot.lane.b32.xlu0 %v1530, 96
      %v1620 = vpop.permute.xlu0 %1619
      %1621 = vrot.lane.b32.xlu0 %v1532, 96
      %v1622 = vpop.permute.xlu0 %1621
      %1623 = vrot.lane.b32.xlu0 %v1534, 96
      %v1624 = vpop.permute.xlu0 %1623
      %1625 = vrot.lane.b32.xlu0 %v1536, 96
      %v1626 = vpop.permute.xlu0 %1625
      %1627 = vrot.lane.b32.xlu0 %v1538, 96
      %v1628 = vpop.permute.xlu0 %1627
      %1629 = vrot.lane.b32.xlu0 %v1540, 96
      %v1630 = vpop.permute.xlu0 %1629
      %1631 = vrot.lane.b32.xlu0 %v1542, 96
      %v1632 = vpop.permute.xlu0 %1631
      %1633 = vrot.lane.b32.xlu0 %v1544, 96
      %v1634 = vpop.permute.xlu0 %1633
      %1635 = vrot.lane.b32.xlu0 %v1546, 96
      %v1636 = vpop.permute.xlu0 %1635
      %1637 = vrot.lane.b32.xlu0 %v1548, 96
      %v1638 = vpop.permute.xlu0 %1637
      %1639 = vrot.lane.b32.xlu0 %v1550, 96
      %v1640 = vpop.permute.xlu0 %1639
      %1641 = vrot.lane.b32.xlu0 %v1552, 96
      %v1642 = vpop.permute.xlu0 %1641
      %1643 = vrot.lane.b32.xlu0 %v1554, 96
      %v1644 = vpop.permute.xlu0 %1643
      %1645 = vrot.lane.b32.xlu0 %v1556, 96
      %v1646 = vpop.permute.xlu0 %1645
      %1647 = vrot.lane.b32.xlu0 %v1558, 96
      %v1648 = vpop.permute.xlu0 %1647
      %1649 = vrot.lane.b32.xlu0 %v1560, 96
      %v1650 = vpop.permute.xlu0 %1649
      %1651 = vrot.lane.b32.xlu0 %v1562, 96
      %v1652 = vpop.permute.xlu0 %1651
      %1653 = vrot.lane.b32.xlu0 %v1564, 96
      %v1654 = vpop.permute.xlu0 %1653
      %1655 = vrot.lane.b32.xlu0 %v1566, 96
      %v1656 = vpop.permute.xlu0 %1655
      %v1702 = vadd.f32 %v1430, %v1568
      %v1703 = vadd.f32 %v1431, %v1570
      %v1704 = vadd.f32 %v1432, %v1572
      %v1705 = vadd.f32 %v1433, %v1574
      %v1706 = vadd.f32 %v1434, %v1576
      %v1707 = vadd.f32 %v1435, %v1578
      %v1708 = vadd.f32 %v1436, %v1580
      %v1709 = vadd.f32 %v1437, %v1582
      %v1710 = vadd.f32 %v1438, %v1584
      %v1711 = vadd.f32 %v1439, %v1586
      %v1712 = vadd.f32 %v1440, %v1588
      %v1713 = vadd.f32 %v1441, %v1590
      %v1714 = vadd.f32 %v1442, %v1592
      %v1715 = vadd.f32 %v1443, %v1594
      %v1716 = vadd.f32 %v1444, %v1596
      %v1717 = vadd.f32 %v1445, %v1598
      %v1718 = vadd.f32 %v1446, %v1600
      %v1719 = vadd.f32 %v1447, %v1602
      %v1720 = vadd.f32 %v1448, %v1604
      %v1721 = vadd.f32 %v1449, %v1606
      %v1722 = vadd.f32 %v1450, %v1608
      %v1723 = vadd.f32 %v1451, %v1610
      %v1724 = vadd.f32 %v1452, %v1612
      %v1725 = vadd.f32 %v1453, %v1614
      %v1726 = vadd.f32 %v1454, %v1616
      %v1727 = vadd.f32 %v1455, %v1618
      %v1728 = vadd.f32 %v1456, %v1620
      %v1729 = vadd.f32 %v1457, %v1622
      %v1730 = vadd.f32 %v1458, %v1624
      %v1731 = vadd.f32 %v1459, %v1626
      %v1732 = vadd.f32 %v1460, %v1628
      %v1733 = vadd.f32 %v1461, %v1630
      %v1734 = vadd.f32 %v1462, %v1632
      %v1735 = vadd.f32 %v1463, %v1634
      %v1736 = vadd.f32 %v1464, %v1636
      %v1737 = vadd.f32 %v1465, %v1638
      %v1738 = vadd.f32 %v1466, %v1640
      %v1739 = vadd.f32 %v1467, %v1642
      %v1740 = vadd.f32 %v1468, %v1644
      %v1741 = vadd.f32 %v1469, %v1646
      %v1742 = vadd.f32 %v1470, %v1648
      %v1743 = vadd.f32 %v1471, %v1650
      %v1744 = vadd.f32 %v1472, %v1652
      %v1745 = vadd.f32 %v1473, %v1654
      %v1746 = vadd.f32 %v1474, %v1656
      %v1749 = vrot.slane %v1139, 2
      %v1750 = vsel %vm1475, %v1565, %v1749
      %v1751 = vrot.slane %v1143, 2
      %v1752 = vsel %vm1475, %v1749, %v1751
      %1753 = vrot.lane.b32.xlu0 %v1482, 80
      %v1754 = vpop.permute.xlu0 %1753
      %1755 = vrot.lane.b32.xlu0 %v1484, 80
      %v1756 = vpop.permute.xlu0 %1755
      %1757 = vrot.lane.b32.xlu0 %v1486, 80
      %v1758 = vpop.permute.xlu0 %1757
      %1759 = vrot.lane.b32.xlu0 %v1488, 80
      %v1760 = vpop.permute.xlu0 %1759
      %1761 = vrot.lane.b32.xlu0 %v1490, 80
      %v1762 = vpop.permute.xlu0 %1761
      %1763 = vrot.lane.b32.xlu0 %v1492, 80
      %v1764 = vpop.permute.xlu0 %1763
      %1765 = vrot.lane.b32.xlu0 %v1494, 80
      %v1766 = vpop.permute.xlu0 %1765
      %1767 = vrot.lane.b32.xlu0 %v1496, 80
      %v1768 = vpop.permute.xlu0 %1767
      %1769 = vrot.lane.b32.xlu0 %v1498, 80
      %v1770 = vpop.permute.xlu0 %1769
      %1771 = vrot.lane.b32.xlu0 %v1500, 80
      %v1772 = vpop.permute.xlu0 %1771
      %1773 = vrot.lane.b32.xlu0 %v1502, 80
      %v1774 = vpop.permute.xlu0 %1773
      %1775 = vrot.lane.b32.xlu0 %v1504, 80
      %v1776 = vpop.permute.xlu0 %1775
      %1777 = vrot.lane.b32.xlu0 %v1506, 80
      %v1778 = vpop.permute.xlu0 %1777
      %1779 = vrot.lane.b32.xlu0 %v1508, 80
      %v1780 = vpop.permute.xlu0 %1779
      %1781 = vrot.lane.b32.xlu0 %v1510, 80
      %v1782 = vpop.permute.xlu0 %1781
      %1783 = vrot.lane.b32.xlu0 %v1512, 80
      %v1784 = vpop.permute.xlu0 %1783
      %1785 = vrot.lane.b32.xlu0 %v1514, 80
      %v1786 = vpop.permute.xlu0 %1785
      %1787 = vrot.lane.b32.xlu0 %v1516, 80
      %v1788 = vpop.permute.xlu0 %1787
      %1789 = vrot.lane.b32.xlu0 %v1518, 80
      %v1790 = vpop.permute.xlu0 %1789
      %1791 = vrot.lane.b32.xlu0 %v1520, 80
      %v1792 = vpop.permute.xlu0 %1791
      %1793 = vrot.lane.b32.xlu0 %v1522, 80
      %v1794 = vpop.permute.xlu0 %1793
      %1795 = vrot.lane.b32.xlu0 %v1524, 80
      %v1796 = vpop.permute.xlu0 %1795
      %1797 = vrot.lane.b32.xlu0 %v1526, 80
      %v1798 = vpop.permute.xlu0 %1797
      %1799 = vrot.lane.b32.xlu0 %v1528, 80
      %v1800 = vpop.permute.xlu0 %1799
      %1801 = vrot.lane.b32.xlu0 %v1530, 80
      %v1802 = vpop.permute.xlu0 %1801
      %1803 = vrot.lane.b32.xlu0 %v1532, 80
      %v1804 = vpop.permute.xlu0 %1803
      %1805 = vrot.lane.b32.xlu0 %v1534, 80
      %v1806 = vpop.permute.xlu0 %1805
      %1807 = vrot.lane.b32.xlu0 %v1536, 80
      %v1808 = vpop.permute.xlu0 %1807
      %1809 = vrot.lane.b32.xlu0 %v1538, 80
      %v1810 = vpop.permute.xlu0 %1809
      %1811 = vrot.lane.b32.xlu0 %v1540, 80
      %v1812 = vpop.permute.xlu0 %1811
      %1813 = vrot.lane.b32.xlu0 %v1542, 80
      %v1814 = vpop.permute.xlu0 %1813
      %1815 = vrot.lane.b32.xlu0 %v1544, 80
      %v1816 = vpop.permute.xlu0 %1815
      %1817 = vrot.lane.b32.xlu0 %v1546, 80
      %v1818 = vpop.permute.xlu0 %1817
      %1819 = vrot.lane.b32.xlu0 %v1548, 80
      %v1820 = vpop.permute.xlu0 %1819
      %1821 = vrot.lane.b32.xlu0 %v1550, 80
      %v1822 = vpop.permute.xlu0 %1821
      %1823 = vrot.lane.b32.xlu0 %v1552, 80
      %v1824 = vpop.permute.xlu0 %1823
      %1825 = vrot.lane.b32.xlu0 %v1554, 80
      %v1826 = vpop.permute.xlu0 %1825
      %1827 = vrot.lane.b32.xlu0 %v1556, 80
      %v1828 = vpop.permute.xlu0 %1827
      %1829 = vrot.lane.b32.xlu0 %v1558, 80
      %v1830 = vpop.permute.xlu0 %1829
      %1831 = vrot.lane.b32.xlu0 %v1560, 80
      %v1832 = vpop.permute.xlu0 %1831
      %1833 = vrot.lane.b32.xlu0 %v1562, 80
      %v1834 = vpop.permute.xlu0 %1833
      %1835 = vrot.lane.b32.xlu0 %v1564, 80
      %v1836 = vpop.permute.xlu0 %1835
      %1837 = vrot.lane.b32.xlu0 %v1566, 80
      %v1838 = vpop.permute.xlu0 %1837
      %1839 = vrot.lane.b32.xlu0 %v1750, 80
      %v1840 = vpop.permute.xlu0 %1839
      %1841 = vrot.lane.b32.xlu0 %v1752, 80
      %v1842 = vpop.permute.xlu0 %1841
      %v1888 = vadd.f32 %v1702, %v1754
      %v1889 = vadd.f32 %v1703, %v1756
      %v1890 = vadd.f32 %v1704, %v1758
      %v1891 = vadd.f32 %v1705, %v1760
      %v1892 = vadd.f32 %v1706, %v1762
      %v1893 = vadd.f32 %v1707, %v1764
      %v1894 = vadd.f32 %v1708, %v1766
      %v1895 = vadd.f32 %v1709, %v1768
      %v1896 = vadd.f32 %v1710, %v1770
      %v1897 = vadd.f32 %v1711, %v1772
      %v1898 = vadd.f32 %v1712, %v1774
      %v1899 = vadd.f32 %v1713, %v1776
      %v1900 = vadd.f32 %v1714, %v1778
      %v1901 = vadd.f32 %v1715, %v1780
      %v1902 = vadd.f32 %v1716, %v1782
      %v1903 = vadd.f32 %v1717, %v1784
      %v1904 = vadd.f32 %v1718, %v1786
      %v1905 = vadd.f32 %v1719, %v1788
      %v1906 = vadd.f32 %v1720, %v1790
      %v1907 = vadd.f32 %v1721, %v1792
      %v1908 = vadd.f32 %v1722, %v1794
      %v1909 = vadd.f32 %v1723, %v1796
      %v1910 = vadd.f32 %v1724, %v1798
      %v1911 = vadd.f32 %v1725, %v1800
      %v1912 = vadd.f32 %v1726, %v1802
      %v1913 = vadd.f32 %v1727, %v1804
      %v1914 = vadd.f32 %v1728, %v1806
      %v1915 = vadd.f32 %v1729, %v1808
      %v1916 = vadd.f32 %v1730, %v1810
      %v1917 = vadd.f32 %v1731, %v1812
      %v1918 = vadd.f32 %v1732, %v1814
      %v1919 = vadd.f32 %v1733, %v1816
      %v1920 = vadd.f32 %v1734, %v1818
      %v1921 = vadd.f32 %v1735, %v1820
      %v1922 = vadd.f32 %v1736, %v1822
      %v1923 = vadd.f32 %v1737, %v1824
      %v1924 = vadd.f32 %v1738, %v1826
      %v1925 = vadd.f32 %v1739, %v1828
      %v1926 = vadd.f32 %v1740, %v1830
      %v1927 = vadd.f32 %v1741, %v1832
      %v1928 = vadd.f32 %v1742, %v1834
      %v1929 = vadd.f32 %v1743, %v1836
      %v1930 = vadd.f32 %v1744, %v1838
      %v1931 = vadd.f32 %v1745, %v1840
      %v1932 = vadd.f32 %v1746, %v1842
      %vm1933 = vcmask 1044480
      %v1934 = vrot.slane %v921, 3
      %v1935 = vrot.slane %v924, 3
      %v1936 = vsel %vm1933, %v1934, %v1935
      %v1937 = vrot.slane %v929, 3
      %v1938 = vsel %vm1933, %v1935, %v1937
      %v1939 = vrot.slane %v933, 3
      %v1940 = vsel %vm1933, %v1937, %v1939
      %v1941 = vrot.slane %v939, 3
      %v1942 = vsel %vm1933, %v1939, %v1941
      %v1943 = vrot.slane %v943, 3
      %v1944 = vsel %vm1933, %v1941, %v1943
      %v1945 = vrot.slane %v949, 3
      %v1946 = vsel %vm1933, %v1943, %v1945
      %v1947 = vrot.slane %v953, 3
      %v1948 = vsel %vm1933, %v1945, %v1947
      %v1949 = vrot.slane %v959, 3
      %v1950 = vsel %vm1933, %v1947, %v1949
      %v1951 = vrot.slane %v963, 3
      %v1952 = vsel %vm1933, %v1949, %v1951
      %v1953 = vrot.slane %v969, 3
      %v1954 = vsel %vm1933, %v1951, %v1953
      %v1955 = vrot.slane %v973, 3
      %v1956 = vsel %vm1933, %v1953, %v1955
      %v1957 = vrot.slane %v979, 3
      %v1958 = vsel %vm1933, %v1955, %v1957
      %v1959 = vrot.slane %v983, 3
      %v1960 = vsel %vm1933, %v1957, %v1959
      %v1961 = vrot.slane %v989, 3
      %v1962 = vsel %vm1933, %v1959, %v1961
      %v1963 = vrot.slane %v993, 3
      %v1964 = vsel %vm1933, %v1961, %v1963
      %v1965 = vrot.slane %v999, 3
      %v1966 = vsel %vm1933, %v1963, %v1965
      %v1967 = vrot.slane %v1003, 3
      %v1968 = vsel %vm1933, %v1965, %v1967
      %v1969 = vrot.slane %v1009, 3
      %v1970 = vsel %vm1933, %v1967, %v1969
      %v1971 = vrot.slane %v1013, 3
      %v1972 = vsel %vm1933, %v1969, %v1971
      %v1973 = vrot.slane %v1019, 3
      %v1974 = vsel %vm1933, %v1971, %v1973
      %v1975 = vrot.slane %v1023, 3
      %v1976 = vsel %vm1933, %v1973, %v1975
      %v1977 = vrot.slane %v1029, 3
      %v1978 = vsel %vm1933, %v1975, %v1977
      %v1979 = vrot.slane %v1033, 3
      %v1980 = vsel %vm1933, %v1977, %v1979
      %v1981 = vrot.slane %v1039, 3
      %v1982 = vsel %vm1933, %v1979, %v1981
      %v1983 = vrot.slane %v1043, 3
      %v1984 = vsel %vm1933, %v1981, %v1983
      %v1985 = vrot.slane %v1049, 3
      %v1986 = vsel %vm1933, %v1983, %v1985
      %v1987 = vrot.slane %v1053, 3
      %v1988 = vsel %vm1933, %v1985, %v1987
      %v1989 = vrot.slane %v1059, 3
      %v1990 = vsel %vm1933, %v1987, %v1989
      %v1991 = vrot.slane %v1063, 3
      %v1992 = vsel %vm1933, %v1989, %v1991
      %v1993 = vrot.slane %v1069, 3
      %v1994 = vsel %vm1933, %v1991, %v1993
      %v1995 = vrot.slane %v1073, 3
      %v1996 = vsel %vm1933, %v1993, %v1995
      %v1997 = vrot.slane %v1079, 3
      %v1998 = vsel %vm1933, %v1995, %v1997
      %v1999 = vrot.slane %v1083, 3
      %v2000 = vsel %vm1933, %v1997, %v1999
      %v2001 = vrot.slane %v1089, 3
      %v2002 = vsel %vm1933, %v1999, %v2001
      %v2003 = vrot.slane %v1093, 3
      %v2004 = vsel %vm1933, %v2001, %v2003
      %v2005 = vrot.slane %v1099, 3
      %v2006 = vsel %vm1933, %v2003, %v2005
      %v2007 = vrot.slane %v1103, 3
      %v2008 = vsel %vm1933, %v2005, %v2007
      %v2009 = vrot.slane %v1109, 3
      %v2010 = vsel %vm1933, %v2007, %v2009
      %v2011 = vrot.slane %v1113, 3
      %v2012 = vsel %vm1933, %v2009, %v2011
      %v2013 = vrot.slane %v1119, 3
      %v2014 = vsel %vm1933, %v2011, %v2013
      %v2015 = vrot.slane %v1123, 3
      %v2016 = vsel %vm1933, %v2013, %v2015
      %v2017 = vrot.slane %v1129, 3
      %v2018 = vsel %vm1933, %v2015, %v2017
      %v2019 = vrot.slane %v1133, 3
      %v2020 = vsel %vm1933, %v2017, %v2019
      %v2021 = vrot.slane %v1139, 3
      %v2022 = vsel %vm1933, %v2019, %v2021
      %v2023 = vrot.slane %v1143, 3
      %v2024 = vsel %vm1933, %v2021, %v2023
      %2025 = vrot.lane.b32.xlu0 %v1936, 64
      %v2026 = vpop.permute.xlu0 %2025
      %2027 = vrot.lane.b32.xlu0 %v1938, 64
      %v2028 = vpop.permute.xlu0 %2027
      %2029 = vrot.lane.b32.xlu0 %v1940, 64
      %v2030 = vpop.permute.xlu0 %2029
      %2031 = vrot.lane.b32.xlu0 %v1942, 64
      %v2032 = vpop.permute.xlu0 %2031
      %2033 = vrot.lane.b32.xlu0 %v1944, 64
      %v2034 = vpop.permute.xlu0 %2033
      %2035 = vrot.lane.b32.xlu0 %v1946, 64
      %v2036 = vpop.permute.xlu0 %2035
      %2037 = vrot.lane.b32.xlu0 %v1948, 64
      %v2038 = vpop.permute.xlu0 %2037
      %2039 = vrot.lane.b32.xlu0 %v1950, 64
      %v2040 = vpop.permute.xlu0 %2039
      %2041 = vrot.lane.b32.xlu0 %v1952, 64
      %v2042 = vpop.permute.xlu0 %2041
      %2043 = vrot.lane.b32.xlu0 %v1954, 64
      %v2044 = vpop.permute.xlu0 %2043
      %2045 = vrot.lane.b32.xlu0 %v1956, 64
      %v2046 = vpop.permute.xlu0 %2045
      %2047 = vrot.lane.b32.xlu0 %v1958, 64
      %v2048 = vpop.permute.xlu0 %2047
      %2049 = vrot.lane.b32.xlu0 %v1960, 64
      %v2050 = vpop.permute.xlu0 %2049
      %2051 = vrot.lane.b32.xlu0 %v1962, 64
      %v2052 = vpop.permute.xlu0 %2051
      %2053 = vrot.lane.b32.xlu0 %v1964, 64
      %v2054 = vpop.permute.xlu0 %2053
      %2055 = vrot.lane.b32.xlu0 %v1966, 64
      %v2056 = vpop.permute.xlu0 %2055
      %2057 = vrot.lane.b32.xlu0 %v1968, 64
      %v2058 = vpop.permute.xlu0 %2057
      %2059 = vrot.lane.b32.xlu0 %v1970, 64
      %v2060 = vpop.permute.xlu0 %2059
      %2061 = vrot.lane.b32.xlu0 %v1972, 64
      %v2062 = vpop.permute.xlu0 %2061
      %2063 = vrot.lane.b32.xlu0 %v1974, 64
      %v2064 = vpop.permute.xlu0 %2063
      %2065 = vrot.lane.b32.xlu0 %v1976, 64
      %v2066 = vpop.permute.xlu0 %2065
      %2067 = vrot.lane.b32.xlu0 %v1978, 64
      %v2068 = vpop.permute.xlu0 %2067
      %2069 = vrot.lane.b32.xlu0 %v1980, 64
      %v2070 = vpop.permute.xlu0 %2069
      %2071 = vrot.lane.b32.xlu0 %v1982, 64
      %v2072 = vpop.permute.xlu0 %2071
      %2073 = vrot.lane.b32.xlu0 %v1984, 64
      %v2074 = vpop.permute.xlu0 %2073
      %2075 = vrot.lane.b32.xlu0 %v1986, 64
      %v2076 = vpop.permute.xlu0 %2075
      %2077 = vrot.lane.b32.xlu0 %v1988, 64
      %v2078 = vpop.permute.xlu0 %2077
      %2079 = vrot.lane.b32.xlu0 %v1990, 64
      %v2080 = vpop.permute.xlu0 %2079
      %2081 = vrot.lane.b32.xlu0 %v1992, 64
      %v2082 = vpop.permute.xlu0 %2081
      %2083 = vrot.lane.b32.xlu0 %v1994, 64
      %v2084 = vpop.permute.xlu0 %2083
      %2085 = vrot.lane.b32.xlu0 %v1996, 64
      %v2086 = vpop.permute.xlu0 %2085
      %2087 = vrot.lane.b32.xlu0 %v1998, 64
      %v2088 = vpop.permute.xlu0 %2087
      %2089 = vrot.lane.b32.xlu0 %v2000, 64
      %v2090 = vpop.permute.xlu0 %2089
      %2091 = vrot.lane.b32.xlu0 %v2002, 64
      %v2092 = vpop.permute.xlu0 %2091
      %2093 = vrot.lane.b32.xlu0 %v2004, 64
      %v2094 = vpop.permute.xlu0 %2093
      %2095 = vrot.lane.b32.xlu0 %v2006, 64
      %v2096 = vpop.permute.xlu0 %2095
      %2097 = vrot.lane.b32.xlu0 %v2008, 64
      %v2098 = vpop.permute.xlu0 %2097
      %2099 = vrot.lane.b32.xlu0 %v2010, 64
      %v2100 = vpop.permute.xlu0 %2099
      %2101 = vrot.lane.b32.xlu0 %v2012, 64
      %v2102 = vpop.permute.xlu0 %2101
      %2103 = vrot.lane.b32.xlu0 %v2014, 64
      %v2104 = vpop.permute.xlu0 %2103
      %2105 = vrot.lane.b32.xlu0 %v2016, 64
      %v2106 = vpop.permute.xlu0 %2105
      %2107 = vrot.lane.b32.xlu0 %v2018, 64
      %v2108 = vpop.permute.xlu0 %2107
      %2109 = vrot.lane.b32.xlu0 %v2020, 64
      %v2110 = vpop.permute.xlu0 %2109
      %2111 = vrot.lane.b32.xlu0 %v2022, 64
      %v2112 = vpop.permute.xlu0 %2111
      %2113 = vrot.lane.b32.xlu0 %v2024, 64
      %v2114 = vpop.permute.xlu0 %2113
      %v2160 = vadd.f32 %v1888, %v2026
      %v2161 = vadd.f32 %v1889, %v2028
      %v2162 = vadd.f32 %v1890, %v2030
      %v2163 = vadd.f32 %v1891, %v2032
      %v2164 = vadd.f32 %v1892, %v2034
      %v2165 = vadd.f32 %v1893, %v2036
      %v2166 = vadd.f32 %v1894, %v2038
      %v2167 = vadd.f32 %v1895, %v2040
      %v2168 = vadd.f32 %v1896, %v2042
      %v2169 = vadd.f32 %v1897, %v2044
      %v2170 = vadd.f32 %v1898, %v2046
      %v2171 = vadd.f32 %v1899, %v2048
      %v2172 = vadd.f32 %v1900, %v2050
      %v2173 = vadd.f32 %v1901, %v2052
      %v2174 = vadd.f32 %v1902, %v2054
      %v2175 = vadd.f32 %v1903, %v2056
      %v2176 = vadd.f32 %v1904, %v2058
      %v2177 = vadd.f32 %v1905, %v2060
      %v2178 = vadd.f32 %v1906, %v2062
      %v2179 = vadd.f32 %v1907, %v2064
      %v2180 = vadd.f32 %v1908, %v2066
      %v2181 = vadd.f32 %v1909, %v2068
      %v2182 = vadd.f32 %v1910, %v2070
      %v2183 = vadd.f32 %v1911, %v2072
      %v2184 = vadd.f32 %v1912, %v2074
      %v2185 = vadd.f32 %v1913, %v2076
      %v2186 = vadd.f32 %v1914, %v2078
      %v2187 = vadd.f32 %v1915, %v2080
      %v2188 = vadd.f32 %v1916, %v2082
      %v2189 = vadd.f32 %v1917, %v2084
      %v2190 = vadd.f32 %v1918, %v2086
      %v2191 = vadd.f32 %v1919, %v2088
      %v2192 = vadd.f32 %v1920, %v2090
      %v2193 = vadd.f32 %v1921, %v2092
      %v2194 = vadd.f32 %v1922, %v2094
      %v2195 = vadd.f32 %v1923, %v2096
      %v2196 = vadd.f32 %v1924, %v2098
      %v2197 = vadd.f32 %v1925, %v2100
      %v2198 = vadd.f32 %v1926, %v2102
      %v2199 = vadd.f32 %v1927, %v2104
      %v2200 = vadd.f32 %v1928, %v2106
      %v2201 = vadd.f32 %v1929, %v2108
      %v2202 = vadd.f32 %v1930, %v2110
      %v2203 = vadd.f32 %v1931, %v2112
      %v2204 = vadd.f32 %v1932, %v2114
      %vm2205 = vcmask 1043456
      %v2206 = vrot.slane %v921, 4
      %v2207 = vrot.slane %v924, 4
      %v2208 = vsel %vm2205, %v2206, %v2207
      %v2209 = vrot.slane %v929, 4
      %v2210 = vsel %vm2205, %v2207, %v2209
      %v2211 = vrot.slane %v933, 4
      %v2212 = vsel %vm2205, %v2209, %v2211
      %v2213 = vrot.slane %v939, 4
      %v2214 = vsel %vm2205, %v2211, %v2213
      %v2215 = vrot.slane %v943, 4
      %v2216 = vsel %vm2205, %v2213, %v2215
      %v2217 = vrot.slane %v949, 4
      %v2218 = vsel %vm2205, %v2215, %v2217
      %v2219 = vrot.slane %v953, 4
      %v2220 = vsel %vm2205, %v2217, %v2219
      %v2221 = vrot.slane %v959, 4
      %v2222 = vsel %vm2205, %v2219, %v2221
      %v2223 = vrot.slane %v963, 4
      %v2224 = vsel %vm2205, %v2221, %v2223
      %v2225 = vrot.slane %v969, 4
      %v2226 = vsel %vm2205, %v2223, %v2225
      %v2227 = vrot.slane %v973, 4
      %v2228 = vsel %vm2205, %v2225, %v2227
      %v2229 = vrot.slane %v979, 4
      %v2230 = vsel %vm2205, %v2227, %v2229
      %v2231 = vrot.slane %v983, 4
      %v2232 = vsel %vm2205, %v2229, %v2231
      %v2233 = vrot.slane %v989, 4
      %v2234 = vsel %vm2205, %v2231, %v2233
      %v2235 = vrot.slane %v993, 4
      %v2236 = vsel %vm2205, %v2233, %v2235
      %v2237 = vrot.slane %v999, 4
      %v2238 = vsel %vm2205, %v2235, %v2237
      %v2239 = vrot.slane %v1003, 4
      %v2240 = vsel %vm2205, %v2237, %v2239
      %v2241 = vrot.slane %v1009, 4
      %v2242 = vsel %vm2205, %v2239, %v2241
      %v2243 = vrot.slane %v1013, 4
      %v2244 = vsel %vm2205, %v2241, %v2243
      %v2245 = vrot.slane %v1019, 4
      %v2246 = vsel %vm2205, %v2243, %v2245
      %v2247 = vrot.slane %v1023, 4
      %v2248 = vsel %vm2205, %v2245, %v2247
      %v2249 = vrot.slane %v1029, 4
      %v2250 = vsel %vm2205, %v2247, %v2249
      %v2251 = vrot.slane %v1033, 4
      %v2252 = vsel %vm2205, %v2249, %v2251
      %v2253 = vrot.slane %v1039, 4
      %v2254 = vsel %vm2205, %v2251, %v2253
      %v2255 = vrot.slane %v1043, 4
      %v2256 = vsel %vm2205, %v2253, %v2255
      %v2257 = vrot.slane %v1049, 4
      %v2258 = vsel %vm2205, %v2255, %v2257
      %v2259 = vrot.slane %v1053, 4
      %v2260 = vsel %vm2205, %v2257, %v2259
      %v2261 = vrot.slane %v1059, 4
      %v2262 = vsel %vm2205, %v2259, %v2261
      %v2263 = vrot.slane %v1063, 4
      %v2264 = vsel %vm2205, %v2261, %v2263
      %v2265 = vrot.slane %v1069, 4
      %v2266 = vsel %vm2205, %v2263, %v2265
      %v2267 = vrot.slane %v1073, 4
      %v2268 = vsel %vm2205, %v2265, %v2267
      %v2269 = vrot.slane %v1079, 4
      %v2270 = vsel %vm2205, %v2267, %v2269
      %v2271 = vrot.slane %v1083, 4
      %v2272 = vsel %vm2205, %v2269, %v2271
      %v2273 = vrot.slane %v1089, 4
      %v2274 = vsel %vm2205, %v2271, %v2273
      %v2275 = vrot.slane %v1093, 4
      %v2276 = vsel %vm2205, %v2273, %v2275
      %v2277 = vrot.slane %v1099, 4
      %v2278 = vsel %vm2205, %v2275, %v2277
      %v2279 = vrot.slane %v1103, 4
      %v2280 = vsel %vm2205, %v2277, %v2279
      %v2281 = vrot.slane %v1109, 4
      %v2282 = vsel %vm2205, %v2279, %v2281
      %v2283 = vrot.slane %v1113, 4
      %v2284 = vsel %vm2205, %v2281, %v2283
      %v2285 = vrot.slane %v1119, 4
      %v2286 = vsel %vm2205, %v2283, %v2285
      %v2287 = vrot.slane %v1123, 4
      %v2288 = vsel %vm2205, %v2285, %v2287
      %v2289 = vrot.slane %v1129, 4
      %v2290 = vsel %vm2205, %v2287, %v2289
      %v2291 = vrot.slane %v1133, 4
      %v2292 = vsel %vm2205, %v2289, %v2291
      %v2293 = vrot.slane %v1139, 4
      %v2294 = vsel %vm2205, %v2291, %v2293
      %v2295 = vrot.slane %v1143, 4
      %v2296 = vsel %vm2205, %v2293, %v2295
      %2297 = vrot.lane.b32.xlu0 %v2208, 48
      %v2298 = vpop.permute.xlu0 %2297
      %2299 = vrot.lane.b32.xlu0 %v2210, 48
      %v2300 = vpop.permute.xlu0 %2299
      %2301 = vrot.lane.b32.xlu0 %v2212, 48
      %v2302 = vpop.permute.xlu0 %2301
      %2303 = vrot.lane.b32.xlu0 %v2214, 48
      %v2304 = vpop.permute.xlu0 %2303
      %2305 = vrot.lane.b32.xlu0 %v2216, 48
      %v2306 = vpop.permute.xlu0 %2305
      %2307 = vrot.lane.b32.xlu0 %v2218, 48
      %v2308 = vpop.permute.xlu0 %2307
      %2309 = vrot.lane.b32.xlu0 %v2220, 48
      %v2310 = vpop.permute.xlu0 %2309
      %2311 = vrot.lane.b32.xlu0 %v2222, 48
      %v2312 = vpop.permute.xlu0 %2311
      %2313 = vrot.lane.b32.xlu0 %v2224, 48
      %v2314 = vpop.permute.xlu0 %2313
      %2315 = vrot.lane.b32.xlu0 %v2226, 48
      %v2316 = vpop.permute.xlu0 %2315
      %2317 = vrot.lane.b32.xlu0 %v2228, 48
      %v2318 = vpop.permute.xlu0 %2317
      %2319 = vrot.lane.b32.xlu0 %v2230, 48
      %v2320 = vpop.permute.xlu0 %2319
      %2321 = vrot.lane.b32.xlu0 %v2232, 48
      %v2322 = vpop.permute.xlu0 %2321
      %2323 = vrot.lane.b32.xlu0 %v2234, 48
      %v2324 = vpop.permute.xlu0 %2323
      %2325 = vrot.lane.b32.xlu0 %v2236, 48
      %v2326 = vpop.permute.xlu0 %2325
      %2327 = vrot.lane.b32.xlu0 %v2238, 48
      %v2328 = vpop.permute.xlu0 %2327
      %2329 = vrot.lane.b32.xlu0 %v2240, 48
      %v2330 = vpop.permute.xlu0 %2329
      %2331 = vrot.lane.b32.xlu0 %v2242, 48
      %v2332 = vpop.permute.xlu0 %2331
      %2333 = vrot.lane.b32.xlu0 %v2244, 48
      %v2334 = vpop.permute.xlu0 %2333
      %2335 = vrot.lane.b32.xlu0 %v2246, 48
      %v2336 = vpop.permute.xlu0 %2335
      %2337 = vrot.lane.b32.xlu0 %v2248, 48
      %v2338 = vpop.permute.xlu0 %2337
      %2339 = vrot.lane.b32.xlu0 %v2250, 48
      %v2340 = vpop.permute.xlu0 %2339
      %2341 = vrot.lane.b32.xlu0 %v2252, 48
      %v2342 = vpop.permute.xlu0 %2341
      %2343 = vrot.lane.b32.xlu0 %v2254, 48
      %v2344 = vpop.permute.xlu0 %2343
      %2345 = vrot.lane.b32.xlu0 %v2256, 48
      %v2346 = vpop.permute.xlu0 %2345
      %2347 = vrot.lane.b32.xlu0 %v2258, 48
      %v2348 = vpop.permute.xlu0 %2347
      %2349 = vrot.lane.b32.xlu0 %v2260, 48
      %v2350 = vpop.permute.xlu0 %2349
      %2351 = vrot.lane.b32.xlu0 %v2262, 48
      %v2352 = vpop.permute.xlu0 %2351
      %2353 = vrot.lane.b32.xlu0 %v2264, 48
      %v2354 = vpop.permute.xlu0 %2353
      %2355 = vrot.lane.b32.xlu0 %v2266, 48
      %v2356 = vpop.permute.xlu0 %2355
      %2357 = vrot.lane.b32.xlu0 %v2268, 48
      %v2358 = vpop.permute.xlu0 %2357
      %2359 = vrot.lane.b32.xlu0 %v2270, 48
      %v2360 = vpop.permute.xlu0 %2359
      %2361 = vrot.lane.b32.xlu0 %v2272, 48
      %v2362 = vpop.permute.xlu0 %2361
      %2363 = vrot.lane.b32.xlu0 %v2274, 48
      %v2364 = vpop.permute.xlu0 %2363
      %2365 = vrot.lane.b32.xlu0 %v2276, 48
      %v2366 = vpop.permute.xlu0 %2365
      %2367 = vrot.lane.b32.xlu0 %v2278, 48
      %v2368 = vpop.permute.xlu0 %2367
      %2369 = vrot.lane.b32.xlu0 %v2280, 48
      %v2370 = vpop.permute.xlu0 %2369
      %2371 = vrot.lane.b32.xlu0 %v2282, 48
      %v2372 = vpop.permute.xlu0 %2371
      %2373 = vrot.lane.b32.xlu0 %v2284, 48
      %v2374 = vpop.permute.xlu0 %2373
      %2375 = vrot.lane.b32.xlu0 %v2286, 48
      %v2376 = vpop.permute.xlu0 %2375
      %2377 = vrot.lane.b32.xlu0 %v2288, 48
      %v2378 = vpop.permute.xlu0 %2377
      %2379 = vrot.lane.b32.xlu0 %v2290, 48
      %v2380 = vpop.permute.xlu0 %2379
      %2381 = vrot.lane.b32.xlu0 %v2292, 48
      %v2382 = vpop.permute.xlu0 %2381
      %2383 = vrot.lane.b32.xlu0 %v2294, 48
      %v2384 = vpop.permute.xlu0 %2383
      %2385 = vrot.lane.b32.xlu0 %v2296, 48
      %v2386 = vpop.permute.xlu0 %2385
      %v2432 = vadd.f32 %v2160, %v2298
      %v2433 = vadd.f32 %v2161, %v2300
      %v2434 = vadd.f32 %v2162, %v2302
      %v2435 = vadd.f32 %v2163, %v2304
      %v2436 = vadd.f32 %v2164, %v2306
      %v2437 = vadd.f32 %v2165, %v2308
      %v2438 = vadd.f32 %v2166, %v2310
      %v2439 = vadd.f32 %v2167, %v2312
      %v2440 = vadd.f32 %v2168, %v2314
      %v2441 = vadd.f32 %v2169, %v2316
      %v2442 = vadd.f32 %v2170, %v2318
      %v2443 = vadd.f32 %v2171, %v2320
      %v2444 = vadd.f32 %v2172, %v2322
      %v2445 = vadd.f32 %v2173, %v2324
      %v2446 = vadd.f32 %v2174, %v2326
      %v2447 = vadd.f32 %v2175, %v2328
      %v2448 = vadd.f32 %v2176, %v2330
      %v2449 = vadd.f32 %v2177, %v2332
      %v2450 = vadd.f32 %v2178, %v2334
      %v2451 = vadd.f32 %v2179, %v2336
      %v2452 = vadd.f32 %v2180, %v2338
      %v2453 = vadd.f32 %v2181, %v2340
      %v2454 = vadd.f32 %v2182, %v2342
      %v2455 = vadd.f32 %v2183, %v2344
      %v2456 = vadd.f32 %v2184, %v2346
      %v2457 = vadd.f32 %v2185, %v2348
      %v2458 = vadd.f32 %v2186, %v2350
      %v2459 = vadd.f32 %v2187, %v2352
      %v2460 = vadd.f32 %v2188, %v2354
      %v2461 = vadd.f32 %v2189, %v2356
      %v2462 = vadd.f32 %v2190, %v2358
      %v2463 = vadd.f32 %v2191, %v2360
      %v2464 = vadd.f32 %v2192, %v2362
      %v2465 = vadd.f32 %v2193, %v2364
      %v2466 = vadd.f32 %v2194, %v2366
      %v2467 = vadd.f32 %v2195, %v2368
      %v2468 = vadd.f32 %v2196, %v2370
      %v2469 = vadd.f32 %v2197, %v2372
      %v2470 = vadd.f32 %v2198, %v2374
      %v2471 = vadd.f32 %v2199, %v2376
      %v2472 = vadd.f32 %v2200, %v2378
      %v2473 = vadd.f32 %v2201, %v2380
      %v2474 = vadd.f32 %v2202, %v2382
      %v2475 = vadd.f32 %v2203, %v2384
      %v2476 = vadd.f32 %v2204, %v2386
      %v2479 = vrot.slane %v1149, 4
      %v2480 = vsel %vm2205, %v2295, %v2479
      %v2481 = vrot.slane %v1153, 4
      %v2482 = vsel %vm2205, %v2479, %v2481
      %2483 = vrot.lane.b32.xlu0 %v2212, 32
      %v2484 = vpop.permute.xlu0 %2483
      %2485 = vrot.lane.b32.xlu0 %v2214, 32
      %v2486 = vpop.permute.xlu0 %2485
      %2487 = vrot.lane.b32.xlu0 %v2216, 32
      %v2488 = vpop.permute.xlu0 %2487
      %2489 = vrot.lane.b32.xlu0 %v2218, 32
      %v2490 = vpop.permute.xlu0 %2489
      %2491 = vrot.lane.b32.xlu0 %v2220, 32
      %v2492 = vpop.permute.xlu0 %2491
      %2493 = vrot.lane.b32.xlu0 %v2222, 32
      %v2494 = vpop.permute.xlu0 %2493
      %2495 = vrot.lane.b32.xlu0 %v2224, 32
      %v2496 = vpop.permute.xlu0 %2495
      %2497 = vrot.lane.b32.xlu0 %v2226, 32
      %v2498 = vpop.permute.xlu0 %2497
      %2499 = vrot.lane.b32.xlu0 %v2228, 32
      %v2500 = vpop.permute.xlu0 %2499
      %2501 = vrot.lane.b32.xlu0 %v2230, 32
      %v2502 = vpop.permute.xlu0 %2501
      %2503 = vrot.lane.b32.xlu0 %v2232, 32
      %v2504 = vpop.permute.xlu0 %2503
      %2505 = vrot.lane.b32.xlu0 %v2234, 32
      %v2506 = vpop.permute.xlu0 %2505
      %2507 = vrot.lane.b32.xlu0 %v2236, 32
      %v2508 = vpop.permute.xlu0 %2507
      %2509 = vrot.lane.b32.xlu0 %v2238, 32
      %v2510 = vpop.permute.xlu0 %2509
      %2511 = vrot.lane.b32.xlu0 %v2240, 32
      %v2512 = vpop.permute.xlu0 %2511
      %2513 = vrot.lane.b32.xlu0 %v2242, 32
      %v2514 = vpop.permute.xlu0 %2513
      %2515 = vrot.lane.b32.xlu0 %v2244, 32
      %v2516 = vpop.permute.xlu0 %2515
      %2517 = vrot.lane.b32.xlu0 %v2246, 32
      %v2518 = vpop.permute.xlu0 %2517
      %2519 = vrot.lane.b32.xlu0 %v2248, 32
      %v2520 = vpop.permute.xlu0 %2519
      %2521 = vrot.lane.b32.xlu0 %v2250, 32
      %v2522 = vpop.permute.xlu0 %2521
      %2523 = vrot.lane.b32.xlu0 %v2252, 32
      %v2524 = vpop.permute.xlu0 %2523
      %2525 = vrot.lane.b32.xlu0 %v2254, 32
      %v2526 = vpop.permute.xlu0 %2525
      %2527 = vrot.lane.b32.xlu0 %v2256, 32
      %v2528 = vpop.permute.xlu0 %2527
      %2529 = vrot.lane.b32.xlu0 %v2258, 32
      %v2530 = vpop.permute.xlu0 %2529
      %2531 = vrot.lane.b32.xlu0 %v2260, 32
      %v2532 = vpop.permute.xlu0 %2531
      %2533 = vrot.lane.b32.xlu0 %v2262, 32
      %v2534 = vpop.permute.xlu0 %2533
      %2535 = vrot.lane.b32.xlu0 %v2264, 32
      %v2536 = vpop.permute.xlu0 %2535
      %2537 = vrot.lane.b32.xlu0 %v2266, 32
      %v2538 = vpop.permute.xlu0 %2537
      %2539 = vrot.lane.b32.xlu0 %v2268, 32
      %v2540 = vpop.permute.xlu0 %2539
      %2541 = vrot.lane.b32.xlu0 %v2270, 32
      %v2542 = vpop.permute.xlu0 %2541
      %2543 = vrot.lane.b32.xlu0 %v2272, 32
      %v2544 = vpop.permute.xlu0 %2543
      %2545 = vrot.lane.b32.xlu0 %v2274, 32
      %v2546 = vpop.permute.xlu0 %2545
      %2547 = vrot.lane.b32.xlu0 %v2276, 32
      %v2548 = vpop.permute.xlu0 %2547
      %2549 = vrot.lane.b32.xlu0 %v2278, 32
      %v2550 = vpop.permute.xlu0 %2549
      %2551 = vrot.lane.b32.xlu0 %v2280, 32
      %v2552 = vpop.permute.xlu0 %2551
      %2553 = vrot.lane.b32.xlu0 %v2282, 32
      %v2554 = vpop.permute.xlu0 %2553
      %2555 = vrot.lane.b32.xlu0 %v2284, 32
      %v2556 = vpop.permute.xlu0 %2555
      %2557 = vrot.lane.b32.xlu0 %v2286, 32
      %v2558 = vpop.permute.xlu0 %2557
      %2559 = vrot.lane.b32.xlu0 %v2288, 32
      %v2560 = vpop.permute.xlu0 %2559
      %2561 = vrot.lane.b32.xlu0 %v2290, 32
      %v2562 = vpop.permute.xlu0 %2561
      %2563 = vrot.lane.b32.xlu0 %v2292, 32
      %v2564 = vpop.permute.xlu0 %2563
      %2565 = vrot.lane.b32.xlu0 %v2294, 32
      %v2566 = vpop.permute.xlu0 %2565
      %2567 = vrot.lane.b32.xlu0 %v2296, 32
      %v2568 = vpop.permute.xlu0 %2567
      %2569 = vrot.lane.b32.xlu0 %v2480, 32
      %v2570 = vpop.permute.xlu0 %2569
      %2571 = vrot.lane.b32.xlu0 %v2482, 32
      %v2572 = vpop.permute.xlu0 %2571
      %v2618 = vadd.f32 %v2432, %v2484
      %v2619 = vadd.f32 %v2433, %v2486
      %v2620 = vadd.f32 %v2434, %v2488
      %v2621 = vadd.f32 %v2435, %v2490
      %v2622 = vadd.f32 %v2436, %v2492
      %v2623 = vadd.f32 %v2437, %v2494
      %v2624 = vadd.f32 %v2438, %v2496
      %v2625 = vadd.f32 %v2439, %v2498
      %v2626 = vadd.f32 %v2440, %v2500
      %v2627 = vadd.f32 %v2441, %v2502
      %v2628 = vadd.f32 %v2442, %v2504
      %v2629 = vadd.f32 %v2443, %v2506
      %v2630 = vadd.f32 %v2444, %v2508
      %v2631 = vadd.f32 %v2445, %v2510
      %v2632 = vadd.f32 %v2446, %v2512
      %v2633 = vadd.f32 %v2447, %v2514
      %v2634 = vadd.f32 %v2448, %v2516
      %v2635 = vadd.f32 %v2449, %v2518
      %v2636 = vadd.f32 %v2450, %v2520
      %v2637 = vadd.f32 %v2451, %v2522
      %v2638 = vadd.f32 %v2452, %v2524
      %v2639 = vadd.f32 %v2453, %v2526
      %v2640 = vadd.f32 %v2454, %v2528
      %v2641 = vadd.f32 %v2455, %v2530
      %v2642 = vadd.f32 %v2456, %v2532
      %v2643 = vadd.f32 %v2457, %v2534
      %v2644 = vadd.f32 %v2458, %v2536
      %v2645 = vadd.f32 %v2459, %v2538
      %v2646 = vadd.f32 %v2460, %v2540
      %v2647 = vadd.f32 %v2461, %v2542
      %v2648 = vadd.f32 %v2462, %v2544
      %v2649 = vadd.f32 %v2463, %v2546
      %v2650 = vadd.f32 %v2464, %v2548
      %v2651 = vadd.f32 %v2465, %v2550
      %v2652 = vadd.f32 %v2466, %v2552
      %v2653 = vadd.f32 %v2467, %v2554
      %v2654 = vadd.f32 %v2468, %v2556
      %v2655 = vadd.f32 %v2469, %v2558
      %v2656 = vadd.f32 %v2470, %v2560
      %v2657 = vadd.f32 %v2471, %v2562
      %v2658 = vadd.f32 %v2472, %v2564
      %v2659 = vadd.f32 %v2473, %v2566
      %v2660 = vadd.f32 %v2474, %v2568
      %v2661 = vadd.f32 %v2475, %v2570
      %v2662 = vadd.f32 %v2476, %v2572
      %vm2663 = vcmask 1042432
      %v2664 = vrot.slane %v929, 5
      %v2665 = vrot.slane %v933, 5
      %v2666 = vsel %vm2663, %v2664, %v2665
      %v2667 = vrot.slane %v939, 5
      %v2668 = vsel %vm2663, %v2665, %v2667
      %v2669 = vrot.slane %v943, 5
      %v2670 = vsel %vm2663, %v2667, %v2669
      %v2671 = vrot.slane %v949, 5
      %v2672 = vsel %vm2663, %v2669, %v2671
      %v2673 = vrot.slane %v953, 5
      %v2674 = vsel %vm2663, %v2671, %v2673
      %v2675 = vrot.slane %v959, 5
      %v2676 = vsel %vm2663, %v2673, %v2675
      %v2677 = vrot.slane %v963, 5
      %v2678 = vsel %vm2663, %v2675, %v2677
      %v2679 = vrot.slane %v969, 5
      %v2680 = vsel %vm2663, %v2677, %v2679
      %v2681 = vrot.slane %v973, 5
      %v2682 = vsel %vm2663, %v2679, %v2681
      %v2683 = vrot.slane %v979, 5
      %v2684 = vsel %vm2663, %v2681, %v2683
      %v2685 = vrot.slane %v983, 5
      %v2686 = vsel %vm2663, %v2683, %v2685
      %v2687 = vrot.slane %v989, 5
      %v2688 = vsel %vm2663, %v2685, %v2687
      %v2689 = vrot.slane %v993, 5
      %v2690 = vsel %vm2663, %v2687, %v2689
      %v2691 = vrot.slane %v999, 5
      %v2692 = vsel %vm2663, %v2689, %v2691
      %v2693 = vrot.slane %v1003, 5
      %v2694 = vsel %vm2663, %v2691, %v2693
      %v2695 = vrot.slane %v1009, 5
      %v2696 = vsel %vm2663, %v2693, %v2695
      %v2697 = vrot.slane %v1013, 5
      %v2698 = vsel %vm2663, %v2695, %v2697
      %v2699 = vrot.slane %v1019, 5
      %v2700 = vsel %vm2663, %v2697, %v2699
      %v2701 = vrot.slane %v1023, 5
      %v2702 = vsel %vm2663, %v2699, %v2701
      %v2703 = vrot.slane %v1029, 5
      %v2704 = vsel %vm2663, %v2701, %v2703
      %v2705 = vrot.slane %v1033, 5
      %v2706 = vsel %vm2663, %v2703, %v2705
      %v2707 = vrot.slane %v1039, 5
      %v2708 = vsel %vm2663, %v2705, %v2707
      %v2709 = vrot.slane %v1043, 5
      %v2710 = vsel %vm2663, %v2707, %v2709
      %v2711 = vrot.slane %v1049, 5
      %v2712 = vsel %vm2663, %v2709, %v2711
      %v2713 = vrot.slane %v1053, 5
      %v2714 = vsel %vm2663, %v2711, %v2713
      %v2715 = vrot.slane %v1059, 5
      %v2716 = vsel %vm2663, %v2713, %v2715
      %v2717 = vrot.slane %v1063, 5
      %v2718 = vsel %vm2663, %v2715, %v2717
      %v2719 = vrot.slane %v1069, 5
      %v2720 = vsel %vm2663, %v2717, %v2719
      %v2721 = vrot.slane %v1073, 5
      %v2722 = vsel %vm2663, %v2719, %v2721
      %v2723 = vrot.slane %v1079, 5
      %v2724 = vsel %vm2663, %v2721, %v2723
      %v2725 = vrot.slane %v1083, 5
      %v2726 = vsel %vm2663, %v2723, %v2725
      %v2727 = vrot.slane %v1089, 5
      %v2728 = vsel %vm2663, %v2725, %v2727
      %v2729 = vrot.slane %v1093, 5
      %v2730 = vsel %vm2663, %v2727, %v2729
      %v2731 = vrot.slane %v1099, 5
      %v2732 = vsel %vm2663, %v2729, %v2731
      %v2733 = vrot.slane %v1103, 5
      %v2734 = vsel %vm2663, %v2731, %v2733
      %v2735 = vrot.slane %v1109, 5
      %v2736 = vsel %vm2663, %v2733, %v2735
      %v2737 = vrot.slane %v1113, 5
      %v2738 = vsel %vm2663, %v2735, %v2737
      %v2739 = vrot.slane %v1119, 5
      %v2740 = vsel %vm2663, %v2737, %v2739
      %v2741 = vrot.slane %v1123, 5
      %v2742 = vsel %vm2663, %v2739, %v2741
      %v2743 = vrot.slane %v1129, 5
      %v2744 = vsel %vm2663, %v2741, %v2743
      %v2745 = vrot.slane %v1133, 5
      %v2746 = vsel %vm2663, %v2743, %v2745
      %v2747 = vrot.slane %v1139, 5
      %v2748 = vsel %vm2663, %v2745, %v2747
      %v2749 = vrot.slane %v1143, 5
      %v2750 = vsel %vm2663, %v2747, %v2749
      %v2751 = vrot.slane %v1149, 5
      %v2752 = vsel %vm2663, %v2749, %v2751
      %v2753 = vrot.slane %v1153, 5
      %v2754 = vsel %vm2663, %v2751, %v2753
      %2755 = vrot.lane.b32.xlu0 %v2666, 16
      %v2756 = vpop.permute.xlu0 %2755
      %2757 = vrot.lane.b32.xlu0 %v2668, 16
      %v2758 = vpop.permute.xlu0 %2757
      %2759 = vrot.lane.b32.xlu0 %v2670, 16
      %v2760 = vpop.permute.xlu0 %2759
      %2761 = vrot.lane.b32.xlu0 %v2672, 16
      %v2762 = vpop.permute.xlu0 %2761
      %2763 = vrot.lane.b32.xlu0 %v2674, 16
      %v2764 = vpop.permute.xlu0 %2763
      %2765 = vrot.lane.b32.xlu0 %v2676, 16
      %v2766 = vpop.permute.xlu0 %2765
      %2767 = vrot.lane.b32.xlu0 %v2678, 16
      %v2768 = vpop.permute.xlu0 %2767
      %2769 = vrot.lane.b32.xlu0 %v2680, 16
      %v2770 = vpop.permute.xlu0 %2769
      %2771 = vrot.lane.b32.xlu0 %v2682, 16
      %v2772 = vpop.permute.xlu0 %2771
      %2773 = vrot.lane.b32.xlu0 %v2684, 16
      %v2774 = vpop.permute.xlu0 %2773
      %2775 = vrot.lane.b32.xlu0 %v2686, 16
      %v2776 = vpop.permute.xlu0 %2775
      %2777 = vrot.lane.b32.xlu0 %v2688, 16
      %v2778 = vpop.permute.xlu0 %2777
      %2779 = vrot.lane.b32.xlu0 %v2690, 16
      %v2780 = vpop.permute.xlu0 %2779
      %2781 = vrot.lane.b32.xlu0 %v2692, 16
      %v2782 = vpop.permute.xlu0 %2781
      %2783 = vrot.lane.b32.xlu0 %v2694, 16
      %v2784 = vpop.permute.xlu0 %2783
      %2785 = vrot.lane.b32.xlu0 %v2696, 16
      %v2786 = vpop.permute.xlu0 %2785
      %2787 = vrot.lane.b32.xlu0 %v2698, 16
      %v2788 = vpop.permute.xlu0 %2787
      %2789 = vrot.lane.b32.xlu0 %v2700, 16
      %v2790 = vpop.permute.xlu0 %2789
      %2791 = vrot.lane.b32.xlu0 %v2702, 16
      %v2792 = vpop.permute.xlu0 %2791
      %2793 = vrot.lane.b32.xlu0 %v2704, 16
      %v2794 = vpop.permute.xlu0 %2793
      %2795 = vrot.lane.b32.xlu0 %v2706, 16
      %v2796 = vpop.permute.xlu0 %2795
      %2797 = vrot.lane.b32.xlu0 %v2708, 16
      %v2798 = vpop.permute.xlu0 %2797
      %2799 = vrot.lane.b32.xlu0 %v2710, 16
      %v2800 = vpop.permute.xlu0 %2799
      %2801 = vrot.lane.b32.xlu0 %v2712, 16
      %v2802 = vpop.permute.xlu0 %2801
      %2803 = vrot.lane.b32.xlu0 %v2714, 16
      %v2804 = vpop.permute.xlu0 %2803
      %2805 = vrot.lane.b32.xlu0 %v2716, 16
      %v2806 = vpop.permute.xlu0 %2805
      %2807 = vrot.lane.b32.xlu0 %v2718, 16
      %v2808 = vpop.permute.xlu0 %2807
      %2809 = vrot.lane.b32.xlu0 %v2720, 16
      %v2810 = vpop.permute.xlu0 %2809
      %2811 = vrot.lane.b32.xlu0 %v2722, 16
      %v2812 = vpop.permute.xlu0 %2811
      %2813 = vrot.lane.b32.xlu0 %v2724, 16
      %v2814 = vpop.permute.xlu0 %2813
      %2815 = vrot.lane.b32.xlu0 %v2726, 16
      %v2816 = vpop.permute.xlu0 %2815
      %2817 = vrot.lane.b32.xlu0 %v2728, 16
      %v2818 = vpop.permute.xlu0 %2817
      %2819 = vrot.lane.b32.xlu0 %v2730, 16
      %v2820 = vpop.permute.xlu0 %2819
      %2821 = vrot.lane.b32.xlu0 %v2732, 16
      %v2822 = vpop.permute.xlu0 %2821
      %2823 = vrot.lane.b32.xlu0 %v2734, 16
      %v2824 = vpop.permute.xlu0 %2823
      %2825 = vrot.lane.b32.xlu0 %v2736, 16
      %v2826 = vpop.permute.xlu0 %2825
      %2827 = vrot.lane.b32.xlu0 %v2738, 16
      %v2828 = vpop.permute.xlu0 %2827
      %2829 = vrot.lane.b32.xlu0 %v2740, 16
      %v2830 = vpop.permute.xlu0 %2829
      %2831 = vrot.lane.b32.xlu0 %v2742, 16
      %v2832 = vpop.permute.xlu0 %2831
      %2833 = vrot.lane.b32.xlu0 %v2744, 16
      %v2834 = vpop.permute.xlu0 %2833
      %2835 = vrot.lane.b32.xlu0 %v2746, 16
      %v2836 = vpop.permute.xlu0 %2835
      %2837 = vrot.lane.b32.xlu0 %v2748, 16
      %v2838 = vpop.permute.xlu0 %2837
      %2839 = vrot.lane.b32.xlu0 %v2750, 16
      %v2840 = vpop.permute.xlu0 %2839
      %2841 = vrot.lane.b32.xlu0 %v2752, 16
      %v2842 = vpop.permute.xlu0 %2841
      %2843 = vrot.lane.b32.xlu0 %v2754, 16
      %v2844 = vpop.permute.xlu0 %2843
      %v2890 = vadd.f32 %v2618, %v2756
      %v2891 = vadd.f32 %v2619, %v2758
      %v2892 = vadd.f32 %v2620, %v2760
      %v2893 = vadd.f32 %v2621, %v2762
      %v2894 = vadd.f32 %v2622, %v2764
      %v2895 = vadd.f32 %v2623, %v2766
      %v2896 = vadd.f32 %v2624, %v2768
      %v2897 = vadd.f32 %v2625, %v2770
      %v2898 = vadd.f32 %v2626, %v2772
      %v2899 = vadd.f32 %v2627, %v2774
      %v2900 = vadd.f32 %v2628, %v2776
      %v2901 = vadd.f32 %v2629, %v2778
      %v2902 = vadd.f32 %v2630, %v2780
      %v2903 = vadd.f32 %v2631, %v2782
      %v2904 = vadd.f32 %v2632, %v2784
      %v2905 = vadd.f32 %v2633, %v2786
      %v2906 = vadd.f32 %v2634, %v2788
      %v2907 = vadd.f32 %v2635, %v2790
      %v2908 = vadd.f32 %v2636, %v2792
      %v2909 = vadd.f32 %v2637, %v2794
      %v2910 = vadd.f32 %v2638, %v2796
      %v2911 = vadd.f32 %v2639, %v2798
      %v2912 = vadd.f32 %v2640, %v2800
      %v2913 = vadd.f32 %v2641, %v2802
      %v2914 = vadd.f32 %v2642, %v2804
      %v2915 = vadd.f32 %v2643, %v2806
      %v2916 = vadd.f32 %v2644, %v2808
      %v2917 = vadd.f32 %v2645, %v2810
      %v2918 = vadd.f32 %v2646, %v2812
      %v2919 = vadd.f32 %v2647, %v2814
      %v2920 = vadd.f32 %v2648, %v2816
      %v2921 = vadd.f32 %v2649, %v2818
      %v2922 = vadd.f32 %v2650, %v2820
      %v2923 = vadd.f32 %v2651, %v2822
      %v2924 = vadd.f32 %v2652, %v2824
      %v2925 = vadd.f32 %v2653, %v2826
      %v2926 = vadd.f32 %v2654, %v2828
      %v2927 = vadd.f32 %v2655, %v2830
      %v2928 = vadd.f32 %v2656, %v2832
      %v2929 = vadd.f32 %v2657, %v2834
      %v2930 = vadd.f32 %v2658, %v2836
      %v2931 = vadd.f32 %v2659, %v2838
      %v2932 = vadd.f32 %v2660, %v2840
      %v2933 = vadd.f32 %v2661, %v2842
      %v2934 = vadd.f32 %v2662, %v2844
      %vm2981 = vcmask 1041408
      %v2982 = vrot.slane %v931, 6
      %v2983 = vrot.slane %v935, 6
      %v2984 = vsel %vm2981, %v2982, %v2983
      %v2985 = vrot.slane %v941, 6
      %v2986 = vsel %vm2981, %v2983, %v2985
      %v2987 = vrot.slane %v945, 6
      %v2988 = vsel %vm2981, %v2985, %v2987
      %v2989 = vrot.slane %v951, 6
      %v2990 = vsel %vm2981, %v2987, %v2989
      %v2991 = vrot.slane %v955, 6
      %v2992 = vsel %vm2981, %v2989, %v2991
      %v2993 = vrot.slane %v961, 6
      %v2994 = vsel %vm2981, %v2991, %v2993
      %v2995 = vrot.slane %v965, 6
      %v2996 = vsel %vm2981, %v2993, %v2995
      %v2997 = vrot.slane %v971, 6
      %v2998 = vsel %vm2981, %v2995, %v2997
      %v2999 = vrot.slane %v975, 6
      %v3000 = vsel %vm2981, %v2997, %v2999
      %v3001 = vrot.slane %v981, 6
      %v3002 = vsel %vm2981, %v2999, %v3001
      %v3003 = vrot.slane %v985, 6
      %v3004 = vsel %vm2981, %v3001, %v3003
      %v3005 = vrot.slane %v991, 6
      %v3006 = vsel %vm2981, %v3003, %v3005
      %v3007 = vrot.slane %v995, 6
      %v3008 = vsel %vm2981, %v3005, %v3007
      %v3009 = vrot.slane %v1001, 6
      %v3010 = vsel %vm2981, %v3007, %v3009
      %v3011 = vrot.slane %v1005, 6
      %v3012 = vsel %vm2981, %v3009, %v3011
      %v3013 = vrot.slane %v1011, 6
      %v3014 = vsel %vm2981, %v3011, %v3013
      %v3015 = vrot.slane %v1015, 6
      %v3016 = vsel %vm2981, %v3013, %v3015
      %v3017 = vrot.slane %v1021, 6
      %v3018 = vsel %vm2981, %v3015, %v3017
      %v3019 = vrot.slane %v1025, 6
      %v3020 = vsel %vm2981, %v3017, %v3019
      %v3021 = vrot.slane %v1031, 6
      %v3022 = vsel %vm2981, %v3019, %v3021
      %v3023 = vrot.slane %v1035, 6
      %v3024 = vsel %vm2981, %v3021, %v3023
      %v3025 = vrot.slane %v1041, 6
      %v3026 = vsel %vm2981, %v3023, %v3025
      %v3027 = vrot.slane %v1045, 6
      %v3028 = vsel %vm2981, %v3025, %v3027
      %v3029 = vrot.slane %v1051, 6
      %v3030 = vsel %vm2981, %v3027, %v3029
      %v3031 = vrot.slane %v1055, 6
      %v3032 = vsel %vm2981, %v3029, %v3031
      %v3033 = vrot.slane %v1061, 6
      %v3034 = vsel %vm2981, %v3031, %v3033
      %v3035 = vrot.slane %v1065, 6
      %v3036 = vsel %vm2981, %v3033, %v3035
      %v3037 = vrot.slane %v1071, 6
      %v3038 = vsel %vm2981, %v3035, %v3037
      %v3039 = vrot.slane %v1075, 6
      %v3040 = vsel %vm2981, %v3037, %v3039
      %v3041 = vrot.slane %v1081, 6
      %v3042 = vsel %vm2981, %v3039, %v3041
      %v3043 = vrot.slane %v1085, 6
      %v3044 = vsel %vm2981, %v3041, %v3043
      %v3045 = vrot.slane %v1091, 6
      %v3046 = vsel %vm2981, %v3043, %v3045
      %v3047 = vrot.slane %v1095, 6
      %v3048 = vsel %vm2981, %v3045, %v3047
      %v3049 = vrot.slane %v1101, 6
      %v3050 = vsel %vm2981, %v3047, %v3049
      %v3051 = vrot.slane %v1105, 6
      %v3052 = vsel %vm2981, %v3049, %v3051
      %v3053 = vrot.slane %v1111, 6
      %v3054 = vsel %vm2981, %v3051, %v3053
      %v3055 = vrot.slane %v1115, 6
      %v3056 = vsel %vm2981, %v3053, %v3055
      %v3057 = vrot.slane %v1121, 6
      %v3058 = vsel %vm2981, %v3055, %v3057
      %v3059 = vrot.slane %v1125, 6
      %v3060 = vsel %vm2981, %v3057, %v3059
      %v3061 = vrot.slane %v1131, 6
      %v3062 = vsel %vm2981, %v3059, %v3061
      %v3063 = vrot.slane %v1135, 6
      %v3064 = vsel %vm2981, %v3061, %v3063
      %v3065 = vrot.slane %v1141, 6
      %v3066 = vsel %vm2981, %v3063, %v3065
      %v3067 = vrot.slane %v1145, 6
      %v3068 = vsel %vm2981, %v3065, %v3067
      %v3069 = vrot.slane %v1151, 6
      %v3070 = vsel %vm2981, %v3067, %v3069
      %v3071 = vrot.slane %v1155, 6
      %v3072 = vsel %vm2981, %v3069, %v3071
      %v3118 = vadd.f32 %v2890, %v2984
      %v3119 = vadd.f32 %v2891, %v2986
      %v3120 = vadd.f32 %v2892, %v2988
      %v3121 = vadd.f32 %v2893, %v2990
      %v3122 = vadd.f32 %v2894, %v2992
      %v3123 = vadd.f32 %v2895, %v2994
      %v3124 = vadd.f32 %v2896, %v2996
      %v3125 = vadd.f32 %v2897, %v2998
      %v3126 = vadd.f32 %v2898, %v3000
      %v3127 = vadd.f32 %v2899, %v3002
      %v3128 = vadd.f32 %v2900, %v3004
      %v3129 = vadd.f32 %v2901, %v3006
      %v3130 = vadd.f32 %v2902, %v3008
      %v3131 = vadd.f32 %v2903, %v3010
      %v3132 = vadd.f32 %v2904, %v3012
      %v3133 = vadd.f32 %v2905, %v3014
      %v3134 = vadd.f32 %v2906, %v3016
      %v3135 = vadd.f32 %v2907, %v3018
      %v3136 = vadd.f32 %v2908, %v3020
      %v3137 = vadd.f32 %v2909, %v3022
      %v3138 = vadd.f32 %v2910, %v3024
      %v3139 = vadd.f32 %v2911, %v3026
      %v3140 = vadd.f32 %v2912, %v3028
      %v3141 = vadd.f32 %v2913, %v3030
      %v3142 = vadd.f32 %v2914, %v3032
      %v3143 = vadd.f32 %v2915, %v3034
      %v3144 = vadd.f32 %v2916, %v3036
      %v3145 = vadd.f32 %v2917, %v3038
      %v3146 = vadd.f32 %v2918, %v3040
      %v3147 = vadd.f32 %v2919, %v3042
      %v3148 = vadd.f32 %v2920, %v3044
      %v3149 = vadd.f32 %v2921, %v3046
      %v3150 = vadd.f32 %v2922, %v3048
      %v3151 = vadd.f32 %v2923, %v3050
      %v3152 = vadd.f32 %v2924, %v3052
      %v3153 = vadd.f32 %v2925, %v3054
      %v3154 = vadd.f32 %v2926, %v3056
      %v3155 = vadd.f32 %v2927, %v3058
      %v3156 = vadd.f32 %v2928, %v3060
      %v3157 = vadd.f32 %v2929, %v3062
      %v3158 = vadd.f32 %v2930, %v3064
      %v3159 = vadd.f32 %v2931, %v3066
      %v3160 = vadd.f32 %v2932, %v3068
      %v3161 = vadd.f32 %v2933, %v3070
      %v3162 = vadd.f32 %v2934, %v3072
      %v3163 = vld [vmem:[%s4] sm:$0x1]
      %v3165 = vlaneseq
      %v3166 = vshrl.u32 %v3165, 7
      %v3167 = vsub.s32 0, %v3166
      %v3168 = vrot.slane %v3163, %v3167
      %v3170 = vadd.f32 %v3118, %v3168
      %v3171 = vadd.f32 %v3119, %v3168
      %v3172 = vadd.f32 %v3120, %v3168
      %v3173 = vadd.f32 %v3121, %v3168
      %v3174 = vadd.f32 %v3122, %v3168
      %v3175 = vadd.f32 %v3123, %v3168
      %v3176 = vadd.f32 %v3124, %v3168
      %v3177 = vadd.f32 %v3125, %v3168
      %v3178 = vadd.f32 %v3126, %v3168
      %v3179 = vadd.f32 %v3127, %v3168
      %v3180 = vadd.f32 %v3128, %v3168
      %v3181 = vadd.f32 %v3129, %v3168
      %v3182 = vadd.f32 %v3130, %v3168
      %v3183 = vadd.f32 %v3131, %v3168
      %v3184 = vadd.f32 %v3132, %v3168
      %v3185 = vadd.f32 %v3133, %v3168
      %v3186 = vadd.f32 %v3134, %v3168
      %v3187 = vadd.f32 %v3135, %v3168
      %v3188 = vadd.f32 %v3136, %v3168
      %v3189 = vadd.f32 %v3137, %v3168
      %v3190 = vadd.f32 %v3138, %v3168
      %v3191 = vadd.f32 %v3139, %v3168
      %v3192 = vadd.f32 %v3140, %v3168
      %v3193 = vadd.f32 %v3141, %v3168
      %v3194 = vadd.f32 %v3142, %v3168
      %v3195 = vadd.f32 %v3143, %v3168
      %v3196 = vadd.f32 %v3144, %v3168
      %v3197 = vadd.f32 %v3145, %v3168
      %v3198 = vadd.f32 %v3146, %v3168
      %v3199 = vadd.f32 %v3147, %v3168
      %v3200 = vadd.f32 %v3148, %v3168
      %v3201 = vadd.f32 %v3149, %v3168
      %v3202 = vadd.f32 %v3150, %v3168
      %v3203 = vadd.f32 %v3151, %v3168
      %v3204 = vadd.f32 %v3152, %v3168
      %v3205 = vadd.f32 %v3153, %v3168
      %v3206 = vadd.f32 %v3154, %v3168
      %v3207 = vadd.f32 %v3155, %v3168
      %v3208 = vadd.f32 %v3156, %v3168
      %v3209 = vadd.f32 %v3157, %v3168
      %v3210 = vadd.f32 %v3158, %v3168
      %v3211 = vadd.f32 %v3159, %v3168
      %v3212 = vadd.f32 %v3160, %v3168
      %v3213 = vadd.f32 %v3161, %v3168
      %v3214 = vadd.f32 %v3162, %v3168
      %v3215 = vmax.f32 %v3170, 0.0
      %v3216 = vmax.f32 %v3171, 0.0
      %v3217 = vmax.f32 %v3172, 0.0
      %v3218 = vmax.f32 %v3173, 0.0
      %v3219 = vmax.f32 %v3174, 0.0
      %v3220 = vmax.f32 %v3175, 0.0
      %v3221 = vmax.f32 %v3176, 0.0
      %v3222 = vmax.f32 %v3177, 0.0
      %v3223 = vmax.f32 %v3178, 0.0
      %v3224 = vmax.f32 %v3179, 0.0
      %v3225 = vmax.f32 %v3180, 0.0
      %v3226 = vmax.f32 %v3181, 0.0
      %v3227 = vmax.f32 %v3182, 0.0
      %v3228 = vmax.f32 %v3183, 0.0
      %v3229 = vmax.f32 %v3184, 0.0
      %v3230 = vmax.f32 %v3185, 0.0
      %v3231 = vmax.f32 %v3186, 0.0
      %v3232 = vmax.f32 %v3187, 0.0
      %v3233 = vmax.f32 %v3188, 0.0
      %v3234 = vmax.f32 %v3189, 0.0
      %v3235 = vmax.f32 %v3190, 0.0
      %v3236 = vmax.f32 %v3191, 0.0
      %v3237 = vmax.f32 %v3192, 0.0
      %v3238 = vmax.f32 %v3193, 0.0
      %v3239 = vmax.f32 %v3194, 0.0
      %v3240 = vmax.f32 %v3195, 0.0
      %v3241 = vmax.f32 %v3196, 0.0
      %v3242 = vmax.f32 %v3197, 0.0
      %v3243 = vmax.f32 %v3198, 0.0
      %v3244 = vmax.f32 %v3199, 0.0
      %v3245 = vmax.f32 %v3200, 0.0
      %v3246 = vmax.f32 %v3201, 0.0
      %v3247 = vmax.f32 %v3202, 0.0
      %v3248 = vmax.f32 %v3203, 0.0
      %v3249 = vmax.f32 %v3204, 0.0
      %v3250 = vmax.f32 %v3205, 0.0
      %v3251 = vmax.f32 %v3206, 0.0
      %v3252 = vmax.f32 %v3207, 0.0
      %v3253 = vmax.f32 %v3208, 0.0
      %v3254 = vmax.f32 %v3209, 0.0
      %v3255 = vmax.f32 %v3210, 0.0
      %v3256 = vmax.f32 %v3211, 0.0
      %v3257 = vmax.f32 %v3212, 0.0
      %v3258 = vmax.f32 %v3213, 0.0
      %v3259 = vmax.f32 %v3214, 0.0
      %v3260 = vld [vmem:[%s2] sm:$0xff]
      %v3261 = vld [vmem:[%s2 + $0x8] sm:$0xff]
      %v3262 = vld [vmem:[%s2 + $0x10] sm:$0xff]
      %v3263 = vld [vmem:[%s2 + $0x18] sm:$0xff]
      %v3264 = vld [vmem:[%s2 + $0x20] sm:$0xff]
      %v3265 = vld [vmem:[%s2 + $0x28] sm:$0xff]
      %v3266 = vld [vmem:[%s2 + $0x30] sm:$0xff]
      %v3267 = vld [vmem:[%s2 + $0x38] sm:$0xff]
      %v3268 = vld [vmem:[%s2 + $0x40] sm:$0xff]
      %v3269 = vld [vmem:[%s2 + $0x48] sm:$0xff]
      %v3270 = vld [vmem:[%s2 + $0x50] sm:$0xff]
      %v3271 = vld [vmem:[%s2 + $0x58] sm:$0xff]
      %v3272 = vld [vmem:[%s2 + $0x60] sm:$0xff]
      %v3273 = vld [vmem:[%s2 + $0x68] sm:$0xff]
      %v3274 = vld [vmem:[%s2 + $0x70] sm:$0xff]
      %v3275 = vld [vmem:[%s2 + $0x78] sm:$0xff]
      %v3276 = vld [vmem:[%s2 + $0x80] sm:$0xff]
      %v3277 = vld [vmem:[%s2 + $0x88] sm:$0xff]
      %v3278 = vld [vmem:[%s2 + $0x90] sm:$0xff]
      %v3279 = vld [vmem:[%s2 + $0x98] sm:$0xff]
      %v3280 = vld [vmem:[%s2 + $0xa0] sm:$0xff]
      %v3281 = vld [vmem:[%s2 + $0xa8] sm:$0xff]
      %v3282 = vld [vmem:[%s2 + $0xb0] sm:$0xff]
      %v3283 = vld [vmem:[%s2 + $0xb8] sm:$0xff]
      %v3284 = vld [vmem:[%s2 + $0xc0] sm:$0xff]
      %v3285 = vld [vmem:[%s2 + $0xc8] sm:$0xff]
      %v3286 = vld [vmem:[%s2 + $0xd0] sm:$0xff]
      %v3287 = vld [vmem:[%s2 + $0xd8] sm:$0xff]
      %v3288 = vld [vmem:[%s2 + $0xe0] sm:$0xff]
      %v3289 = vld [vmem:[%s2 + $0xe8] sm:$0xff]
      %v3290 = vld [vmem:[%s2 + $0xf0] sm:$0xff]
      %v3291 = vld [vmem:[%s2 + $0xf8] sm:$0xff]
      %v3292 = vld [vmem:[%s2 + $0x100] sm:$0xff]
      %v3293 = vld [vmem:[%s2 + $0x108] sm:$0xff]
      %v3294 = vld [vmem:[%s2 + $0x110] sm:$0xff]
      %v3295 = vld [vmem:[%s2 + $0x118] sm:$0xff]
      %v3296 = vld [vmem:[%s2 + $0x120] sm:$0xff]
      %v3297 = vld [vmem:[%s2 + $0x128] sm:$0xff]
      %v3298 = vld [vmem:[%s2 + $0x130] sm:$0xff]
      %v3299 = vld [vmem:[%s2 + $0x138] sm:$0xff]
      %v3300 = vld [vmem:[%s2 + $0x140] sm:$0xff]
      %v3301 = vld [vmem:[%s2 + $0x148] sm:$0xff]
      %v3302 = vld [vmem:[%s2 + $0x150] sm:$0xff]
      %v3303 = vld [vmem:[%s2 + $0x158] sm:$0xff]
      %v3304 = vld [vmem:[%s2 + $0x160] sm:$0xff]
      %s3305 = sadd.s32 %s425, 4294967294
      %v3306 = vstv %s3305
      %v3307 = vadd.s32 %v3260, %v3306
      %v3308 = vadd.s32 %v3261, %v3306
      %v3309 = vadd.s32 %v3262, %v3306
      %v3310 = vadd.s32 %v3263, %v3306
      %v3311 = vadd.s32 %v3264, %v3306
      %v3312 = vadd.s32 %v3265, %v3306
      %v3313 = vadd.s32 %v3266, %v3306
      %v3314 = vadd.s32 %v3267, %v3306
      %v3315 = vadd.s32 %v3268, %v3306
      %v3316 = vadd.s32 %v3269, %v3306
      %v3317 = vadd.s32 %v3270, %v3306
      %v3318 = vadd.s32 %v3271, %v3306
      %v3319 = vadd.s32 %v3272, %v3306
      %v3320 = vadd.s32 %v3273, %v3306
      %v3321 = vadd.s32 %v3274, %v3306
      %v3322 = vadd.s32 %v3275, %v3306
      %v3323 = vadd.s32 %v3276, %v3306
      %v3324 = vadd.s32 %v3277, %v3306
      %v3325 = vadd.s32 %v3278, %v3306
      %v3326 = vadd.s32 %v3279, %v3306
      %v3327 = vadd.s32 %v3280, %v3306
      %v3328 = vadd.s32 %v3281, %v3306
      %v3329 = vadd.s32 %v3282, %v3306
      %v3330 = vadd.s32 %v3283, %v3306
      %v3331 = vadd.s32 %v3284, %v3306
      %v3332 = vadd.s32 %v3285, %v3306
      %v3333 = vadd.s32 %v3286, %v3306
      %v3334 = vadd.s32 %v3287, %v3306
      %v3335 = vadd.s32 %v3288, %v3306
      %v3336 = vadd.s32 %v3289, %v3306
      %v3337 = vadd.s32 %v3290, %v3306
      %v3338 = vadd.s32 %v3291, %v3306
      %v3339 = vadd.s32 %v3292, %v3306
      %v3340 = vadd.s32 %v3293, %v3306
      %v3341 = vadd.s32 %v3294, %v3306
      %v3342 = vadd.s32 %v3295, %v3306
      %v3343 = vadd.s32 %v3296, %v3306
      %v3344 = vadd.s32 %v3297, %v3306
      %v3345 = vadd.s32 %v3298, %v3306
      %v3346 = vadd.s32 %v3299, %v3306
      %v3347 = vadd.s32 %v3300, %v3306
      %v3348 = vadd.s32 %v3301, %v3306
      %v3349 = vadd.s32 %v3302, %v3306
      %v3350 = vadd.s32 %v3303, %v3306
      %v3351 = vadd.s32 %v3304, %v3306
      %v3352 = vld [vmem:[%s1] sm:$0xff]
      %v3353 = vld [vmem:[%s1 + $0x8] sm:$0xff]
      %v3354 = vld [vmem:[%s1 + $0x10] sm:$0xff]
      %v3355 = vld [vmem:[%s1 + $0x18] sm:$0xff]
      %v3356 = vld [vmem:[%s1 + $0x20] sm:$0xff]
      %v3357 = vld [vmem:[%s1 + $0x28] sm:$0xff]
      %v3358 = vld [vmem:[%s1 + $0x30] sm:$0xff]
      %v3359 = vld [vmem:[%s1 + $0x38] sm:$0xff]
      %v3360 = vld [vmem:[%s1 + $0x40] sm:$0xff]
      %v3361 = vld [vmem:[%s1 + $0x48] sm:$0xff]
      %v3362 = vld [vmem:[%s1 + $0x50] sm:$0xff]
      %v3363 = vld [vmem:[%s1 + $0x58] sm:$0xff]
      %v3364 = vld [vmem:[%s1 + $0x60] sm:$0xff]
      %v3365 = vld [vmem:[%s1 + $0x68] sm:$0xff]
      %v3366 = vld [vmem:[%s1 + $0x70] sm:$0xff]
      %v3367 = vld [vmem:[%s1 + $0x78] sm:$0xff]
      %v3368 = vld [vmem:[%s1 + $0x80] sm:$0xff]
      %v3369 = vld [vmem:[%s1 + $0x88] sm:$0xff]
      %v3370 = vld [vmem:[%s1 + $0x90] sm:$0xff]
      %v3371 = vld [vmem:[%s1 + $0x98] sm:$0xff]
      %v3372 = vld [vmem:[%s1 + $0xa0] sm:$0xff]
      %v3373 = vld [vmem:[%s1 + $0xa8] sm:$0xff]
      %v3374 = vld [vmem:[%s1 + $0xb0] sm:$0xff]
      %v3375 = vld [vmem:[%s1 + $0xb8] sm:$0xff]
      %v3376 = vld [vmem:[%s1 + $0xc0] sm:$0xff]
      %v3377 = vld [vmem:[%s1 + $0xc8] sm:$0xff]
      %v3378 = vld [vmem:[%s1 + $0xd0] sm:$0xff]
      %v3379 = vld [vmem:[%s1 + $0xd8] sm:$0xff]
      %v3380 = vld [vmem:[%s1 + $0xe0] sm:$0xff]
      %v3381 = vld [vmem:[%s1 + $0xe8] sm:$0xff]
      %v3382 = vld [vmem:[%s1 + $0xf0] sm:$0xff]
      %v3383 = vld [vmem:[%s1 + $0xf8] sm:$0xff]
      %v3384 = vld [vmem:[%s1 + $0x100] sm:$0xff]
      %v3385 = vld [vmem:[%s1 + $0x108] sm:$0xff]
      %v3386 = vld [vmem:[%s1 + $0x110] sm:$0xff]
      %v3387 = vld [vmem:[%s1 + $0x118] sm:$0xff]
      %v3388 = vld [vmem:[%s1 + $0x120] sm:$0xff]
      %v3389 = vld [vmem:[%s1 + $0x128] sm:$0xff]
      %v3390 = vld [vmem:[%s1 + $0x130] sm:$0xff]
      %v3391 = vld [vmem:[%s1 + $0x138] sm:$0xff]
      %v3392 = vld [vmem:[%s1 + $0x140] sm:$0xff]
      %v3393 = vld [vmem:[%s1 + $0x148] sm:$0xff]
      %v3394 = vld [vmem:[%s1 + $0x150] sm:$0xff]
      %v3395 = vld [vmem:[%s1 + $0x158] sm:$0xff]
      %v3396 = vld [vmem:[%s1 + $0x160] sm:$0xff]
      %vm3397 = vcmp.gt.s32.totalorder %v3352, 0
      %vm3398 = vcmp.gt.s32.totalorder %v3353, 0
      %vm3399 = vcmp.gt.s32.totalorder %v3354, 0
      %vm3400 = vcmp.gt.s32.totalorder %v3355, 0
      %vm3401 = vcmp.gt.s32.totalorder %v3356, 0
      %vm3402 = vcmp.gt.s32.totalorder %v3357, 0
      %vm3403 = vcmp.gt.s32.totalorder %v3358, 0
      %vm3404 = vcmp.gt.s32.totalorder %v3359, 0
      %vm3405 = vcmp.gt.s32.totalorder %v3360, 0
      %vm3406 = vcmp.gt.s32.totalorder %v3361, 0
      %vm3407 = vcmp.gt.s32.totalorder %v3362, 0
      %vm3408 = vcmp.gt.s32.totalorder %v3363, 0
      %vm3409 = vcmp.gt.s32.totalorder %v3364, 0
      %vm3410 = vcmp.gt.s32.totalorder %v3365, 0
      %vm3411 = vcmp.gt.s32.totalorder %v3366, 0
      %vm3412 = vcmp.gt.s32.totalorder %v3367, 0
      %vm3413 = vcmp.gt.s32.totalorder %v3368, 0
      %vm3414 = vcmp.gt.s32.totalorder %v3369, 0
      %vm3415 = vcmp.gt.s32.totalorder %v3370, 0
      %vm3416 = vcmp.gt.s32.totalorder %v3371, 0
      %vm3417 = vcmp.gt.s32.totalorder %v3372, 0
      %vm3418 = vcmp.gt.s32.totalorder %v3373, 0
      %vm3419 = vcmp.gt.s32.totalorder %v3374, 0
      %vm3420 = vcmp.gt.s32.totalorder %v3375, 0
      %vm3421 = vcmp.gt.s32.totalorder %v3376, 0
      %vm3422 = vcmp.gt.s32.totalorder %v3377, 0
      %vm3423 = vcmp.gt.s32.totalorder %v3378, 0
      %vm3424 = vcmp.gt.s32.totalorder %v3379, 0
      %vm3425 = vcmp.gt.s32.totalorder %v3380, 0
      %vm3426 = vcmp.gt.s32.totalorder %v3381, 0
      %vm3427 = vcmp.gt.s32.totalorder %v3382, 0
      %vm3428 = vcmp.gt.s32.totalorder %v3383, 0
      %vm3429 = vcmp.gt.s32.totalorder %v3384, 0
      %vm3430 = vcmp.gt.s32.totalorder %v3385, 0
      %vm3431 = vcmp.gt.s32.totalorder %v3386, 0
      %vm3432 = vcmp.gt.s32.totalorder %v3387, 0
      %vm3433 = vcmp.gt.s32.totalorder %v3388, 0
      %vm3434 = vcmp.gt.s32.totalorder %v3389, 0
      %vm3435 = vcmp.gt.s32.totalorder %v3390, 0
      %vm3436 = vcmp.gt.s32.totalorder %v3391, 0
      %vm3437 = vcmp.gt.s32.totalorder %v3392, 0
      %vm3438 = vcmp.gt.s32.totalorder %v3393, 0
      %vm3439 = vcmp.gt.s32.totalorder %v3394, 0
      %vm3440 = vcmp.gt.s32.totalorder %v3395, 0
      %vm3441 = vcmp.gt.s32.totalorder %v3396, 0
      %vm3442 = vcmp.ge.s32.totalorder %v3307, 0
      %vm3443 = vcmp.ge.s32.totalorder %v3308, 0
      %vm3444 = vcmp.ge.s32.totalorder %v3309, 0
      %vm3445 = vcmp.ge.s32.totalorder %v3310, 0
      %vm3446 = vcmp.ge.s32.totalorder %v3311, 0
      %vm3447 = vcmp.ge.s32.totalorder %v3312, 0
      %vm3448 = vcmp.ge.s32.totalorder %v3313, 0
      %vm3449 = vcmp.ge.s32.totalorder %v3314, 0
      %vm3450 = vcmp.ge.s32.totalorder %v3315, 0
      %vm3451 = vcmp.ge.s32.totalorder %v3316, 0
      %vm3452 = vcmp.ge.s32.totalorder %v3317, 0
      %vm3453 = vcmp.ge.s32.totalorder %v3318, 0
      %vm3454 = vcmp.ge.s32.totalorder %v3319, 0
      %vm3455 = vcmp.ge.s32.totalorder %v3320, 0
      %vm3456 = vcmp.ge.s32.totalorder %v3321, 0
      %vm3457 = vcmp.ge.s32.totalorder %v3322, 0
      %vm3458 = vcmp.ge.s32.totalorder %v3323, 0
      %vm3459 = vcmp.ge.s32.totalorder %v3324, 0
      %vm3460 = vcmp.ge.s32.totalorder %v3325, 0
      %vm3461 = vcmp.ge.s32.totalorder %v3326, 0
      %vm3462 = vcmp.ge.s32.totalorder %v3327, 0
      %vm3463 = vcmp.ge.s32.totalorder %v3328, 0
      %vm3464 = vcmp.ge.s32.totalorder %v3329, 0
      %vm3465 = vcmp.ge.s32.totalorder %v3330, 0
      %vm3466 = vcmp.ge.s32.totalorder %v3331, 0
      %vm3467 = vcmp.ge.s32.totalorder %v3332, 0
      %vm3468 = vcmp.ge.s32.totalorder %v3333, 0
      %vm3469 = vcmp.ge.s32.totalorder %v3334, 0
      %vm3470 = vcmp.ge.s32.totalorder %v3335, 0
      %vm3471 = vcmp.ge.s32.totalorder %v3336, 0
      %vm3472 = vcmp.ge.s32.totalorder %v3337, 0
      %vm3473 = vcmp.ge.s32.totalorder %v3338, 0
      %vm3474 = vcmp.ge.s32.totalorder %v3339, 0
      %vm3475 = vcmp.ge.s32.totalorder %v3340, 0
      %vm3476 = vcmp.ge.s32.totalorder %v3341, 0
      %vm3477 = vcmp.ge.s32.totalorder %v3342, 0
      %vm3478 = vcmp.ge.s32.totalorder %v3343, 0
      %vm3479 = vcmp.ge.s32.totalorder %v3344, 0
      %vm3480 = vcmp.ge.s32.totalorder %v3345, 0
      %vm3481 = vcmp.ge.s32.totalorder %v3346, 0
      %vm3482 = vcmp.ge.s32.totalorder %v3347, 0
      %vm3483 = vcmp.ge.s32.totalorder %v3348, 0
      %vm3484 = vcmp.ge.s32.totalorder %v3349, 0
      %vm3485 = vcmp.ge.s32.totalorder %v3350, 0
      %vm3486 = vcmp.ge.s32.totalorder %v3351, 0
      %vm3487 = vmand %vm3397, %vm3442
      %vm3488 = vmand %vm3398, %vm3443
      %vm3489 = vmand %vm3399, %vm3444
      %vm3490 = vmand %vm3400, %vm3445
      %vm3491 = vmand %vm3401, %vm3446
      %vm3492 = vmand %vm3402, %vm3447
      %vm3493 = vmand %vm3403, %vm3448
      %vm3494 = vmand %vm3404, %vm3449
      %vm3495 = vmand %vm3405, %vm3450
      %vm3496 = vmand %vm3406, %vm3451
      %vm3497 = vmand %vm3407, %vm3452
      %vm3498 = vmand %vm3408, %vm3453
      %vm3499 = vmand %vm3409, %vm3454
      %vm3500 = vmand %vm3410, %vm3455
      %vm3501 = vmand %vm3411, %vm3456
      %vm3502 = vmand %vm3412, %vm3457
      %vm3503 = vmand %vm3413, %vm3458
      %vm3504 = vmand %vm3414, %vm3459
      %vm3505 = vmand %vm3415, %vm3460
      %vm3506 = vmand %vm3416, %vm3461
      %vm3507 = vmand %vm3417, %vm3462
      %vm3508 = vmand %vm3418, %vm3463
      %vm3509 = vmand %vm3419, %vm3464
      %vm3510 = vmand %vm3420, %vm3465
      %vm3511 = vmand %vm3421, %vm3466
      %vm3512 = vmand %vm3422, %vm3467
      %vm3513 = vmand %vm3423, %vm3468
      %vm3514 = vmand %vm3424, %vm3469
      %vm3515 = vmand %vm3425, %vm3470
      %vm3516 = vmand %vm3426, %vm3471
      %vm3517 = vmand %vm3427, %vm3472
      %vm3518 = vmand %vm3428, %vm3473
      %vm3519 = vmand %vm3429, %vm3474
      %vm3520 = vmand %vm3430, %vm3475
      %vm3521 = vmand %vm3431, %vm3476
      %vm3522 = vmand %vm3432, %vm3477
      %vm3523 = vmand %vm3433, %vm3478
      %vm3524 = vmand %vm3434, %vm3479
      %vm3525 = vmand %vm3435, %vm3480
      %vm3526 = vmand %vm3436, %vm3481
      %vm3527 = vmand %vm3437, %vm3482
      %vm3528 = vmand %vm3438, %vm3483
      %vm3529 = vmand %vm3439, %vm3484
      %vm3530 = vmand %vm3440, %vm3485
      %vm3531 = vmand %vm3441, %vm3486
      %vm3532 = vcmp.lt.s32.totalorder %v3307, 16
      %vm3533 = vcmp.lt.s32.totalorder %v3308, 16
      %vm3534 = vcmp.lt.s32.totalorder %v3309, 16
      %vm3535 = vcmp.lt.s32.totalorder %v3310, 16
      %vm3536 = vcmp.lt.s32.totalorder %v3311, 16
      %vm3537 = vcmp.lt.s32.totalorder %v3312, 16
      %vm3538 = vcmp.lt.s32.totalorder %v3313, 16
      %vm3539 = vcmp.lt.s32.totalorder %v3314, 16
      %vm3540 = vcmp.lt.s32.totalorder %v3315, 16
      %vm3541 = vcmp.lt.s32.totalorder %v3316, 16
      %vm3542 = vcmp.lt.s32.totalorder %v3317, 16
      %vm3543 = vcmp.lt.s32.totalorder %v3318, 16
      %vm3544 = vcmp.lt.s32.totalorder %v3319, 16
      %vm3545 = vcmp.lt.s32.totalorder %v3320, 16
      %vm3546 = vcmp.lt.s32.totalorder %v3321, 16
      %vm3547 = vcmp.lt.s32.totalorder %v3322, 16
      %vm3548 = vcmp.lt.s32.totalorder %v3323, 16
      %vm3549 = vcmp.lt.s32.totalorder %v3324, 16
      %vm3550 = vcmp.lt.s32.totalorder %v3325, 16
      %vm3551 = vcmp.lt.s32.totalorder %v3326, 16
      %vm3552 = vcmp.lt.s32.totalorder %v3327, 16
      %vm3553 = vcmp.lt.s32.totalorder %v3328, 16
      %vm3554 = vcmp.lt.s32.totalorder %v3329, 16
      %vm3555 = vcmp.lt.s32.totalorder %v3330, 16
      %vm3556 = vcmp.lt.s32.totalorder %v3331, 16
      %vm3557 = vcmp.lt.s32.totalorder %v3332, 16
      %vm3558 = vcmp.lt.s32.totalorder %v3333, 16
      %vm3559 = vcmp.lt.s32.totalorder %v3334, 16
      %vm3560 = vcmp.lt.s32.totalorder %v3335, 16
      %vm3561 = vcmp.lt.s32.totalorder %v3336, 16
      %vm3562 = vcmp.lt.s32.totalorder %v3337, 16
      %vm3563 = vcmp.lt.s32.totalorder %v3338, 16
      %vm3564 = vcmp.lt.s32.totalorder %v3339, 16
      %vm3565 = vcmp.lt.s32.totalorder %v3340, 16
      %vm3566 = vcmp.lt.s32.totalorder %v3341, 16
      %vm3567 = vcmp.lt.s32.totalorder %v3342, 16
      %vm3568 = vcmp.lt.s32.totalorder %v3343, 16
      %vm3569 = vcmp.lt.s32.totalorder %v3344, 16
      %vm3570 = vcmp.lt.s32.totalorder %v3345, 16
      %vm3571 = vcmp.lt.s32.totalorder %v3346, 16
      %vm3572 = vcmp.lt.s32.totalorder %v3347, 16
      %vm3573 = vcmp.lt.s32.totalorder %v3348, 16
      %vm3574 = vcmp.lt.s32.totalorder %v3349, 16
      %vm3575 = vcmp.lt.s32.totalorder %v3350, 16
      %vm3576 = vcmp.lt.s32.totalorder %v3351, 16
      %vm3577 = vmand %vm3487, %vm3532
      %vm3578 = vmand %vm3488, %vm3533
      %vm3579 = vmand %vm3489, %vm3534
      %vm3580 = vmand %vm3490, %vm3535
      %vm3581 = vmand %vm3491, %vm3536
      %vm3582 = vmand %vm3492, %vm3537
      %vm3583 = vmand %vm3493, %vm3538
      %vm3584 = vmand %vm3494, %vm3539
      %vm3585 = vmand %vm3495, %vm3540
      %vm3586 = vmand %vm3496, %vm3541
      %vm3587 = vmand %vm3497, %vm3542
      %vm3588 = vmand %vm3498, %vm3543
      %vm3589 = vmand %vm3499, %vm3544
      %vm3590 = vmand %vm3500, %vm3545
      %vm3591 = vmand %vm3501, %vm3546
      %vm3592 = vmand %vm3502, %vm3547
      %vm3593 = vmand %vm3503, %vm3548
      %vm3594 = vmand %vm3504, %vm3549
      %vm3595 = vmand %vm3505, %vm3550
      %vm3596 = vmand %vm3506, %vm3551
      %vm3597 = vmand %vm3507, %vm3552
      %vm3598 = vmand %vm3508, %vm3553
      %vm3599 = vmand %vm3509, %vm3554
      %vm3600 = vmand %vm3510, %vm3555
      %vm3601 = vmand %vm3511, %vm3556
      %vm3602 = vmand %vm3512, %vm3557
      %vm3603 = vmand %vm3513, %vm3558
      %vm3604 = vmand %vm3514, %vm3559
      %vm3605 = vmand %vm3515, %vm3560
      %vm3606 = vmand %vm3516, %vm3561
      %vm3607 = vmand %vm3517, %vm3562
      %vm3608 = vmand %vm3518, %vm3563
      %vm3609 = vmand %vm3519, %vm3564
      %vm3610 = vmand %vm3520, %vm3565
      %vm3611 = vmand %vm3521, %vm3566
      %vm3612 = vmand %vm3522, %vm3567
      %vm3613 = vmand %vm3523, %vm3568
      %vm3614 = vmand %vm3524, %vm3569
      %vm3615 = vmand %vm3525, %vm3570
      %vm3616 = vmand %vm3526, %vm3571
      %vm3617 = vmand %vm3527, %vm3572
      %vm3618 = vmand %vm3528, %vm3573
      %vm3619 = vmand %vm3529, %vm3574
      %vm3620 = vmand %vm3530, %vm3575
      %vm3621 = vmand %vm3531, %vm3576
      %v3622 = vsel %vm3577, 1, 0
      %v3623 = vsel %vm3578, 1, 0
      %v3624 = vsel %vm3579, 1, 0
      %v3625 = vsel %vm3580, 1, 0
      %v3626 = vsel %vm3581, 1, 0
      %v3627 = vsel %vm3582, 1, 0
      %v3628 = vsel %vm3583, 1, 0
      %v3629 = vsel %vm3584, 1, 0
      %v3630 = vsel %vm3585, 1, 0
      %v3631 = vsel %vm3586, 1, 0
      %v3632 = vsel %vm3587, 1, 0
      %v3633 = vsel %vm3588, 1, 0
      %v3634 = vsel %vm3589, 1, 0
      %v3635 = vsel %vm3590, 1, 0
      %v3636 = vsel %vm3591, 1, 0
      %v3637 = vsel %vm3592, 1, 0
      %v3638 = vsel %vm3593, 1, 0
      %v3639 = vsel %vm3594, 1, 0
      %v3640 = vsel %vm3595, 1, 0
      %v3641 = vsel %vm3596, 1, 0
      %v3642 = vsel %vm3597, 1, 0
      %v3643 = vsel %vm3598, 1, 0
      %v3644 = vsel %vm3599, 1, 0
      %v3645 = vsel %vm3600, 1, 0
      %v3646 = vsel %vm3601, 1, 0
      %v3647 = vsel %vm3602, 1, 0
      %v3648 = vsel %vm3603, 1, 0
      %v3649 = vsel %vm3604, 1, 0
      %v3650 = vsel %vm3605, 1, 0
      %v3651 = vsel %vm3606, 1, 0
      %v3652 = vsel %vm3607, 1, 0
      %v3653 = vsel %vm3608, 1, 0
      %v3654 = vsel %vm3609, 1, 0
      %v3655 = vsel %vm3610, 1, 0
      %v3656 = vsel %vm3611, 1, 0
      %v3657 = vsel %vm3612, 1, 0
      %v3658 = vsel %vm3613, 1, 0
      %v3659 = vsel %vm3614, 1, 0
      %v3660 = vsel %vm3615, 1, 0
      %v3661 = vsel %vm3616, 1, 0
      %v3662 = vsel %vm3617, 1, 0
      %v3663 = vsel %vm3618, 1, 0
      %v3664 = vsel %vm3619, 1, 0
      %v3665 = vsel %vm3620, 1, 0
      %v3666 = vsel %vm3621, 1, 0
      %3667 = vset.pattern.permute.xlu0 0
      %3668 = vperm.xlu0 %3667, %v3622
      %v3669 = vpop.permute.xlu0 %3668
      %3670 = vset.pattern.permute.xlu0 0
      %3671 = vperm.xlu0 %3670, %v3623
      %v3672 = vpop.permute.xlu0 %3671
      %3673 = vset.pattern.permute.xlu0 0
      %3674 = vperm.xlu0 %3673, %v3624
      %v3675 = vpop.permute.xlu0 %3674
      %3676 = vset.pattern.permute.xlu0 0
      %3677 = vperm.xlu0 %3676, %v3625
      %v3678 = vpop.permute.xlu0 %3677
      %3679 = vset.pattern.permute.xlu0 0
      %3680 = vperm.xlu0 %3679, %v3626
      %v3681 = vpop.permute.xlu0 %3680
      %3682 = vset.pattern.permute.xlu0 0
      %3683 = vperm.xlu0 %3682, %v3627
      %v3684 = vpop.permute.xlu0 %3683
      %3685 = vset.pattern.permute.xlu0 0
      %3686 = vperm.xlu0 %3685, %v3628
      %v3687 = vpop.permute.xlu0 %3686
      %3688 = vset.pattern.permute.xlu0 0
      %3689 = vperm.xlu0 %3688, %v3629
      %v3690 = vpop.permute.xlu0 %3689
      %3691 = vset.pattern.permute.xlu0 0
      %3692 = vperm.xlu0 %3691, %v3630
      %v3693 = vpop.permute.xlu0 %3692
      %3694 = vset.pattern.permute.xlu0 0
      %3695 = vperm.xlu0 %3694, %v3631
      %v3696 = vpop.permute.xlu0 %3695
      %3697 = vset.pattern.permute.xlu0 0
      %3698 = vperm.xlu0 %3697, %v3632
      %v3699 = vpop.permute.xlu0 %3698
      %3700 = vset.pattern.permute.xlu0 0
      %3701 = vperm.xlu0 %3700, %v3633
      %v3702 = vpop.permute.xlu0 %3701
      %3703 = vset.pattern.permute.xlu0 0
      %3704 = vperm.xlu0 %3703, %v3634
      %v3705 = vpop.permute.xlu0 %3704
      %3706 = vset.pattern.permute.xlu0 0
      %3707 = vperm.xlu0 %3706, %v3635
      %v3708 = vpop.permute.xlu0 %3707
      %3709 = vset.pattern.permute.xlu0 0
      %3710 = vperm.xlu0 %3709, %v3636
      %v3711 = vpop.permute.xlu0 %3710
      %3712 = vset.pattern.permute.xlu0 0
      %3713 = vperm.xlu0 %3712, %v3637
      %v3714 = vpop.permute.xlu0 %3713
      %3715 = vset.pattern.permute.xlu0 0
      %3716 = vperm.xlu0 %3715, %v3638
      %v3717 = vpop.permute.xlu0 %3716
      %3718 = vset.pattern.permute.xlu0 0
      %3719 = vperm.xlu0 %3718, %v3639
      %v3720 = vpop.permute.xlu0 %3719
      %3721 = vset.pattern.permute.xlu0 0
      %3722 = vperm.xlu0 %3721, %v3640
      %v3723 = vpop.permute.xlu0 %3722
      %3724 = vset.pattern.permute.xlu0 0
      %3725 = vperm.xlu0 %3724, %v3641
      %v3726 = vpop.permute.xlu0 %3725
      %3727 = vset.pattern.permute.xlu0 0
      %3728 = vperm.xlu0 %3727, %v3642
      %v3729 = vpop.permute.xlu0 %3728
      %3730 = vset.pattern.permute.xlu0 0
      %3731 = vperm.xlu0 %3730, %v3643
      %v3732 = vpop.permute.xlu0 %3731
      %3733 = vset.pattern.permute.xlu0 0
      %3734 = vperm.xlu0 %3733, %v3644
      %v3735 = vpop.permute.xlu0 %3734
      %3736 = vset.pattern.permute.xlu0 0
      %3737 = vperm.xlu0 %3736, %v3645
      %v3738 = vpop.permute.xlu0 %3737
      %3739 = vset.pattern.permute.xlu0 0
      %3740 = vperm.xlu0 %3739, %v3646
      %v3741 = vpop.permute.xlu0 %3740
      %3742 = vset.pattern.permute.xlu0 0
      %3743 = vperm.xlu0 %3742, %v3647
      %v3744 = vpop.permute.xlu0 %3743
      %3745 = vset.pattern.permute.xlu0 0
      %3746 = vperm.xlu0 %3745, %v3648
      %v3747 = vpop.permute.xlu0 %3746
      %3748 = vset.pattern.permute.xlu0 0
      %3749 = vperm.xlu0 %3748, %v3649
      %v3750 = vpop.permute.xlu0 %3749
      %3751 = vset.pattern.permute.xlu0 0
      %3752 = vperm.xlu0 %3751, %v3650
      %v3753 = vpop.permute.xlu0 %3752
      %3754 = vset.pattern.permute.xlu0 0
      %3755 = vperm.xlu0 %3754, %v3651
      %v3756 = vpop.permute.xlu0 %3755
      %3757 = vset.pattern.permute.xlu0 0
      %3758 = vperm.xlu0 %3757, %v3652
      %v3759 = vpop.permute.xlu0 %3758
      %3760 = vset.pattern.permute.xlu0 0
      %3761 = vperm.xlu0 %3760, %v3653
      %v3762 = vpop.permute.xlu0 %3761
      %3763 = vset.pattern.permute.xlu0 0
      %3764 = vperm.xlu0 %3763, %v3654
      %v3765 = vpop.permute.xlu0 %3764
      %3766 = vset.pattern.permute.xlu0 0
      %3767 = vperm.xlu0 %3766, %v3655
      %v3768 = vpop.permute.xlu0 %3767
      %3769 = vset.pattern.permute.xlu0 0
      %3770 = vperm.xlu0 %3769, %v3656
      %v3771 = vpop.permute.xlu0 %3770
      %3772 = vset.pattern.permute.xlu0 0
      %3773 = vperm.xlu0 %3772, %v3657
      %v3774 = vpop.permute.xlu0 %3773
      %3775 = vset.pattern.permute.xlu0 0
      %3776 = vperm.xlu0 %3775, %v3658
      %v3777 = vpop.permute.xlu0 %3776
      %3778 = vset.pattern.permute.xlu0 0
      %3779 = vperm.xlu0 %3778, %v3659
      %v3780 = vpop.permute.xlu0 %3779
      %3781 = vset.pattern.permute.xlu0 0
      %3782 = vperm.xlu0 %3781, %v3660
      %v3783 = vpop.permute.xlu0 %3782
      %3784 = vset.pattern.permute.xlu0 0
      %3785 = vperm.xlu0 %3784, %v3661
      %v3786 = vpop.permute.xlu0 %3785
      %3787 = vset.pattern.permute.xlu0 0
      %3788 = vperm.xlu0 %3787, %v3662
      %v3789 = vpop.permute.xlu0 %3788
      %3790 = vset.pattern.permute.xlu0 0
      %3791 = vperm.xlu0 %3790, %v3663
      %v3792 = vpop.permute.xlu0 %3791
      %3793 = vset.pattern.permute.xlu0 0
      %3794 = vperm.xlu0 %3793, %v3664
      %v3795 = vpop.permute.xlu0 %3794
      %3796 = vset.pattern.permute.xlu0 0
      %3797 = vperm.xlu0 %3796, %v3665
      %v3798 = vpop.permute.xlu0 %3797
      %3799 = vset.pattern.permute.xlu0 0
      %3800 = vperm.xlu0 %3799, %v3666
      %v3801 = vpop.permute.xlu0 %3800
      %vm3802 = vcmp.eq.s32.totalorder %v3669, 1
      %vm3803 = vcmp.eq.s32.totalorder %v3672, 1
      %vm3804 = vcmp.eq.s32.totalorder %v3675, 1
      %vm3805 = vcmp.eq.s32.totalorder %v3678, 1
      %vm3806 = vcmp.eq.s32.totalorder %v3681, 1
      %vm3807 = vcmp.eq.s32.totalorder %v3684, 1
      %vm3808 = vcmp.eq.s32.totalorder %v3687, 1
      %vm3809 = vcmp.eq.s32.totalorder %v3690, 1
      %vm3810 = vcmp.eq.s32.totalorder %v3693, 1
      %vm3811 = vcmp.eq.s32.totalorder %v3696, 1
      %vm3812 = vcmp.eq.s32.totalorder %v3699, 1
      %vm3813 = vcmp.eq.s32.totalorder %v3702, 1
      %vm3814 = vcmp.eq.s32.totalorder %v3705, 1
      %vm3815 = vcmp.eq.s32.totalorder %v3708, 1
      %vm3816 = vcmp.eq.s32.totalorder %v3711, 1
      %vm3817 = vcmp.eq.s32.totalorder %v3714, 1
      %vm3818 = vcmp.eq.s32.totalorder %v3717, 1
      %vm3819 = vcmp.eq.s32.totalorder %v3720, 1
      %vm3820 = vcmp.eq.s32.totalorder %v3723, 1
      %vm3821 = vcmp.eq.s32.totalorder %v3726, 1
      %vm3822 = vcmp.eq.s32.totalorder %v3729, 1
      %vm3823 = vcmp.eq.s32.totalorder %v3732, 1
      %vm3824 = vcmp.eq.s32.totalorder %v3735, 1
      %vm3825 = vcmp.eq.s32.totalorder %v3738, 1
      %vm3826 = vcmp.eq.s32.totalorder %v3741, 1
      %vm3827 = vcmp.eq.s32.totalorder %v3744, 1
      %vm3828 = vcmp.eq.s32.totalorder %v3747, 1
      %vm3829 = vcmp.eq.s32.totalorder %v3750, 1
      %vm3830 = vcmp.eq.s32.totalorder %v3753, 1
      %vm3831 = vcmp.eq.s32.totalorder %v3756, 1
      %vm3832 = vcmp.eq.s32.totalorder %v3759, 1
      %vm3833 = vcmp.eq.s32.totalorder %v3762, 1
      %vm3834 = vcmp.eq.s32.totalorder %v3765, 1
      %vm3835 = vcmp.eq.s32.totalorder %v3768, 1
      %vm3836 = vcmp.eq.s32.totalorder %v3771, 1
      %vm3837 = vcmp.eq.s32.totalorder %v3774, 1
      %vm3838 = vcmp.eq.s32.totalorder %v3777, 1
      %vm3839 = vcmp.eq.s32.totalorder %v3780, 1
      %vm3840 = vcmp.eq.s32.totalorder %v3783, 1
      %vm3841 = vcmp.eq.s32.totalorder %v3786, 1
      %vm3842 = vcmp.eq.s32.totalorder %v3789, 1
      %vm3843 = vcmp.eq.s32.totalorder %v3792, 1
      %vm3844 = vcmp.eq.s32.totalorder %v3795, 1
      %vm3845 = vcmp.eq.s32.totalorder %v3798, 1
      %vm3846 = vcmp.eq.s32.totalorder %v3801, 1
      %v3847 = vsel %vm3802, %v3215, 0.0
      %v3848 = vsel %vm3803, %v3216, 0.0
      %v3849 = vsel %vm3804, %v3217, 0.0
      %v3850 = vsel %vm3805, %v3218, 0.0
      %v3851 = vsel %vm3806, %v3219, 0.0
      %v3852 = vsel %vm3807, %v3220, 0.0
      %v3853 = vsel %vm3808, %v3221, 0.0
      %v3854 = vsel %vm3809, %v3222, 0.0
      %v3855 = vsel %vm3810, %v3223, 0.0
      %v3856 = vsel %vm3811, %v3224, 0.0
      %v3857 = vsel %vm3812, %v3225, 0.0
      %v3858 = vsel %vm3813, %v3226, 0.0
      %v3859 = vsel %vm3814, %v3227, 0.0
      %v3860 = vsel %vm3815, %v3228, 0.0
      %v3861 = vsel %vm3816, %v3229, 0.0
      %v3862 = vsel %vm3817, %v3230, 0.0
      %v3863 = vsel %vm3818, %v3231, 0.0
      %v3864 = vsel %vm3819, %v3232, 0.0
      %v3865 = vsel %vm3820, %v3233, 0.0
      %v3866 = vsel %vm3821, %v3234, 0.0
      %v3867 = vsel %vm3822, %v3235, 0.0
      %v3868 = vsel %vm3823, %v3236, 0.0
      %v3869 = vsel %vm3824, %v3237, 0.0
      %v3870 = vsel %vm3825, %v3238, 0.0
      %v3871 = vsel %vm3826, %v3239, 0.0
      %v3872 = vsel %vm3827, %v3240, 0.0
      %v3873 = vsel %vm3828, %v3241, 0.0
      %v3874 = vsel %vm3829, %v3242, 0.0
      %v3875 = vsel %vm3830, %v3243, 0.0
      %v3876 = vsel %vm3831, %v3244, 0.0
      %v3877 = vsel %vm3832, %v3245, 0.0
      %v3878 = vsel %vm3833, %v3246, 0.0
      %v3879 = vsel %vm3834, %v3247, 0.0
      %v3880 = vsel %vm3835, %v3248, 0.0
      %v3881 = vsel %vm3836, %v3249, 0.0
      %v3882 = vsel %vm3837, %v3250, 0.0
      %v3883 = vsel %vm3838, %v3251, 0.0
      %v3884 = vsel %vm3839, %v3252, 0.0
      %v3885 = vsel %vm3840, %v3253, 0.0
      %v3886 = vsel %vm3841, %v3254, 0.0
      %v3887 = vsel %vm3842, %v3255, 0.0
      %v3888 = vsel %vm3843, %v3256, 0.0
      %v3889 = vsel %vm3844, %v3257, 0.0
      %v3890 = vsel %vm3845, %v3258, 0.0
      %v3891 = vsel %vm3846, %v3259, 0.0
      %v3892 = vpack.c.bf16 %v3848, %v3847
      %v3893 = vpack.c.bf16 %v3850, %v3849
      %v3894 = vpack.c.bf16 %v3852, %v3851
      %v3895 = vpack.c.bf16 %v3854, %v3853
      %v3896 = vpack.c.bf16 %v3856, %v3855
      %v3897 = vpack.c.bf16 %v3858, %v3857
      %v3898 = vpack.c.bf16 %v3860, %v3859
      %v3899 = vpack.c.bf16 %v3862, %v3861
      %v3900 = vpack.c.bf16 %v3864, %v3863
      %v3901 = vpack.c.bf16 %v3866, %v3865
      %v3902 = vpack.c.bf16 %v3868, %v3867
      %v3903 = vpack.c.bf16 %v3870, %v3869
      %v3904 = vpack.c.bf16 %v3872, %v3871
      %v3905 = vpack.c.bf16 %v3874, %v3873
      %v3906 = vpack.c.bf16 %v3876, %v3875
      %v3907 = vpack.c.bf16 %v3878, %v3877
      %v3908 = vpack.c.bf16 %v3880, %v3879
      %v3909 = vpack.c.bf16 %v3882, %v3881
      %v3910 = vpack.c.bf16 %v3884, %v3883
      %v3911 = vpack.c.bf16 %v3886, %v3885
      %v3912 = vpack.c.bf16 %v3888, %v3887
      %v3913 = vpack.c.bf16 %v3890, %v3889
      %v3914 = vpack.c.bf16 %v3891, %v3891
      %v3938 = vunpack.c.l.b16 %v3892
      %v3939 = vunpack.c.h.b16 %v3892
      %v3940 = vunpack.c.l.b16 %v3893
      %v3941 = vunpack.c.h.b16 %v3893
      %v3942 = vunpack.c.l.b16 %v3894
      %v3943 = vunpack.c.h.b16 %v3894
      %v3944 = vunpack.c.l.b16 %v3895
      %v3945 = vunpack.c.h.b16 %v3895
      %v3946 = vunpack.c.l.b16 %v3896
      %v3947 = vunpack.c.h.b16 %v3896
      %v3948 = vunpack.c.l.b16 %v3897
      %v3949 = vunpack.c.h.b16 %v3897
      %v3950 = vunpack.c.l.b16 %v3898
      %v3951 = vunpack.c.h.b16 %v3898
      %v3952 = vunpack.c.l.b16 %v3899
      %v3953 = vunpack.c.h.b16 %v3899
      %v3954 = vunpack.c.l.b16 %v3900
      %v3955 = vunpack.c.h.b16 %v3900
      %v3956 = vunpack.c.l.b16 %v3901
      %v3957 = vunpack.c.h.b16 %v3901
      %v3958 = vunpack.c.l.b16 %v3902
      %v3959 = vunpack.c.h.b16 %v3902
      %v3960 = vunpack.c.l.b16 %v3903
      %v3961 = vunpack.c.h.b16 %v3903
      %v3962 = vunpack.c.l.b16 %v3904
      %v3963 = vunpack.c.h.b16 %v3904
      %v3964 = vunpack.c.l.b16 %v3905
      %v3965 = vunpack.c.h.b16 %v3905
      %v3966 = vunpack.c.l.b16 %v3906
      %v3967 = vunpack.c.h.b16 %v3906
      %v3968 = vunpack.c.l.b16 %v3907
      %v3969 = vunpack.c.h.b16 %v3907
      %v3970 = vunpack.c.l.b16 %v3908
      %v3971 = vunpack.c.h.b16 %v3908
      %v3972 = vunpack.c.l.b16 %v3909
      %v3973 = vunpack.c.h.b16 %v3909
      %v3974 = vunpack.c.l.b16 %v3910
      %v3975 = vunpack.c.h.b16 %v3910
      %v3976 = vunpack.c.l.b16 %v3911
      %v3977 = vunpack.c.h.b16 %v3911
      %v3978 = vunpack.c.l.b16 %v3912
      %v3979 = vunpack.c.h.b16 %v3912
      %v3980 = vunpack.c.l.b16 %v3913
      %v3981 = vunpack.c.h.b16 %v3913
      %v3982 = vunpack.c.l.b16 %v3914
      %v3983 = vpack.c.b16 %v3938, %v3938
      %v3984 = vpack.c.b16 %v3939, %v3939
      %v3985 = vpack.c.b16 %v3940, %v3940
      %v3986 = vpack.c.b16 %v3941, %v3941
      %v3987 = vpack.c.b16 %v3942, %v3942
      %v3988 = vpack.c.b16 %v3943, %v3943
      %v3989 = vpack.c.b16 %v3944, %v3944
      %v3990 = vpack.c.b16 %v3945, %v3945
      %v3991 = vpack.c.b16 %v3946, %v3946
      %v3992 = vpack.c.b16 %v3947, %v3947
      %v3993 = vpack.c.b16 %v3948, %v3948
      %v3994 = vpack.c.b16 %v3949, %v3949
      %v3995 = vpack.c.b16 %v3950, %v3950
      %v3996 = vpack.c.b16 %v3951, %v3951
      %v3997 = vpack.c.b16 %v3952, %v3952
      %v3998 = vpack.c.b16 %v3953, %v3953
      %v3999 = vpack.c.b16 %v3954, %v3954
      %v4000 = vpack.c.b16 %v3955, %v3955
      %v4001 = vpack.c.b16 %v3956, %v3956
      %v4002 = vpack.c.b16 %v3957, %v3957
      %v4003 = vpack.c.b16 %v3958, %v3958
      %v4004 = vpack.c.b16 %v3959, %v3959
      %v4005 = vpack.c.b16 %v3960, %v3960
      %v4006 = vpack.c.b16 %v3961, %v3961
      %v4007 = vpack.c.b16 %v3962, %v3962
      %v4008 = vpack.c.b16 %v3963, %v3963
      %v4009 = vpack.c.b16 %v3964, %v3964
      %v4010 = vpack.c.b16 %v3965, %v3965
      %v4011 = vpack.c.b16 %v3966, %v3966
      %v4012 = vpack.c.b16 %v3967, %v3967
      %v4013 = vpack.c.b16 %v3968, %v3968
      %v4014 = vpack.c.b16 %v3969, %v3969
      %v4015 = vpack.c.b16 %v3970, %v3970
      %v4016 = vpack.c.b16 %v3971, %v3971
      %v4017 = vpack.c.b16 %v3972, %v3972
      %v4018 = vpack.c.b16 %v3973, %v3973
      %v4019 = vpack.c.b16 %v3974, %v3974
      %v4020 = vpack.c.b16 %v3975, %v3975
      %v4021 = vpack.c.b16 %v3976, %v3976
      %v4022 = vpack.c.b16 %v3977, %v3977
      %v4023 = vpack.c.b16 %v3978, %v3978
      %v4024 = vpack.c.b16 %v3979, %v3979
      %v4025 = vpack.c.b16 %v3980, %v3980
      %v4026 = vpack.c.b16 %v3981, %v3981
      %v4027 = vpack.c.b16 %v3982, %v3982
      %vm4028 = vsmask.f32 1280
      %vm4029 = vsmask.f32 5392
      %vm4030 = vmor %vm4028, %vm4029
      %v4032 = vshrl.u32 %v3983, 16
      %v4034 = vrot.slane %v4032, 6
      %v4035 = vshll.u32 %v3983, 16
      %v4037 = vrot.slane %v4035, 7
      %v4038 = vor.u32 %v4034, %v4037
      %v4039 = vrot.slane %v4038, 4
      %v4041 = vshrl.u32 %v3984, 16
      %v4043 = vrot.slane %v4041, 6
      %v4044 = vshll.u32 %v3984, 16
      %v4046 = vrot.slane %v4044, 7
      %v4047 = vor.u32 %v4043, %v4046
      %v4048 = vsel %vm4030, %v4039, %v4047
      %v4049 = vrot.slane %v4047, 4
      %v4051 = vshrl.u32 %v3985, 16
      %v4053 = vrot.slane %v4051, 6
      %v4054 = vshll.u32 %v3985, 16
      %v4056 = vrot.slane %v4054, 7
      %v4057 = vor.u32 %v4053, %v4056
      %v4058 = vsel %vm4030, %v4049, %v4057
      %v4059 = vrot.slane %v4057, 4
      %v4061 = vshrl.u32 %v3986, 16
      %v4063 = vrot.slane %v4061, 6
      %v4064 = vshll.u32 %v3986, 16
      %v4066 = vrot.slane %v4064, 7
      %v4067 = vor.u32 %v4063, %v4066
      %v4068 = vsel %vm4030, %v4059, %v4067
      %v4069 = vrot.slane %v4067, 4
      %v4071 = vshrl.u32 %v3987, 16
      %v4073 = vrot.slane %v4071, 6
      %v4074 = vshll.u32 %v3987, 16
      %v4076 = vrot.slane %v4074, 7
      %v4077 = vor.u32 %v4073, %v4076
      %v4078 = vsel %vm4030, %v4069, %v4077
      %v4079 = vrot.slane %v4077, 4
      %v4081 = vshrl.u32 %v3988, 16
      %v4083 = vrot.slane %v4081, 6
      %v4084 = vshll.u32 %v3988, 16
      %v4086 = vrot.slane %v4084, 7
      %v4087 = vor.u32 %v4083, %v4086
      %v4088 = vsel %vm4030, %v4079, %v4087
      %v4089 = vrot.slane %v4087, 4
      %v4091 = vshrl.u32 %v3989, 16
      %v4093 = vrot.slane %v4091, 6
      %v4094 = vshll.u32 %v3989, 16
      %v4096 = vrot.slane %v4094, 7
      %v4097 = vor.u32 %v4093, %v4096
      %v4098 = vsel %vm4030, %v4089, %v4097
      %v4099 = vrot.slane %v4097, 4
      %v4101 = vshrl.u32 %v3990, 16
      %v4103 = vrot.slane %v4101, 6
      %v4104 = vshll.u32 %v3990, 16
      %v4106 = vrot.slane %v4104, 7
      %v4107 = vor.u32 %v4103, %v4106
      %v4108 = vsel %vm4030, %v4099, %v4107
      %v4109 = vrot.slane %v4107, 4
      %v4111 = vshrl.u32 %v3991, 16
      %v4113 = vrot.slane %v4111, 6
      %v4114 = vshll.u32 %v3991, 16
      %v4116 = vrot.slane %v4114, 7
      %v4117 = vor.u32 %v4113, %v4116
      %v4118 = vsel %vm4030, %v4109, %v4117
      %v4119 = vrot.slane %v4117, 4
      %v4121 = vshrl.u32 %v3992, 16
      %v4123 = vrot.slane %v4121, 6
      %v4124 = vshll.u32 %v3992, 16
      %v4126 = vrot.slane %v4124, 7
      %v4127 = vor.u32 %v4123, %v4126
      %v4128 = vsel %vm4030, %v4119, %v4127
      %v4129 = vrot.slane %v4127, 4
      %v4131 = vshrl.u32 %v3993, 16
      %v4133 = vrot.slane %v4131, 6
      %v4134 = vshll.u32 %v3993, 16
      %v4136 = vrot.slane %v4134, 7
      %v4137 = vor.u32 %v4133, %v4136
      %v4138 = vsel %vm4030, %v4129, %v4137
      %v4139 = vrot.slane %v4137, 4
      %v4141 = vshrl.u32 %v3994, 16
      %v4143 = vrot.slane %v4141, 6
      %v4144 = vshll.u32 %v3994, 16
      %v4146 = vrot.slane %v4144, 7
      %v4147 = vor.u32 %v4143, %v4146
      %v4148 = vsel %vm4030, %v4139, %v4147
      %v4149 = vrot.slane %v4147, 4
      %v4151 = vshrl.u32 %v3995, 16
      %v4153 = vrot.slane %v4151, 6
      %v4154 = vshll.u32 %v3995, 16
      %v4156 = vrot.slane %v4154, 7
      %v4157 = vor.u32 %v4153, %v4156
      %v4158 = vsel %vm4030, %v4149, %v4157
      %v4159 = vrot.slane %v4157, 4
      %v4161 = vshrl.u32 %v3996, 16
      %v4163 = vrot.slane %v4161, 6
      %v4164 = vshll.u32 %v3996, 16
      %v4166 = vrot.slane %v4164, 7
      %v4167 = vor.u32 %v4163, %v4166
      %v4168 = vsel %vm4030, %v4159, %v4167
      %v4169 = vrot.slane %v4167, 4
      %v4171 = vshrl.u32 %v3997, 16
      %v4173 = vrot.slane %v4171, 6
      %v4174 = vshll.u32 %v3997, 16
      %v4176 = vrot.slane %v4174, 7
      %v4177 = vor.u32 %v4173, %v4176
      %v4178 = vsel %vm4030, %v4169, %v4177
      %v4179 = vrot.slane %v4177, 4
      %v4181 = vshrl.u32 %v3998, 16
      %v4183 = vrot.slane %v4181, 6
      %v4184 = vshll.u32 %v3998, 16
      %v4186 = vrot.slane %v4184, 7
      %v4187 = vor.u32 %v4183, %v4186
      %v4188 = vsel %vm4030, %v4179, %v4187
      %v4189 = vrot.slane %v4187, 4
      %v4191 = vshrl.u32 %v3999, 16
      %v4193 = vrot.slane %v4191, 6
      %v4194 = vshll.u32 %v3999, 16
      %v4196 = vrot.slane %v4194, 7
      %v4197 = vor.u32 %v4193, %v4196
      %v4198 = vsel %vm4030, %v4189, %v4197
      %v4199 = vrot.slane %v4197, 4
      %v4201 = vshrl.u32 %v4000, 16
      %v4203 = vrot.slane %v4201, 6
      %v4204 = vshll.u32 %v4000, 16
      %v4206 = vrot.slane %v4204, 7
      %v4207 = vor.u32 %v4203, %v4206
      %v4208 = vsel %vm4030, %v4199, %v4207
      %v4209 = vrot.slane %v4207, 4
      %v4211 = vshrl.u32 %v4001, 16
      %v4213 = vrot.slane %v4211, 6
      %v4214 = vshll.u32 %v4001, 16
      %v4216 = vrot.slane %v4214, 7
      %v4217 = vor.u32 %v4213, %v4216
      %v4218 = vsel %vm4030, %v4209, %v4217
      %v4219 = vrot.slane %v4217, 4
      %v4221 = vshrl.u32 %v4002, 16
      %v4223 = vrot.slane %v4221, 6
      %v4224 = vshll.u32 %v4002, 16
      %v4226 = vrot.slane %v4224, 7
      %v4227 = vor.u32 %v4223, %v4226
      %v4228 = vsel %vm4030, %v4219, %v4227
      %v4229 = vrot.slane %v4227, 4
      %v4231 = vshrl.u32 %v4003, 16
      %v4233 = vrot.slane %v4231, 6
      %v4234 = vshll.u32 %v4003, 16
      %v4236 = vrot.slane %v4234, 7
      %v4237 = vor.u32 %v4233, %v4236
      %v4238 = vsel %vm4030, %v4229, %v4237
      %v4239 = vrot.slane %v4237, 4
      %v4241 = vshrl.u32 %v4004, 16
      %v4243 = vrot.slane %v4241, 6
      %v4244 = vshll.u32 %v4004, 16
      %v4246 = vrot.slane %v4244, 7
      %v4247 = vor.u32 %v4243, %v4246
      %v4248 = vsel %vm4030, %v4239, %v4247
      %v4249 = vrot.slane %v4247, 4
      %v4251 = vshrl.u32 %v4005, 16
      %v4253 = vrot.slane %v4251, 6
      %v4254 = vshll.u32 %v4005, 16
      %v4256 = vrot.slane %v4254, 7
      %v4257 = vor.u32 %v4253, %v4256
      %v4258 = vsel %vm4030, %v4249, %v4257
      %v4259 = vrot.slane %v4257, 4
      %v4261 = vshrl.u32 %v4006, 16
      %v4263 = vrot.slane %v4261, 6
      %v4264 = vshll.u32 %v4006, 16
      %v4266 = vrot.slane %v4264, 7
      %v4267 = vor.u32 %v4263, %v4266
      %v4268 = vsel %vm4030, %v4259, %v4267
      %v4269 = vrot.slane %v4267, 4
      %v4271 = vshrl.u32 %v4007, 16
      %v4273 = vrot.slane %v4271, 6
      %v4274 = vshll.u32 %v4007, 16
      %v4276 = vrot.slane %v4274, 7
      %v4277 = vor.u32 %v4273, %v4276
      %v4278 = vsel %vm4030, %v4269, %v4277
      %v4279 = vrot.slane %v4277, 4
      %v4281 = vshrl.u32 %v4008, 16
      %v4283 = vrot.slane %v4281, 6
      %v4284 = vshll.u32 %v4008, 16
      %v4286 = vrot.slane %v4284, 7
      %v4287 = vor.u32 %v4283, %v4286
      %v4288 = vsel %vm4030, %v4279, %v4287
      %v4289 = vrot.slane %v4287, 4
      %v4291 = vshrl.u32 %v4009, 16
      %v4293 = vrot.slane %v4291, 6
      %v4294 = vshll.u32 %v4009, 16
      %v4296 = vrot.slane %v4294, 7
      %v4297 = vor.u32 %v4293, %v4296
      %v4298 = vsel %vm4030, %v4289, %v4297
      %v4299 = vrot.slane %v4297, 4
      %v4301 = vshrl.u32 %v4010, 16
      %v4303 = vrot.slane %v4301, 6
      %v4304 = vshll.u32 %v4010, 16
      %v4306 = vrot.slane %v4304, 7
      %v4307 = vor.u32 %v4303, %v4306
      %v4308 = vsel %vm4030, %v4299, %v4307
      %v4309 = vrot.slane %v4307, 4
      %v4311 = vshrl.u32 %v4011, 16
      %v4313 = vrot.slane %v4311, 6
      %v4314 = vshll.u32 %v4011, 16
      %v4316 = vrot.slane %v4314, 7
      %v4317 = vor.u32 %v4313, %v4316
      %v4318 = vsel %vm4030, %v4309, %v4317
      %v4319 = vrot.slane %v4317, 4
      %v4321 = vshrl.u32 %v4012, 16
      %v4323 = vrot.slane %v4321, 6
      %v4324 = vshll.u32 %v4012, 16
      %v4326 = vrot.slane %v4324, 7
      %v4327 = vor.u32 %v4323, %v4326
      %v4328 = vsel %vm4030, %v4319, %v4327
      %v4329 = vrot.slane %v4327, 4
      %v4331 = vshrl.u32 %v4013, 16
      %v4333 = vrot.slane %v4331, 6
      %v4334 = vshll.u32 %v4013, 16
      %v4336 = vrot.slane %v4334, 7
      %v4337 = vor.u32 %v4333, %v4336
      %v4338 = vsel %vm4030, %v4329, %v4337
      %v4339 = vrot.slane %v4337, 4
      %v4341 = vshrl.u32 %v4014, 16
      %v4343 = vrot.slane %v4341, 6
      %v4344 = vshll.u32 %v4014, 16
      %v4346 = vrot.slane %v4344, 7
      %v4347 = vor.u32 %v4343, %v4346
      %v4348 = vsel %vm4030, %v4339, %v4347
      %v4349 = vrot.slane %v4347, 4
      %v4351 = vshrl.u32 %v4015, 16
      %v4353 = vrot.slane %v4351, 6
      %v4354 = vshll.u32 %v4015, 16
      %v4356 = vrot.slane %v4354, 7
      %v4357 = vor.u32 %v4353, %v4356
      %v4358 = vsel %vm4030, %v4349, %v4357
      %v4359 = vrot.slane %v4357, 4
      %v4361 = vshrl.u32 %v4016, 16
      %v4363 = vrot.slane %v4361, 6
      %v4364 = vshll.u32 %v4016, 16
      %v4366 = vrot.slane %v4364, 7
      %v4367 = vor.u32 %v4363, %v4366
      %v4368 = vsel %vm4030, %v4359, %v4367
      %v4369 = vrot.slane %v4367, 4
      %v4371 = vshrl.u32 %v4017, 16
      %v4373 = vrot.slane %v4371, 6
      %v4374 = vshll.u32 %v4017, 16
      %v4376 = vrot.slane %v4374, 7
      %v4377 = vor.u32 %v4373, %v4376
      %v4378 = vsel %vm4030, %v4369, %v4377
      %v4379 = vrot.slane %v4377, 4
      %v4381 = vshrl.u32 %v4018, 16
      %v4383 = vrot.slane %v4381, 6
      %v4384 = vshll.u32 %v4018, 16
      %v4386 = vrot.slane %v4384, 7
      %v4387 = vor.u32 %v4383, %v4386
      %v4388 = vsel %vm4030, %v4379, %v4387
      %v4389 = vrot.slane %v4387, 4
      %v4391 = vshrl.u32 %v4019, 16
      %v4393 = vrot.slane %v4391, 6
      %v4394 = vshll.u32 %v4019, 16
      %v4396 = vrot.slane %v4394, 7
      %v4397 = vor.u32 %v4393, %v4396
      %v4398 = vsel %vm4030, %v4389, %v4397
      %v4399 = vrot.slane %v4397, 4
      %v4401 = vshrl.u32 %v4020, 16
      %v4403 = vrot.slane %v4401, 6
      %v4404 = vshll.u32 %v4020, 16
      %v4406 = vrot.slane %v4404, 7
      %v4407 = vor.u32 %v4403, %v4406
      %v4408 = vsel %vm4030, %v4399, %v4407
      %v4409 = vrot.slane %v4407, 4
      %v4411 = vshrl.u32 %v4021, 16
      %v4413 = vrot.slane %v4411, 6
      %v4414 = vshll.u32 %v4021, 16
      %v4416 = vrot.slane %v4414, 7
      %v4417 = vor.u32 %v4413, %v4416
      %v4418 = vsel %vm4030, %v4409, %v4417
      %v4419 = vrot.slane %v4417, 4
      %v4421 = vshrl.u32 %v4022, 16
      %v4423 = vrot.slane %v4421, 6
      %v4424 = vshll.u32 %v4022, 16
      %v4426 = vrot.slane %v4424, 7
      %v4427 = vor.u32 %v4423, %v4426
      %v4428 = vsel %vm4030, %v4419, %v4427
      %v4429 = vrot.slane %v4427, 4
      %v4431 = vshrl.u32 %v4023, 16
      %v4433 = vrot.slane %v4431, 6
      %v4434 = vshll.u32 %v4023, 16
      %v4436 = vrot.slane %v4434, 7
      %v4437 = vor.u32 %v4433, %v4436
      %v4438 = vsel %vm4030, %v4429, %v4437
      %v4439 = vrot.slane %v4437, 4
      %v4441 = vshrl.u32 %v4024, 16
      %v4443 = vrot.slane %v4441, 6
      %v4444 = vshll.u32 %v4024, 16
      %v4446 = vrot.slane %v4444, 7
      %v4447 = vor.u32 %v4443, %v4446
      %v4448 = vsel %vm4030, %v4439, %v4447
      %v4449 = vrot.slane %v4447, 4
      %v4451 = vshrl.u32 %v4025, 16
      %v4453 = vrot.slane %v4451, 6
      %v4454 = vshll.u32 %v4025, 16
      %v4456 = vrot.slane %v4454, 7
      %v4457 = vor.u32 %v4453, %v4456
      %v4458 = vsel %vm4030, %v4449, %v4457
      %v4459 = vrot.slane %v4457, 4
      %v4461 = vshrl.u32 %v4026, 16
      %v4463 = vrot.slane %v4461, 6
      %v4464 = vshll.u32 %v4026, 16
      %v4466 = vrot.slane %v4464, 7
      %v4467 = vor.u32 %v4463, %v4466
      %v4468 = vsel %vm4030, %v4459, %v4467
      %v4469 = vrot.slane %v4467, 4
      %v4471 = vshrl.u32 %v4027, 16
      %v4473 = vrot.slane %v4471, 6
      %v4474 = vshll.u32 %v4027, 16
      %v4476 = vrot.slane %v4474, 7
      %v4477 = vor.u32 %v4473, %v4476
      %v4478 = vsel %vm4030, %v4469, %v4477
      %v4479 = vrot.slane %v4477, 4
      %4480 = vrot.lane.b32.xlu0 %v4038, 64
      %v4481 = vpop.permute.xlu0 %4480
      %4482 = vrot.lane.b32.xlu0 %v4048, 64
      %v4483 = vpop.permute.xlu0 %4482
      %4484 = vrot.lane.b32.xlu0 %v4058, 64
      %v4485 = vpop.permute.xlu0 %4484
      %4486 = vrot.lane.b32.xlu0 %v4068, 64
      %v4487 = vpop.permute.xlu0 %4486
      %4488 = vrot.lane.b32.xlu0 %v4078, 64
      %v4489 = vpop.permute.xlu0 %4488
      %4490 = vrot.lane.b32.xlu0 %v4088, 64
      %v4491 = vpop.permute.xlu0 %4490
      %4492 = vrot.lane.b32.xlu0 %v4098, 64
      %v4493 = vpop.permute.xlu0 %4492
      %4494 = vrot.lane.b32.xlu0 %v4108, 64
      %v4495 = vpop.permute.xlu0 %4494
      %4496 = vrot.lane.b32.xlu0 %v4118, 64
      %v4497 = vpop.permute.xlu0 %4496
      %4498 = vrot.lane.b32.xlu0 %v4128, 64
      %v4499 = vpop.permute.xlu0 %4498
      %4500 = vrot.lane.b32.xlu0 %v4138, 64
      %v4501 = vpop.permute.xlu0 %4500
      %4502 = vrot.lane.b32.xlu0 %v4148, 64
      %v4503 = vpop.permute.xlu0 %4502
      %4504 = vrot.lane.b32.xlu0 %v4158, 64
      %v4505 = vpop.permute.xlu0 %4504
      %4506 = vrot.lane.b32.xlu0 %v4168, 64
      %v4507 = vpop.permute.xlu0 %4506
      %4508 = vrot.lane.b32.xlu0 %v4178, 64
      %v4509 = vpop.permute.xlu0 %4508
      %4510 = vrot.lane.b32.xlu0 %v4188, 64
      %v4511 = vpop.permute.xlu0 %4510
      %4512 = vrot.lane.b32.xlu0 %v4198, 64
      %v4513 = vpop.permute.xlu0 %4512
      %4514 = vrot.lane.b32.xlu0 %v4208, 64
      %v4515 = vpop.permute.xlu0 %4514
      %4516 = vrot.lane.b32.xlu0 %v4218, 64
      %v4517 = vpop.permute.xlu0 %4516
      %4518 = vrot.lane.b32.xlu0 %v4228, 64
      %v4519 = vpop.permute.xlu0 %4518
      %4520 = vrot.lane.b32.xlu0 %v4238, 64
      %v4521 = vpop.permute.xlu0 %4520
      %4522 = vrot.lane.b32.xlu0 %v4248, 64
      %v4523 = vpop.permute.xlu0 %4522
      %4524 = vrot.lane.b32.xlu0 %v4258, 64
      %v4525 = vpop.permute.xlu0 %4524
      %4526 = vrot.lane.b32.xlu0 %v4268, 64
      %v4527 = vpop.permute.xlu0 %4526
      %4528 = vrot.lane.b32.xlu0 %v4278, 64
      %v4529 = vpop.permute.xlu0 %4528
      %4530 = vrot.lane.b32.xlu0 %v4288, 64
      %v4531 = vpop.permute.xlu0 %4530
      %4532 = vrot.lane.b32.xlu0 %v4298, 64
      %v4533 = vpop.permute.xlu0 %4532
      %4534 = vrot.lane.b32.xlu0 %v4308, 64
      %v4535 = vpop.permute.xlu0 %4534
      %4536 = vrot.lane.b32.xlu0 %v4318, 64
      %v4537 = vpop.permute.xlu0 %4536
      %4538 = vrot.lane.b32.xlu0 %v4328, 64
      %v4539 = vpop.permute.xlu0 %4538
      %4540 = vrot.lane.b32.xlu0 %v4338, 64
      %v4541 = vpop.permute.xlu0 %4540
      %4542 = vrot.lane.b32.xlu0 %v4348, 64
      %v4543 = vpop.permute.xlu0 %4542
      %4544 = vrot.lane.b32.xlu0 %v4358, 64
      %v4545 = vpop.permute.xlu0 %4544
      %4546 = vrot.lane.b32.xlu0 %v4368, 64
      %v4547 = vpop.permute.xlu0 %4546
      %4548 = vrot.lane.b32.xlu0 %v4378, 64
      %v4549 = vpop.permute.xlu0 %4548
      %4550 = vrot.lane.b32.xlu0 %v4388, 64
      %v4551 = vpop.permute.xlu0 %4550
      %4552 = vrot.lane.b32.xlu0 %v4398, 64
      %v4553 = vpop.permute.xlu0 %4552
      %4554 = vrot.lane.b32.xlu0 %v4408, 64
      %v4555 = vpop.permute.xlu0 %4554
      %4556 = vrot.lane.b32.xlu0 %v4418, 64
      %v4557 = vpop.permute.xlu0 %4556
      %4558 = vrot.lane.b32.xlu0 %v4428, 64
      %v4559 = vpop.permute.xlu0 %4558
      %4560 = vrot.lane.b32.xlu0 %v4438, 64
      %v4561 = vpop.permute.xlu0 %4560
      %4562 = vrot.lane.b32.xlu0 %v4448, 64
      %v4563 = vpop.permute.xlu0 %4562
      %4564 = vrot.lane.b32.xlu0 %v4458, 64
      %v4565 = vpop.permute.xlu0 %4564
      %4566 = vrot.lane.b32.xlu0 %v4468, 64
      %v4567 = vpop.permute.xlu0 %4566
      %4568 = vrot.lane.b32.xlu0 %v4478, 64
      %v4569 = vpop.permute.xlu0 %4568
      %4570 = vrot.lane.b32.xlu0 %v4479, 64
      %v4571 = vpop.permute.xlu0 %4570
      %vm4618 = vcmask 650753
      %vm4619 = vsmask.f32 7942
      %vm4620 = vmand %vm4618, %vm4619
      %v4621 = vld [vmem:[#allocation2 + $0x8] sm:$0xe]
      %v4622 = vsel %vm4620, %v4481, %v4621
      %4623 = vst [vmem:[#allocation2 + $0x8] sm:$0xe] %v4622
      %vm4624 = vcmask 650752
      %4625 = vst.msk [vmem:[#allocation2 + $0xc] sm:$0xf] %vm4624, %v4483
      %4626 = vst.msk [vmem:[#allocation2 + $0x10] sm:$0xf] %vm4624, %v4485
      %4627 = vst.msk [vmem:[#allocation2 + $0x14] sm:$0xf] %vm4624, %v4487
      %4628 = vst.msk [vmem:[#allocation2 + $0x18] sm:$0xf] %vm4624, %v4489
      %4629 = vst.msk [vmem:[#allocation2 + $0x1c] sm:$0xf] %vm4624, %v4491
      %4630 = vst.msk [vmem:[#allocation2 + $0x20] sm:$0xf] %vm4624, %v4493
      %4631 = vst.msk [vmem:[#allocation2 + $0x24] sm:$0xf] %vm4624, %v4495
      %4632 = vst.msk [vmem:[#allocation2 + $0x28] sm:$0xf] %vm4624, %v4497
      %4633 = vst.msk [vmem:[#allocation2 + $0x2c] sm:$0xf] %vm4624, %v4499
      %4634 = vst.msk [vmem:[#allocation2 + $0x30] sm:$0xf] %vm4624, %v4501
      %4635 = vst.msk [vmem:[#allocation2 + $0x34] sm:$0xf] %vm4624, %v4503
      %4636 = vst.msk [vmem:[#allocation2 + $0x38] sm:$0xf] %vm4624, %v4505
      %4637 = vst.msk [vmem:[#allocation2 + $0x3c] sm:$0xf] %vm4624, %v4507
      %4638 = vst.msk [vmem:[#allocation2 + $0x40] sm:$0xf] %vm4624, %v4509
      %4639 = vst.msk [vmem:[#allocation2 + $0x44] sm:$0xf] %vm4624, %v4511
      %4640 = vst.msk [vmem:[#allocation2 + $0x48] sm:$0xf] %vm4624, %v4513
      %4641 = vst.msk [vmem:[#allocation2 + $0x4c] sm:$0xf] %vm4624, %v4515
      %4642 = vst.msk [vmem:[#allocation2 + $0x50] sm:$0xf] %vm4624, %v4517
      %4643 = vst.msk [vmem:[#allocation2 + $0x54] sm:$0xf] %vm4624, %v4519
      %4644 = vst.msk [vmem:[#allocation2 + $0x58] sm:$0xf] %vm4624, %v4521
      %4645 = vst.msk [vmem:[#allocation2 + $0x5c] sm:$0xf] %vm4624, %v4523
      %4646 = vst.msk [vmem:[#allocation2 + $0x60] sm:$0xf] %vm4624, %v4525
      %4647 = vst.msk [vmem:[#allocation2 + $0x64] sm:$0xf] %vm4624, %v4527
      %4648 = vst.msk [vmem:[#allocation2 + $0x68] sm:$0xf] %vm4624, %v4529
      %4649 = vst.msk [vmem:[#allocation2 + $0x6c] sm:$0xf] %vm4624, %v4531
      %4650 = vst.msk [vmem:[#allocation2 + $0x70] sm:$0xf] %vm4624, %v4533
      %4651 = vst.msk [vmem:[#allocation2 + $0x74] sm:$0xf] %vm4624, %v4535
      %4652 = vst.msk [vmem:[#allocation2 + $0x78] sm:$0xf] %vm4624, %v4537
      %4653 = vst.msk [vmem:[#allocation2 + $0x7c] sm:$0xf] %vm4624, %v4539
      %4654 = vst.msk [vmem:[#allocation2 + $0x80] sm:$0xf] %vm4624, %v4541
      %4655 = vst.msk [vmem:[#allocation2 + $0x84] sm:$0xf] %vm4624, %v4543
      %4656 = vst.msk [vmem:[#allocation2 + $0x88] sm:$0xf] %vm4624, %v4545
      %4657 = vst.msk [vmem:[#allocation2 + $0x8c] sm:$0xf] %vm4624, %v4547
      %4658 = vst.msk [vmem:[#allocation2 + $0x90] sm:$0xf] %vm4624, %v4549
      %4659 = vst.msk [vmem:[#allocation2 + $0x94] sm:$0xf] %vm4624, %v4551
      %4660 = vst.msk [vmem:[#allocation2 + $0x98] sm:$0xf] %vm4624, %v4553
      %4661 = vst.msk [vmem:[#allocation2 + $0x9c] sm:$0xf] %vm4624, %v4555
      %4662 = vst.msk [vmem:[#allocation2 + $0xa0] sm:$0xf] %vm4624, %v4557
      %4663 = vst.msk [vmem:[#allocation2 + $0xa4] sm:$0xf] %vm4624, %v4559
      %4664 = vst.msk [vmem:[#allocation2 + $0xa8] sm:$0xf] %vm4624, %v4561
      %4665 = vst.msk [vmem:[#allocation2 + $0xac] sm:$0xf] %vm4624, %v4563
      %4666 = vst.msk [vmem:[#allocation2 + $0xb0] sm:$0xf] %vm4624, %v4565
      %4667 = vst.msk [vmem:[#allocation2 + $0xb4] sm:$0xf] %vm4624, %v4567
      %4668 = vst.msk [vmem:[#allocation2 + $0xb8] sm:$0xf] %vm4624, %v4569
      %vm4669 = vcmask 648704
      %vm4670 = vmand %vm4669, %vm4028
      %v4671 = vld [vmem:[#allocation2 + $0xbc] sm:$0x3]
      %v4672 = vsel %vm4670, %v4571, %v4671
      %4673 = vst [vmem:[#allocation2 + $0xbc] sm:$0x3] %v4672
      %v4674 = vld [vmem:[#allocation2 + $0x8] sm:$0xe]
      %v4675 = vld [vmem:[#allocation2 + $0xc] sm:$0xf]
      %v4676 = vld [vmem:[#allocation2 + $0x10] sm:$0xf]
      %v4677 = vld [vmem:[#allocation2 + $0x14] sm:$0xf]
      %v4678 = vld [vmem:[#allocation2 + $0x18] sm:$0xf]
      %v4679 = vld [vmem:[#allocation2 + $0x1c] sm:$0xf]
      %v4680 = vld [vmem:[#allocation2 + $0x20] sm:$0xf]
      %v4681 = vld [vmem:[#allocation2 + $0x24] sm:$0xf]
      %v4682 = vld [vmem:[#allocation2 + $0x28] sm:$0xf]
      %v4683 = vld [vmem:[#allocation2 + $0x2c] sm:$0xf]
      %v4684 = vld [vmem:[#allocation2 + $0x30] sm:$0xf]
      %v4685 = vld [vmem:[#allocation2 + $0x34] sm:$0xf]
      %v4686 = vld [vmem:[#allocation2 + $0x38] sm:$0xf]
      %v4687 = vld [vmem:[#allocation2 + $0x3c] sm:$0xf]
      %v4688 = vld [vmem:[#allocation2 + $0x40] sm:$0xf]
      %v4689 = vld [vmem:[#allocation2 + $0x44] sm:$0xf]
      %v4690 = vld [vmem:[#allocation2 + $0x48] sm:$0xf]
      %v4691 = vld [vmem:[#allocation2 + $0x4c] sm:$0xf]
      %v4692 = vld [vmem:[#allocation2 + $0x50] sm:$0xf]
      %v4693 = vld [vmem:[#allocation2 + $0x54] sm:$0xf]
      %v4694 = vld [vmem:[#allocation2 + $0x58] sm:$0xf]
      %v4695 = vld [vmem:[#allocation2 + $0x5c] sm:$0xf]
      %v4696 = vld [vmem:[#allocation2 + $0x60] sm:$0xf]
      %v4697 = vld [vmem:[#allocation2 + $0x64] sm:$0xf]
      %v4698 = vld [vmem:[#allocation2 + $0x68] sm:$0xf]
      %v4699 = vld [vmem:[#allocation2 + $0x6c] sm:$0xf]
      %v4700 = vld [vmem:[#allocation2 + $0x70] sm:$0xf]
      %v4701 = vld [vmem:[#allocation2 + $0x74] sm:$0xf]
      %v4702 = vld [vmem:[#allocation2 + $0x78] sm:$0xf]
      %v4703 = vld [vmem:[#allocation2 + $0x7c] sm:$0xf]
      %v4704 = vld [vmem:[#allocation2 + $0x80] sm:$0xf]
      %v4705 = vld [vmem:[#allocation2 + $0x84] sm:$0xf]
      %v4706 = vld [vmem:[#allocation2 + $0x88] sm:$0xf]
      %v4707 = vld [vmem:[#allocation2 + $0x8c] sm:$0xf]
      %v4708 = vld [vmem:[#allocation2 + $0x90] sm:$0xf]
      %v4709 = vld [vmem:[#allocation2 + $0x94] sm:$0xf]
      %v4710 = vld [vmem:[#allocation2 + $0x98] sm:$0xf]
      %v4711 = vld [vmem:[#allocation2 + $0x9c] sm:$0xf]
      %v4712 = vld [vmem:[#allocation2 + $0xa0] sm:$0xf]
      %v4713 = vld [vmem:[#allocation2 + $0xa4] sm:$0xf]
      %v4714 = vld [vmem:[#allocation2 + $0xa8] sm:$0xf]
      %v4715 = vld [vmem:[#allocation2 + $0xac] sm:$0xf]
      %v4716 = vld [vmem:[#allocation2 + $0xb0] sm:$0xf]
      %v4717 = vld [vmem:[#allocation2 + $0xb4] sm:$0xf]
      %v4718 = vld [vmem:[#allocation2 + $0xb8] sm:$0xf]
      %v4719 = vld [vmem:[#allocation2 + $0xbc] sm:$0x3]
      %v4720 = vld [vmem:[%s5] sm:$0xff]
      %v4721 = vld [vmem:[%s5 + $0x8] sm:$0xff]
      %v4722 = vld [vmem:[%s5 + $0x10] sm:$0xff]
      %v4723 = vld [vmem:[%s5 + $0x18] sm:$0xff]
      %v4724 = vld [vmem:[%s5 + $0x20] sm:$0xff]
      %v4725 = vld [vmem:[%s5 + $0x28] sm:$0xff]
      %v4726 = vld [vmem:[%s5 + $0x30] sm:$0xff]
      %v4727 = vld [vmem:[%s5 + $0x38] sm:$0xff]
      %v4728 = vld [vmem:[%s5 + $0x40] sm:$0xff]
      %v4729 = vld [vmem:[%s5 + $0x48] sm:$0xff]
      %v4730 = vld [vmem:[%s5 + $0x50] sm:$0xff]
      %v4731 = vld [vmem:[%s5 + $0x58] sm:$0xff]
      %v4732 = vld [vmem:[%s5 + $0x60] sm:$0xff]
      %v4733 = vld [vmem:[%s5 + $0x68] sm:$0xff]
      %v4734 = vld [vmem:[%s5 + $0x70] sm:$0xff]
      %v4735 = vld [vmem:[%s5 + $0x78] sm:$0xff]
      %v4782 = vunpack.c.l.b16 %v4674
      %v4783 = vunpack.c.l.b16 %v4675
      %v4784 = vunpack.c.l.b16 %v4676
      %v4785 = vunpack.c.l.b16 %v4677
      %v4786 = vunpack.c.l.b16 %v4678
      %v4787 = vunpack.c.l.b16 %v4679
      %v4788 = vunpack.c.l.b16 %v4680
      %v4789 = vunpack.c.l.b16 %v4681
      %v4790 = vunpack.c.l.b16 %v4682
      %v4791 = vunpack.c.l.b16 %v4683
      %v4792 = vunpack.c.l.b16 %v4684
      %v4793 = vunpack.c.l.b16 %v4685
      %v4794 = vunpack.c.l.b16 %v4686
      %v4795 = vunpack.c.l.b16 %v4687
      %v4796 = vunpack.c.l.b16 %v4688
      %v4797 = vunpack.c.l.b16 %v4689
      %v4798 = vunpack.c.l.b16 %v4690
      %v4799 = vunpack.c.l.b16 %v4691
      %v4800 = vunpack.c.l.b16 %v4692
      %v4801 = vunpack.c.l.b16 %v4693
      %v4802 = vunpack.c.l.b16 %v4694
      %v4803 = vunpack.c.l.b16 %v4695
      %v4804 = vunpack.c.l.b16 %v4696
      %v4805 = vunpack.c.l.b16 %v4697
      %v4806 = vunpack.c.l.b16 %v4698
      %v4807 = vunpack.c.l.b16 %v4699
      %v4808 = vunpack.c.l.b16 %v4700
      %v4809 = vunpack.c.l.b16 %v4701
      %v4810 = vunpack.c.l.b16 %v4702
      %v4811 = vunpack.c.l.b16 %v4703
      %v4812 = vunpack.c.l.b16 %v4704
      %v4813 = vunpack.c.l.b16 %v4705
      %v4814 = vunpack.c.l.b16 %v4706
      %v4815 = vunpack.c.l.b16 %v4707
      %v4816 = vunpack.c.l.b16 %v4708
      %v4817 = vunpack.c.l.b16 %v4709
      %v4818 = vunpack.c.l.b16 %v4710
      %v4819 = vunpack.c.l.b16 %v4711
      %v4820 = vunpack.c.l.b16 %v4712
      %v4821 = vunpack.c.l.b16 %v4713
      %v4822 = vunpack.c.l.b16 %v4714
      %v4823 = vunpack.c.l.b16 %v4715
      %v4824 = vunpack.c.l.b16 %v4716
      %v4825 = vunpack.c.l.b16 %v4717
      %v4826 = vunpack.c.l.b16 %v4718
      %v4827 = vunpack.c.l.b16 %v4719
      %v4828 = vpack.c.b16 %v4783, %v4782
      %v4829 = vpack.c.b16 %v4785, %v4784
      %v4830 = vpack.c.b16 %v4787, %v4786
      %v4831 = vpack.c.b16 %v4789, %v4788
      %v4832 = vpack.c.b16 %v4791, %v4790
      %v4833 = vpack.c.b16 %v4793, %v4792
      %v4834 = vpack.c.b16 %v4795, %v4794
      %v4835 = vpack.c.b16 %v4797, %v4796
      %v4836 = vpack.c.b16 %v4799, %v4798
      %v4837 = vpack.c.b16 %v4801, %v4800
      %v4838 = vpack.c.b16 %v4803, %v4802
      %v4839 = vpack.c.b16 %v4805, %v4804
      %v4840 = vpack.c.b16 %v4807, %v4806
      %v4841 = vpack.c.b16 %v4809, %v4808
      %v4842 = vpack.c.b16 %v4811, %v4810
      %v4843 = vpack.c.b16 %v4813, %v4812
      %v4844 = vpack.c.b16 %v4815, %v4814
      %v4845 = vpack.c.b16 %v4817, %v4816
      %v4846 = vpack.c.b16 %v4819, %v4818
      %v4847 = vpack.c.b16 %v4821, %v4820
      %v4848 = vpack.c.b16 %v4823, %v4822
      %v4849 = vpack.c.b16 %v4825, %v4824
      %v4850 = vpack.c.b16 %v4827, %v4826
      %vm4851 = vcmask 1046528
      %v4852 = vrot.slane %v4828, 1
      %v4853 = vrot.slane %v4829, 1
      %v4854 = vsel %vm4851, %v4852, %v4853
      %v4855 = vrot.slane %v4830, 1
      %v4856 = vsel %vm4851, %v4853, %v4855
      %v4857 = vrot.slane %v4831, 1
      %v4858 = vsel %vm4851, %v4855, %v4857
      %v4859 = vrot.slane %v4832, 1
      %v4860 = vsel %vm4851, %v4857, %v4859
      %v4861 = vrot.slane %v4833, 1
      %v4862 = vsel %vm4851, %v4859, %v4861
      %v4863 = vrot.slane %v4834, 1
      %v4864 = vsel %vm4851, %v4861, %v4863
      %v4865 = vrot.slane %v4835, 1
      %v4866 = vsel %vm4851, %v4863, %v4865
      %v4867 = vrot.slane %v4836, 1
      %v4868 = vsel %vm4851, %v4865, %v4867
      %v4869 = vrot.slane %v4837, 1
      %v4870 = vsel %vm4851, %v4867, %v4869
      %v4871 = vrot.slane %v4838, 1
      %v4872 = vsel %vm4851, %v4869, %v4871
      %v4873 = vrot.slane %v4839, 1
      %v4874 = vsel %vm4851, %v4871, %v4873
      %v4875 = vrot.slane %v4840, 1
      %v4876 = vsel %vm4851, %v4873, %v4875
      %v4877 = vrot.slane %v4841, 1
      %v4878 = vsel %vm4851, %v4875, %v4877
      %v4879 = vrot.slane %v4842, 1
      %v4880 = vsel %vm4851, %v4877, %v4879
      %v4881 = vrot.slane %v4843, 1
      %v4882 = vsel %vm4851, %v4879, %v4881
      %v4883 = vrot.slane %v4844, 1
      %v4884 = vsel %vm4851, %v4881, %v4883
      %v4885 = vrot.slane %v4845, 1
      %v4886 = vsel %vm4851, %v4883, %v4885
      %v4887 = vrot.slane %v4846, 1
      %v4888 = vsel %vm4851, %v4885, %v4887
      %v4889 = vrot.slane %v4847, 1
      %v4890 = vsel %vm4851, %v4887, %v4889
      %v4891 = vrot.slane %v4848, 1
      %v4892 = vsel %vm4851, %v4889, %v4891
      %v4893 = vrot.slane %v4849, 1
      %v4894 = vsel %vm4851, %v4891, %v4893
      %v4895 = vrot.slane %v4850, 1
      %v4896 = vsel %vm4851, %v4893, %v4895
      %v4936 = vunpack.c.l.b16 %v4720
      %v4937 = vunpack.c.h.b16 %v4720
      %v4938 = vunpack.c.l.b16 %v4721
      %v4939 = vunpack.c.h.b16 %v4721
      %v4940 = vunpack.c.l.b16 %v4722
      %v4941 = vunpack.c.h.b16 %v4722
      %v4942 = vunpack.c.l.b16 %v4723
      %v4943 = vunpack.c.h.b16 %v4723
      %v4944 = vunpack.c.l.b16 %v4724
      %v4945 = vunpack.c.h.b16 %v4724
      %v4946 = vunpack.c.l.b16 %v4725
      %v4947 = vunpack.c.h.b16 %v4725
      %v4948 = vunpack.c.l.b16 %v4726
      %v4949 = vunpack.c.h.b16 %v4726
      %v4950 = vunpack.c.l.b16 %v4727
      %v4951 = vunpack.c.h.b16 %v4727
      %v4952 = vunpack.c.l.b16 %v4728
      %v4953 = vunpack.c.h.b16 %v4728
      %v4954 = vunpack.c.l.b16 %v4729
      %v4955 = vunpack.c.h.b16 %v4729
      %v4956 = vunpack.c.l.b16 %v4730
      %v4957 = vunpack.c.h.b16 %v4730
      %v4958 = vunpack.c.l.b16 %v4731
      %v4959 = vunpack.c.h.b16 %v4731
      %v4960 = vunpack.c.l.b16 %v4732
      %v4961 = vunpack.c.h.b16 %v4732
      %v4962 = vunpack.c.l.b16 %v4733
      %v4963 = vunpack.c.h.b16 %v4733
      %v4964 = vunpack.c.l.b16 %v4734
      %v4965 = vunpack.c.h.b16 %v4734
      %v4966 = vunpack.c.l.b16 %v4735
      %v4967 = vunpack.c.h.b16 %v4735
      %v4968 = vpack.c.b16 %v4938, %v4936
      %v4969 = vpack.c.b16 %v4939, %v4937
      %v4970 = vpack.c.b16 %v4942, %v4940
      %v4971 = vpack.c.b16 %v4943, %v4941
      %v4972 = vpack.c.b16 %v4946, %v4944
      %v4973 = vpack.c.b16 %v4947, %v4945
      %v4974 = vpack.c.b16 %v4950, %v4948
      %v4975 = vpack.c.b16 %v4951, %v4949
      %v4976 = vpack.c.b16 %v4954, %v4952
      %v4977 = vpack.c.b16 %v4955, %v4953
      %v4978 = vpack.c.b16 %v4958, %v4956
      %v4979 = vpack.c.b16 %v4959, %v4957
      %v4980 = vpack.c.b16 %v4962, %v4960
      %v4981 = vpack.c.b16 %v4963, %v4961
      %v4982 = vpack.c.b16 %v4966, %v4964
      %v4983 = vpack.c.b16 %v4967, %v4965
      %5000 = vmatprep.subr.bf16.mxu0 %v4983
      %5001 = vmatpush1.bf16.msra.mxu0 %v4982
      %5002 = vmatprep.subr.bf16.mxu0 %v4981
      %5003 = vmatpush1.bf16.msra.mxu0 %v4980
      %5004 = vmatprep.subr.bf16.mxu0 %v4979
      %5005 = vmatpush1.bf16.msra.mxu0 %v4978
      %5006 = vmatprep.subr.bf16.mxu0 %v4977
      %5007 = vmatpush1.bf16.msra.mxu0 %v4976
      %5008 = vmatprep.subr.bf16.mxu0 %v4975
      %5009 = vmatpush1.bf16.msra.mxu0 %v4974
      %5010 = vmatprep.subr.bf16.mxu0 %v4973
      %5011 = vmatpush1.bf16.msra.mxu0 %v4972
      %5012 = vmatprep.subr.bf16.mxu0 %v4971
      %5013 = vmatpush1.bf16.msra.mxu0 %v4970
      %5014 = vmatprep.subr.bf16.mxu0 %v4969
      %5015 = vmatpush1.bf16.msra.mxu0 %v4968
      %5016 = vmatprep.subr.bf16.mxu0 0
      %5017 = vmatpush2.bf16.msra.mxu0 0
      %5018 = vmatprep.subr.bf16.mxu0 0
      %5019 = vmatpush2.bf16.msra.mxu0 0
      %5020 = vmatprep.subr.bf16.mxu0 0
      %5021 = vmatpush2.bf16.msra.mxu0 0
      %5022 = vmatprep.subr.bf16.mxu0 0
      %5023 = vmatpush2.bf16.msra.mxu0 0
      %5024 = vmatprep.subr.bf16.mxu0 0
      %5025 = vmatpush2.bf16.msra.mxu0 0
      %5026 = vmatprep.subr.bf16.mxu0 0
      %5027 = vmatpush2.bf16.msra.mxu0 0
      %5028 = vmatprep.subr.bf16.mxu0 0
      %5029 = vmatpush2.bf16.msra.mxu0 0
      %5030 = vmatprep.subr.bf16.mxu0 0
      %5031 = vmatpush2.bf16.msra.mxu0 0
      %5032 = vmatprep.mubr.bf16.mxu0 0
      %5033 = vmatmul.mubr.bf16.gmra.mxu0 %v4854
      %v5034 = vpop.f32.mrf.mxu0
      %v5035 = vadd.f32 0.0, %v5034
      %v5036 = vpop.f32.mrf.mxu0
      %v5037 = vpop.f32.mrf.mxu0
      %v5038 = vadd.f32 0.0, %v5037
      %v5039 = vpop.f32.mrf.mxu0
      %5040 = vmatprep.mubr.bf16.mxu0 0
      %5041 = vmatmul.mubr.bf16.gmra.mxu0 %v4856
      %v5042 = vpop.f32.mrf.mxu0
      %v5043 = vadd.f32 0.0, %v5042
      %v5044 = vpop.f32.mrf.mxu0
      %v5045 = vpop.f32.mrf.mxu0
      %v5046 = vadd.f32 0.0, %v5045
      %v5047 = vpop.f32.mrf.mxu0
      %5048 = vmatprep.mubr.bf16.mxu0 0
      %5049 = vmatmul.mubr.bf16.gmra.mxu0 %v4858
      %v5050 = vpop.f32.mrf.mxu0
      %v5051 = vadd.f32 0.0, %v5050
      %v5052 = vpop.f32.mrf.mxu0
      %v5053 = vadd.f32 0.0, %v5052
      %v5054 = vpop.f32.mrf.mxu0
      %v5055 = vadd.f32 0.0, %v5054
      %v5056 = vpop.f32.mrf.mxu0
      %v5057 = vadd.f32 0.0, %v5056
      %5058 = vmatprep.mubr.bf16.mxu0 0
      %5059 = vmatmul.mubr.bf16.gmra.mxu0 %v4860
      %v5060 = vpop.f32.mrf.mxu0
      %v5061 = vadd.f32 0.0, %v5060
      %v5062 = vpop.f32.mrf.mxu0
      %v5063 = vadd.f32 0.0, %v5062
      %v5064 = vpop.f32.mrf.mxu0
      %v5065 = vadd.f32 0.0, %v5064
      %v5066 = vpop.f32.mrf.mxu0
      %v5067 = vadd.f32 0.0, %v5066
      %5068 = vmatprep.mubr.bf16.mxu0 0
      %5069 = vmatmul.mubr.bf16.gmra.mxu0 %v4862
      %v5070 = vpop.f32.mrf.mxu0
      %v5071 = vadd.f32 0.0, %v5070
      %v5072 = vpop.f32.mrf.mxu0
      %v5073 = vadd.f32 0.0, %v5072
      %v5074 = vpop.f32.mrf.mxu0
      %v5075 = vadd.f32 0.0, %v5074
      %v5076 = vpop.f32.mrf.mxu0
      %v5077 = vadd.f32 0.0, %v5076
      %5078 = vmatprep.mubr.bf16.mxu0 0
      %5079 = vmatmul.mubr.bf16.gmra.mxu0 %v4864
      %v5080 = vpop.f32.mrf.mxu0
      %v5081 = vadd.f32 0.0, %v5080
      %v5082 = vpop.f32.mrf.mxu0
      %v5083 = vadd.f32 0.0, %v5082
      %v5084 = vpop.f32.mrf.mxu0
      %v5085 = vadd.f32 0.0, %v5084
      %v5086 = vpop.f32.mrf.mxu0
      %v5087 = vadd.f32 0.0, %v5086
      %5088 = vmatprep.mubr.bf16.mxu0 0
      %5089 = vmatmul.mubr.bf16.gmra.mxu0 %v4866
      %v5090 = vpop.f32.mrf.mxu0
      %v5091 = vadd.f32 0.0, %v5090
      %v5092 = vpop.f32.mrf.mxu0
      %v5093 = vadd.f32 0.0, %v5092
      %v5094 = vpop.f32.mrf.mxu0
      %v5095 = vadd.f32 0.0, %v5094
      %v5096 = vpop.f32.mrf.mxu0
      %v5097 = vadd.f32 0.0, %v5096
      %5098 = vmatprep.mubr.bf16.mxu0 0
      %5099 = vmatmul.mubr.bf16.gmra.mxu0 %v4868
      %v5100 = vpop.f32.mrf.mxu0
      %v5101 = vadd.f32 0.0, %v5100
      %v5102 = vpop.f32.mrf.mxu0
      %v5103 = vadd.f32 0.0, %v5102
      %v5104 = vpop.f32.mrf.mxu0
      %v5105 = vadd.f32 0.0, %v5104
      %v5106 = vpop.f32.mrf.mxu0
      %v5107 = vadd.f32 0.0, %v5106
      %5108 = vmatprep.mubr.bf16.mxu0 0
      %5109 = vmatmul.mubr.bf16.gmra.mxu0 %v4870
      %v5110 = vpop.f32.mrf.mxu0
      %v5111 = vadd.f32 0.0, %v5110
      %v5112 = vpop.f32.mrf.mxu0
      %v5113 = vadd.f32 0.0, %v5112
      %v5114 = vpop.f32.mrf.mxu0
      %v5115 = vadd.f32 0.0, %v5114
      %v5116 = vpop.f32.mrf.mxu0
      %v5117 = vadd.f32 0.0, %v5116
      %5118 = vmatprep.mubr.bf16.mxu0 0
      %5119 = vmatmul.mubr.bf16.gmra.mxu0 %v4872
      %v5120 = vpop.f32.mrf.mxu0
      %v5121 = vadd.f32 0.0, %v5120
      %v5122 = vpop.f32.mrf.mxu0
      %v5123 = vadd.f32 0.0, %v5122
      %v5124 = vpop.f32.mrf.mxu0
      %v5125 = vadd.f32 0.0, %v5124
      %v5126 = vpop.f32.mrf.mxu0
      %v5127 = vadd.f32 0.0, %v5126
      %5128 = vmatprep.mubr.bf16.mxu0 0
      %5129 = vmatmul.mubr.bf16.gmra.mxu0 %v4874
      %v5130 = vpop.f32.mrf.mxu0
      %v5131 = vadd.f32 0.0, %v5130
      %v5132 = vpop.f32.mrf.mxu0
      %v5133 = vadd.f32 0.0, %v5132
      %v5134 = vpop.f32.mrf.mxu0
      %v5135 = vadd.f32 0.0, %v5134
      %v5136 = vpop.f32.mrf.mxu0
      %v5137 = vadd.f32 0.0, %v5136
      %5138 = vmatprep.mubr.bf16.mxu0 0
      %5139 = vmatmul.mubr.bf16.gmra.mxu0 %v4876
      %v5140 = vpop.f32.mrf.mxu0
      %v5141 = vadd.f32 0.0, %v5140
      %v5142 = vpop.f32.mrf.mxu0
      %v5143 = vadd.f32 0.0, %v5142
      %v5144 = vpop.f32.mrf.mxu0
      %v5145 = vadd.f32 0.0, %v5144
      %v5146 = vpop.f32.mrf.mxu0
      %v5147 = vadd.f32 0.0, %v5146
      %5148 = vmatprep.mubr.bf16.mxu0 0
      %5149 = vmatmul.mubr.bf16.gmra.mxu0 %v4878
      %v5150 = vpop.f32.mrf.mxu0
      %v5151 = vadd.f32 0.0, %v5150
      %v5152 = vpop.f32.mrf.mxu0
      %v5153 = vadd.f32 0.0, %v5152
      %v5154 = vpop.f32.mrf.mxu0
      %v5155 = vadd.f32 0.0, %v5154
      %v5156 = vpop.f32.mrf.mxu0
      %v5157 = vadd.f32 0.0, %v5156
      %5158 = vmatprep.mubr.bf16.mxu0 0
      %5159 = vmatmul.mubr.bf16.gmra.mxu0 %v4880
      %v5160 = vpop.f32.mrf.mxu0
      %v5161 = vadd.f32 0.0, %v5160
      %v5162 = vpop.f32.mrf.mxu0
      %v5163 = vadd.f32 0.0, %v5162
      %v5164 = vpop.f32.mrf.mxu0
      %v5165 = vadd.f32 0.0, %v5164
      %v5166 = vpop.f32.mrf.mxu0
      %v5167 = vadd.f32 0.0, %v5166
      %5168 = vmatprep.mubr.bf16.mxu0 0
      %5169 = vmatmul.mubr.bf16.gmra.mxu0 %v4882
      %v5170 = vpop.f32.mrf.mxu0
      %v5171 = vadd.f32 0.0, %v5170
      %v5172 = vpop.f32.mrf.mxu0
      %v5173 = vadd.f32 0.0, %v5172
      %v5174 = vpop.f32.mrf.mxu0
      %v5175 = vadd.f32 0.0, %v5174
      %v5176 = vpop.f32.mrf.mxu0
      %v5177 = vadd.f32 0.0, %v5176
      %5178 = vmatprep.mubr.bf16.mxu0 0
      %5179 = vmatmul.mubr.bf16.gmra.mxu0 %v4884
      %v5180 = vpop.f32.mrf.mxu0
      %v5181 = vadd.f32 0.0, %v5180
      %v5182 = vpop.f32.mrf.mxu0
      %v5183 = vadd.f32 0.0, %v5182
      %v5184 = vpop.f32.mrf.mxu0
      %v5185 = vadd.f32 0.0, %v5184
      %v5186 = vpop.f32.mrf.mxu0
      %v5187 = vadd.f32 0.0, %v5186
      %5188 = vmatprep.mubr.bf16.mxu0 0
      %5189 = vmatmul.mubr.bf16.gmra.mxu0 %v4886
      %v5190 = vpop.f32.mrf.mxu0
      %v5191 = vadd.f32 0.0, %v5190
      %v5192 = vpop.f32.mrf.mxu0
      %v5193 = vadd.f32 0.0, %v5192
      %v5194 = vpop.f32.mrf.mxu0
      %v5195 = vadd.f32 0.0, %v5194
      %v5196 = vpop.f32.mrf.mxu0
      %v5197 = vadd.f32 0.0, %v5196
      %5198 = vmatprep.mubr.bf16.mxu0 0
      %5199 = vmatmul.mubr.bf16.gmra.mxu0 %v4888
      %v5200 = vpop.f32.mrf.mxu0
      %v5201 = vadd.f32 0.0, %v5200
      %v5202 = vpop.f32.mrf.mxu0
      %v5203 = vadd.f32 0.0, %v5202
      %v5204 = vpop.f32.mrf.mxu0
      %v5205 = vadd.f32 0.0, %v5204
      %v5206 = vpop.f32.mrf.mxu0
      %v5207 = vadd.f32 0.0, %v5206
      %5208 = vmatprep.mubr.bf16.mxu0 0
      %5209 = vmatmul.mubr.bf16.gmra.mxu0 %v4890
      %v5210 = vpop.f32.mrf.mxu0
      %v5211 = vadd.f32 0.0, %v5210
      %v5212 = vpop.f32.mrf.mxu0
      %v5213 = vadd.f32 0.0, %v5212
      %v5214 = vpop.f32.mrf.mxu0
      %v5215 = vadd.f32 0.0, %v5214
      %v5216 = vpop.f32.mrf.mxu0
      %v5217 = vadd.f32 0.0, %v5216
      %5218 = vmatprep.mubr.bf16.mxu0 0
      %5219 = vmatmul.mubr.bf16.gmra.mxu0 %v4892
      %v5220 = vpop.f32.mrf.mxu0
      %v5221 = vadd.f32 0.0, %v5220
      %v5222 = vpop.f32.mrf.mxu0
      %v5223 = vadd.f32 0.0, %v5222
      %v5224 = vpop.f32.mrf.mxu0
      %v5225 = vadd.f32 0.0, %v5224
      %v5226 = vpop.f32.mrf.mxu0
      %v5227 = vadd.f32 0.0, %v5226
      %5228 = vmatprep.mubr.bf16.mxu0 0
      %5229 = vmatmul.mubr.bf16.gmra.mxu0 %v4894
      %v5230 = vpop.f32.mrf.mxu0
      %v5231 = vadd.f32 0.0, %v5230
      %v5232 = vpop.f32.mrf.mxu0
      %v5233 = vadd.f32 0.0, %v5232
      %v5234 = vpop.f32.mrf.mxu0
      %v5235 = vadd.f32 0.0, %v5234
      %v5236 = vpop.f32.mrf.mxu0
      %v5237 = vadd.f32 0.0, %v5236
      %5238 = vmatprep.mubr.bf16.mxu0 0
      %5239 = vmatmul.mubr.bf16.gmra.mxu0 %v4896
      %v5240 = vpop.f32.mrf.mxu0
      %v5241 = vadd.f32 0.0, %v5240
      %v5242 = vpop.f32.mrf.mxu0
      %v5243 = vadd.f32 0.0, %v5242
      %v5244 = vpop.f32.mrf.mxu0
      %v5245 = vadd.f32 0.0, %v5244
      %v5246 = vpop.f32.mrf.mxu0
      %v5247 = vadd.f32 0.0, %v5246
      %5248 = vmatprep.mubr.bf16.mxu0 0
      %5249 = vmatmul.mubr.bf16.gmra.mxu0 %v4895
      %v5250 = vpop.f32.mrf.mxu0
      %v5251 = vadd.f32 0.0, %v5250
      %v5252 = vpop.f32.mrf.mxu0
      %v5253 = vadd.f32 0.0, %v5252
      %v5254 = vpop.f32.mrf.mxu0
      %v5255 = vadd.f32 0.0, %v5254
      %v5256 = vpop.f32.mrf.mxu0
      %v5257 = vadd.f32 0.0, %v5256
      %5258 = vdwg.mxu0
      %v5300 = vrot.slane %v5035, 1
      %v5301 = vrot.slane %v5038, 1
      %v5302 = vsel %vm1203, %v5300, %v5301
      %v5303 = vrot.slane %v5043, 1
      %v5304 = vsel %vm1203, %v5301, %v5303
      %v5305 = vrot.slane %v5046, 1
      %v5306 = vsel %vm1203, %v5303, %v5305
      %v5307 = vrot.slane %v5051, 1
      %v5308 = vsel %vm1203, %v5305, %v5307
      %v5309 = vrot.slane %v5055, 1
      %v5310 = vsel %vm1203, %v5307, %v5309
      %v5311 = vrot.slane %v5061, 1
      %v5312 = vsel %vm1203, %v5309, %v5311
      %v5313 = vrot.slane %v5065, 1
      %v5314 = vsel %vm1203, %v5311, %v5313
      %v5315 = vrot.slane %v5071, 1
      %v5316 = vsel %vm1203, %v5313, %v5315
      %v5317 = vrot.slane %v5075, 1
      %v5318 = vsel %vm1203, %v5315, %v5317
      %v5319 = vrot.slane %v5081, 1
      %v5320 = vsel %vm1203, %v5317, %v5319
      %v5321 = vrot.slane %v5085, 1
      %v5322 = vsel %vm1203, %v5319, %v5321
      %v5323 = vrot.slane %v5091, 1
      %v5324 = vsel %vm1203, %v5321, %v5323
      %v5325 = vrot.slane %v5095, 1
      %v5326 = vsel %vm1203, %v5323, %v5325
      %v5327 = vrot.slane %v5101, 1
      %v5328 = vsel %vm1203, %v5325, %v5327
      %v5329 = vrot.slane %v5105, 1
      %v5330 = vsel %vm1203, %v5327, %v5329
      %v5331 = vrot.slane %v5111, 1
      %v5332 = vsel %vm1203, %v5329, %v5331
      %v5333 = vrot.slane %v5115, 1
      %v5334 = vsel %vm1203, %v5331, %v5333
      %v5335 = vrot.slane %v5121, 1
      %v5336 = vsel %vm1203, %v5333, %v5335
      %v5337 = vrot.slane %v5125, 1
      %v5338 = vsel %vm1203, %v5335, %v5337
      %v5339 = vrot.slane %v5131, 1
      %v5340 = vsel %vm1203, %v5337, %v5339
      %v5341 = vrot.slane %v5135, 1
      %v5342 = vsel %vm1203, %v5339, %v5341
      %v5343 = vrot.slane %v5141, 1
      %v5344 = vsel %vm1203, %v5341, %v5343
      %v5345 = vrot.slane %v5145, 1
      %v5346 = vsel %vm1203, %v5343, %v5345
      %v5347 = vrot.slane %v5151, 1
      %v5348 = vsel %vm1203, %v5345, %v5347
      %v5349 = vrot.slane %v5155, 1
      %v5350 = vsel %vm1203, %v5347, %v5349
      %v5351 = vrot.slane %v5161, 1
      %v5352 = vsel %vm1203, %v5349, %v5351
      %v5353 = vrot.slane %v5165, 1
      %v5354 = vsel %vm1203, %v5351, %v5353
      %v5355 = vrot.slane %v5171, 1
      %v5356 = vsel %vm1203, %v5353, %v5355
      %v5357 = vrot.slane %v5175, 1
      %v5358 = vsel %vm1203, %v5355, %v5357
      %v5359 = vrot.slane %v5181, 1
      %v5360 = vsel %vm1203, %v5357, %v5359
      %v5361 = vrot.slane %v5185, 1
      %v5362 = vsel %vm1203, %v5359, %v5361
      %v5363 = vrot.slane %v5191, 1
      %v5364 = vsel %vm1203, %v5361, %v5363
      %v5365 = vrot.slane %v5195, 1
      %v5366 = vsel %vm1203, %v5363, %v5365
      %v5367 = vrot.slane %v5201, 1
      %v5368 = vsel %vm1203, %v5365, %v5367
      %v5369 = vrot.slane %v5205, 1
      %v5370 = vsel %vm1203, %v5367, %v5369
      %v5371 = vrot.slane %v5211, 1
      %v5372 = vsel %vm1203, %v5369, %v5371
      %v5373 = vrot.slane %v5215, 1
      %v5374 = vsel %vm1203, %v5371, %v5373
      %v5375 = vrot.slane %v5221, 1
      %v5376 = vsel %vm1203, %v5373, %v5375
      %v5377 = vrot.slane %v5225, 1
      %v5378 = vsel %vm1203, %v5375, %v5377
      %v5379 = vrot.slane %v5231, 1
      %v5380 = vsel %vm1203, %v5377, %v5379
      %5381 = vrot.lane.b32.xlu0 %v5302, 112
      %v5382 = vpop.permute.xlu0 %5381
      %5383 = vrot.lane.b32.xlu0 %v5304, 112
      %v5384 = vpop.permute.xlu0 %5383
      %5385 = vrot.lane.b32.xlu0 %v5306, 112
      %v5386 = vpop.permute.xlu0 %5385
      %5387 = vrot.lane.b32.xlu0 %v5308, 112
      %v5388 = vpop.permute.xlu0 %5387
      %5389 = vrot.lane.b32.xlu0 %v5310, 112
      %v5390 = vpop.permute.xlu0 %5389
      %5391 = vrot.lane.b32.xlu0 %v5312, 112
      %v5392 = vpop.permute.xlu0 %5391
      %5393 = vrot.lane.b32.xlu0 %v5314, 112
      %v5394 = vpop.permute.xlu0 %5393
      %5395 = vrot.lane.b32.xlu0 %v5316, 112
      %v5396 = vpop.permute.xlu0 %5395
      %5397 = vrot.lane.b32.xlu0 %v5318, 112
      %v5398 = vpop.permute.xlu0 %5397
      %5399 = vrot.lane.b32.xlu0 %v5320, 112
      %v5400 = vpop.permute.xlu0 %5399
      %5401 = vrot.lane.b32.xlu0 %v5322, 112
      %v5402 = vpop.permute.xlu0 %5401
      %5403 = vrot.lane.b32.xlu0 %v5324, 112
      %v5404 = vpop.permute.xlu0 %5403
      %5405 = vrot.lane.b32.xlu0 %v5326, 112
      %v5406 = vpop.permute.xlu0 %5405
      %5407 = vrot.lane.b32.xlu0 %v5328, 112
      %v5408 = vpop.permute.xlu0 %5407
      %5409 = vrot.lane.b32.xlu0 %v5330, 112
      %v5410 = vpop.permute.xlu0 %5409
      %5411 = vrot.lane.b32.xlu0 %v5332, 112
      %v5412 = vpop.permute.xlu0 %5411
      %5413 = vrot.lane.b32.xlu0 %v5334, 112
      %v5414 = vpop.permute.xlu0 %5413
      %5415 = vrot.lane.b32.xlu0 %v5336, 112
      %v5416 = vpop.permute.xlu0 %5415
      %5417 = vrot.lane.b32.xlu0 %v5338, 112
      %v5418 = vpop.permute.xlu0 %5417
      %5419 = vrot.lane.b32.xlu0 %v5340, 112
      %v5420 = vpop.permute.xlu0 %5419
      %5421 = vrot.lane.b32.xlu0 %v5342, 112
      %v5422 = vpop.permute.xlu0 %5421
      %5423 = vrot.lane.b32.xlu0 %v5344, 112
      %v5424 = vpop.permute.xlu0 %5423
      %5425 = vrot.lane.b32.xlu0 %v5346, 112
      %v5426 = vpop.permute.xlu0 %5425
      %5427 = vrot.lane.b32.xlu0 %v5348, 112
      %v5428 = vpop.permute.xlu0 %5427
      %5429 = vrot.lane.b32.xlu0 %v5350, 112
      %v5430 = vpop.permute.xlu0 %5429
      %5431 = vrot.lane.b32.xlu0 %v5352, 112
      %v5432 = vpop.permute.xlu0 %5431
      %5433 = vrot.lane.b32.xlu0 %v5354, 112
      %v5434 = vpop.permute.xlu0 %5433
      %5435 = vrot.lane.b32.xlu0 %v5356, 112
      %v5436 = vpop.permute.xlu0 %5435
      %5437 = vrot.lane.b32.xlu0 %v5358, 112
      %v5438 = vpop.permute.xlu0 %5437
      %5439 = vrot.lane.b32.xlu0 %v5360, 112
      %v5440 = vpop.permute.xlu0 %5439
      %5441 = vrot.lane.b32.xlu0 %v5362, 112
      %v5442 = vpop.permute.xlu0 %5441
      %5443 = vrot.lane.b32.xlu0 %v5364, 112
      %v5444 = vpop.permute.xlu0 %5443
      %5445 = vrot.lane.b32.xlu0 %v5366, 112
      %v5446 = vpop.permute.xlu0 %5445
      %5447 = vrot.lane.b32.xlu0 %v5368, 112
      %v5448 = vpop.permute.xlu0 %5447
      %5449 = vrot.lane.b32.xlu0 %v5370, 112
      %v5450 = vpop.permute.xlu0 %5449
      %5451 = vrot.lane.b32.xlu0 %v5372, 112
      %v5452 = vpop.permute.xlu0 %5451
      %5453 = vrot.lane.b32.xlu0 %v5374, 112
      %v5454 = vpop.permute.xlu0 %5453
      %5455 = vrot.lane.b32.xlu0 %v5376, 112
      %v5456 = vpop.permute.xlu0 %5455
      %5457 = vrot.lane.b32.xlu0 %v5378, 112
      %v5458 = vpop.permute.xlu0 %5457
      %5459 = vrot.lane.b32.xlu0 %v5380, 112
      %v5460 = vpop.permute.xlu0 %5459
      %5461 = vrot.lane.b32.xlu0 %v5379, 112
      %v5462 = vpop.permute.xlu0 %5461
      %v5504 = vadd.f32 %v5035, %v5382
      %v5505 = vadd.f32 %v5038, %v5384
      %v5506 = vadd.f32 %v5043, %v5386
      %v5507 = vadd.f32 %v5046, %v5388
      %v5508 = vadd.f32 %v5051, %v5390
      %v5509 = vadd.f32 %v5055, %v5392
      %v5510 = vadd.f32 %v5061, %v5394
      %v5511 = vadd.f32 %v5065, %v5396
      %v5512 = vadd.f32 %v5071, %v5398
      %v5513 = vadd.f32 %v5075, %v5400
      %v5514 = vadd.f32 %v5081, %v5402
      %v5515 = vadd.f32 %v5085, %v5404
      %v5516 = vadd.f32 %v5091, %v5406
      %v5517 = vadd.f32 %v5095, %v5408
      %v5518 = vadd.f32 %v5101, %v5410
      %v5519 = vadd.f32 %v5105, %v5412
      %v5520 = vadd.f32 %v5111, %v5414
      %v5521 = vadd.f32 %v5115, %v5416
      %v5522 = vadd.f32 %v5121, %v5418
      %v5523 = vadd.f32 %v5125, %v5420
      %v5524 = vadd.f32 %v5131, %v5422
      %v5525 = vadd.f32 %v5135, %v5424
      %v5526 = vadd.f32 %v5141, %v5426
      %v5527 = vadd.f32 %v5145, %v5428
      %v5528 = vadd.f32 %v5151, %v5430
      %v5529 = vadd.f32 %v5155, %v5432
      %v5530 = vadd.f32 %v5161, %v5434
      %v5531 = vadd.f32 %v5165, %v5436
      %v5532 = vadd.f32 %v5171, %v5438
      %v5533 = vadd.f32 %v5175, %v5440
      %v5534 = vadd.f32 %v5181, %v5442
      %v5535 = vadd.f32 %v5185, %v5444
      %v5536 = vadd.f32 %v5191, %v5446
      %v5537 = vadd.f32 %v5195, %v5448
      %v5538 = vadd.f32 %v5201, %v5450
      %v5539 = vadd.f32 %v5205, %v5452
      %v5540 = vadd.f32 %v5211, %v5454
      %v5541 = vadd.f32 %v5215, %v5456
      %v5542 = vadd.f32 %v5221, %v5458
      %v5543 = vadd.f32 %v5225, %v5460
      %v5544 = vadd.f32 %v5231, %v5462
      %v5545 = vrot.slane %v5035, 2
      %v5546 = vrot.slane %v5038, 2
      %v5547 = vsel %vm1475, %v5545, %v5546
      %v5548 = vrot.slane %v5043, 2
      %v5549 = vsel %vm1475, %v5546, %v5548
      %v5550 = vrot.slane %v5046, 2
      %v5551 = vsel %vm1475, %v5548, %v5550
      %v5552 = vrot.slane %v5051, 2
      %v5553 = vsel %vm1475, %v5550, %v5552
      %v5554 = vrot.slane %v5055, 2
      %v5555 = vsel %vm1475, %v5552, %v5554
      %v5556 = vrot.slane %v5061, 2
      %v5557 = vsel %vm1475, %v5554, %v5556
      %v5558 = vrot.slane %v5065, 2
      %v5559 = vsel %vm1475, %v5556, %v5558
      %v5560 = vrot.slane %v5071, 2
      %v5561 = vsel %vm1475, %v5558, %v5560
      %v5562 = vrot.slane %v5075, 2
      %v5563 = vsel %vm1475, %v5560, %v5562
      %v5564 = vrot.slane %v5081, 2
      %v5565 = vsel %vm1475, %v5562, %v5564
      %v5566 = vrot.slane %v5085, 2
      %v5567 = vsel %vm1475, %v5564, %v5566
      %v5568 = vrot.slane %v5091, 2
      %v5569 = vsel %vm1475, %v5566, %v5568
      %v5570 = vrot.slane %v5095, 2
      %v5571 = vsel %vm1475, %v5568, %v5570
      %v5572 = vrot.slane %v5101, 2
      %v5573 = vsel %vm1475, %v5570, %v5572
      %v5574 = vrot.slane %v5105, 2
      %v5575 = vsel %vm1475, %v5572, %v5574
      %v5576 = vrot.slane %v5111, 2
      %v5577 = vsel %vm1475, %v5574, %v5576
      %v5578 = vrot.slane %v5115, 2
      %v5579 = vsel %vm1475, %v5576, %v5578
      %v5580 = vrot.slane %v5121, 2
      %v5581 = vsel %vm1475, %v5578, %v5580
      %v5582 = vrot.slane %v5125, 2
      %v5583 = vsel %vm1475, %v5580, %v5582
      %v5584 = vrot.slane %v5131, 2
      %v5585 = vsel %vm1475, %v5582, %v5584
      %v5586 = vrot.slane %v5135, 2
      %v5587 = vsel %vm1475, %v5584, %v5586
      %v5588 = vrot.slane %v5141, 2
      %v5589 = vsel %vm1475, %v5586, %v5588
      %v5590 = vrot.slane %v5145, 2
      %v5591 = vsel %vm1475, %v5588, %v5590
      %v5592 = vrot.slane %v5151, 2
      %v5593 = vsel %vm1475, %v5590, %v5592
      %v5594 = vrot.slane %v5155, 2
      %v5595 = vsel %vm1475, %v5592, %v5594
      %v5596 = vrot.slane %v5161, 2
      %v5597 = vsel %vm1475, %v5594, %v5596
      %v5598 = vrot.slane %v5165, 2
      %v5599 = vsel %vm1475, %v5596, %v5598
      %v5600 = vrot.slane %v5171, 2
      %v5601 = vsel %vm1475, %v5598, %v5600
      %v5602 = vrot.slane %v5175, 2
      %v5603 = vsel %vm1475, %v5600, %v5602
      %v5604 = vrot.slane %v5181, 2
      %v5605 = vsel %vm1475, %v5602, %v5604
      %v5606 = vrot.slane %v5185, 2
      %v5607 = vsel %vm1475, %v5604, %v5606
      %v5608 = vrot.slane %v5191, 2
      %v5609 = vsel %vm1475, %v5606, %v5608
      %v5610 = vrot.slane %v5195, 2
      %v5611 = vsel %vm1475, %v5608, %v5610
      %v5612 = vrot.slane %v5201, 2
      %v5613 = vsel %vm1475, %v5610, %v5612
      %v5614 = vrot.slane %v5205, 2
      %v5615 = vsel %vm1475, %v5612, %v5614
      %v5616 = vrot.slane %v5211, 2
      %v5617 = vsel %vm1475, %v5614, %v5616
      %v5618 = vrot.slane %v5215, 2
      %v5619 = vsel %vm1475, %v5616, %v5618
      %v5620 = vrot.slane %v5221, 2
      %v5621 = vsel %vm1475, %v5618, %v5620
      %v5622 = vrot.slane %v5225, 2
      %v5623 = vsel %vm1475, %v5620, %v5622
      %v5624 = vrot.slane %v5231, 2
      %v5625 = vsel %vm1475, %v5622, %v5624
      %5626 = vrot.lane.b32.xlu0 %v5547, 96
      %v5627 = vpop.permute.xlu0 %5626
      %5628 = vrot.lane.b32.xlu0 %v5549, 96
      %v5629 = vpop.permute.xlu0 %5628
      %5630 = vrot.lane.b32.xlu0 %v5551, 96
      %v5631 = vpop.permute.xlu0 %5630
      %5632 = vrot.lane.b32.xlu0 %v5553, 96
      %v5633 = vpop.permute.xlu0 %5632
      %5634 = vrot.lane.b32.xlu0 %v5555, 96
      %v5635 = vpop.permute.xlu0 %5634
      %5636 = vrot.lane.b32.xlu0 %v5557, 96
      %v5637 = vpop.permute.xlu0 %5636
      %5638 = vrot.lane.b32.xlu0 %v5559, 96
      %v5639 = vpop.permute.xlu0 %5638
      %5640 = vrot.lane.b32.xlu0 %v5561, 96
      %v5641 = vpop.permute.xlu0 %5640
      %5642 = vrot.lane.b32.xlu0 %v5563, 96
      %v5643 = vpop.permute.xlu0 %5642
      %5644 = vrot.lane.b32.xlu0 %v5565, 96
      %v5645 = vpop.permute.xlu0 %5644
      %5646 = vrot.lane.b32.xlu0 %v5567, 96
      %v5647 = vpop.permute.xlu0 %5646
      %5648 = vrot.lane.b32.xlu0 %v5569, 96
      %v5649 = vpop.permute.xlu0 %5648
      %5650 = vrot.lane.b32.xlu0 %v5571, 96
      %v5651 = vpop.permute.xlu0 %5650
      %5652 = vrot.lane.b32.xlu0 %v5573, 96
      %v5653 = vpop.permute.xlu0 %5652
      %5654 = vrot.lane.b32.xlu0 %v5575, 96
      %v5655 = vpop.permute.xlu0 %5654
      %5656 = vrot.lane.b32.xlu0 %v5577, 96
      %v5657 = vpop.permute.xlu0 %5656
      %5658 = vrot.lane.b32.xlu0 %v5579, 96
      %v5659 = vpop.permute.xlu0 %5658
      %5660 = vrot.lane.b32.xlu0 %v5581, 96
      %v5661 = vpop.permute.xlu0 %5660
      %5662 = vrot.lane.b32.xlu0 %v5583, 96
      %v5663 = vpop.permute.xlu0 %5662
      %5664 = vrot.lane.b32.xlu0 %v5585, 96
      %v5665 = vpop.permute.xlu0 %5664
      %5666 = vrot.lane.b32.xlu0 %v5587, 96
      %v5667 = vpop.permute.xlu0 %5666
      %5668 = vrot.lane.b32.xlu0 %v5589, 96
      %v5669 = vpop.permute.xlu0 %5668
      %5670 = vrot.lane.b32.xlu0 %v5591, 96
      %v5671 = vpop.permute.xlu0 %5670
      %5672 = vrot.lane.b32.xlu0 %v5593, 96
      %v5673 = vpop.permute.xlu0 %5672
      %5674 = vrot.lane.b32.xlu0 %v5595, 96
      %v5675 = vpop.permute.xlu0 %5674
      %5676 = vrot.lane.b32.xlu0 %v5597, 96
      %v5677 = vpop.permute.xlu0 %5676
      %5678 = vrot.lane.b32.xlu0 %v5599, 96
      %v5679 = vpop.permute.xlu0 %5678
      %5680 = vrot.lane.b32.xlu0 %v5601, 96
      %v5681 = vpop.permute.xlu0 %5680
      %5682 = vrot.lane.b32.xlu0 %v5603, 96
      %v5683 = vpop.permute.xlu0 %5682
      %5684 = vrot.lane.b32.xlu0 %v5605, 96
      %v5685 = vpop.permute.xlu0 %5684
      %5686 = vrot.lane.b32.xlu0 %v5607, 96
      %v5687 = vpop.permute.xlu0 %5686
      %5688 = vrot.lane.b32.xlu0 %v5609, 96
      %v5689 = vpop.permute.xlu0 %5688
      %5690 = vrot.lane.b32.xlu0 %v5611, 96
      %v5691 = vpop.permute.xlu0 %5690
      %5692 = vrot.lane.b32.xlu0 %v5613, 96
      %v5693 = vpop.permute.xlu0 %5692
      %5694 = vrot.lane.b32.xlu0 %v5615, 96
      %v5695 = vpop.permute.xlu0 %5694
      %5696 = vrot.lane.b32.xlu0 %v5617, 96
      %v5697 = vpop.permute.xlu0 %5696
      %5698 = vrot.lane.b32.xlu0 %v5619, 96
      %v5699 = vpop.permute.xlu0 %5698
      %5700 = vrot.lane.b32.xlu0 %v5621, 96
      %v5701 = vpop.permute.xlu0 %5700
      %5702 = vrot.lane.b32.xlu0 %v5623, 96
      %v5703 = vpop.permute.xlu0 %5702
      %5704 = vrot.lane.b32.xlu0 %v5625, 96
      %v5705 = vpop.permute.xlu0 %5704
      %5706 = vrot.lane.b32.xlu0 %v5624, 96
      %v5707 = vpop.permute.xlu0 %5706
      %v5749 = vadd.f32 %v5504, %v5627
      %v5750 = vadd.f32 %v5505, %v5629
      %v5751 = vadd.f32 %v5506, %v5631
      %v5752 = vadd.f32 %v5507, %v5633
      %v5753 = vadd.f32 %v5508, %v5635
      %v5754 = vadd.f32 %v5509, %v5637
      %v5755 = vadd.f32 %v5510, %v5639
      %v5756 = vadd.f32 %v5511, %v5641
      %v5757 = vadd.f32 %v5512, %v5643
      %v5758 = vadd.f32 %v5513, %v5645
      %v5759 = vadd.f32 %v5514, %v5647
      %v5760 = vadd.f32 %v5515, %v5649
      %v5761 = vadd.f32 %v5516, %v5651
      %v5762 = vadd.f32 %v5517, %v5653
      %v5763 = vadd.f32 %v5518, %v5655
      %v5764 = vadd.f32 %v5519, %v5657
      %v5765 = vadd.f32 %v5520, %v5659
      %v5766 = vadd.f32 %v5521, %v5661
      %v5767 = vadd.f32 %v5522, %v5663
      %v5768 = vadd.f32 %v5523, %v5665
      %v5769 = vadd.f32 %v5524, %v5667
      %v5770 = vadd.f32 %v5525, %v5669
      %v5771 = vadd.f32 %v5526, %v5671
      %v5772 = vadd.f32 %v5527, %v5673
      %v5773 = vadd.f32 %v5528, %v5675
      %v5774 = vadd.f32 %v5529, %v5677
      %v5775 = vadd.f32 %v5530, %v5679
      %v5776 = vadd.f32 %v5531, %v5681
      %v5777 = vadd.f32 %v5532, %v5683
      %v5778 = vadd.f32 %v5533, %v5685
      %v5779 = vadd.f32 %v5534, %v5687
      %v5780 = vadd.f32 %v5535, %v5689
      %v5781 = vadd.f32 %v5536, %v5691
      %v5782 = vadd.f32 %v5537, %v5693
      %v5783 = vadd.f32 %v5538, %v5695
      %v5784 = vadd.f32 %v5539, %v5697
      %v5785 = vadd.f32 %v5540, %v5699
      %v5786 = vadd.f32 %v5541, %v5701
      %v5787 = vadd.f32 %v5542, %v5703
      %v5788 = vadd.f32 %v5543, %v5705
      %v5789 = vadd.f32 %v5544, %v5707
      %v5792 = vrot.slane %v5235, 2
      %v5793 = vsel %vm1475, %v5624, %v5792
      %v5794 = vrot.slane %v5241, 2
      %v5795 = vsel %vm1475, %v5792, %v5794
      %5796 = vrot.lane.b32.xlu0 %v5551, 80
      %v5797 = vpop.permute.xlu0 %5796
      %5798 = vrot.lane.b32.xlu0 %v5553, 80
      %v5799 = vpop.permute.xlu0 %5798
      %5800 = vrot.lane.b32.xlu0 %v5555, 80
      %v5801 = vpop.permute.xlu0 %5800
      %5802 = vrot.lane.b32.xlu0 %v5557, 80
      %v5803 = vpop.permute.xlu0 %5802
      %5804 = vrot.lane.b32.xlu0 %v5559, 80
      %v5805 = vpop.permute.xlu0 %5804
      %5806 = vrot.lane.b32.xlu0 %v5561, 80
      %v5807 = vpop.permute.xlu0 %5806
      %5808 = vrot.lane.b32.xlu0 %v5563, 80
      %v5809 = vpop.permute.xlu0 %5808
      %5810 = vrot.lane.b32.xlu0 %v5565, 80
      %v5811 = vpop.permute.xlu0 %5810
      %5812 = vrot.lane.b32.xlu0 %v5567, 80
      %v5813 = vpop.permute.xlu0 %5812
      %5814 = vrot.lane.b32.xlu0 %v5569, 80
      %v5815 = vpop.permute.xlu0 %5814
      %5816 = vrot.lane.b32.xlu0 %v5571, 80
      %v5817 = vpop.permute.xlu0 %5816
      %5818 = vrot.lane.b32.xlu0 %v5573, 80
      %v5819 = vpop.permute.xlu0 %5818
      %5820 = vrot.lane.b32.xlu0 %v5575, 80
      %v5821 = vpop.permute.xlu0 %5820
      %5822 = vrot.lane.b32.xlu0 %v5577, 80
      %v5823 = vpop.permute.xlu0 %5822
      %5824 = vrot.lane.b32.xlu0 %v5579, 80
      %v5825 = vpop.permute.xlu0 %5824
      %5826 = vrot.lane.b32.xlu0 %v5581, 80
      %v5827 = vpop.permute.xlu0 %5826
      %5828 = vrot.lane.b32.xlu0 %v5583, 80
      %v5829 = vpop.permute.xlu0 %5828
      %5830 = vrot.lane.b32.xlu0 %v5585, 80
      %v5831 = vpop.permute.xlu0 %5830
      %5832 = vrot.lane.b32.xlu0 %v5587, 80
      %v5833 = vpop.permute.xlu0 %5832
      %5834 = vrot.lane.b32.xlu0 %v5589, 80
      %v5835 = vpop.permute.xlu0 %5834
      %5836 = vrot.lane.b32.xlu0 %v5591, 80
      %v5837 = vpop.permute.xlu0 %5836
      %5838 = vrot.lane.b32.xlu0 %v5593, 80
      %v5839 = vpop.permute.xlu0 %5838
      %5840 = vrot.lane.b32.xlu0 %v5595, 80
      %v5841 = vpop.permute.xlu0 %5840
      %5842 = vrot.lane.b32.xlu0 %v5597, 80
      %v5843 = vpop.permute.xlu0 %5842
      %5844 = vrot.lane.b32.xlu0 %v5599, 80
      %v5845 = vpop.permute.xlu0 %5844
      %5846 = vrot.lane.b32.xlu0 %v5601, 80
      %v5847 = vpop.permute.xlu0 %5846
      %5848 = vrot.lane.b32.xlu0 %v5603, 80
      %v5849 = vpop.permute.xlu0 %5848
      %5850 = vrot.lane.b32.xlu0 %v5605, 80
      %v5851 = vpop.permute.xlu0 %5850
      %5852 = vrot.lane.b32.xlu0 %v5607, 80
      %v5853 = vpop.permute.xlu0 %5852
      %5854 = vrot.lane.b32.xlu0 %v5609, 80
      %v5855 = vpop.permute.xlu0 %5854
      %5856 = vrot.lane.b32.xlu0 %v5611, 80
      %v5857 = vpop.permute.xlu0 %5856
      %5858 = vrot.lane.b32.xlu0 %v5613, 80
      %v5859 = vpop.permute.xlu0 %5858
      %5860 = vrot.lane.b32.xlu0 %v5615, 80
      %v5861 = vpop.permute.xlu0 %5860
      %5862 = vrot.lane.b32.xlu0 %v5617, 80
      %v5863 = vpop.permute.xlu0 %5862
      %5864 = vrot.lane.b32.xlu0 %v5619, 80
      %v5865 = vpop.permute.xlu0 %5864
      %5866 = vrot.lane.b32.xlu0 %v5621, 80
      %v5867 = vpop.permute.xlu0 %5866
      %5868 = vrot.lane.b32.xlu0 %v5623, 80
      %v5869 = vpop.permute.xlu0 %5868
      %5870 = vrot.lane.b32.xlu0 %v5625, 80
      %v5871 = vpop.permute.xlu0 %5870
      %5872 = vrot.lane.b32.xlu0 %v5793, 80
      %v5873 = vpop.permute.xlu0 %5872
      %5874 = vrot.lane.b32.xlu0 %v5795, 80
      %v5875 = vpop.permute.xlu0 %5874
      %5876 = vrot.lane.b32.xlu0 %v5794, 80
      %v5877 = vpop.permute.xlu0 %5876
      %v5919 = vadd.f32 %v5749, %v5797
      %v5920 = vadd.f32 %v5750, %v5799
      %v5921 = vadd.f32 %v5751, %v5801
      %v5922 = vadd.f32 %v5752, %v5803
      %v5923 = vadd.f32 %v5753, %v5805
      %v5924 = vadd.f32 %v5754, %v5807
      %v5925 = vadd.f32 %v5755, %v5809
      %v5926 = vadd.f32 %v5756, %v5811
      %v5927 = vadd.f32 %v5757, %v5813
      %v5928 = vadd.f32 %v5758, %v5815
      %v5929 = vadd.f32 %v5759, %v5817
      %v5930 = vadd.f32 %v5760, %v5819
      %v5931 = vadd.f32 %v5761, %v5821
      %v5932 = vadd.f32 %v5762, %v5823
      %v5933 = vadd.f32 %v5763, %v5825
      %v5934 = vadd.f32 %v5764, %v5827
      %v5935 = vadd.f32 %v5765, %v5829
      %v5936 = vadd.f32 %v5766, %v5831
      %v5937 = vadd.f32 %v5767, %v5833
      %v5938 = vadd.f32 %v5768, %v5835
      %v5939 = vadd.f32 %v5769, %v5837
      %v5940 = vadd.f32 %v5770, %v5839
      %v5941 = vadd.f32 %v5771, %v5841
      %v5942 = vadd.f32 %v5772, %v5843
      %v5943 = vadd.f32 %v5773, %v5845
      %v5944 = vadd.f32 %v5774, %v5847
      %v5945 = vadd.f32 %v5775, %v5849
      %v5946 = vadd.f32 %v5776, %v5851
      %v5947 = vadd.f32 %v5777, %v5853
      %v5948 = vadd.f32 %v5778, %v5855
      %v5949 = vadd.f32 %v5779, %v5857
      %v5950 = vadd.f32 %v5780, %v5859
      %v5951 = vadd.f32 %v5781, %v5861
      %v5952 = vadd.f32 %v5782, %v5863
      %v5953 = vadd.f32 %v5783, %v5865
      %v5954 = vadd.f32 %v5784, %v5867
      %v5955 = vadd.f32 %v5785, %v5869
      %v5956 = vadd.f32 %v5786, %v5871
      %v5957 = vadd.f32 %v5787, %v5873
      %v5958 = vadd.f32 %v5788, %v5875
      %v5959 = vadd.f32 %v5789, %v5877
      %v5960 = vrot.slane %v5043, 3
      %v5961 = vrot.slane %v5046, 3
      %v5962 = vsel %vm1933, %v5960, %v5961
      %v5963 = vrot.slane %v5051, 3
      %v5964 = vsel %vm1933, %v5961, %v5963
      %v5965 = vrot.slane %v5055, 3
      %v5966 = vsel %vm1933, %v5963, %v5965
      %v5967 = vrot.slane %v5061, 3
      %v5968 = vsel %vm1933, %v5965, %v5967
      %v5969 = vrot.slane %v5065, 3
      %v5970 = vsel %vm1933, %v5967, %v5969
      %v5971 = vrot.slane %v5071, 3
      %v5972 = vsel %vm1933, %v5969, %v5971
      %v5973 = vrot.slane %v5075, 3
      %v5974 = vsel %vm1933, %v5971, %v5973
      %v5975 = vrot.slane %v5081, 3
      %v5976 = vsel %vm1933, %v5973, %v5975
      %v5977 = vrot.slane %v5085, 3
      %v5978 = vsel %vm1933, %v5975, %v5977
      %v5979 = vrot.slane %v5091, 3
      %v5980 = vsel %vm1933, %v5977, %v5979
      %v5981 = vrot.slane %v5095, 3
      %v5982 = vsel %vm1933, %v5979, %v5981
      %v5983 = vrot.slane %v5101, 3
      %v5984 = vsel %vm1933, %v5981, %v5983
      %v5985 = vrot.slane %v5105, 3
      %v5986 = vsel %vm1933, %v5983, %v5985
      %v5987 = vrot.slane %v5111, 3
      %v5988 = vsel %vm1933, %v5985, %v5987
      %v5989 = vrot.slane %v5115, 3
      %v5990 = vsel %vm1933, %v5987, %v5989
      %v5991 = vrot.slane %v5121, 3
      %v5992 = vsel %vm1933, %v5989, %v5991
      %v5993 = vrot.slane %v5125, 3
      %v5994 = vsel %vm1933, %v5991, %v5993
      %v5995 = vrot.slane %v5131, 3
      %v5996 = vsel %vm1933, %v5993, %v5995
      %v5997 = vrot.slane %v5135, 3
      %v5998 = vsel %vm1933, %v5995, %v5997
      %v5999 = vrot.slane %v5141, 3
      %v6000 = vsel %vm1933, %v5997, %v5999
      %v6001 = vrot.slane %v5145, 3
      %v6002 = vsel %vm1933, %v5999, %v6001
      %v6003 = vrot.slane %v5151, 3
      %v6004 = vsel %vm1933, %v6001, %v6003
      %v6005 = vrot.slane %v5155, 3
      %v6006 = vsel %vm1933, %v6003, %v6005
      %v6007 = vrot.slane %v5161, 3
      %v6008 = vsel %vm1933, %v6005, %v6007
      %v6009 = vrot.slane %v5165, 3
      %v6010 = vsel %vm1933, %v6007, %v6009
      %v6011 = vrot.slane %v5171, 3
      %v6012 = vsel %vm1933, %v6009, %v6011
      %v6013 = vrot.slane %v5175, 3
      %v6014 = vsel %vm1933, %v6011, %v6013
      %v6015 = vrot.slane %v5181, 3
      %v6016 = vsel %vm1933, %v6013, %v6015
      %v6017 = vrot.slane %v5185, 3
      %v6018 = vsel %vm1933, %v6015, %v6017
      %v6019 = vrot.slane %v5191, 3
      %v6020 = vsel %vm1933, %v6017, %v6019
      %v6021 = vrot.slane %v5195, 3
      %v6022 = vsel %vm1933, %v6019, %v6021
      %v6023 = vrot.slane %v5201, 3
      %v6024 = vsel %vm1933, %v6021, %v6023
      %v6025 = vrot.slane %v5205, 3
      %v6026 = vsel %vm1933, %v6023, %v6025
      %v6027 = vrot.slane %v5211, 3
      %v6028 = vsel %vm1933, %v6025, %v6027
      %v6029 = vrot.slane %v5215, 3
      %v6030 = vsel %vm1933, %v6027, %v6029
      %v6031 = vrot.slane %v5221, 3
      %v6032 = vsel %vm1933, %v6029, %v6031
      %v6033 = vrot.slane %v5225, 3
      %v6034 = vsel %vm1933, %v6031, %v6033
      %v6035 = vrot.slane %v5231, 3
      %v6036 = vsel %vm1933, %v6033, %v6035
      %v6037 = vrot.slane %v5235, 3
      %v6038 = vsel %vm1933, %v6035, %v6037
      %v6039 = vrot.slane %v5241, 3
      %v6040 = vsel %vm1933, %v6037, %v6039
      %6041 = vrot.lane.b32.xlu0 %v5962, 64
      %v6042 = vpop.permute.xlu0 %6041
      %6043 = vrot.lane.b32.xlu0 %v5964, 64
      %v6044 = vpop.permute.xlu0 %6043
      %6045 = vrot.lane.b32.xlu0 %v5966, 64
      %v6046 = vpop.permute.xlu0 %6045
      %6047 = vrot.lane.b32.xlu0 %v5968, 64
      %v6048 = vpop.permute.xlu0 %6047
      %6049 = vrot.lane.b32.xlu0 %v5970, 64
      %v6050 = vpop.permute.xlu0 %6049
      %6051 = vrot.lane.b32.xlu0 %v5972, 64
      %v6052 = vpop.permute.xlu0 %6051
      %6053 = vrot.lane.b32.xlu0 %v5974, 64
      %v6054 = vpop.permute.xlu0 %6053
      %6055 = vrot.lane.b32.xlu0 %v5976, 64
      %v6056 = vpop.permute.xlu0 %6055
      %6057 = vrot.lane.b32.xlu0 %v5978, 64
      %v6058 = vpop.permute.xlu0 %6057
      %6059 = vrot.lane.b32.xlu0 %v5980, 64
      %v6060 = vpop.permute.xlu0 %6059
      %6061 = vrot.lane.b32.xlu0 %v5982, 64
      %v6062 = vpop.permute.xlu0 %6061
      %6063 = vrot.lane.b32.xlu0 %v5984, 64
      %v6064 = vpop.permute.xlu0 %6063
      %6065 = vrot.lane.b32.xlu0 %v5986, 64
      %v6066 = vpop.permute.xlu0 %6065
      %6067 = vrot.lane.b32.xlu0 %v5988, 64
      %v6068 = vpop.permute.xlu0 %6067
      %6069 = vrot.lane.b32.xlu0 %v5990, 64
      %v6070 = vpop.permute.xlu0 %6069
      %6071 = vrot.lane.b32.xlu0 %v5992, 64
      %v6072 = vpop.permute.xlu0 %6071
      %6073 = vrot.lane.b32.xlu0 %v5994, 64
      %v6074 = vpop.permute.xlu0 %6073
      %6075 = vrot.lane.b32.xlu0 %v5996, 64
      %v6076 = vpop.permute.xlu0 %6075
      %6077 = vrot.lane.b32.xlu0 %v5998, 64
      %v6078 = vpop.permute.xlu0 %6077
      %6079 = vrot.lane.b32.xlu0 %v6000, 64
      %v6080 = vpop.permute.xlu0 %6079
      %6081 = vrot.lane.b32.xlu0 %v6002, 64
      %v6082 = vpop.permute.xlu0 %6081
      %6083 = vrot.lane.b32.xlu0 %v6004, 64
      %v6084 = vpop.permute.xlu0 %6083
      %6085 = vrot.lane.b32.xlu0 %v6006, 64
      %v6086 = vpop.permute.xlu0 %6085
      %6087 = vrot.lane.b32.xlu0 %v6008, 64
      %v6088 = vpop.permute.xlu0 %6087
      %6089 = vrot.lane.b32.xlu0 %v6010, 64
      %v6090 = vpop.permute.xlu0 %6089
      %6091 = vrot.lane.b32.xlu0 %v6012, 64
      %v6092 = vpop.permute.xlu0 %6091
      %6093 = vrot.lane.b32.xlu0 %v6014, 64
      %v6094 = vpop.permute.xlu0 %6093
      %6095 = vrot.lane.b32.xlu0 %v6016, 64
      %v6096 = vpop.permute.xlu0 %6095
      %6097 = vrot.lane.b32.xlu0 %v6018, 64
      %v6098 = vpop.permute.xlu0 %6097
      %6099 = vrot.lane.b32.xlu0 %v6020, 64
      %v6100 = vpop.permute.xlu0 %6099
      %6101 = vrot.lane.b32.xlu0 %v6022, 64
      %v6102 = vpop.permute.xlu0 %6101
      %6103 = vrot.lane.b32.xlu0 %v6024, 64
      %v6104 = vpop.permute.xlu0 %6103
      %6105 = vrot.lane.b32.xlu0 %v6026, 64
      %v6106 = vpop.permute.xlu0 %6105
      %6107 = vrot.lane.b32.xlu0 %v6028, 64
      %v6108 = vpop.permute.xlu0 %6107
      %6109 = vrot.lane.b32.xlu0 %v6030, 64
      %v6110 = vpop.permute.xlu0 %6109
      %6111 = vrot.lane.b32.xlu0 %v6032, 64
      %v6112 = vpop.permute.xlu0 %6111
      %6113 = vrot.lane.b32.xlu0 %v6034, 64
      %v6114 = vpop.permute.xlu0 %6113
      %6115 = vrot.lane.b32.xlu0 %v6036, 64
      %v6116 = vpop.permute.xlu0 %6115
      %6117 = vrot.lane.b32.xlu0 %v6038, 64
      %v6118 = vpop.permute.xlu0 %6117
      %6119 = vrot.lane.b32.xlu0 %v6040, 64
      %v6120 = vpop.permute.xlu0 %6119
      %6121 = vrot.lane.b32.xlu0 %v6039, 64
      %v6122 = vpop.permute.xlu0 %6121
      %v6164 = vadd.f32 %v5919, %v6042
      %v6165 = vadd.f32 %v5920, %v6044
      %v6166 = vadd.f32 %v5921, %v6046
      %v6167 = vadd.f32 %v5922, %v6048
      %v6168 = vadd.f32 %v5923, %v6050
      %v6169 = vadd.f32 %v5924, %v6052
      %v6170 = vadd.f32 %v5925, %v6054
      %v6171 = vadd.f32 %v5926, %v6056
      %v6172 = vadd.f32 %v5927, %v6058
      %v6173 = vadd.f32 %v5928, %v6060
      %v6174 = vadd.f32 %v5929, %v6062
      %v6175 = vadd.f32 %v5930, %v6064
      %v6176 = vadd.f32 %v5931, %v6066
      %v6177 = vadd.f32 %v5932, %v6068
      %v6178 = vadd.f32 %v5933, %v6070
      %v6179 = vadd.f32 %v5934, %v6072
      %v6180 = vadd.f32 %v5935, %v6074
      %v6181 = vadd.f32 %v5936, %v6076
      %v6182 = vadd.f32 %v5937, %v6078
      %v6183 = vadd.f32 %v5938, %v6080
      %v6184 = vadd.f32 %v5939, %v6082
      %v6185 = vadd.f32 %v5940, %v6084
      %v6186 = vadd.f32 %v5941, %v6086
      %v6187 = vadd.f32 %v5942, %v6088
      %v6188 = vadd.f32 %v5943, %v6090
      %v6189 = vadd.f32 %v5944, %v6092
      %v6190 = vadd.f32 %v5945, %v6094
      %v6191 = vadd.f32 %v5946, %v6096
      %v6192 = vadd.f32 %v5947, %v6098
      %v6193 = vadd.f32 %v5948, %v6100
      %v6194 = vadd.f32 %v5949, %v6102
      %v6195 = vadd.f32 %v5950, %v6104
      %v6196 = vadd.f32 %v5951, %v6106
      %v6197 = vadd.f32 %v5952, %v6108
      %v6198 = vadd.f32 %v5953, %v6110
      %v6199 = vadd.f32 %v5954, %v6112
      %v6200 = vadd.f32 %v5955, %v6114
      %v6201 = vadd.f32 %v5956, %v6116
      %v6202 = vadd.f32 %v5957, %v6118
      %v6203 = vadd.f32 %v5958, %v6120
      %v6204 = vadd.f32 %v5959, %v6122
      %v6205 = vrot.slane %v5043, 4
      %v6206 = vrot.slane %v5046, 4
      %v6207 = vsel %vm2205, %v6205, %v6206
      %v6208 = vrot.slane %v5051, 4
      %v6209 = vsel %vm2205, %v6206, %v6208
      %v6210 = vrot.slane %v5055, 4
      %v6211 = vsel %vm2205, %v6208, %v6210
      %v6212 = vrot.slane %v5061, 4
      %v6213 = vsel %vm2205, %v6210, %v6212
      %v6214 = vrot.slane %v5065, 4
      %v6215 = vsel %vm2205, %v6212, %v6214
      %v6216 = vrot.slane %v5071, 4
      %v6217 = vsel %vm2205, %v6214, %v6216
      %v6218 = vrot.slane %v5075, 4
      %v6219 = vsel %vm2205, %v6216, %v6218
      %v6220 = vrot.slane %v5081, 4
      %v6221 = vsel %vm2205, %v6218, %v6220
      %v6222 = vrot.slane %v5085, 4
      %v6223 = vsel %vm2205, %v6220, %v6222
      %v6224 = vrot.slane %v5091, 4
      %v6225 = vsel %vm2205, %v6222, %v6224
      %v6226 = vrot.slane %v5095, 4
      %v6227 = vsel %vm2205, %v6224, %v6226
      %v6228 = vrot.slane %v5101, 4
      %v6229 = vsel %vm2205, %v6226, %v6228
      %v6230 = vrot.slane %v5105, 4
      %v6231 = vsel %vm2205, %v6228, %v6230
      %v6232 = vrot.slane %v5111, 4
      %v6233 = vsel %vm2205, %v6230, %v6232
      %v6234 = vrot.slane %v5115, 4
      %v6235 = vsel %vm2205, %v6232, %v6234
      %v6236 = vrot.slane %v5121, 4
      %v6237 = vsel %vm2205, %v6234, %v6236
      %v6238 = vrot.slane %v5125, 4
      %v6239 = vsel %vm2205, %v6236, %v6238
      %v6240 = vrot.slane %v5131, 4
      %v6241 = vsel %vm2205, %v6238, %v6240
      %v6242 = vrot.slane %v5135, 4
      %v6243 = vsel %vm2205, %v6240, %v6242
      %v6244 = vrot.slane %v5141, 4
      %v6245 = vsel %vm2205, %v6242, %v6244
      %v6246 = vrot.slane %v5145, 4
      %v6247 = vsel %vm2205, %v6244, %v6246
      %v6248 = vrot.slane %v5151, 4
      %v6249 = vsel %vm2205, %v6246, %v6248
      %v6250 = vrot.slane %v5155, 4
      %v6251 = vsel %vm2205, %v6248, %v6250
      %v6252 = vrot.slane %v5161, 4
      %v6253 = vsel %vm2205, %v6250, %v6252
      %v6254 = vrot.slane %v5165, 4
      %v6255 = vsel %vm2205, %v6252, %v6254
      %v6256 = vrot.slane %v5171, 4
      %v6257 = vsel %vm2205, %v6254, %v6256
      %v6258 = vrot.slane %v5175, 4
      %v6259 = vsel %vm2205, %v6256, %v6258
      %v6260 = vrot.slane %v5181, 4
      %v6261 = vsel %vm2205, %v6258, %v6260
      %v6262 = vrot.slane %v5185, 4
      %v6263 = vsel %vm2205, %v6260, %v6262
      %v6264 = vrot.slane %v5191, 4
      %v6265 = vsel %vm2205, %v6262, %v6264
      %v6266 = vrot.slane %v5195, 4
      %v6267 = vsel %vm2205, %v6264, %v6266
      %v6268 = vrot.slane %v5201, 4
      %v6269 = vsel %vm2205, %v6266, %v6268
      %v6270 = vrot.slane %v5205, 4
      %v6271 = vsel %vm2205, %v6268, %v6270
      %v6272 = vrot.slane %v5211, 4
      %v6273 = vsel %vm2205, %v6270, %v6272
      %v6274 = vrot.slane %v5215, 4
      %v6275 = vsel %vm2205, %v6272, %v6274
      %v6276 = vrot.slane %v5221, 4
      %v6277 = vsel %vm2205, %v6274, %v6276
      %v6278 = vrot.slane %v5225, 4
      %v6279 = vsel %vm2205, %v6276, %v6278
      %v6280 = vrot.slane %v5231, 4
      %v6281 = vsel %vm2205, %v6278, %v6280
      %v6282 = vrot.slane %v5235, 4
      %v6283 = vsel %vm2205, %v6280, %v6282
      %v6284 = vrot.slane %v5241, 4
      %v6285 = vsel %vm2205, %v6282, %v6284
      %6286 = vrot.lane.b32.xlu0 %v6207, 48
      %v6287 = vpop.permute.xlu0 %6286
      %6288 = vrot.lane.b32.xlu0 %v6209, 48
      %v6289 = vpop.permute.xlu0 %6288
      %6290 = vrot.lane.b32.xlu0 %v6211, 48
      %v6291 = vpop.permute.xlu0 %6290
      %6292 = vrot.lane.b32.xlu0 %v6213, 48
      %v6293 = vpop.permute.xlu0 %6292
      %6294 = vrot.lane.b32.xlu0 %v6215, 48
      %v6295 = vpop.permute.xlu0 %6294
      %6296 = vrot.lane.b32.xlu0 %v6217, 48
      %v6297 = vpop.permute.xlu0 %6296
      %6298 = vrot.lane.b32.xlu0 %v6219, 48
      %v6299 = vpop.permute.xlu0 %6298
      %6300 = vrot.lane.b32.xlu0 %v6221, 48
      %v6301 = vpop.permute.xlu0 %6300
      %6302 = vrot.lane.b32.xlu0 %v6223, 48
      %v6303 = vpop.permute.xlu0 %6302
      %6304 = vrot.lane.b32.xlu0 %v6225, 48
      %v6305 = vpop.permute.xlu0 %6304
      %6306 = vrot.lane.b32.xlu0 %v6227, 48
      %v6307 = vpop.permute.xlu0 %6306
      %6308 = vrot.lane.b32.xlu0 %v6229, 48
      %v6309 = vpop.permute.xlu0 %6308
      %6310 = vrot.lane.b32.xlu0 %v6231, 48
      %v6311 = vpop.permute.xlu0 %6310
      %6312 = vrot.lane.b32.xlu0 %v6233, 48
      %v6313 = vpop.permute.xlu0 %6312
      %6314 = vrot.lane.b32.xlu0 %v6235, 48
      %v6315 = vpop.permute.xlu0 %6314
      %6316 = vrot.lane.b32.xlu0 %v6237, 48
      %v6317 = vpop.permute.xlu0 %6316
      %6318 = vrot.lane.b32.xlu0 %v6239, 48
      %v6319 = vpop.permute.xlu0 %6318
      %6320 = vrot.lane.b32.xlu0 %v6241, 48
      %v6321 = vpop.permute.xlu0 %6320
      %6322 = vrot.lane.b32.xlu0 %v6243, 48
      %v6323 = vpop.permute.xlu0 %6322
      %6324 = vrot.lane.b32.xlu0 %v6245, 48
      %v6325 = vpop.permute.xlu0 %6324
      %6326 = vrot.lane.b32.xlu0 %v6247, 48
      %v6327 = vpop.permute.xlu0 %6326
      %6328 = vrot.lane.b32.xlu0 %v6249, 48
      %v6329 = vpop.permute.xlu0 %6328
      %6330 = vrot.lane.b32.xlu0 %v6251, 48
      %v6331 = vpop.permute.xlu0 %6330
      %6332 = vrot.lane.b32.xlu0 %v6253, 48
      %v6333 = vpop.permute.xlu0 %6332
      %6334 = vrot.lane.b32.xlu0 %v6255, 48
      %v6335 = vpop.permute.xlu0 %6334
      %6336 = vrot.lane.b32.xlu0 %v6257, 48
      %v6337 = vpop.permute.xlu0 %6336
      %6338 = vrot.lane.b32.xlu0 %v6259, 48
      %v6339 = vpop.permute.xlu0 %6338
      %6340 = vrot.lane.b32.xlu0 %v6261, 48
      %v6341 = vpop.permute.xlu0 %6340
      %6342 = vrot.lane.b32.xlu0 %v6263, 48
      %v6343 = vpop.permute.xlu0 %6342
      %6344 = vrot.lane.b32.xlu0 %v6265, 48
      %v6345 = vpop.permute.xlu0 %6344
      %6346 = vrot.lane.b32.xlu0 %v6267, 48
      %v6347 = vpop.permute.xlu0 %6346
      %6348 = vrot.lane.b32.xlu0 %v6269, 48
      %v6349 = vpop.permute.xlu0 %6348
      %6350 = vrot.lane.b32.xlu0 %v6271, 48
      %v6351 = vpop.permute.xlu0 %6350
      %6352 = vrot.lane.b32.xlu0 %v6273, 48
      %v6353 = vpop.permute.xlu0 %6352
      %6354 = vrot.lane.b32.xlu0 %v6275, 48
      %v6355 = vpop.permute.xlu0 %6354
      %6356 = vrot.lane.b32.xlu0 %v6277, 48
      %v6357 = vpop.permute.xlu0 %6356
      %6358 = vrot.lane.b32.xlu0 %v6279, 48
      %v6359 = vpop.permute.xlu0 %6358
      %6360 = vrot.lane.b32.xlu0 %v6281, 48
      %v6361 = vpop.permute.xlu0 %6360
      %6362 = vrot.lane.b32.xlu0 %v6283, 48
      %v6363 = vpop.permute.xlu0 %6362
      %6364 = vrot.lane.b32.xlu0 %v6285, 48
      %v6365 = vpop.permute.xlu0 %6364
      %6366 = vrot.lane.b32.xlu0 %v6284, 48
      %v6367 = vpop.permute.xlu0 %6366
      %v6409 = vadd.f32 %v6164, %v6287
      %v6410 = vadd.f32 %v6165, %v6289
      %v6411 = vadd.f32 %v6166, %v6291
      %v6412 = vadd.f32 %v6167, %v6293
      %v6413 = vadd.f32 %v6168, %v6295
      %v6414 = vadd.f32 %v6169, %v6297
      %v6415 = vadd.f32 %v6170, %v6299
      %v6416 = vadd.f32 %v6171, %v6301
      %v6417 = vadd.f32 %v6172, %v6303
      %v6418 = vadd.f32 %v6173, %v6305
      %v6419 = vadd.f32 %v6174, %v6307
      %v6420 = vadd.f32 %v6175, %v6309
      %v6421 = vadd.f32 %v6176, %v6311
      %v6422 = vadd.f32 %v6177, %v6313
      %v6423 = vadd.f32 %v6178, %v6315
      %v6424 = vadd.f32 %v6179, %v6317
      %v6425 = vadd.f32 %v6180, %v6319
      %v6426 = vadd.f32 %v6181, %v6321
      %v6427 = vadd.f32 %v6182, %v6323
      %v6428 = vadd.f32 %v6183, %v6325
      %v6429 = vadd.f32 %v6184, %v6327
      %v6430 = vadd.f32 %v6185, %v6329
      %v6431 = vadd.f32 %v6186, %v6331
      %v6432 = vadd.f32 %v6187, %v6333
      %v6433 = vadd.f32 %v6188, %v6335
      %v6434 = vadd.f32 %v6189, %v6337
      %v6435 = vadd.f32 %v6190, %v6339
      %v6436 = vadd.f32 %v6191, %v6341
      %v6437 = vadd.f32 %v6192, %v6343
      %v6438 = vadd.f32 %v6193, %v6345
      %v6439 = vadd.f32 %v6194, %v6347
      %v6440 = vadd.f32 %v6195, %v6349
      %v6441 = vadd.f32 %v6196, %v6351
      %v6442 = vadd.f32 %v6197, %v6353
      %v6443 = vadd.f32 %v6198, %v6355
      %v6444 = vadd.f32 %v6199, %v6357
      %v6445 = vadd.f32 %v6200, %v6359
      %v6446 = vadd.f32 %v6201, %v6361
      %v6447 = vadd.f32 %v6202, %v6363
      %v6448 = vadd.f32 %v6203, %v6365
      %v6449 = vadd.f32 %v6204, %v6367
      %v6452 = vrot.slane %v5245, 4
      %v6453 = vsel %vm2205, %v6284, %v6452
      %v6454 = vrot.slane %v5251, 4
      %v6455 = vsel %vm2205, %v6452, %v6454
      %6456 = vrot.lane.b32.xlu0 %v6211, 32
      %v6457 = vpop.permute.xlu0 %6456
      %6458 = vrot.lane.b32.xlu0 %v6213, 32
      %v6459 = vpop.permute.xlu0 %6458
      %6460 = vrot.lane.b32.xlu0 %v6215, 32
      %v6461 = vpop.permute.xlu0 %6460
      %6462 = vrot.lane.b32.xlu0 %v6217, 32
      %v6463 = vpop.permute.xlu0 %6462
      %6464 = vrot.lane.b32.xlu0 %v6219, 32
      %v6465 = vpop.permute.xlu0 %6464
      %6466 = vrot.lane.b32.xlu0 %v6221, 32
      %v6467 = vpop.permute.xlu0 %6466
      %6468 = vrot.lane.b32.xlu0 %v6223, 32
      %v6469 = vpop.permute.xlu0 %6468
      %6470 = vrot.lane.b32.xlu0 %v6225, 32
      %v6471 = vpop.permute.xlu0 %6470
      %6472 = vrot.lane.b32.xlu0 %v6227, 32
      %v6473 = vpop.permute.xlu0 %6472
      %6474 = vrot.lane.b32.xlu0 %v6229, 32
      %v6475 = vpop.permute.xlu0 %6474
      %6476 = vrot.lane.b32.xlu0 %v6231, 32
      %v6477 = vpop.permute.xlu0 %6476
      %6478 = vrot.lane.b32.xlu0 %v6233, 32
      %v6479 = vpop.permute.xlu0 %6478
      %6480 = vrot.lane.b32.xlu0 %v6235, 32
      %v6481 = vpop.permute.xlu0 %6480
      %6482 = vrot.lane.b32.xlu0 %v6237, 32
      %v6483 = vpop.permute.xlu0 %6482
      %6484 = vrot.lane.b32.xlu0 %v6239, 32
      %v6485 = vpop.permute.xlu0 %6484
      %6486 = vrot.lane.b32.xlu0 %v6241, 32
      %v6487 = vpop.permute.xlu0 %6486
      %6488 = vrot.lane.b32.xlu0 %v6243, 32
      %v6489 = vpop.permute.xlu0 %6488
      %6490 = vrot.lane.b32.xlu0 %v6245, 32
      %v6491 = vpop.permute.xlu0 %6490
      %6492 = vrot.lane.b32.xlu0 %v6247, 32
      %v6493 = vpop.permute.xlu0 %6492
      %6494 = vrot.lane.b32.xlu0 %v6249, 32
      %v6495 = vpop.permute.xlu0 %6494
      %6496 = vrot.lane.b32.xlu0 %v6251, 32
      %v6497 = vpop.permute.xlu0 %6496
      %6498 = vrot.lane.b32.xlu0 %v6253, 32
      %v6499 = vpop.permute.xlu0 %6498
      %6500 = vrot.lane.b32.xlu0 %v6255, 32
      %v6501 = vpop.permute.xlu0 %6500
      %6502 = vrot.lane.b32.xlu0 %v6257, 32
      %v6503 = vpop.permute.xlu0 %6502
      %6504 = vrot.lane.b32.xlu0 %v6259, 32
      %v6505 = vpop.permute.xlu0 %6504
      %6506 = vrot.lane.b32.xlu0 %v6261, 32
      %v6507 = vpop.permute.xlu0 %6506
      %6508 = vrot.lane.b32.xlu0 %v6263, 32
      %v6509 = vpop.permute.xlu0 %6508
      %6510 = vrot.lane.b32.xlu0 %v6265, 32
      %v6511 = vpop.permute.xlu0 %6510
      %6512 = vrot.lane.b32.xlu0 %v6267, 32
      %v6513 = vpop.permute.xlu0 %6512
      %6514 = vrot.lane.b32.xlu0 %v6269, 32
      %v6515 = vpop.permute.xlu0 %6514
      %6516 = vrot.lane.b32.xlu0 %v6271, 32
      %v6517 = vpop.permute.xlu0 %6516
      %6518 = vrot.lane.b32.xlu0 %v6273, 32
      %v6519 = vpop.permute.xlu0 %6518
      %6520 = vrot.lane.b32.xlu0 %v6275, 32
      %v6521 = vpop.permute.xlu0 %6520
      %6522 = vrot.lane.b32.xlu0 %v6277, 32
      %v6523 = vpop.permute.xlu0 %6522
      %6524 = vrot.lane.b32.xlu0 %v6279, 32
      %v6525 = vpop.permute.xlu0 %6524
      %6526 = vrot.lane.b32.xlu0 %v6281, 32
      %v6527 = vpop.permute.xlu0 %6526
      %6528 = vrot.lane.b32.xlu0 %v6283, 32
      %v6529 = vpop.permute.xlu0 %6528
      %6530 = vrot.lane.b32.xlu0 %v6285, 32
      %v6531 = vpop.permute.xlu0 %6530
      %6532 = vrot.lane.b32.xlu0 %v6453, 32
      %v6533 = vpop.permute.xlu0 %6532
      %6534 = vrot.lane.b32.xlu0 %v6455, 32
      %v6535 = vpop.permute.xlu0 %6534
      %6536 = vrot.lane.b32.xlu0 %v6454, 32
      %v6537 = vpop.permute.xlu0 %6536
      %v6579 = vadd.f32 %v6409, %v6457
      %v6580 = vadd.f32 %v6410, %v6459
      %v6581 = vadd.f32 %v6411, %v6461
      %v6582 = vadd.f32 %v6412, %v6463
      %v6583 = vadd.f32 %v6413, %v6465
      %v6584 = vadd.f32 %v6414, %v6467
      %v6585 = vadd.f32 %v6415, %v6469
      %v6586 = vadd.f32 %v6416, %v6471
      %v6587 = vadd.f32 %v6417, %v6473
      %v6588 = vadd.f32 %v6418, %v6475
      %v6589 = vadd.f32 %v6419, %v6477
      %v6590 = vadd.f32 %v6420, %v6479
      %v6591 = vadd.f32 %v6421, %v6481
      %v6592 = vadd.f32 %v6422, %v6483
      %v6593 = vadd.f32 %v6423, %v6485
      %v6594 = vadd.f32 %v6424, %v6487
      %v6595 = vadd.f32 %v6425, %v6489
      %v6596 = vadd.f32 %v6426, %v6491
      %v6597 = vadd.f32 %v6427, %v6493
      %v6598 = vadd.f32 %v6428, %v6495
      %v6599 = vadd.f32 %v6429, %v6497
      %v6600 = vadd.f32 %v6430, %v6499
      %v6601 = vadd.f32 %v6431, %v6501
      %v6602 = vadd.f32 %v6432, %v6503
      %v6603 = vadd.f32 %v6433, %v6505
      %v6604 = vadd.f32 %v6434, %v6507
      %v6605 = vadd.f32 %v6435, %v6509
      %v6606 = vadd.f32 %v6436, %v6511
      %v6607 = vadd.f32 %v6437, %v6513
      %v6608 = vadd.f32 %v6438, %v6515
      %v6609 = vadd.f32 %v6439, %v6517
      %v6610 = vadd.f32 %v6440, %v6519
      %v6611 = vadd.f32 %v6441, %v6521
      %v6612 = vadd.f32 %v6442, %v6523
      %v6613 = vadd.f32 %v6443, %v6525
      %v6614 = vadd.f32 %v6444, %v6527
      %v6615 = vadd.f32 %v6445, %v6529
      %v6616 = vadd.f32 %v6446, %v6531
      %v6617 = vadd.f32 %v6447, %v6533
      %v6618 = vadd.f32 %v6448, %v6535
      %v6619 = vadd.f32 %v6449, %v6537
      %v6621 = vrot.slane %v5051, 5
      %v6622 = vrot.slane %v5055, 5
      %v6623 = vsel %vm2663, %v6621, %v6622
      %v6624 = vrot.slane %v5061, 5
      %v6625 = vsel %vm2663, %v6622, %v6624
      %v6626 = vrot.slane %v5065, 5
      %v6627 = vsel %vm2663, %v6624, %v6626
      %v6628 = vrot.slane %v5071, 5
      %v6629 = vsel %vm2663, %v6626, %v6628
      %v6630 = vrot.slane %v5075, 5
      %v6631 = vsel %vm2663, %v6628, %v6630
      %v6632 = vrot.slane %v5081, 5
      %v6633 = vsel %vm2663, %v6630, %v6632
      %v6634 = vrot.slane %v5085, 5
      %v6635 = vsel %vm2663, %v6632, %v6634
      %v6636 = vrot.slane %v5091, 5
      %v6637 = vsel %vm2663, %v6634, %v6636
      %v6638 = vrot.slane %v5095, 5
      %v6639 = vsel %vm2663, %v6636, %v6638
      %v6640 = vrot.slane %v5101, 5
      %v6641 = vsel %vm2663, %v6638, %v6640
      %v6642 = vrot.slane %v5105, 5
      %v6643 = vsel %vm2663, %v6640, %v6642
      %v6644 = vrot.slane %v5111, 5
      %v6645 = vsel %vm2663, %v6642, %v6644
      %v6646 = vrot.slane %v5115, 5
      %v6647 = vsel %vm2663, %v6644, %v6646
      %v6648 = vrot.slane %v5121, 5
      %v6649 = vsel %vm2663, %v6646, %v6648
      %v6650 = vrot.slane %v5125, 5
      %v6651 = vsel %vm2663, %v6648, %v6650
      %v6652 = vrot.slane %v5131, 5
      %v6653 = vsel %vm2663, %v6650, %v6652
      %v6654 = vrot.slane %v5135, 5
      %v6655 = vsel %vm2663, %v6652, %v6654
      %v6656 = vrot.slane %v5141, 5
      %v6657 = vsel %vm2663, %v6654, %v6656
      %v6658 = vrot.slane %v5145, 5
      %v6659 = vsel %vm2663, %v6656, %v6658
      %v6660 = vrot.slane %v5151, 5
      %v6661 = vsel %vm2663, %v6658, %v6660
      %v6662 = vrot.slane %v5155, 5
      %v6663 = vsel %vm2663, %v6660, %v6662
      %v6664 = vrot.slane %v5161, 5
      %v6665 = vsel %vm2663, %v6662, %v6664
      %v6666 = vrot.slane %v5165, 5
      %v6667 = vsel %vm2663, %v6664, %v6666
      %v6668 = vrot.slane %v5171, 5
      %v6669 = vsel %vm2663, %v6666, %v6668
      %v6670 = vrot.slane %v5175, 5
      %v6671 = vsel %vm2663, %v6668, %v6670
      %v6672 = vrot.slane %v5181, 5
      %v6673 = vsel %vm2663, %v6670, %v6672
      %v6674 = vrot.slane %v5185, 5
      %v6675 = vsel %vm2663, %v6672, %v6674
      %v6676 = vrot.slane %v5191, 5
      %v6677 = vsel %vm2663, %v6674, %v6676
      %v6678 = vrot.slane %v5195, 5
      %v6679 = vsel %vm2663, %v6676, %v6678
      %v6680 = vrot.slane %v5201, 5
      %v6681 = vsel %vm2663, %v6678, %v6680
      %v6682 = vrot.slane %v5205, 5
      %v6683 = vsel %vm2663, %v6680, %v6682
      %v6684 = vrot.slane %v5211, 5
      %v6685 = vsel %vm2663, %v6682, %v6684
      %v6686 = vrot.slane %v5215, 5
      %v6687 = vsel %vm2663, %v6684, %v6686
      %v6688 = vrot.slane %v5221, 5
      %v6689 = vsel %vm2663, %v6686, %v6688
      %v6690 = vrot.slane %v5225, 5
      %v6691 = vsel %vm2663, %v6688, %v6690
      %v6692 = vrot.slane %v5231, 5
      %v6693 = vsel %vm2663, %v6690, %v6692
      %v6694 = vrot.slane %v5235, 5
      %v6695 = vsel %vm2663, %v6692, %v6694
      %v6696 = vrot.slane %v5241, 5
      %v6697 = vsel %vm2663, %v6694, %v6696
      %v6698 = vrot.slane %v5245, 5
      %v6699 = vsel %vm2663, %v6696, %v6698
      %v6700 = vrot.slane %v5251, 5
      %v6701 = vsel %vm2663, %v6698, %v6700
      %v6702 = vrot.slane %v5255, 5
      %v6703 = vsel %vm2663, %v6700, %v6702
      %6704 = vrot.lane.b32.xlu0 %v6623, 16
      %v6705 = vpop.permute.xlu0 %6704
      %6706 = vrot.lane.b32.xlu0 %v6625, 16
      %v6707 = vpop.permute.xlu0 %6706
      %6708 = vrot.lane.b32.xlu0 %v6627, 16
      %v6709 = vpop.permute.xlu0 %6708
      %6710 = vrot.lane.b32.xlu0 %v6629, 16
      %v6711 = vpop.permute.xlu0 %6710
      %6712 = vrot.lane.b32.xlu0 %v6631, 16
      %v6713 = vpop.permute.xlu0 %6712
      %6714 = vrot.lane.b32.xlu0 %v6633, 16
      %v6715 = vpop.permute.xlu0 %6714
      %6716 = vrot.lane.b32.xlu0 %v6635, 16
      %v6717 = vpop.permute.xlu0 %6716
      %6718 = vrot.lane.b32.xlu0 %v6637, 16
      %v6719 = vpop.permute.xlu0 %6718
      %6720 = vrot.lane.b32.xlu0 %v6639, 16
      %v6721 = vpop.permute.xlu0 %6720
      %6722 = vrot.lane.b32.xlu0 %v6641, 16
      %v6723 = vpop.permute.xlu0 %6722
      %6724 = vrot.lane.b32.xlu0 %v6643, 16
      %v6725 = vpop.permute.xlu0 %6724
      %6726 = vrot.lane.b32.xlu0 %v6645, 16
      %v6727 = vpop.permute.xlu0 %6726
      %6728 = vrot.lane.b32.xlu0 %v6647, 16
      %v6729 = vpop.permute.xlu0 %6728
      %6730 = vrot.lane.b32.xlu0 %v6649, 16
      %v6731 = vpop.permute.xlu0 %6730
      %6732 = vrot.lane.b32.xlu0 %v6651, 16
      %v6733 = vpop.permute.xlu0 %6732
      %6734 = vrot.lane.b32.xlu0 %v6653, 16
      %v6735 = vpop.permute.xlu0 %6734
      %6736 = vrot.lane.b32.xlu0 %v6655, 16
      %v6737 = vpop.permute.xlu0 %6736
      %6738 = vrot.lane.b32.xlu0 %v6657, 16
      %v6739 = vpop.permute.xlu0 %6738
      %6740 = vrot.lane.b32.xlu0 %v6659, 16
      %v6741 = vpop.permute.xlu0 %6740
      %6742 = vrot.lane.b32.xlu0 %v6661, 16
      %v6743 = vpop.permute.xlu0 %6742
      %6744 = vrot.lane.b32.xlu0 %v6663, 16
      %v6745 = vpop.permute.xlu0 %6744
      %6746 = vrot.lane.b32.xlu0 %v6665, 16
      %v6747 = vpop.permute.xlu0 %6746
      %6748 = vrot.lane.b32.xlu0 %v6667, 16
      %v6749 = vpop.permute.xlu0 %6748
      %6750 = vrot.lane.b32.xlu0 %v6669, 16
      %v6751 = vpop.permute.xlu0 %6750
      %6752 = vrot.lane.b32.xlu0 %v6671, 16
      %v6753 = vpop.permute.xlu0 %6752
      %6754 = vrot.lane.b32.xlu0 %v6673, 16
      %v6755 = vpop.permute.xlu0 %6754
      %6756 = vrot.lane.b32.xlu0 %v6675, 16
      %v6757 = vpop.permute.xlu0 %6756
      %6758 = vrot.lane.b32.xlu0 %v6677, 16
      %v6759 = vpop.permute.xlu0 %6758
      %6760 = vrot.lane.b32.xlu0 %v6679, 16
      %v6761 = vpop.permute.xlu0 %6760
      %6762 = vrot.lane.b32.xlu0 %v6681, 16
      %v6763 = vpop.permute.xlu0 %6762
      %6764 = vrot.lane.b32.xlu0 %v6683, 16
      %v6765 = vpop.permute.xlu0 %6764
      %6766 = vrot.lane.b32.xlu0 %v6685, 16
      %v6767 = vpop.permute.xlu0 %6766
      %6768 = vrot.lane.b32.xlu0 %v6687, 16
      %v6769 = vpop.permute.xlu0 %6768
      %6770 = vrot.lane.b32.xlu0 %v6689, 16
      %v6771 = vpop.permute.xlu0 %6770
      %6772 = vrot.lane.b32.xlu0 %v6691, 16
      %v6773 = vpop.permute.xlu0 %6772
      %6774 = vrot.lane.b32.xlu0 %v6693, 16
      %v6775 = vpop.permute.xlu0 %6774
      %6776 = vrot.lane.b32.xlu0 %v6695, 16
      %v6777 = vpop.permute.xlu0 %6776
      %6778 = vrot.lane.b32.xlu0 %v6697, 16
      %v6779 = vpop.permute.xlu0 %6778
      %6780 = vrot.lane.b32.xlu0 %v6699, 16
      %v6781 = vpop.permute.xlu0 %6780
      %6782 = vrot.lane.b32.xlu0 %v6701, 16
      %v6783 = vpop.permute.xlu0 %6782
      %6784 = vrot.lane.b32.xlu0 %v6703, 16
      %v6785 = vpop.permute.xlu0 %6784
      %v6827 = vadd.f32 %v6579, %v6705
      %v6828 = vadd.f32 %v6580, %v6707
      %v6829 = vadd.f32 %v6581, %v6709
      %v6830 = vadd.f32 %v6582, %v6711
      %v6831 = vadd.f32 %v6583, %v6713
      %v6832 = vadd.f32 %v6584, %v6715
      %v6833 = vadd.f32 %v6585, %v6717
      %v6834 = vadd.f32 %v6586, %v6719
      %v6835 = vadd.f32 %v6587, %v6721
      %v6836 = vadd.f32 %v6588, %v6723
      %v6837 = vadd.f32 %v6589, %v6725
      %v6838 = vadd.f32 %v6590, %v6727
      %v6839 = vadd.f32 %v6591, %v6729
      %v6840 = vadd.f32 %v6592, %v6731
      %v6841 = vadd.f32 %v6593, %v6733
      %v6842 = vadd.f32 %v6594, %v6735
      %v6843 = vadd.f32 %v6595, %v6737
      %v6844 = vadd.f32 %v6596, %v6739
      %v6845 = vadd.f32 %v6597, %v6741
      %v6846 = vadd.f32 %v6598, %v6743
      %v6847 = vadd.f32 %v6599, %v6745
      %v6848 = vadd.f32 %v6600, %v6747
      %v6849 = vadd.f32 %v6601, %v6749
      %v6850 = vadd.f32 %v6602, %v6751
      %v6851 = vadd.f32 %v6603, %v6753
      %v6852 = vadd.f32 %v6604, %v6755
      %v6853 = vadd.f32 %v6605, %v6757
      %v6854 = vadd.f32 %v6606, %v6759
      %v6855 = vadd.f32 %v6607, %v6761
      %v6856 = vadd.f32 %v6608, %v6763
      %v6857 = vadd.f32 %v6609, %v6765
      %v6858 = vadd.f32 %v6610, %v6767
      %v6859 = vadd.f32 %v6611, %v6769
      %v6860 = vadd.f32 %v6612, %v6771
      %v6861 = vadd.f32 %v6613, %v6773
      %v6862 = vadd.f32 %v6614, %v6775
      %v6863 = vadd.f32 %v6615, %v6777
      %v6864 = vadd.f32 %v6616, %v6779
      %v6865 = vadd.f32 %v6617, %v6781
      %v6866 = vadd.f32 %v6618, %v6783
      %v6867 = vadd.f32 %v6619, %v6785
      %v6910 = vrot.slane %v5053, 6
      %v6911 = vrot.slane %v5057, 6
      %v6912 = vsel %vm2981, %v6910, %v6911
      %v6913 = vrot.slane %v5063, 6
      %v6914 = vsel %vm2981, %v6911, %v6913
      %v6915 = vrot.slane %v5067, 6
      %v6916 = vsel %vm2981, %v6913, %v6915
      %v6917 = vrot.slane %v5073, 6
      %v6918 = vsel %vm2981, %v6915, %v6917
      %v6919 = vrot.slane %v5077, 6
      %v6920 = vsel %vm2981, %v6917, %v6919
      %v6921 = vrot.slane %v5083, 6
      %v6922 = vsel %vm2981, %v6919, %v6921
      %v6923 = vrot.slane %v5087, 6
      %v6924 = vsel %vm2981, %v6921, %v6923
      %v6925 = vrot.slane %v5093, 6
      %v6926 = vsel %vm2981, %v6923, %v6925
      %v6927 = vrot.slane %v5097, 6
      %v6928 = vsel %vm2981, %v6925, %v6927
      %v6929 = vrot.slane %v5103, 6
      %v6930 = vsel %vm2981, %v6927, %v6929
      %v6931 = vrot.slane %v5107, 6
      %v6932 = vsel %vm2981, %v6929, %v6931
      %v6933 = vrot.slane %v5113, 6
      %v6934 = vsel %vm2981, %v6931, %v6933
      %v6935 = vrot.slane %v5117, 6
      %v6936 = vsel %vm2981, %v6933, %v6935
      %v6937 = vrot.slane %v5123, 6
      %v6938 = vsel %vm2981, %v6935, %v6937
      %v6939 = vrot.slane %v5127, 6
      %v6940 = vsel %vm2981, %v6937, %v6939
      %v6941 = vrot.slane %v5133, 6
      %v6942 = vsel %vm2981, %v6939, %v6941
      %v6943 = vrot.slane %v5137, 6
      %v6944 = vsel %vm2981, %v6941, %v6943
      %v6945 = vrot.slane %v5143, 6
      %v6946 = vsel %vm2981, %v6943, %v6945
      %v6947 = vrot.slane %v5147, 6
      %v6948 = vsel %vm2981, %v6945, %v6947
      %v6949 = vrot.slane %v5153, 6
      %v6950 = vsel %vm2981, %v6947, %v6949
      %v6951 = vrot.slane %v5157, 6
      %v6952 = vsel %vm2981, %v6949, %v6951
      %v6953 = vrot.slane %v5163, 6
      %v6954 = vsel %vm2981, %v6951, %v6953
      %v6955 = vrot.slane %v5167, 6
      %v6956 = vsel %vm2981, %v6953, %v6955
      %v6957 = vrot.slane %v5173, 6
      %v6958 = vsel %vm2981, %v6955, %v6957
      %v6959 = vrot.slane %v5177, 6
      %v6960 = vsel %vm2981, %v6957, %v6959
      %v6961 = vrot.slane %v5183, 6
      %v6962 = vsel %vm2981, %v6959, %v6961
      %v6963 = vrot.slane %v5187, 6
      %v6964 = vsel %vm2981, %v6961, %v6963
      %v6965 = vrot.slane %v5193, 6
      %v6966 = vsel %vm2981, %v6963, %v6965
      %v6967 = vrot.slane %v5197, 6
      %v6968 = vsel %vm2981, %v6965, %v6967
      %v6969 = vrot.slane %v5203, 6
      %v6970 = vsel %vm2981, %v6967, %v6969
      %v6971 = vrot.slane %v5207, 6
      %v6972 = vsel %vm2981, %v6969, %v6971
      %v6973 = vrot.slane %v5213, 6
      %v6974 = vsel %vm2981, %v6971, %v6973
      %v6975 = vrot.slane %v5217, 6
      %v6976 = vsel %vm2981, %v6973, %v6975
      %v6977 = vrot.slane %v5223, 6
      %v6978 = vsel %vm2981, %v6975, %v6977
      %v6979 = vrot.slane %v5227, 6
      %v6980 = vsel %vm2981, %v6977, %v6979
      %v6981 = vrot.slane %v5233, 6
      %v6982 = vsel %vm2981, %v6979, %v6981
      %v6983 = vrot.slane %v5237, 6
      %v6984 = vsel %vm2981, %v6981, %v6983
      %v6985 = vrot.slane %v5243, 6
      %v6986 = vsel %vm2981, %v6983, %v6985
      %v6987 = vrot.slane %v5247, 6
      %v6988 = vsel %vm2981, %v6985, %v6987
      %v6989 = vrot.slane %v5253, 6
      %v6990 = vsel %vm2981, %v6987, %v6989
      %v6991 = vrot.slane %v5257, 6
      %v6992 = vsel %vm2981, %v6989, %v6991
      %v7034 = vadd.f32 %v6827, %v6912
      %v7035 = vadd.f32 %v6828, %v6914
      %v7036 = vadd.f32 %v6829, %v6916
      %v7037 = vadd.f32 %v6830, %v6918
      %v7038 = vadd.f32 %v6831, %v6920
      %v7039 = vadd.f32 %v6832, %v6922
      %v7040 = vadd.f32 %v6833, %v6924
      %v7041 = vadd.f32 %v6834, %v6926
      %v7042 = vadd.f32 %v6835, %v6928
      %v7043 = vadd.f32 %v6836, %v6930
      %v7044 = vadd.f32 %v6837, %v6932
      %v7045 = vadd.f32 %v6838, %v6934
      %v7046 = vadd.f32 %v6839, %v6936
      %v7047 = vadd.f32 %v6840, %v6938
      %v7048 = vadd.f32 %v6841, %v6940
      %v7049 = vadd.f32 %v6842, %v6942
      %v7050 = vadd.f32 %v6843, %v6944
      %v7051 = vadd.f32 %v6844, %v6946
      %v7052 = vadd.f32 %v6845, %v6948
      %v7053 = vadd.f32 %v6846, %v6950
      %v7054 = vadd.f32 %v6847, %v6952
      %v7055 = vadd.f32 %v6848, %v6954
      %v7056 = vadd.f32 %v6849, %v6956
      %v7057 = vadd.f32 %v6850, %v6958
      %v7058 = vadd.f32 %v6851, %v6960
      %v7059 = vadd.f32 %v6852, %v6962
      %v7060 = vadd.f32 %v6853, %v6964
      %v7061 = vadd.f32 %v6854, %v6966
      %v7062 = vadd.f32 %v6855, %v6968
      %v7063 = vadd.f32 %v6856, %v6970
      %v7064 = vadd.f32 %v6857, %v6972
      %v7065 = vadd.f32 %v6858, %v6974
      %v7066 = vadd.f32 %v6859, %v6976
      %v7067 = vadd.f32 %v6860, %v6978
      %v7068 = vadd.f32 %v6861, %v6980
      %v7069 = vadd.f32 %v6862, %v6982
      %v7070 = vadd.f32 %v6863, %v6984
      %v7071 = vadd.f32 %v6864, %v6986
      %v7072 = vadd.f32 %v6865, %v6988
      %v7073 = vadd.f32 %v6866, %v6990
      %v7074 = vadd.f32 %v6867, %v6992
      %v7075 = vld [vmem:[%s6] sm:$0x1]
      %v7077 = vlaneseq
      %v7078 = vshrl.u32 %v7077, 7
      %v7079 = vsub.s32 0, %v7078
      %v7080 = vrot.slane %v7075, %v7079
      %v7082 = vadd.f32 %v7034, %v7080
      %v7083 = vadd.f32 %v7035, %v7080
      %v7084 = vadd.f32 %v7036, %v7080
      %v7085 = vadd.f32 %v7037, %v7080
      %v7086 = vadd.f32 %v7038, %v7080
      %v7087 = vadd.f32 %v7039, %v7080
      %v7088 = vadd.f32 %v7040, %v7080
      %v7089 = vadd.f32 %v7041, %v7080
      %v7090 = vadd.f32 %v7042, %v7080
      %v7091 = vadd.f32 %v7043, %v7080
      %v7092 = vadd.f32 %v7044, %v7080
      %v7093 = vadd.f32 %v7045, %v7080
      %v7094 = vadd.f32 %v7046, %v7080
      %v7095 = vadd.f32 %v7047, %v7080
      %v7096 = vadd.f32 %v7048, %v7080
      %v7097 = vadd.f32 %v7049, %v7080
      %v7098 = vadd.f32 %v7050, %v7080
      %v7099 = vadd.f32 %v7051, %v7080
      %v7100 = vadd.f32 %v7052, %v7080
      %v7101 = vadd.f32 %v7053, %v7080
      %v7102 = vadd.f32 %v7054, %v7080
      %v7103 = vadd.f32 %v7055, %v7080
      %v7104 = vadd.f32 %v7056, %v7080
      %v7105 = vadd.f32 %v7057, %v7080
      %v7106 = vadd.f32 %v7058, %v7080
      %v7107 = vadd.f32 %v7059, %v7080
      %v7108 = vadd.f32 %v7060, %v7080
      %v7109 = vadd.f32 %v7061, %v7080
      %v7110 = vadd.f32 %v7062, %v7080
      %v7111 = vadd.f32 %v7063, %v7080
      %v7112 = vadd.f32 %v7064, %v7080
      %v7113 = vadd.f32 %v7065, %v7080
      %v7114 = vadd.f32 %v7066, %v7080
      %v7115 = vadd.f32 %v7067, %v7080
      %v7116 = vadd.f32 %v7068, %v7080
      %v7117 = vadd.f32 %v7069, %v7080
      %v7118 = vadd.f32 %v7070, %v7080
      %v7119 = vadd.f32 %v7071, %v7080
      %v7120 = vadd.f32 %v7072, %v7080
      %v7121 = vadd.f32 %v7073, %v7080
      %v7122 = vadd.f32 %v7074, %v7080
      %v7123 = vmax.f32 %v7082, 0.0
      %v7124 = vmax.f32 %v7083, 0.0
      %v7125 = vmax.f32 %v7084, 0.0
      %v7126 = vmax.f32 %v7085, 0.0
      %v7127 = vmax.f32 %v7086, 0.0
      %v7128 = vmax.f32 %v7087, 0.0
      %v7129 = vmax.f32 %v7088, 0.0
      %v7130 = vmax.f32 %v7089, 0.0
      %v7131 = vmax.f32 %v7090, 0.0
      %v7132 = vmax.f32 %v7091, 0.0
      %v7133 = vmax.f32 %v7092, 0.0
      %v7134 = vmax.f32 %v7093, 0.0
      %v7135 = vmax.f32 %v7094, 0.0
      %v7136 = vmax.f32 %v7095, 0.0
      %v7137 = vmax.f32 %v7096, 0.0
      %v7138 = vmax.f32 %v7097, 0.0
      %v7139 = vmax.f32 %v7098, 0.0
      %v7140 = vmax.f32 %v7099, 0.0
      %v7141 = vmax.f32 %v7100, 0.0
      %v7142 = vmax.f32 %v7101, 0.0
      %v7143 = vmax.f32 %v7102, 0.0
      %v7144 = vmax.f32 %v7103, 0.0
      %v7145 = vmax.f32 %v7104, 0.0
      %v7146 = vmax.f32 %v7105, 0.0
      %v7147 = vmax.f32 %v7106, 0.0
      %v7148 = vmax.f32 %v7107, 0.0
      %v7149 = vmax.f32 %v7108, 0.0
      %v7150 = vmax.f32 %v7109, 0.0
      %v7151 = vmax.f32 %v7110, 0.0
      %v7152 = vmax.f32 %v7111, 0.0
      %v7153 = vmax.f32 %v7112, 0.0
      %v7154 = vmax.f32 %v7113, 0.0
      %v7155 = vmax.f32 %v7114, 0.0
      %v7156 = vmax.f32 %v7115, 0.0
      %v7157 = vmax.f32 %v7116, 0.0
      %v7158 = vmax.f32 %v7117, 0.0
      %v7159 = vmax.f32 %v7118, 0.0
      %v7160 = vmax.f32 %v7119, 0.0
      %v7161 = vmax.f32 %v7120, 0.0
      %v7162 = vmax.f32 %v7121, 0.0
      %v7163 = vmax.f32 %v7122, 0.0
      %v7164 = vld [vmem:[%s2] sm:$0xff]
      %v7165 = vld [vmem:[%s2 + $0x8] sm:$0xff]
      %v7166 = vld [vmem:[%s2 + $0x10] sm:$0xff]
      %v7167 = vld [vmem:[%s2 + $0x18] sm:$0xff]
      %v7168 = vld [vmem:[%s2 + $0x20] sm:$0xff]
      %v7169 = vld [vmem:[%s2 + $0x28] sm:$0xff]
      %v7170 = vld [vmem:[%s2 + $0x30] sm:$0xff]
      %v7171 = vld [vmem:[%s2 + $0x38] sm:$0xff]
      %v7172 = vld [vmem:[%s2 + $0x40] sm:$0xff]
      %v7173 = vld [vmem:[%s2 + $0x48] sm:$0xff]
      %v7174 = vld [vmem:[%s2 + $0x50] sm:$0xff]
      %v7175 = vld [vmem:[%s2 + $0x58] sm:$0xff]
      %v7176 = vld [vmem:[%s2 + $0x60] sm:$0xff]
      %v7177 = vld [vmem:[%s2 + $0x68] sm:$0xff]
      %v7178 = vld [vmem:[%s2 + $0x70] sm:$0xff]
      %v7179 = vld [vmem:[%s2 + $0x78] sm:$0xff]
      %v7180 = vld [vmem:[%s2 + $0x80] sm:$0xff]
      %v7181 = vld [vmem:[%s2 + $0x88] sm:$0xff]
      %v7182 = vld [vmem:[%s2 + $0x90] sm:$0xff]
      %v7183 = vld [vmem:[%s2 + $0x98] sm:$0xff]
      %v7184 = vld [vmem:[%s2 + $0xa0] sm:$0xff]
      %v7185 = vld [vmem:[%s2 + $0xa8] sm:$0xff]
      %v7186 = vld [vmem:[%s2 + $0xb0] sm:$0xff]
      %v7187 = vld [vmem:[%s2 + $0xb8] sm:$0xff]
      %v7188 = vld [vmem:[%s2 + $0xc0] sm:$0xff]
      %v7189 = vld [vmem:[%s2 + $0xc8] sm:$0xff]
      %v7190 = vld [vmem:[%s2 + $0xd0] sm:$0xff]
      %v7191 = vld [vmem:[%s2 + $0xd8] sm:$0xff]
      %v7192 = vld [vmem:[%s2 + $0xe0] sm:$0xff]
      %v7193 = vld [vmem:[%s2 + $0xe8] sm:$0xff]
      %v7194 = vld [vmem:[%s2 + $0xf0] sm:$0xff]
      %v7195 = vld [vmem:[%s2 + $0xf8] sm:$0xff]
      %v7196 = vld [vmem:[%s2 + $0x100] sm:$0xff]
      %v7197 = vld [vmem:[%s2 + $0x108] sm:$0xff]
      %v7198 = vld [vmem:[%s2 + $0x110] sm:$0xff]
      %v7199 = vld [vmem:[%s2 + $0x118] sm:$0xff]
      %v7200 = vld [vmem:[%s2 + $0x120] sm:$0xff]
      %v7201 = vld [vmem:[%s2 + $0x128] sm:$0xff]
      %v7202 = vld [vmem:[%s2 + $0x130] sm:$0xff]
      %v7203 = vld [vmem:[%s2 + $0x138] sm:$0xff]
      %v7204 = vld [vmem:[%s2 + $0x140] sm:$0xf]
      %s7205 = sadd.s32 %s425, 4294967295
      %v7206 = vstv %s7205
      %v7207 = vadd.s32 %v7164, %v7206
      %v7208 = vadd.s32 %v7165, %v7206
      %v7209 = vadd.s32 %v7166, %v7206
      %v7210 = vadd.s32 %v7167, %v7206
      %v7211 = vadd.s32 %v7168, %v7206
      %v7212 = vadd.s32 %v7169, %v7206
      %v7213 = vadd.s32 %v7170, %v7206
      %v7214 = vadd.s32 %v7171, %v7206
      %v7215 = vadd.s32 %v7172, %v7206
      %v7216 = vadd.s32 %v7173, %v7206
      %v7217 = vadd.s32 %v7174, %v7206
      %v7218 = vadd.s32 %v7175, %v7206
      %v7219 = vadd.s32 %v7176, %v7206
      %v7220 = vadd.s32 %v7177, %v7206
      %v7221 = vadd.s32 %v7178, %v7206
      %v7222 = vadd.s32 %v7179, %v7206
      %v7223 = vadd.s32 %v7180, %v7206
      %v7224 = vadd.s32 %v7181, %v7206
      %v7225 = vadd.s32 %v7182, %v7206
      %v7226 = vadd.s32 %v7183, %v7206
      %v7227 = vadd.s32 %v7184, %v7206
      %v7228 = vadd.s32 %v7185, %v7206
      %v7229 = vadd.s32 %v7186, %v7206
      %v7230 = vadd.s32 %v7187, %v7206
      %v7231 = vadd.s32 %v7188, %v7206
      %v7232 = vadd.s32 %v7189, %v7206
      %v7233 = vadd.s32 %v7190, %v7206
      %v7234 = vadd.s32 %v7191, %v7206
      %v7235 = vadd.s32 %v7192, %v7206
      %v7236 = vadd.s32 %v7193, %v7206
      %v7237 = vadd.s32 %v7194, %v7206
      %v7238 = vadd.s32 %v7195, %v7206
      %v7239 = vadd.s32 %v7196, %v7206
      %v7240 = vadd.s32 %v7197, %v7206
      %v7241 = vadd.s32 %v7198, %v7206
      %v7242 = vadd.s32 %v7199, %v7206
      %v7243 = vadd.s32 %v7200, %v7206
      %v7244 = vadd.s32 %v7201, %v7206
      %v7245 = vadd.s32 %v7202, %v7206
      %v7246 = vadd.s32 %v7203, %v7206
      %v7247 = vadd.s32 %v7204, %v7206
      %v7248 = vld [vmem:[%s1] sm:$0xff]
      %v7249 = vld [vmem:[%s1 + $0x8] sm:$0xff]
      %v7250 = vld [vmem:[%s1 + $0x10] sm:$0xff]
      %v7251 = vld [vmem:[%s1 + $0x18] sm:$0xff]
      %v7252 = vld [vmem:[%s1 + $0x20] sm:$0xff]
      %v7253 = vld [vmem:[%s1 + $0x28] sm:$0xff]
      %v7254 = vld [vmem:[%s1 + $0x30] sm:$0xff]
      %v7255 = vld [vmem:[%s1 + $0x38] sm:$0xff]
      %v7256 = vld [vmem:[%s1 + $0x40] sm:$0xff]
      %v7257 = vld [vmem:[%s1 + $0x48] sm:$0xff]
      %v7258 = vld [vmem:[%s1 + $0x50] sm:$0xff]
      %v7259 = vld [vmem:[%s1 + $0x58] sm:$0xff]
      %v7260 = vld [vmem:[%s1 + $0x60] sm:$0xff]
      %v7261 = vld [vmem:[%s1 + $0x68] sm:$0xff]
      %v7262 = vld [vmem:[%s1 + $0x70] sm:$0xff]
      %v7263 = vld [vmem:[%s1 + $0x78] sm:$0xff]
      %v7264 = vld [vmem:[%s1 + $0x80] sm:$0xff]
      %v7265 = vld [vmem:[%s1 + $0x88] sm:$0xff]
      %v7266 = vld [vmem:[%s1 + $0x90] sm:$0xff]
      %v7267 = vld [vmem:[%s1 + $0x98] sm:$0xff]
      %v7268 = vld [vmem:[%s1 + $0xa0] sm:$0xff]
      %v7269 = vld [vmem:[%s1 + $0xa8] sm:$0xff]
      %v7270 = vld [vmem:[%s1 + $0xb0] sm:$0xff]
      %v7271 = vld [vmem:[%s1 + $0xb8] sm:$0xff]
      %v7272 = vld [vmem:[%s1 + $0xc0] sm:$0xff]
      %v7273 = vld [vmem:[%s1 + $0xc8] sm:$0xff]
      %v7274 = vld [vmem:[%s1 + $0xd0] sm:$0xff]
      %v7275 = vld [vmem:[%s1 + $0xd8] sm:$0xff]
      %v7276 = vld [vmem:[%s1 + $0xe0] sm:$0xff]
      %v7277 = vld [vmem:[%s1 + $0xe8] sm:$0xff]
      %v7278 = vld [vmem:[%s1 + $0xf0] sm:$0xff]
      %v7279 = vld [vmem:[%s1 + $0xf8] sm:$0xff]
      %v7280 = vld [vmem:[%s1 + $0x100] sm:$0xff]
      %v7281 = vld [vmem:[%s1 + $0x108] sm:$0xff]
      %v7282 = vld [vmem:[%s1 + $0x110] sm:$0xff]
      %v7283 = vld [vmem:[%s1 + $0x118] sm:$0xff]
      %v7284 = vld [vmem:[%s1 + $0x120] sm:$0xff]
      %v7285 = vld [vmem:[%s1 + $0x128] sm:$0xff]
      %v7286 = vld [vmem:[%s1 + $0x130] sm:$0xff]
      %v7287 = vld [vmem:[%s1 + $0x138] sm:$0xff]
      %v7288 = vld [vmem:[%s1 + $0x140] sm:$0xf]
      %vm7289 = vcmp.gt.s32.totalorder %v7248, 0
      %vm7290 = vcmp.gt.s32.totalorder %v7249, 0
      %vm7291 = vcmp.gt.s32.totalorder %v7250, 0
      %vm7292 = vcmp.gt.s32.totalorder %v7251, 0
      %vm7293 = vcmp.gt.s32.totalorder %v7252, 0
      %vm7294 = vcmp.gt.s32.totalorder %v7253, 0
      %vm7295 = vcmp.gt.s32.totalorder %v7254, 0
      %vm7296 = vcmp.gt.s32.totalorder %v7255, 0
      %vm7297 = vcmp.gt.s32.totalorder %v7256, 0
      %vm7298 = vcmp.gt.s32.totalorder %v7257, 0
      %vm7299 = vcmp.gt.s32.totalorder %v7258, 0
      %vm7300 = vcmp.gt.s32.totalorder %v7259, 0
      %vm7301 = vcmp.gt.s32.totalorder %v7260, 0
      %vm7302 = vcmp.gt.s32.totalorder %v7261, 0
      %vm7303 = vcmp.gt.s32.totalorder %v7262, 0
      %vm7304 = vcmp.gt.s32.totalorder %v7263, 0
      %vm7305 = vcmp.gt.s32.totalorder %v7264, 0
      %vm7306 = vcmp.gt.s32.totalorder %v7265, 0
      %vm7307 = vcmp.gt.s32.totalorder %v7266, 0
      %vm7308 = vcmp.gt.s32.totalorder %v7267, 0
      %vm7309 = vcmp.gt.s32.totalorder %v7268, 0
      %vm7310 = vcmp.gt.s32.totalorder %v7269, 0
      %vm7311 = vcmp.gt.s32.totalorder %v7270, 0
      %vm7312 = vcmp.gt.s32.totalorder %v7271, 0
      %vm7313 = vcmp.gt.s32.totalorder %v7272, 0
      %vm7314 = vcmp.gt.s32.totalorder %v7273, 0
      %vm7315 = vcmp.gt.s32.totalorder %v7274, 0
      %vm7316 = vcmp.gt.s32.totalorder %v7275, 0
      %vm7317 = vcmp.gt.s32.totalorder %v7276, 0
      %vm7318 = vcmp.gt.s32.totalorder %v7277, 0
      %vm7319 = vcmp.gt.s32.totalorder %v7278, 0
      %vm7320 = vcmp.gt.s32.totalorder %v7279, 0
      %vm7321 = vcmp.gt.s32.totalorder %v7280, 0
      %vm7322 = vcmp.gt.s32.totalorder %v7281, 0
      %vm7323 = vcmp.gt.s32.totalorder %v7282, 0
      %vm7324 = vcmp.gt.s32.totalorder %v7283, 0
      %vm7325 = vcmp.gt.s32.totalorder %v7284, 0
      %vm7326 = vcmp.gt.s32.totalorder %v7285, 0
      %vm7327 = vcmp.gt.s32.totalorder %v7286, 0
      %vm7328 = vcmp.gt.s32.totalorder %v7287, 0
      %vm7329 = vcmp.gt.s32.totalorder %v7288, 0
      %vm7330 = vcmp.ge.s32.totalorder %v7207, 0
      %vm7331 = vcmp.ge.s32.totalorder %v7208, 0
      %vm7332 = vcmp.ge.s32.totalorder %v7209, 0
      %vm7333 = vcmp.ge.s32.totalorder %v7210, 0
      %vm7334 = vcmp.ge.s32.totalorder %v7211, 0
      %vm7335 = vcmp.ge.s32.totalorder %v7212, 0
      %vm7336 = vcmp.ge.s32.totalorder %v7213, 0
      %vm7337 = vcmp.ge.s32.totalorder %v7214, 0
      %vm7338 = vcmp.ge.s32.totalorder %v7215, 0
      %vm7339 = vcmp.ge.s32.totalorder %v7216, 0
      %vm7340 = vcmp.ge.s32.totalorder %v7217, 0
      %vm7341 = vcmp.ge.s32.totalorder %v7218, 0
      %vm7342 = vcmp.ge.s32.totalorder %v7219, 0
      %vm7343 = vcmp.ge.s32.totalorder %v7220, 0
      %vm7344 = vcmp.ge.s32.totalorder %v7221, 0
      %vm7345 = vcmp.ge.s32.totalorder %v7222, 0
      %vm7346 = vcmp.ge.s32.totalorder %v7223, 0
      %vm7347 = vcmp.ge.s32.totalorder %v7224, 0
      %vm7348 = vcmp.ge.s32.totalorder %v7225, 0
      %vm7349 = vcmp.ge.s32.totalorder %v7226, 0
      %vm7350 = vcmp.ge.s32.totalorder %v7227, 0
      %vm7351 = vcmp.ge.s32.totalorder %v7228, 0
      %vm7352 = vcmp.ge.s32.totalorder %v7229, 0
      %vm7353 = vcmp.ge.s32.totalorder %v7230, 0
      %vm7354 = vcmp.ge.s32.totalorder %v7231, 0
      %vm7355 = vcmp.ge.s32.totalorder %v7232, 0
      %vm7356 = vcmp.ge.s32.totalorder %v7233, 0
      %vm7357 = vcmp.ge.s32.totalorder %v7234, 0
      %vm7358 = vcmp.ge.s32.totalorder %v7235, 0
      %vm7359 = vcmp.ge.s32.totalorder %v7236, 0
      %vm7360 = vcmp.ge.s32.totalorder %v7237, 0
      %vm7361 = vcmp.ge.s32.totalorder %v7238, 0
      %vm7362 = vcmp.ge.s32.totalorder %v7239, 0
      %vm7363 = vcmp.ge.s32.totalorder %v7240, 0
      %vm7364 = vcmp.ge.s32.totalorder %v7241, 0
      %vm7365 = vcmp.ge.s32.totalorder %v7242, 0
      %vm7366 = vcmp.ge.s32.totalorder %v7243, 0
      %vm7367 = vcmp.ge.s32.totalorder %v7244, 0
      %vm7368 = vcmp.ge.s32.totalorder %v7245, 0
      %vm7369 = vcmp.ge.s32.totalorder %v7246, 0
      %vm7370 = vcmp.ge.s32.totalorder %v7247, 0
      %vm7371 = vmand %vm7289, %vm7330
      %vm7372 = vmand %vm7290, %vm7331
      %vm7373 = vmand %vm7291, %vm7332
      %vm7374 = vmand %vm7292, %vm7333
      %vm7375 = vmand %vm7293, %vm7334
      %vm7376 = vmand %vm7294, %vm7335
      %vm7377 = vmand %vm7295, %vm7336
      %vm7378 = vmand %vm7296, %vm7337
      %vm7379 = vmand %vm7297, %vm7338
      %vm7380 = vmand %vm7298, %vm7339
      %vm7381 = vmand %vm7299, %vm7340
      %vm7382 = vmand %vm7300, %vm7341
      %vm7383 = vmand %vm7301, %vm7342
      %vm7384 = vmand %vm7302, %vm7343
      %vm7385 = vmand %vm7303, %vm7344
      %vm7386 = vmand %vm7304, %vm7345
      %vm7387 = vmand %vm7305, %vm7346
      %vm7388 = vmand %vm7306, %vm7347
      %vm7389 = vmand %vm7307, %vm7348
      %vm7390 = vmand %vm7308, %vm7349
      %vm7391 = vmand %vm7309, %vm7350
      %vm7392 = vmand %vm7310, %vm7351
      %vm7393 = vmand %vm7311, %vm7352
      %vm7394 = vmand %vm7312, %vm7353
      %vm7395 = vmand %vm7313, %vm7354
      %vm7396 = vmand %vm7314, %vm7355
      %vm7397 = vmand %vm7315, %vm7356
      %vm7398 = vmand %vm7316, %vm7357
      %vm7399 = vmand %vm7317, %vm7358
      %vm7400 = vmand %vm7318, %vm7359
      %vm7401 = vmand %vm7319, %vm7360
      %vm7402 = vmand %vm7320, %vm7361
      %vm7403 = vmand %vm7321, %vm7362
      %vm7404 = vmand %vm7322, %vm7363
      %vm7405 = vmand %vm7323, %vm7364
      %vm7406 = vmand %vm7324, %vm7365
      %vm7407 = vmand %vm7325, %vm7366
      %vm7408 = vmand %vm7326, %vm7367
      %vm7409 = vmand %vm7327, %vm7368
      %vm7410 = vmand %vm7328, %vm7369
      %vm7411 = vmand %vm7329, %vm7370
      %vm7412 = vcmp.lt.s32.totalorder %v7207, 16
      %vm7413 = vcmp.lt.s32.totalorder %v7208, 16
      %vm7414 = vcmp.lt.s32.totalorder %v7209, 16
      %vm7415 = vcmp.lt.s32.totalorder %v7210, 16
      %vm7416 = vcmp.lt.s32.totalorder %v7211, 16
      %vm7417 = vcmp.lt.s32.totalorder %v7212, 16
      %vm7418 = vcmp.lt.s32.totalorder %v7213, 16
      %vm7419 = vcmp.lt.s32.totalorder %v7214, 16
      %vm7420 = vcmp.lt.s32.totalorder %v7215, 16
      %vm7421 = vcmp.lt.s32.totalorder %v7216, 16
      %vm7422 = vcmp.lt.s32.totalorder %v7217, 16
      %vm7423 = vcmp.lt.s32.totalorder %v7218, 16
      %vm7424 = vcmp.lt.s32.totalorder %v7219, 16
      %vm7425 = vcmp.lt.s32.totalorder %v7220, 16
      %vm7426 = vcmp.lt.s32.totalorder %v7221, 16
      %vm7427 = vcmp.lt.s32.totalorder %v7222, 16
      %vm7428 = vcmp.lt.s32.totalorder %v7223, 16
      %vm7429 = vcmp.lt.s32.totalorder %v7224, 16
      %vm7430 = vcmp.lt.s32.totalorder %v7225, 16
      %vm7431 = vcmp.lt.s32.totalorder %v7226, 16
      %vm7432 = vcmp.lt.s32.totalorder %v7227, 16
      %vm7433 = vcmp.lt.s32.totalorder %v7228, 16
      %vm7434 = vcmp.lt.s32.totalorder %v7229, 16
      %vm7435 = vcmp.lt.s32.totalorder %v7230, 16
      %vm7436 = vcmp.lt.s32.totalorder %v7231, 16
      %vm7437 = vcmp.lt.s32.totalorder %v7232, 16
      %vm7438 = vcmp.lt.s32.totalorder %v7233, 16
      %vm7439 = vcmp.lt.s32.totalorder %v7234, 16
      %vm7440 = vcmp.lt.s32.totalorder %v7235, 16
      %vm7441 = vcmp.lt.s32.totalorder %v7236, 16
      %vm7442 = vcmp.lt.s32.totalorder %v7237, 16
      %vm7443 = vcmp.lt.s32.totalorder %v7238, 16
      %vm7444 = vcmp.lt.s32.totalorder %v7239, 16
      %vm7445 = vcmp.lt.s32.totalorder %v7240, 16
      %vm7446 = vcmp.lt.s32.totalorder %v7241, 16
      %vm7447 = vcmp.lt.s32.totalorder %v7242, 16
      %vm7448 = vcmp.lt.s32.totalorder %v7243, 16
      %vm7449 = vcmp.lt.s32.totalorder %v7244, 16
      %vm7450 = vcmp.lt.s32.totalorder %v7245, 16
      %vm7451 = vcmp.lt.s32.totalorder %v7246, 16
      %vm7452 = vcmp.lt.s32.totalorder %v7247, 16
      %vm7453 = vmand %vm7371, %vm7412
      %vm7454 = vmand %vm7372, %vm7413
      %vm7455 = vmand %vm7373, %vm7414
      %vm7456 = vmand %vm7374, %vm7415
      %vm7457 = vmand %vm7375, %vm7416
      %vm7458 = vmand %vm7376, %vm7417
      %vm7459 = vmand %vm7377, %vm7418
      %vm7460 = vmand %vm7378, %vm7419
      %vm7461 = vmand %vm7379, %vm7420
      %vm7462 = vmand %vm7380, %vm7421
      %vm7463 = vmand %vm7381, %vm7422
      %vm7464 = vmand %vm7382, %vm7423
      %vm7465 = vmand %vm7383, %vm7424
      %vm7466 = vmand %vm7384, %vm7425
      %vm7467 = vmand %vm7385, %vm7426
      %vm7468 = vmand %vm7386, %vm7427
      %vm7469 = vmand %vm7387, %vm7428
      %vm7470 = vmand %vm7388, %vm7429
      %vm7471 = vmand %vm7389, %vm7430
      %vm7472 = vmand %vm7390, %vm7431
      %vm7473 = vmand %vm7391, %vm7432
      %vm7474 = vmand %vm7392, %vm7433
      %vm7475 = vmand %vm7393, %vm7434
      %vm7476 = vmand %vm7394, %vm7435
      %vm7477 = vmand %vm7395, %vm7436
      %vm7478 = vmand %vm7396, %vm7437
      %vm7479 = vmand %vm7397, %vm7438
      %vm7480 = vmand %vm7398, %vm7439
      %vm7481 = vmand %vm7399, %vm7440
      %vm7482 = vmand %vm7400, %vm7441
      %vm7483 = vmand %vm7401, %vm7442
      %vm7484 = vmand %vm7402, %vm7443
      %vm7485 = vmand %vm7403, %vm7444
      %vm7486 = vmand %vm7404, %vm7445
      %vm7487 = vmand %vm7405, %vm7446
      %vm7488 = vmand %vm7406, %vm7447
      %vm7489 = vmand %vm7407, %vm7448
      %vm7490 = vmand %vm7408, %vm7449
      %vm7491 = vmand %vm7409, %vm7450
      %vm7492 = vmand %vm7410, %vm7451
      %vm7493 = vmand %vm7411, %vm7452
      %v7494 = vsel %vm7453, 1, 0
      %v7495 = vsel %vm7454, 1, 0
      %v7496 = vsel %vm7455, 1, 0
      %v7497 = vsel %vm7456, 1, 0
      %v7498 = vsel %vm7457, 1, 0
      %v7499 = vsel %vm7458, 1, 0
      %v7500 = vsel %vm7459, 1, 0
      %v7501 = vsel %vm7460, 1, 0
      %v7502 = vsel %vm7461, 1, 0
      %v7503 = vsel %vm7462, 1, 0
      %v7504 = vsel %vm7463, 1, 0
      %v7505 = vsel %vm7464, 1, 0
      %v7506 = vsel %vm7465, 1, 0
      %v7507 = vsel %vm7466, 1, 0
      %v7508 = vsel %vm7467, 1, 0
      %v7509 = vsel %vm7468, 1, 0
      %v7510 = vsel %vm7469, 1, 0
      %v7511 = vsel %vm7470, 1, 0
      %v7512 = vsel %vm7471, 1, 0
      %v7513 = vsel %vm7472, 1, 0
      %v7514 = vsel %vm7473, 1, 0
      %v7515 = vsel %vm7474, 1, 0
      %v7516 = vsel %vm7475, 1, 0
      %v7517 = vsel %vm7476, 1, 0
      %v7518 = vsel %vm7477, 1, 0
      %v7519 = vsel %vm7478, 1, 0
      %v7520 = vsel %vm7479, 1, 0
      %v7521 = vsel %vm7480, 1, 0
      %v7522 = vsel %vm7481, 1, 0
      %v7523 = vsel %vm7482, 1, 0
      %v7524 = vsel %vm7483, 1, 0
      %v7525 = vsel %vm7484, 1, 0
      %v7526 = vsel %vm7485, 1, 0
      %v7527 = vsel %vm7486, 1, 0
      %v7528 = vsel %vm7487, 1, 0
      %v7529 = vsel %vm7488, 1, 0
      %v7530 = vsel %vm7489, 1, 0
      %v7531 = vsel %vm7490, 1, 0
      %v7532 = vsel %vm7491, 1, 0
      %v7533 = vsel %vm7492, 1, 0
      %v7534 = vsel %vm7493, 1, 0
      %7535 = vset.pattern.permute.xlu0 0
      %7536 = vperm.xlu0 %7535, %v7494
      %v7537 = vpop.permute.xlu0 %7536
      %7538 = vset.pattern.permute.xlu0 0
      %7539 = vperm.xlu0 %7538, %v7495
      %v7540 = vpop.permute.xlu0 %7539
      %7541 = vset.pattern.permute.xlu0 0
      %7542 = vperm.xlu0 %7541, %v7496
      %v7543 = vpop.permute.xlu0 %7542
      %7544 = vset.pattern.permute.xlu0 0
      %7545 = vperm.xlu0 %7544, %v7497
      %v7546 = vpop.permute.xlu0 %7545
      %7547 = vset.pattern.permute.xlu0 0
      %7548 = vperm.xlu0 %7547, %v7498
      %v7549 = vpop.permute.xlu0 %7548
      %7550 = vset.pattern.permute.xlu0 0
      %7551 = vperm.xlu0 %7550, %v7499
      %v7552 = vpop.permute.xlu0 %7551
      %7553 = vset.pattern.permute.xlu0 0
      %7554 = vperm.xlu0 %7553, %v7500
      %v7555 = vpop.permute.xlu0 %7554
      %7556 = vset.pattern.permute.xlu0 0
      %7557 = vperm.xlu0 %7556, %v7501
      %v7558 = vpop.permute.xlu0 %7557
      %7559 = vset.pattern.permute.xlu0 0
      %7560 = vperm.xlu0 %7559, %v7502
      %v7561 = vpop.permute.xlu0 %7560
      %7562 = vset.pattern.permute.xlu0 0
      %7563 = vperm.xlu0 %7562, %v7503
      %v7564 = vpop.permute.xlu0 %7563
      %7565 = vset.pattern.permute.xlu0 0
      %7566 = vperm.xlu0 %7565, %v7504
      %v7567 = vpop.permute.xlu0 %7566
      %7568 = vset.pattern.permute.xlu0 0
      %7569 = vperm.xlu0 %7568, %v7505
      %v7570 = vpop.permute.xlu0 %7569
      %7571 = vset.pattern.permute.xlu0 0
      %7572 = vperm.xlu0 %7571, %v7506
      %v7573 = vpop.permute.xlu0 %7572
      %7574 = vset.pattern.permute.xlu0 0
      %7575 = vperm.xlu0 %7574, %v7507
      %v7576 = vpop.permute.xlu0 %7575
      %7577 = vset.pattern.permute.xlu0 0
      %7578 = vperm.xlu0 %7577, %v7508
      %v7579 = vpop.permute.xlu0 %7578
      %7580 = vset.pattern.permute.xlu0 0
      %7581 = vperm.xlu0 %7580, %v7509
      %v7582 = vpop.permute.xlu0 %7581
      %7583 = vset.pattern.permute.xlu0 0
      %7584 = vperm.xlu0 %7583, %v7510
      %v7585 = vpop.permute.xlu0 %7584
      %7586 = vset.pattern.permute.xlu0 0
      %7587 = vperm.xlu0 %7586, %v7511
      %v7588 = vpop.permute.xlu0 %7587
      %7589 = vset.pattern.permute.xlu0 0
      %7590 = vperm.xlu0 %7589, %v7512
      %v7591 = vpop.permute.xlu0 %7590
      %7592 = vset.pattern.permute.xlu0 0
      %7593 = vperm.xlu0 %7592, %v7513
      %v7594 = vpop.permute.xlu0 %7593
      %7595 = vset.pattern.permute.xlu0 0
      %7596 = vperm.xlu0 %7595, %v7514
      %v7597 = vpop.permute.xlu0 %7596
      %7598 = vset.pattern.permute.xlu0 0
      %7599 = vperm.xlu0 %7598, %v7515
      %v7600 = vpop.permute.xlu0 %7599
      %7601 = vset.pattern.permute.xlu0 0
      %7602 = vperm.xlu0 %7601, %v7516
      %v7603 = vpop.permute.xlu0 %7602
      %7604 = vset.pattern.permute.xlu0 0
      %7605 = vperm.xlu0 %7604, %v7517
      %v7606 = vpop.permute.xlu0 %7605
      %7607 = vset.pattern.permute.xlu0 0
      %7608 = vperm.xlu0 %7607, %v7518
      %v7609 = vpop.permute.xlu0 %7608
      %7610 = vset.pattern.permute.xlu0 0
      %7611 = vperm.xlu0 %7610, %v7519
      %v7612 = vpop.permute.xlu0 %7611
      %7613 = vset.pattern.permute.xlu0 0
      %7614 = vperm.xlu0 %7613, %v7520
      %v7615 = vpop.permute.xlu0 %7614
      %7616 = vset.pattern.permute.xlu0 0
      %7617 = vperm.xlu0 %7616, %v7521
      %v7618 = vpop.permute.xlu0 %7617
      %7619 = vset.pattern.permute.xlu0 0
      %7620 = vperm.xlu0 %7619, %v7522
      %v7621 = vpop.permute.xlu0 %7620
      %7622 = vset.pattern.permute.xlu0 0
      %7623 = vperm.xlu0 %7622, %v7523
      %v7624 = vpop.permute.xlu0 %7623
      %7625 = vset.pattern.permute.xlu0 0
      %7626 = vperm.xlu0 %7625, %v7524
      %v7627 = vpop.permute.xlu0 %7626
      %7628 = vset.pattern.permute.xlu0 0
      %7629 = vperm.xlu0 %7628, %v7525
      %v7630 = vpop.permute.xlu0 %7629
      %7631 = vset.pattern.permute.xlu0 0
      %7632 = vperm.xlu0 %7631, %v7526
      %v7633 = vpop.permute.xlu0 %7632
      %7634 = vset.pattern.permute.xlu0 0
      %7635 = vperm.xlu0 %7634, %v7527
      %v7636 = vpop.permute.xlu0 %7635
      %7637 = vset.pattern.permute.xlu0 0
      %7638 = vperm.xlu0 %7637, %v7528
      %v7639 = vpop.permute.xlu0 %7638
      %7640 = vset.pattern.permute.xlu0 0
      %7641 = vperm.xlu0 %7640, %v7529
      %v7642 = vpop.permute.xlu0 %7641
      %7643 = vset.pattern.permute.xlu0 0
      %7644 = vperm.xlu0 %7643, %v7530
      %v7645 = vpop.permute.xlu0 %7644
      %7646 = vset.pattern.permute.xlu0 0
      %7647 = vperm.xlu0 %7646, %v7531
      %v7648 = vpop.permute.xlu0 %7647
      %7649 = vset.pattern.permute.xlu0 0
      %7650 = vperm.xlu0 %7649, %v7532
      %v7651 = vpop.permute.xlu0 %7650
      %7652 = vset.pattern.permute.xlu0 0
      %7653 = vperm.xlu0 %7652, %v7533
      %v7654 = vpop.permute.xlu0 %7653
      %7655 = vset.pattern.permute.xlu0 0
      %7656 = vperm.xlu0 %7655, %v7534
      %v7657 = vpop.permute.xlu0 %7656
      %vm7658 = vcmp.eq.s32.totalorder %v7537, 1
      %vm7659 = vcmp.eq.s32.totalorder %v7540, 1
      %vm7660 = vcmp.eq.s32.totalorder %v7543, 1
      %vm7661 = vcmp.eq.s32.totalorder %v7546, 1
      %vm7662 = vcmp.eq.s32.totalorder %v7549, 1
      %vm7663 = vcmp.eq.s32.totalorder %v7552, 1
      %vm7664 = vcmp.eq.s32.totalorder %v7555, 1
      %vm7665 = vcmp.eq.s32.totalorder %v7558, 1
      %vm7666 = vcmp.eq.s32.totalorder %v7561, 1
      %vm7667 = vcmp.eq.s32.totalorder %v7564, 1
      %vm7668 = vcmp.eq.s32.totalorder %v7567, 1
      %vm7669 = vcmp.eq.s32.totalorder %v7570, 1
      %vm7670 = vcmp.eq.s32.totalorder %v7573, 1
      %vm7671 = vcmp.eq.s32.totalorder %v7576, 1
      %vm7672 = vcmp.eq.s32.totalorder %v7579, 1
      %vm7673 = vcmp.eq.s32.totalorder %v7582, 1
      %vm7674 = vcmp.eq.s32.totalorder %v7585, 1
      %vm7675 = vcmp.eq.s32.totalorder %v7588, 1
      %vm7676 = vcmp.eq.s32.totalorder %v7591, 1
      %vm7677 = vcmp.eq.s32.totalorder %v7594, 1
      %vm7678 = vcmp.eq.s32.totalorder %v7597, 1
      %vm7679 = vcmp.eq.s32.totalorder %v7600, 1
      %vm7680 = vcmp.eq.s32.totalorder %v7603, 1
      %vm7681 = vcmp.eq.s32.totalorder %v7606, 1
      %vm7682 = vcmp.eq.s32.totalorder %v7609, 1
      %vm7683 = vcmp.eq.s32.totalorder %v7612, 1
      %vm7684 = vcmp.eq.s32.totalorder %v7615, 1
      %vm7685 = vcmp.eq.s32.totalorder %v7618, 1
      %vm7686 = vcmp.eq.s32.totalorder %v7621, 1
      %vm7687 = vcmp.eq.s32.totalorder %v7624, 1
      %vm7688 = vcmp.eq.s32.totalorder %v7627, 1
      %vm7689 = vcmp.eq.s32.totalorder %v7630, 1
      %vm7690 = vcmp.eq.s32.totalorder %v7633, 1
      %vm7691 = vcmp.eq.s32.totalorder %v7636, 1
      %vm7692 = vcmp.eq.s32.totalorder %v7639, 1
      %vm7693 = vcmp.eq.s32.totalorder %v7642, 1
      %vm7694 = vcmp.eq.s32.totalorder %v7645, 1
      %vm7695 = vcmp.eq.s32.totalorder %v7648, 1
      %vm7696 = vcmp.eq.s32.totalorder %v7651, 1
      %vm7697 = vcmp.eq.s32.totalorder %v7654, 1
      %vm7698 = vcmp.eq.s32.totalorder %v7657, 1
      %v7699 = vsel %vm7658, %v7123, 0.0
      %v7700 = vsel %vm7659, %v7124, 0.0
      %v7701 = vsel %vm7660, %v7125, 0.0
      %v7702 = vsel %vm7661, %v7126, 0.0
      %v7703 = vsel %vm7662, %v7127, 0.0
      %v7704 = vsel %vm7663, %v7128, 0.0
      %v7705 = vsel %vm7664, %v7129, 0.0
      %v7706 = vsel %vm7665, %v7130, 0.0
      %v7707 = vsel %vm7666, %v7131, 0.0
      %v7708 = vsel %vm7667, %v7132, 0.0
      %v7709 = vsel %vm7668, %v7133, 0.0
      %v7710 = vsel %vm7669, %v7134, 0.0
      %v7711 = vsel %vm7670, %v7135, 0.0
      %v7712 = vsel %vm7671, %v7136, 0.0
      %v7713 = vsel %vm7672, %v7137, 0.0
      %v7714 = vsel %vm7673, %v7138, 0.0
      %v7715 = vsel %vm7674, %v7139, 0.0
      %v7716 = vsel %vm7675, %v7140, 0.0
      %v7717 = vsel %vm7676, %v7141, 0.0
      %v7718 = vsel %vm7677, %v7142, 0.0
      %v7719 = vsel %vm7678, %v7143, 0.0
      %v7720 = vsel %vm7679, %v7144, 0.0
      %v7721 = vsel %vm7680, %v7145, 0.0
      %v7722 = vsel %vm7681, %v7146, 0.0
      %v7723 = vsel %vm7682, %v7147, 0.0
      %v7724 = vsel %vm7683, %v7148, 0.0
      %v7725 = vsel %vm7684, %v7149, 0.0
      %v7726 = vsel %vm7685, %v7150, 0.0
      %v7727 = vsel %vm7686, %v7151, 0.0
      %v7728 = vsel %vm7687, %v7152, 0.0
      %v7729 = vsel %vm7688, %v7153, 0.0
      %v7730 = vsel %vm7689, %v7154, 0.0
      %v7731 = vsel %vm7690, %v7155, 0.0
      %v7732 = vsel %vm7691, %v7156, 0.0
      %v7733 = vsel %vm7692, %v7157, 0.0
      %v7734 = vsel %vm7693, %v7158, 0.0
      %v7735 = vsel %vm7694, %v7159, 0.0
      %v7736 = vsel %vm7695, %v7160, 0.0
      %v7737 = vsel %vm7696, %v7161, 0.0
      %v7738 = vsel %vm7697, %v7162, 0.0
      %v7739 = vsel %vm7698, %v7163, 0.0
      %v7740 = vpack.c.bf16 %v7700, %v7699
      %v7741 = vpack.c.bf16 %v7702, %v7701
      %v7742 = vpack.c.bf16 %v7704, %v7703
      %v7743 = vpack.c.bf16 %v7706, %v7705
      %v7744 = vpack.c.bf16 %v7708, %v7707
      %v7745 = vpack.c.bf16 %v7710, %v7709
      %v7746 = vpack.c.bf16 %v7712, %v7711
      %v7747 = vpack.c.bf16 %v7714, %v7713
      %v7748 = vpack.c.bf16 %v7716, %v7715
      %v7749 = vpack.c.bf16 %v7718, %v7717
      %v7750 = vpack.c.bf16 %v7720, %v7719
      %v7751 = vpack.c.bf16 %v7722, %v7721
      %v7752 = vpack.c.bf16 %v7724, %v7723
      %v7753 = vpack.c.bf16 %v7726, %v7725
      %v7754 = vpack.c.bf16 %v7728, %v7727
      %v7755 = vpack.c.bf16 %v7730, %v7729
      %v7756 = vpack.c.bf16 %v7732, %v7731
      %v7757 = vpack.c.bf16 %v7734, %v7733
      %v7758 = vpack.c.bf16 %v7736, %v7735
      %v7759 = vpack.c.bf16 %v7738, %v7737
      %v7760 = vpack.c.bf16 %v7739, %v7739
      %v7782 = vunpack.c.l.b16 %v7740
      %v7783 = vunpack.c.h.b16 %v7740
      %v7784 = vunpack.c.l.b16 %v7741
      %v7785 = vunpack.c.h.b16 %v7741
      %v7786 = vunpack.c.l.b16 %v7742
      %v7787 = vunpack.c.h.b16 %v7742
      %v7788 = vunpack.c.l.b16 %v7743
      %v7789 = vunpack.c.h.b16 %v7743
      %v7790 = vunpack.c.l.b16 %v7744
      %v7791 = vunpack.c.h.b16 %v7744
      %v7792 = vunpack.c.l.b16 %v7745
      %v7793 = vunpack.c.h.b16 %v7745
      %v7794 = vunpack.c.l.b16 %v7746
      %v7795 = vunpack.c.h.b16 %v7746
      %v7796 = vunpack.c.l.b16 %v7747
      %v7797 = vunpack.c.h.b16 %v7747
      %v7798 = vunpack.c.l.b16 %v7748
      %v7799 = vunpack.c.h.b16 %v7748
      %v7800 = vunpack.c.l.b16 %v7749
      %v7801 = vunpack.c.h.b16 %v7749
      %v7802 = vunpack.c.l.b16 %v7750
      %v7803 = vunpack.c.h.b16 %v7750
      %v7804 = vunpack.c.l.b16 %v7751
      %v7805 = vunpack.c.h.b16 %v7751
      %v7806 = vunpack.c.l.b16 %v7752
      %v7807 = vunpack.c.h.b16 %v7752
      %v7808 = vunpack.c.l.b16 %v7753
      %v7809 = vunpack.c.h.b16 %v7753
      %v7810 = vunpack.c.l.b16 %v7754
      %v7811 = vunpack.c.h.b16 %v7754
      %v7812 = vunpack.c.l.b16 %v7755
      %v7813 = vunpack.c.h.b16 %v7755
      %v7814 = vunpack.c.l.b16 %v7756
      %v7815 = vunpack.c.h.b16 %v7756
      %v7816 = vunpack.c.l.b16 %v7757
      %v7817 = vunpack.c.h.b16 %v7757
      %v7818 = vunpack.c.l.b16 %v7758
      %v7819 = vunpack.c.h.b16 %v7758
      %v7820 = vunpack.c.l.b16 %v7759
      %v7821 = vunpack.c.h.b16 %v7759
      %v7822 = vunpack.c.l.b16 %v7760
      %v7823 = vpack.c.b16 %v7782, %v7782
      %v7824 = vpack.c.b16 %v7783, %v7783
      %v7825 = vpack.c.b16 %v7784, %v7784
      %v7826 = vpack.c.b16 %v7785, %v7785
      %v7827 = vpack.c.b16 %v7786, %v7786
      %v7828 = vpack.c.b16 %v7787, %v7787
      %v7829 = vpack.c.b16 %v7788, %v7788
      %v7830 = vpack.c.b16 %v7789, %v7789
      %v7831 = vpack.c.b16 %v7790, %v7790
      %v7832 = vpack.c.b16 %v7791, %v7791
      %v7833 = vpack.c.b16 %v7792, %v7792
      %v7834 = vpack.c.b16 %v7793, %v7793
      %v7835 = vpack.c.b16 %v7794, %v7794
      %v7836 = vpack.c.b16 %v7795, %v7795
      %v7837 = vpack.c.b16 %v7796, %v7796
      %v7838 = vpack.c.b16 %v7797, %v7797
      %v7839 = vpack.c.b16 %v7798, %v7798
      %v7840 = vpack.c.b16 %v7799, %v7799
      %v7841 = vpack.c.b16 %v7800, %v7800
      %v7842 = vpack.c.b16 %v7801, %v7801
      %v7843 = vpack.c.b16 %v7802, %v7802
      %v7844 = vpack.c.b16 %v7803, %v7803
      %v7845 = vpack.c.b16 %v7804, %v7804
      %v7846 = vpack.c.b16 %v7805, %v7805
      %v7847 = vpack.c.b16 %v7806, %v7806
      %v7848 = vpack.c.b16 %v7807, %v7807
      %v7849 = vpack.c.b16 %v7808, %v7808
      %v7850 = vpack.c.b16 %v7809, %v7809
      %v7851 = vpack.c.b16 %v7810, %v7810
      %v7852 = vpack.c.b16 %v7811, %v7811
      %v7853 = vpack.c.b16 %v7812, %v7812
      %v7854 = vpack.c.b16 %v7813, %v7813
      %v7855 = vpack.c.b16 %v7814, %v7814
      %v7856 = vpack.c.b16 %v7815, %v7815
      %v7857 = vpack.c.b16 %v7816, %v7816
      %v7858 = vpack.c.b16 %v7817, %v7817
      %v7859 = vpack.c.b16 %v7818, %v7818
      %v7860 = vpack.c.b16 %v7819, %v7819
      %v7861 = vpack.c.b16 %v7820, %v7820
      %v7862 = vpack.c.b16 %v7821, %v7821
      %v7863 = vpack.c.b16 %v7822, %v7822
      %vm7864 = vsmask.f32 2304
      %vm7865 = vsmask.f32 6416
      %vm7866 = vmor %vm7864, %vm7865
      %v7868 = vshrl.u32 %v7823, 16
      %v7870 = vrot.slane %v7868, 5
      %v7871 = vshll.u32 %v7823, 16
      %v7873 = vrot.slane %v7871, 6
      %v7874 = vor.u32 %v7870, %v7873
      %v7875 = vrot.slane %v7874, 4
      %v7877 = vshrl.u32 %v7824, 16
      %v7879 = vrot.slane %v7877, 5
      %v7880 = vshll.u32 %v7824, 16
      %v7882 = vrot.slane %v7880, 6
      %v7883 = vor.u32 %v7879, %v7882
      %v7884 = vsel %vm7866, %v7875, %v7883
      %v7885 = vrot.slane %v7883, 4
      %v7887 = vshrl.u32 %v7825, 16
      %v7889 = vrot.slane %v7887, 5
      %v7890 = vshll.u32 %v7825, 16
      %v7892 = vrot.slane %v7890, 6
      %v7893 = vor.u32 %v7889, %v7892
      %v7894 = vsel %vm7866, %v7885, %v7893
      %v7895 = vrot.slane %v7893, 4
      %v7897 = vshrl.u32 %v7826, 16
      %v7899 = vrot.slane %v7897, 5
      %v7900 = vshll.u32 %v7826, 16
      %v7902 = vrot.slane %v7900, 6
      %v7903 = vor.u32 %v7899, %v7902
      %v7904 = vsel %vm7866, %v7895, %v7903
      %v7905 = vrot.slane %v7903, 4
      %v7907 = vshrl.u32 %v7827, 16
      %v7909 = vrot.slane %v7907, 5
      %v7910 = vshll.u32 %v7827, 16
      %v7912 = vrot.slane %v7910, 6
      %v7913 = vor.u32 %v7909, %v7912
      %v7914 = vsel %vm7866, %v7905, %v7913
      %v7915 = vrot.slane %v7913, 4
      %v7917 = vshrl.u32 %v7828, 16
      %v7919 = vrot.slane %v7917, 5
      %v7920 = vshll.u32 %v7828, 16
      %v7922 = vrot.slane %v7920, 6
      %v7923 = vor.u32 %v7919, %v7922
      %v7924 = vsel %vm7866, %v7915, %v7923
      %v7925 = vrot.slane %v7923, 4
      %v7927 = vshrl.u32 %v7829, 16
      %v7929 = vrot.slane %v7927, 5
      %v7930 = vshll.u32 %v7829, 16
      %v7932 = vrot.slane %v7930, 6
      %v7933 = vor.u32 %v7929, %v7932
      %v7934 = vsel %vm7866, %v7925, %v7933
      %v7935 = vrot.slane %v7933, 4
      %v7937 = vshrl.u32 %v7830, 16
      %v7939 = vrot.slane %v7937, 5
      %v7940 = vshll.u32 %v7830, 16
      %v7942 = vrot.slane %v7940, 6
      %v7943 = vor.u32 %v7939, %v7942
      %v7944 = vsel %vm7866, %v7935, %v7943
      %v7945 = vrot.slane %v7943, 4
      %v7947 = vshrl.u32 %v7831, 16
      %v7949 = vrot.slane %v7947, 5
      %v7950 = vshll.u32 %v7831, 16
      %v7952 = vrot.slane %v7950, 6
      %v7953 = vor.u32 %v7949, %v7952
      %v7954 = vsel %vm7866, %v7945, %v7953
      %v7955 = vrot.slane %v7953, 4
      %v7957 = vshrl.u32 %v7832, 16
      %v7959 = vrot.slane %v7957, 5
      %v7960 = vshll.u32 %v7832, 16
      %v7962 = vrot.slane %v7960, 6
      %v7963 = vor.u32 %v7959, %v7962
      %v7964 = vsel %vm7866, %v7955, %v7963
      %v7965 = vrot.slane %v7963, 4
      %v7967 = vshrl.u32 %v7833, 16
      %v7969 = vrot.slane %v7967, 5
      %v7970 = vshll.u32 %v7833, 16
      %v7972 = vrot.slane %v7970, 6
      %v7973 = vor.u32 %v7969, %v7972
      %v7974 = vsel %vm7866, %v7965, %v7973
      %v7975 = vrot.slane %v7973, 4
      %v7977 = vshrl.u32 %v7834, 16
      %v7979 = vrot.slane %v7977, 5
      %v7980 = vshll.u32 %v7834, 16
      %v7982 = vrot.slane %v7980, 6
      %v7983 = vor.u32 %v7979, %v7982
      %v7984 = vsel %vm7866, %v7975, %v7983
      %v7985 = vrot.slane %v7983, 4
      %v7987 = vshrl.u32 %v7835, 16
      %v7989 = vrot.slane %v7987, 5
      %v7990 = vshll.u32 %v7835, 16
      %v7992 = vrot.slane %v7990, 6
      %v7993 = vor.u32 %v7989, %v7992
      %v7994 = vsel %vm7866, %v7985, %v7993
      %v7995 = vrot.slane %v7993, 4
      %v7997 = vshrl.u32 %v7836, 16
      %v7999 = vrot.slane %v7997, 5
      %v8000 = vshll.u32 %v7836, 16
      %v8002 = vrot.slane %v8000, 6
      %v8003 = vor.u32 %v7999, %v8002
      %v8004 = vsel %vm7866, %v7995, %v8003
      %v8005 = vrot.slane %v8003, 4
      %v8007 = vshrl.u32 %v7837, 16
      %v8009 = vrot.slane %v8007, 5
      %v8010 = vshll.u32 %v7837, 16
      %v8012 = vrot.slane %v8010, 6
      %v8013 = vor.u32 %v8009, %v8012
      %v8014 = vsel %vm7866, %v8005, %v8013
      %v8015 = vrot.slane %v8013, 4
      %v8017 = vshrl.u32 %v7838, 16
      %v8019 = vrot.slane %v8017, 5
      %v8020 = vshll.u32 %v7838, 16
      %v8022 = vrot.slane %v8020, 6
      %v8023 = vor.u32 %v8019, %v8022
      %v8024 = vsel %vm7866, %v8015, %v8023
      %v8025 = vrot.slane %v8023, 4
      %v8027 = vshrl.u32 %v7839, 16
      %v8029 = vrot.slane %v8027, 5
      %v8030 = vshll.u32 %v7839, 16
      %v8032 = vrot.slane %v8030, 6
      %v8033 = vor.u32 %v8029, %v8032
      %v8034 = vsel %vm7866, %v8025, %v8033
      %v8035 = vrot.slane %v8033, 4
      %v8037 = vshrl.u32 %v7840, 16
      %v8039 = vrot.slane %v8037, 5
      %v8040 = vshll.u32 %v7840, 16
      %v8042 = vrot.slane %v8040, 6
      %v8043 = vor.u32 %v8039, %v8042
      %v8044 = vsel %vm7866, %v8035, %v8043
      %v8045 = vrot.slane %v8043, 4
      %v8047 = vshrl.u32 %v7841, 16
      %v8049 = vrot.slane %v8047, 5
      %v8050 = vshll.u32 %v7841, 16
      %v8052 = vrot.slane %v8050, 6
      %v8053 = vor.u32 %v8049, %v8052
      %v8054 = vsel %vm7866, %v8045, %v8053
      %v8055 = vrot.slane %v8053, 4
      %v8057 = vshrl.u32 %v7842, 16
      %v8059 = vrot.slane %v8057, 5
      %v8060 = vshll.u32 %v7842, 16
      %v8062 = vrot.slane %v8060, 6
      %v8063 = vor.u32 %v8059, %v8062
      %v8064 = vsel %vm7866, %v8055, %v8063
      %v8065 = vrot.slane %v8063, 4
      %v8067 = vshrl.u32 %v7843, 16
      %v8069 = vrot.slane %v8067, 5
      %v8070 = vshll.u32 %v7843, 16
      %v8072 = vrot.slane %v8070, 6
      %v8073 = vor.u32 %v8069, %v8072
      %v8074 = vsel %vm7866, %v8065, %v8073
      %v8075 = vrot.slane %v8073, 4
      %v8077 = vshrl.u32 %v7844, 16
      %v8079 = vrot.slane %v8077, 5
      %v8080 = vshll.u32 %v7844, 16
      %v8082 = vrot.slane %v8080, 6
      %v8083 = vor.u32 %v8079, %v8082
      %v8084 = vsel %vm7866, %v8075, %v8083
      %v8085 = vrot.slane %v8083, 4
      %v8087 = vshrl.u32 %v7845, 16
      %v8089 = vrot.slane %v8087, 5
      %v8090 = vshll.u32 %v7845, 16
      %v8092 = vrot.slane %v8090, 6
      %v8093 = vor.u32 %v8089, %v8092
      %v8094 = vsel %vm7866, %v8085, %v8093
      %v8095 = vrot.slane %v8093, 4
      %v8097 = vshrl.u32 %v7846, 16
      %v8099 = vrot.slane %v8097, 5
      %v8100 = vshll.u32 %v7846, 16
      %v8102 = vrot.slane %v8100, 6
      %v8103 = vor.u32 %v8099, %v8102
      %v8104 = vsel %vm7866, %v8095, %v8103
      %v8105 = vrot.slane %v8103, 4
      %v8107 = vshrl.u32 %v7847, 16
      %v8109 = vrot.slane %v8107, 5
      %v8110 = vshll.u32 %v7847, 16
      %v8112 = vrot.slane %v8110, 6
      %v8113 = vor.u32 %v8109, %v8112
      %v8114 = vsel %vm7866, %v8105, %v8113
      %v8115 = vrot.slane %v8113, 4
      %v8117 = vshrl.u32 %v7848, 16
      %v8119 = vrot.slane %v8117, 5
      %v8120 = vshll.u32 %v7848, 16
      %v8122 = vrot.slane %v8120, 6
      %v8123 = vor.u32 %v8119, %v8122
      %v8124 = vsel %vm7866, %v8115, %v8123
      %v8125 = vrot.slane %v8123, 4
      %v8127 = vshrl.u32 %v7849, 16
      %v8129 = vrot.slane %v8127, 5
      %v8130 = vshll.u32 %v7849, 16
      %v8132 = vrot.slane %v8130, 6
      %v8133 = vor.u32 %v8129, %v8132
      %v8134 = vsel %vm7866, %v8125, %v8133
      %v8135 = vrot.slane %v8133, 4
      %v8137 = vshrl.u32 %v7850, 16
      %v8139 = vrot.slane %v8137, 5
      %v8140 = vshll.u32 %v7850, 16
      %v8142 = vrot.slane %v8140, 6
      %v8143 = vor.u32 %v8139, %v8142
      %v8144 = vsel %vm7866, %v8135, %v8143
      %v8145 = vrot.slane %v8143, 4
      %v8147 = vshrl.u32 %v7851, 16
      %v8149 = vrot.slane %v8147, 5
      %v8150 = vshll.u32 %v7851, 16
      %v8152 = vrot.slane %v8150, 6
      %v8153 = vor.u32 %v8149, %v8152
      %v8154 = vsel %vm7866, %v8145, %v8153
      %v8155 = vrot.slane %v8153, 4
      %v8157 = vshrl.u32 %v7852, 16
      %v8159 = vrot.slane %v8157, 5
      %v8160 = vshll.u32 %v7852, 16
      %v8162 = vrot.slane %v8160, 6
      %v8163 = vor.u32 %v8159, %v8162
      %v8164 = vsel %vm7866, %v8155, %v8163
      %v8165 = vrot.slane %v8163, 4
      %v8167 = vshrl.u32 %v7853, 16
      %v8169 = vrot.slane %v8167, 5
      %v8170 = vshll.u32 %v7853, 16
      %v8172 = vrot.slane %v8170, 6
      %v8173 = vor.u32 %v8169, %v8172
      %v8174 = vsel %vm7866, %v8165, %v8173
      %v8175 = vrot.slane %v8173, 4
      %v8177 = vshrl.u32 %v7854, 16
      %v8179 = vrot.slane %v8177, 5
      %v8180 = vshll.u32 %v7854, 16
      %v8182 = vrot.slane %v8180, 6
      %v8183 = vor.u32 %v8179, %v8182
      %v8184 = vsel %vm7866, %v8175, %v8183
      %v8185 = vrot.slane %v8183, 4
      %v8187 = vshrl.u32 %v7855, 16
      %v8189 = vrot.slane %v8187, 5
      %v8190 = vshll.u32 %v7855, 16
      %v8192 = vrot.slane %v8190, 6
      %v8193 = vor.u32 %v8189, %v8192
      %v8194 = vsel %vm7866, %v8185, %v8193
      %v8195 = vrot.slane %v8193, 4
      %v8197 = vshrl.u32 %v7856, 16
      %v8199 = vrot.slane %v8197, 5
      %v8200 = vshll.u32 %v7856, 16
      %v8202 = vrot.slane %v8200, 6
      %v8203 = vor.u32 %v8199, %v8202
      %v8204 = vsel %vm7866, %v8195, %v8203
      %v8205 = vrot.slane %v8203, 4
      %v8207 = vshrl.u32 %v7857, 16
      %v8209 = vrot.slane %v8207, 5
      %v8210 = vshll.u32 %v7857, 16
      %v8212 = vrot.slane %v8210, 6
      %v8213 = vor.u32 %v8209, %v8212
      %v8214 = vsel %vm7866, %v8205, %v8213
      %v8215 = vrot.slane %v8213, 4
      %v8217 = vshrl.u32 %v7858, 16
      %v8219 = vrot.slane %v8217, 5
      %v8220 = vshll.u32 %v7858, 16
      %v8222 = vrot.slane %v8220, 6
      %v8223 = vor.u32 %v8219, %v8222
      %v8224 = vsel %vm7866, %v8215, %v8223
      %v8225 = vrot.slane %v8223, 4
      %v8227 = vshrl.u32 %v7859, 16
      %v8229 = vrot.slane %v8227, 5
      %v8230 = vshll.u32 %v7859, 16
      %v8232 = vrot.slane %v8230, 6
      %v8233 = vor.u32 %v8229, %v8232
      %v8234 = vsel %vm7866, %v8225, %v8233
      %v8235 = vrot.slane %v8233, 4
      %v8237 = vshrl.u32 %v7860, 16
      %v8239 = vrot.slane %v8237, 5
      %v8240 = vshll.u32 %v7860, 16
      %v8242 = vrot.slane %v8240, 6
      %v8243 = vor.u32 %v8239, %v8242
      %v8244 = vsel %vm7866, %v8235, %v8243
      %v8245 = vrot.slane %v8243, 4
      %v8247 = vshrl.u32 %v7861, 16
      %v8249 = vrot.slane %v8247, 5
      %v8250 = vshll.u32 %v7861, 16
      %v8252 = vrot.slane %v8250, 6
      %v8253 = vor.u32 %v8249, %v8252
      %v8254 = vsel %vm7866, %v8245, %v8253
      %v8255 = vrot.slane %v8253, 4
      %v8257 = vshrl.u32 %v7862, 16
      %v8259 = vrot.slane %v8257, 5
      %v8260 = vshll.u32 %v7862, 16
      %v8262 = vrot.slane %v8260, 6
      %v8263 = vor.u32 %v8259, %v8262
      %v8264 = vsel %vm7866, %v8255, %v8263
      %v8265 = vrot.slane %v8263, 4
      %v8267 = vshrl.u32 %v7863, 16
      %v8269 = vrot.slane %v8267, 5
      %v8270 = vshll.u32 %v7863, 16
      %v8272 = vrot.slane %v8270, 6
      %v8273 = vor.u32 %v8269, %v8272
      %v8274 = vsel %vm7866, %v8265, %v8273
      %v8275 = vrot.slane %v8269, 4
      %8276 = vrot.lane.b32.xlu0 %v7874, 80
      %v8277 = vpop.permute.xlu0 %8276
      %8278 = vrot.lane.b32.xlu0 %v7884, 80
      %v8279 = vpop.permute.xlu0 %8278
      %8280 = vrot.lane.b32.xlu0 %v7894, 80
      %v8281 = vpop.permute.xlu0 %8280
      %8282 = vrot.lane.b32.xlu0 %v7904, 80
      %v8283 = vpop.permute.xlu0 %8282
      %8284 = vrot.lane.b32.xlu0 %v7914, 80
      %v8285 = vpop.permute.xlu0 %8284
      %8286 = vrot.lane.b32.xlu0 %v7924, 80
      %v8287 = vpop.permute.xlu0 %8286
      %8288 = vrot.lane.b32.xlu0 %v7934, 80
      %v8289 = vpop.permute.xlu0 %8288
      %8290 = vrot.lane.b32.xlu0 %v7944, 80
      %v8291 = vpop.permute.xlu0 %8290
      %8292 = vrot.lane.b32.xlu0 %v7954, 80
      %v8293 = vpop.permute.xlu0 %8292
      %8294 = vrot.lane.b32.xlu0 %v7964, 80
      %v8295 = vpop.permute.xlu0 %8294
      %8296 = vrot.lane.b32.xlu0 %v7974, 80
      %v8297 = vpop.permute.xlu0 %8296
      %8298 = vrot.lane.b32.xlu0 %v7984, 80
      %v8299 = vpop.permute.xlu0 %8298
      %8300 = vrot.lane.b32.xlu0 %v7994, 80
      %v8301 = vpop.permute.xlu0 %8300
      %8302 = vrot.lane.b32.xlu0 %v8004, 80
      %v8303 = vpop.permute.xlu0 %8302
      %8304 = vrot.lane.b32.xlu0 %v8014, 80
      %v8305 = vpop.permute.xlu0 %8304
      %8306 = vrot.lane.b32.xlu0 %v8024, 80
      %v8307 = vpop.permute.xlu0 %8306
      %8308 = vrot.lane.b32.xlu0 %v8034, 80
      %v8309 = vpop.permute.xlu0 %8308
      %8310 = vrot.lane.b32.xlu0 %v8044, 80
      %v8311 = vpop.permute.xlu0 %8310
      %8312 = vrot.lane.b32.xlu0 %v8054, 80
      %v8313 = vpop.permute.xlu0 %8312
      %8314 = vrot.lane.b32.xlu0 %v8064, 80
      %v8315 = vpop.permute.xlu0 %8314
      %8316 = vrot.lane.b32.xlu0 %v8074, 80
      %v8317 = vpop.permute.xlu0 %8316
      %8318 = vrot.lane.b32.xlu0 %v8084, 80
      %v8319 = vpop.permute.xlu0 %8318
      %8320 = vrot.lane.b32.xlu0 %v8094, 80
      %v8321 = vpop.permute.xlu0 %8320
      %8322 = vrot.lane.b32.xlu0 %v8104, 80
      %v8323 = vpop.permute.xlu0 %8322
      %8324 = vrot.lane.b32.xlu0 %v8114, 80
      %v8325 = vpop.permute.xlu0 %8324
      %8326 = vrot.lane.b32.xlu0 %v8124, 80
      %v8327 = vpop.permute.xlu0 %8326
      %8328 = vrot.lane.b32.xlu0 %v8134, 80
      %v8329 = vpop.permute.xlu0 %8328
      %8330 = vrot.lane.b32.xlu0 %v8144, 80
      %v8331 = vpop.permute.xlu0 %8330
      %8332 = vrot.lane.b32.xlu0 %v8154, 80
      %v8333 = vpop.permute.xlu0 %8332
      %8334 = vrot.lane.b32.xlu0 %v8164, 80
      %v8335 = vpop.permute.xlu0 %8334
      %8336 = vrot.lane.b32.xlu0 %v8174, 80
      %v8337 = vpop.permute.xlu0 %8336
      %8338 = vrot.lane.b32.xlu0 %v8184, 80
      %v8339 = vpop.permute.xlu0 %8338
      %8340 = vrot.lane.b32.xlu0 %v8194, 80
      %v8341 = vpop.permute.xlu0 %8340
      %8342 = vrot.lane.b32.xlu0 %v8204, 80
      %v8343 = vpop.permute.xlu0 %8342
      %8344 = vrot.lane.b32.xlu0 %v8214, 80
      %v8345 = vpop.permute.xlu0 %8344
      %8346 = vrot.lane.b32.xlu0 %v8224, 80
      %v8347 = vpop.permute.xlu0 %8346
      %8348 = vrot.lane.b32.xlu0 %v8234, 80
      %v8349 = vpop.permute.xlu0 %8348
      %8350 = vrot.lane.b32.xlu0 %v8244, 80
      %v8351 = vpop.permute.xlu0 %8350
      %8352 = vrot.lane.b32.xlu0 %v8254, 80
      %v8353 = vpop.permute.xlu0 %8352
      %8354 = vrot.lane.b32.xlu0 %v8264, 80
      %v8355 = vpop.permute.xlu0 %8354
      %8356 = vrot.lane.b32.xlu0 %v8274, 80
      %v8357 = vpop.permute.xlu0 %8356
      %8358 = vrot.lane.b32.xlu0 %v8275, 80
      %v8359 = vpop.permute.xlu0 %8358
      %vm8402 = vcmask 781954
      %vm8403 = vsmask.f32 7946
      %vm8404 = vmand %vm8402, %vm8403
      %v8405 = vld [vmem:[#allocation2 + $0x10] sm:$0xc]
      %v8406 = vsel %vm8404, %v8277, %v8405
      %8407 = vst [vmem:[#allocation2 + $0x10] sm:$0xc] %v8406
      %vm8408 = vcmask 781952
      %8409 = vst.msk [vmem:[#allocation2 + $0x14] sm:$0xf] %vm8408, %v8279
      %8410 = vst.msk [vmem:[#allocation2 + $0x18] sm:$0xf] %vm8408, %v8281
      %8411 = vst.msk [vmem:[#allocation2 + $0x1c] sm:$0xf] %vm8408, %v8283
      %8412 = vst.msk [vmem:[#allocation2 + $0x20] sm:$0xf] %vm8408, %v8285
      %8413 = vst.msk [vmem:[#allocation2 + $0x24] sm:$0xf] %vm8408, %v8287
      %8414 = vst.msk [vmem:[#allocation2 + $0x28] sm:$0xf] %vm8408, %v8289
      %8415 = vst.msk [vmem:[#allocation2 + $0x2c] sm:$0xf] %vm8408, %v8291
      %8416 = vst.msk [vmem:[#allocation2 + $0x30] sm:$0xf] %vm8408, %v8293
      %8417 = vst.msk [vmem:[#allocation2 + $0x34] sm:$0xf] %vm8408, %v8295
      %8418 = vst.msk [vmem:[#allocation2 + $0x38] sm:$0xf] %vm8408, %v8297
      %8419 = vst.msk [vmem:[#allocation2 + $0x3c] sm:$0xf] %vm8408, %v8299
      %8420 = vst.msk [vmem:[#allocation2 + $0x40] sm:$0xf] %vm8408, %v8301
      %8421 = vst.msk [vmem:[#allocation2 + $0x44] sm:$0xf] %vm8408, %v8303
      %8422 = vst.msk [vmem:[#allocation2 + $0x48] sm:$0xf] %vm8408, %v8305
      %8423 = vst.msk [vmem:[#allocation2 + $0x4c] sm:$0xf] %vm8408, %v8307
      %8424 = vst.msk [vmem:[#allocation2 + $0x50] sm:$0xf] %vm8408, %v8309
      %8425 = vst.msk [vmem:[#allocation2 + $0x54] sm:$0xf] %vm8408, %v8311
      %8426 = vst.msk [vmem:[#allocation2 + $0x58] sm:$0xf] %vm8408, %v8313
      %8427 = vst.msk [vmem:[#allocation2 + $0x5c] sm:$0xf] %vm8408, %v8315
      %8428 = vst.msk [vmem:[#allocation2 + $0x60] sm:$0xf] %vm8408, %v8317
      %8429 = vst.msk [vmem:[#allocation2 + $0x64] sm:$0xf] %vm8408, %v8319
      %8430 = vst.msk [vmem:[#allocation2 + $0x68] sm:$0xf] %vm8408, %v8321
      %8431 = vst.msk [vmem:[#allocation2 + $0x6c] sm:$0xf] %vm8408, %v8323
      %8432 = vst.msk [vmem:[#allocation2 + $0x70] sm:$0xf] %vm8408, %v8325
      %8433 = vst.msk [vmem:[#allocation2 + $0x74] sm:$0xf] %vm8408, %v8327
      %8434 = vst.msk [vmem:[#allocation2 + $0x78] sm:$0xf] %vm8408, %v8329
      %8435 = vst.msk [vmem:[#allocation2 + $0x7c] sm:$0xf] %vm8408, %v8331
      %8436 = vst.msk [vmem:[#allocation2 + $0x80] sm:$0xf] %vm8408, %v8333
      %8437 = vst.msk [vmem:[#allocation2 + $0x84] sm:$0xf] %vm8408, %v8335
      %8438 = vst.msk [vmem:[#allocation2 + $0x88] sm:$0xf] %vm8408, %v8337
      %8439 = vst.msk [vmem:[#allocation2 + $0x8c] sm:$0xf] %vm8408, %v8339
      %8440 = vst.msk [vmem:[#allocation2 + $0x90] sm:$0xf] %vm8408, %v8341
      %8441 = vst.msk [vmem:[#allocation2 + $0x94] sm:$0xf] %vm8408, %v8343
      %8442 = vst.msk [vmem:[#allocation2 + $0x98] sm:$0xf] %vm8408, %v8345
      %8443 = vst.msk [vmem:[#allocation2 + $0x9c] sm:$0xf] %vm8408, %v8347
      %8444 = vst.msk [vmem:[#allocation2 + $0xa0] sm:$0xf] %vm8408, %v8349
      %8445 = vst.msk [vmem:[#allocation2 + $0xa4] sm:$0xf] %vm8408, %v8351
      %8446 = vst.msk [vmem:[#allocation2 + $0xa8] sm:$0xf] %vm8408, %v8353
      %8447 = vst.msk [vmem:[#allocation2 + $0xac] sm:$0xf] %vm8408, %v8355
      %8448 = vst.msk [vmem:[#allocation2 + $0xb0] sm:$0xf] %vm8408, %v8357
      %vm8449 = vcmask 778880
      %vm8450 = vsmask.f32 256
      %vm8451 = vmand %vm8449, %vm8450
      %v8452 = vld [vmem:[#allocation2 + $0xb4] sm:$0x1]
      %v8453 = vsel %vm8451, %v8359, %v8452
      %8454 = vst [vmem:[#allocation2 + $0xb4] sm:$0x1] %v8453
      %v8455 = vld [vmem:[#allocation2 + $0x10] sm:$0xc]
      %v8456 = vld [vmem:[#allocation2 + $0x14] sm:$0xf]
      %v8457 = vld [vmem:[#allocation2 + $0x18] sm:$0xf]
      %v8458 = vld [vmem:[#allocation2 + $0x1c] sm:$0xf]
      %v8459 = vld [vmem:[#allocation2 + $0x20] sm:$0xf]
      %v8460 = vld [vmem:[#allocation2 + $0x24] sm:$0xf]
      %v8461 = vld [vmem:[#allocation2 + $0x28] sm:$0xf]
      %v8462 = vld [vmem:[#allocation2 + $0x2c] sm:$0xf]
      %v8463 = vld [vmem:[#allocation2 + $0x30] sm:$0xf]
      %v8464 = vld [vmem:[#allocation2 + $0x34] sm:$0xf]
      %v8465 = vld [vmem:[#allocation2 + $0x38] sm:$0xf]
      %v8466 = vld [vmem:[#allocation2 + $0x3c] sm:$0xf]
      %v8467 = vld [vmem:[#allocation2 + $0x40] sm:$0xf]
      %v8468 = vld [vmem:[#allocation2 + $0x44] sm:$0xf]
      %v8469 = vld [vmem:[#allocation2 + $0x48] sm:$0xf]
      %v8470 = vld [vmem:[#allocation2 + $0x4c] sm:$0xf]
      %v8471 = vld [vmem:[#allocation2 + $0x50] sm:$0xf]
      %v8472 = vld [vmem:[#allocation2 + $0x54] sm:$0xf]
      %v8473 = vld [vmem:[#allocation2 + $0x58] sm:$0xf]
      %v8474 = vld [vmem:[#allocation2 + $0x5c] sm:$0xf]
      %v8475 = vld [vmem:[#allocation2 + $0x60] sm:$0xf]
      %v8476 = vld [vmem:[#allocation2 + $0x64] sm:$0xf]
      %v8477 = vld [vmem:[#allocation2 + $0x68] sm:$0xf]
      %v8478 = vld [vmem:[#allocation2 + $0x6c] sm:$0xf]
      %v8479 = vld [vmem:[#allocation2 + $0x70] sm:$0xf]
      %v8480 = vld [vmem:[#allocation2 + $0x74] sm:$0xf]
      %v8481 = vld [vmem:[#allocation2 + $0x78] sm:$0xf]
      %v8482 = vld [vmem:[#allocation2 + $0x7c] sm:$0xf]
      %v8483 = vld [vmem:[#allocation2 + $0x80] sm:$0xf]
      %v8484 = vld [vmem:[#allocation2 + $0x84] sm:$0xf]
      %v8485 = vld [vmem:[#allocation2 + $0x88] sm:$0xf]
      %v8486 = vld [vmem:[#allocation2 + $0x8c] sm:$0xf]
      %v8487 = vld [vmem:[#allocation2 + $0x90] sm:$0xf]
      %v8488 = vld [vmem:[#allocation2 + $0x94] sm:$0xf]
      %v8489 = vld [vmem:[#allocation2 + $0x98] sm:$0xf]
      %v8490 = vld [vmem:[#allocation2 + $0x9c] sm:$0xf]
      %v8491 = vld [vmem:[#allocation2 + $0xa0] sm:$0xf]
      %v8492 = vld [vmem:[#allocation2 + $0xa4] sm:$0xf]
      %v8493 = vld [vmem:[#allocation2 + $0xa8] sm:$0xf]
      %v8494 = vld [vmem:[#allocation2 + $0xac] sm:$0xf]
      %v8495 = vld [vmem:[#allocation2 + $0xb0] sm:$0xf]
      %v8496 = vld [vmem:[#allocation2 + $0xb4] sm:$0x1]
      %v8497 = vld [vmem:[%s7] sm:$0xff]
      %v8498 = vld [vmem:[%s7 + $0x8] sm:$0xff]
      %v8499 = vld [vmem:[%s7 + $0x10] sm:$0xff]
      %v8500 = vld [vmem:[%s7 + $0x18] sm:$0xff]
      %v8501 = vld [vmem:[%s7 + $0x20] sm:$0xff]
      %v8502 = vld [vmem:[%s7 + $0x28] sm:$0xff]
      %v8503 = vld [vmem:[%s7 + $0x30] sm:$0xff]
      %v8504 = vld [vmem:[%s7 + $0x38] sm:$0xff]
      %v8505 = vld [vmem:[%s7 + $0x40] sm:$0xff]
      %v8506 = vld [vmem:[%s7 + $0x48] sm:$0xff]
      %v8507 = vld [vmem:[%s7 + $0x50] sm:$0xff]
      %v8508 = vld [vmem:[%s7 + $0x58] sm:$0xff]
      %v8509 = vld [vmem:[%s7 + $0x60] sm:$0xff]
      %v8510 = vld [vmem:[%s7 + $0x68] sm:$0xff]
      %v8511 = vld [vmem:[%s7 + $0x70] sm:$0xff]
      %v8512 = vld [vmem:[%s7 + $0x78] sm:$0xff]
      %v8555 = vunpack.c.l.b16 %v8455
      %v8556 = vunpack.c.l.b16 %v8456
      %v8557 = vunpack.c.l.b16 %v8457
      %v8558 = vunpack.c.l.b16 %v8458
      %v8559 = vunpack.c.l.b16 %v8459
      %v8560 = vunpack.c.l.b16 %v8460
      %v8561 = vunpack.c.l.b16 %v8461
      %v8562 = vunpack.c.l.b16 %v8462
      %v8563 = vunpack.c.l.b16 %v8463
      %v8564 = vunpack.c.l.b16 %v8464
      %v8565 = vunpack.c.l.b16 %v8465
      %v8566 = vunpack.c.l.b16 %v8466
      %v8567 = vunpack.c.l.b16 %v8467
      %v8568 = vunpack.c.l.b16 %v8468
      %v8569 = vunpack.c.l.b16 %v8469
      %v8570 = vunpack.c.l.b16 %v8470
      %v8571 = vunpack.c.l.b16 %v8471
      %v8572 = vunpack.c.l.b16 %v8472
      %v8573 = vunpack.c.l.b16 %v8473
      %v8574 = vunpack.c.l.b16 %v8474
      %v8575 = vunpack.c.l.b16 %v8475
      %v8576 = vunpack.c.l.b16 %v8476
      %v8577 = vunpack.c.l.b16 %v8477
      %v8578 = vunpack.c.l.b16 %v8478
      %v8579 = vunpack.c.l.b16 %v8479
      %v8580 = vunpack.c.l.b16 %v8480
      %v8581 = vunpack.c.l.b16 %v8481
      %v8582 = vunpack.c.l.b16 %v8482
      %v8583 = vunpack.c.l.b16 %v8483
      %v8584 = vunpack.c.l.b16 %v8484
      %v8585 = vunpack.c.l.b16 %v8485
      %v8586 = vunpack.c.l.b16 %v8486
      %v8587 = vunpack.c.l.b16 %v8487
      %v8588 = vunpack.c.l.b16 %v8488
      %v8589 = vunpack.c.l.b16 %v8489
      %v8590 = vunpack.c.l.b16 %v8490
      %v8591 = vunpack.c.l.b16 %v8491
      %v8592 = vunpack.c.l.b16 %v8492
      %v8593 = vunpack.c.l.b16 %v8493
      %v8594 = vunpack.c.l.b16 %v8494
      %v8595 = vunpack.c.l.b16 %v8495
      %v8596 = vunpack.c.l.b16 %v8496
      %v8597 = vpack.c.b16 %v8556, %v8555
      %v8598 = vpack.c.b16 %v8558, %v8557
      %v8599 = vpack.c.b16 %v8560, %v8559
      %v8600 = vpack.c.b16 %v8562, %v8561
      %v8601 = vpack.c.b16 %v8564, %v8563
      %v8602 = vpack.c.b16 %v8566, %v8565
      %v8603 = vpack.c.b16 %v8568, %v8567
      %v8604 = vpack.c.b16 %v8570, %v8569
      %v8605 = vpack.c.b16 %v8572, %v8571
      %v8606 = vpack.c.b16 %v8574, %v8573
      %v8607 = vpack.c.b16 %v8576, %v8575
      %v8608 = vpack.c.b16 %v8578, %v8577
      %v8609 = vpack.c.b16 %v8580, %v8579
      %v8610 = vpack.c.b16 %v8582, %v8581
      %v8611 = vpack.c.b16 %v8584, %v8583
      %v8612 = vpack.c.b16 %v8586, %v8585
      %v8613 = vpack.c.b16 %v8588, %v8587
      %v8614 = vpack.c.b16 %v8590, %v8589
      %v8615 = vpack.c.b16 %v8592, %v8591
      %v8616 = vpack.c.b16 %v8594, %v8593
      %v8617 = vpack.c.b16 %v8596, %v8595
      %vm8618 = vcmask 1045504
      %v8619 = vrot.slane %v8597, 2
      %v8620 = vrot.slane %v8598, 2
      %v8621 = vsel %vm8618, %v8619, %v8620
      %v8622 = vrot.slane %v8599, 2
      %v8623 = vsel %vm8618, %v8620, %v8622
      %v8624 = vrot.slane %v8600, 2
      %v8625 = vsel %vm8618, %v8622, %v8624
      %v8626 = vrot.slane %v8601, 2
      %v8627 = vsel %vm8618, %v8624, %v8626
      %v8628 = vrot.slane %v8602, 2
      %v8629 = vsel %vm8618, %v8626, %v8628
      %v8630 = vrot.slane %v8603, 2
      %v8631 = vsel %vm8618, %v8628, %v8630
      %v8632 = vrot.slane %v8604, 2
      %v8633 = vsel %vm8618, %v8630, %v8632
      %v8634 = vrot.slane %v8605, 2
      %v8635 = vsel %vm8618, %v8632, %v8634
      %v8636 = vrot.slane %v8606, 2
      %v8637 = vsel %vm8618, %v8634, %v8636
      %v8638 = vrot.slane %v8607, 2
      %v8639 = vsel %vm8618, %v8636, %v8638
      %v8640 = vrot.slane %v8608, 2
      %v8641 = vsel %vm8618, %v8638, %v8640
      %v8642 = vrot.slane %v8609, 2
      %v8643 = vsel %vm8618, %v8640, %v8642
      %v8644 = vrot.slane %v8610, 2
      %v8645 = vsel %vm8618, %v8642, %v8644
      %v8646 = vrot.slane %v8611, 2
      %v8647 = vsel %vm8618, %v8644, %v8646
      %v8648 = vrot.slane %v8612, 2
      %v8649 = vsel %vm8618, %v8646, %v8648
      %v8650 = vrot.slane %v8613, 2
      %v8651 = vsel %vm8618, %v8648, %v8650
      %v8652 = vrot.slane %v8614, 2
      %v8653 = vsel %vm8618, %v8650, %v8652
      %v8654 = vrot.slane %v8615, 2
      %v8655 = vsel %vm8618, %v8652, %v8654
      %v8656 = vrot.slane %v8616, 2
      %v8657 = vsel %vm8618, %v8654, %v8656
      %v8658 = vrot.slane %v8617, 2
      %v8659 = vsel %vm8618, %v8656, %v8658
      %v8697 = vunpack.c.l.b16 %v8497
      %v8698 = vunpack.c.h.b16 %v8497
      %v8699 = vunpack.c.l.b16 %v8498
      %v8700 = vunpack.c.h.b16 %v8498
      %v8701 = vunpack.c.l.b16 %v8499
      %v8702 = vunpack.c.h.b16 %v8499
      %v8703 = vunpack.c.l.b16 %v8500
      %v8704 = vunpack.c.h.b16 %v8500
      %v8705 = vunpack.c.l.b16 %v8501
      %v8706 = vunpack.c.h.b16 %v8501
      %v8707 = vunpack.c.l.b16 %v8502
      %v8708 = vunpack.c.h.b16 %v8502
      %v8709 = vunpack.c.l.b16 %v8503
      %v8710 = vunpack.c.h.b16 %v8503
      %v8711 = vunpack.c.l.b16 %v8504
      %v8712 = vunpack.c.h.b16 %v8504
      %v8713 = vunpack.c.l.b16 %v8505
      %v8714 = vunpack.c.h.b16 %v8505
      %v8715 = vunpack.c.l.b16 %v8506
      %v8716 = vunpack.c.h.b16 %v8506
      %v8717 = vunpack.c.l.b16 %v8507
      %v8718 = vunpack.c.h.b16 %v8507
      %v8719 = vunpack.c.l.b16 %v8508
      %v8720 = vunpack.c.h.b16 %v8508
      %v8721 = vunpack.c.l.b16 %v8509
      %v8722 = vunpack.c.h.b16 %v8509
      %v8723 = vunpack.c.l.b16 %v8510
      %v8724 = vunpack.c.h.b16 %v8510
      %v8725 = vunpack.c.l.b16 %v8511
      %v8726 = vunpack.c.h.b16 %v8511
      %v8727 = vunpack.c.l.b16 %v8512
      %v8728 = vunpack.c.h.b16 %v8512
      %v8729 = vpack.c.b16 %v8699, %v8697
      %v8730 = vpack.c.b16 %v8700, %v8698
      %v8731 = vpack.c.b16 %v8703, %v8701
      %v8732 = vpack.c.b16 %v8704, %v8702
      %v8733 = vpack.c.b16 %v8707, %v8705
      %v8734 = vpack.c.b16 %v8708, %v8706
      %v8735 = vpack.c.b16 %v8711, %v8709
      %v8736 = vpack.c.b16 %v8712, %v8710
      %v8737 = vpack.c.b16 %v8715, %v8713
      %v8738 = vpack.c.b16 %v8716, %v8714
      %v8739 = vpack.c.b16 %v8719, %v8717
      %v8740 = vpack.c.b16 %v8720, %v8718
      %v8741 = vpack.c.b16 %v8723, %v8721
      %v8742 = vpack.c.b16 %v8724, %v8722
      %v8743 = vpack.c.b16 %v8727, %v8725
      %v8744 = vpack.c.b16 %v8728, %v8726
      %8761 = vmatprep.subr.bf16.mxu0 %v8744
      %8762 = vmatpush1.bf16.msra.mxu0 %v8743
      %8763 = vmatprep.subr.bf16.mxu0 %v8742
      %8764 = vmatpush1.bf16.msra.mxu0 %v8741
      %8765 = vmatprep.subr.bf16.mxu0 %v8740
      %8766 = vmatpush1.bf16.msra.mxu0 %v8739
      %8767 = vmatprep.subr.bf16.mxu0 %v8738
      %8768 = vmatpush1.bf16.msra.mxu0 %v8737
      %8769 = vmatprep.subr.bf16.mxu0 %v8736
      %8770 = vmatpush1.bf16.msra.mxu0 %v8735
      %8771 = vmatprep.subr.bf16.mxu0 %v8734
      %8772 = vmatpush1.bf16.msra.mxu0 %v8733
      %8773 = vmatprep.subr.bf16.mxu0 %v8732
      %8774 = vmatpush1.bf16.msra.mxu0 %v8731
      %8775 = vmatprep.subr.bf16.mxu0 %v8730
      %8776 = vmatpush1.bf16.msra.mxu0 %v8729
      %8777 = vmatprep.subr.bf16.mxu0 0
      %8778 = vmatpush2.bf16.msra.mxu0 0
      %8779 = vmatprep.subr.bf16.mxu0 0
      %8780 = vmatpush2.bf16.msra.mxu0 0
      %8781 = vmatprep.subr.bf16.mxu0 0
      %8782 = vmatpush2.bf16.msra.mxu0 0
      %8783 = vmatprep.subr.bf16.mxu0 0
      %8784 = vmatpush2.bf16.msra.mxu0 0
      %8785 = vmatprep.subr.bf16.mxu0 0
      %8786 = vmatpush2.bf16.msra.mxu0 0
      %8787 = vmatprep.subr.bf16.mxu0 0
      %8788 = vmatpush2.bf16.msra.mxu0 0
      %8789 = vmatprep.subr.bf16.mxu0 0
      %8790 = vmatpush2.bf16.msra.mxu0 0
      %8791 = vmatprep.subr.bf16.mxu0 0
      %8792 = vmatpush2.bf16.msra.mxu0 0
      %8793 = vmatprep.mubr.bf16.mxu0 0
      %8794 = vmatmul.mubr.bf16.gmra.mxu0 %v8621
      %v8795 = vpop.f32.mrf.mxu0
      %v8796 = vadd.f32 0.0, %v8795
      %v8797 = vpop.f32.mrf.mxu0
      %v8798 = vpop.f32.mrf.mxu0
      %v8799 = vadd.f32 0.0, %v8798
      %v8800 = vpop.f32.mrf.mxu0
      %8801 = vmatprep.mubr.bf16.mxu0 0
      %8802 = vmatmul.mubr.bf16.gmra.mxu0 %v8623
      %v8803 = vpop.f32.mrf.mxu0
      %v8804 = vadd.f32 0.0, %v8803
      %v8805 = vpop.f32.mrf.mxu0
      %v8806 = vpop.f32.mrf.mxu0
      %v8807 = vadd.f32 0.0, %v8806
      %v8808 = vpop.f32.mrf.mxu0
      %8809 = vmatprep.mubr.bf16.mxu0 0
      %8810 = vmatmul.mubr.bf16.gmra.mxu0 %v8625
      %v8811 = vpop.f32.mrf.mxu0
      %v8812 = vadd.f32 0.0, %v8811
      %v8813 = vpop.f32.mrf.mxu0
      %v8814 = vadd.f32 0.0, %v8813
      %v8815 = vpop.f32.mrf.mxu0
      %v8816 = vadd.f32 0.0, %v8815
      %v8817 = vpop.f32.mrf.mxu0
      %v8818 = vadd.f32 0.0, %v8817
      %8819 = vmatprep.mubr.bf16.mxu0 0
      %8820 = vmatmul.mubr.bf16.gmra.mxu0 %v8627
      %v8821 = vpop.f32.mrf.mxu0
      %v8822 = vadd.f32 0.0, %v8821
      %v8823 = vpop.f32.mrf.mxu0
      %v8824 = vadd.f32 0.0, %v8823
      %v8825 = vpop.f32.mrf.mxu0
      %v8826 = vadd.f32 0.0, %v8825
      %v8827 = vpop.f32.mrf.mxu0
      %v8828 = vadd.f32 0.0, %v8827
      %8829 = vmatprep.mubr.bf16.mxu0 0
      %8830 = vmatmul.mubr.bf16.gmra.mxu0 %v8629
      %v8831 = vpop.f32.mrf.mxu0
      %v8832 = vadd.f32 0.0, %v8831
      %v8833 = vpop.f32.mrf.mxu0
      %v8834 = vadd.f32 0.0, %v8833
      %v8835 = vpop.f32.mrf.mxu0
      %v8836 = vadd.f32 0.0, %v8835
      %v8837 = vpop.f32.mrf.mxu0
      %v8838 = vadd.f32 0.0, %v8837
      %8839 = vmatprep.mubr.bf16.mxu0 0
      %8840 = vmatmul.mubr.bf16.gmra.mxu0 %v8631
      %v8841 = vpop.f32.mrf.mxu0
      %v8842 = vadd.f32 0.0, %v8841
      %v8843 = vpop.f32.mrf.mxu0
      %v8844 = vadd.f32 0.0, %v8843
      %v8845 = vpop.f32.mrf.mxu0
      %v8846 = vadd.f32 0.0, %v8845
      %v8847 = vpop.f32.mrf.mxu0
      %v8848 = vadd.f32 0.0, %v8847
      %8849 = vmatprep.mubr.bf16.mxu0 0
      %8850 = vmatmul.mubr.bf16.gmra.mxu0 %v8633
      %v8851 = vpop.f32.mrf.mxu0
      %v8852 = vadd.f32 0.0, %v8851
      %v8853 = vpop.f32.mrf.mxu0
      %v8854 = vadd.f32 0.0, %v8853
      %v8855 = vpop.f32.mrf.mxu0
      %v8856 = vadd.f32 0.0, %v8855
      %v8857 = vpop.f32.mrf.mxu0
      %v8858 = vadd.f32 0.0, %v8857
      %8859 = vmatprep.mubr.bf16.mxu0 0
      %8860 = vmatmul.mubr.bf16.gmra.mxu0 %v8635
      %v8861 = vpop.f32.mrf.mxu0
      %v8862 = vadd.f32 0.0, %v8861
      %v8863 = vpop.f32.mrf.mxu0
      %v8864 = vadd.f32 0.0, %v8863
      %v8865 = vpop.f32.mrf.mxu0
      %v8866 = vadd.f32 0.0, %v8865
      %v8867 = vpop.f32.mrf.mxu0
      %v8868 = vadd.f32 0.0, %v8867
      %8869 = vmatprep.mubr.bf16.mxu0 0
      %8870 = vmatmul.mubr.bf16.gmra.mxu0 %v8637
      %v8871 = vpop.f32.mrf.mxu0
      %v8872 = vadd.f32 0.0, %v8871
      %v8873 = vpop.f32.mrf.mxu0
      %v8874 = vadd.f32 0.0, %v8873
      %v8875 = vpop.f32.mrf.mxu0
      %v8876 = vadd.f32 0.0, %v8875
      %v8877 = vpop.f32.mrf.mxu0
      %v8878 = vadd.f32 0.0, %v8877
      %8879 = vmatprep.mubr.bf16.mxu0 0
      %8880 = vmatmul.mubr.bf16.gmra.mxu0 %v8639
      %v8881 = vpop.f32.mrf.mxu0
      %v8882 = vadd.f32 0.0, %v8881
      %v8883 = vpop.f32.mrf.mxu0
      %v8884 = vadd.f32 0.0, %v8883
      %v8885 = vpop.f32.mrf.mxu0
      %v8886 = vadd.f32 0.0, %v8885
      %v8887 = vpop.f32.mrf.mxu0
      %v8888 = vadd.f32 0.0, %v8887
      %8889 = vmatprep.mubr.bf16.mxu0 0
      %8890 = vmatmul.mubr.bf16.gmra.mxu0 %v8641
      %v8891 = vpop.f32.mrf.mxu0
      %v8892 = vadd.f32 0.0, %v8891
      %v8893 = vpop.f32.mrf.mxu0
      %v8894 = vadd.f32 0.0, %v8893
      %v8895 = vpop.f32.mrf.mxu0
      %v8896 = vadd.f32 0.0, %v8895
      %v8897 = vpop.f32.mrf.mxu0
      %v8898 = vadd.f32 0.0, %v8897
      %8899 = vmatprep.mubr.bf16.mxu0 0
      %8900 = vmatmul.mubr.bf16.gmra.mxu0 %v8643
      %v8901 = vpop.f32.mrf.mxu0
      %v8902 = vadd.f32 0.0, %v8901
      %v8903 = vpop.f32.mrf.mxu0
      %v8904 = vadd.f32 0.0, %v8903
      %v8905 = vpop.f32.mrf.mxu0
      %v8906 = vadd.f32 0.0, %v8905
      %v8907 = vpop.f32.mrf.mxu0
      %v8908 = vadd.f32 0.0, %v8907
      %8909 = vmatprep.mubr.bf16.mxu0 0
      %8910 = vmatmul.mubr.bf16.gmra.mxu0 %v8645
      %v8911 = vpop.f32.mrf.mxu0
      %v8912 = vadd.f32 0.0, %v8911
      %v8913 = vpop.f32.mrf.mxu0
      %v8914 = vadd.f32 0.0, %v8913
      %v8915 = vpop.f32.mrf.mxu0
      %v8916 = vadd.f32 0.0, %v8915
      %v8917 = vpop.f32.mrf.mxu0
      %v8918 = vadd.f32 0.0, %v8917
      %8919 = vmatprep.mubr.bf16.mxu0 0
      %8920 = vmatmul.mubr.bf16.gmra.mxu0 %v8647
      %v8921 = vpop.f32.mrf.mxu0
      %v8922 = vadd.f32 0.0, %v8921
      %v8923 = vpop.f32.mrf.mxu0
      %v8924 = vadd.f32 0.0, %v8923
      %v8925 = vpop.f32.mrf.mxu0
      %v8926 = vadd.f32 0.0, %v8925
      %v8927 = vpop.f32.mrf.mxu0
      %v8928 = vadd.f32 0.0, %v8927
      %8929 = vmatprep.mubr.bf16.mxu0 0
      %8930 = vmatmul.mubr.bf16.gmra.mxu0 %v8649
      %v8931 = vpop.f32.mrf.mxu0
      %v8932 = vadd.f32 0.0, %v8931
      %v8933 = vpop.f32.mrf.mxu0
      %v8934 = vadd.f32 0.0, %v8933
      %v8935 = vpop.f32.mrf.mxu0
      %v8936 = vadd.f32 0.0, %v8935
      %v8937 = vpop.f32.mrf.mxu0
      %v8938 = vadd.f32 0.0, %v8937
      %8939 = vmatprep.mubr.bf16.mxu0 0
      %8940 = vmatmul.mubr.bf16.gmra.mxu0 %v8651
      %v8941 = vpop.f32.mrf.mxu0
      %v8942 = vadd.f32 0.0, %v8941
      %v8943 = vpop.f32.mrf.mxu0
      %v8944 = vadd.f32 0.0, %v8943
      %v8945 = vpop.f32.mrf.mxu0
      %v8946 = vadd.f32 0.0, %v8945
      %v8947 = vpop.f32.mrf.mxu0
      %v8948 = vadd.f32 0.0, %v8947
      %8949 = vmatprep.mubr.bf16.mxu0 0
      %8950 = vmatmul.mubr.bf16.gmra.mxu0 %v8653
      %v8951 = vpop.f32.mrf.mxu0
      %v8952 = vadd.f32 0.0, %v8951
      %v8953 = vpop.f32.mrf.mxu0
      %v8954 = vadd.f32 0.0, %v8953
      %v8955 = vpop.f32.mrf.mxu0
      %v8956 = vadd.f32 0.0, %v8955
      %v8957 = vpop.f32.mrf.mxu0
      %v8958 = vadd.f32 0.0, %v8957
      %8959 = vmatprep.mubr.bf16.mxu0 0
      %8960 = vmatmul.mubr.bf16.gmra.mxu0 %v8655
      %v8961 = vpop.f32.mrf.mxu0
      %v8962 = vadd.f32 0.0, %v8961
      %v8963 = vpop.f32.mrf.mxu0
      %v8964 = vadd.f32 0.0, %v8963
      %v8965 = vpop.f32.mrf.mxu0
      %v8966 = vadd.f32 0.0, %v8965
      %v8967 = vpop.f32.mrf.mxu0
      %v8968 = vadd.f32 0.0, %v8967
      %8969 = vmatprep.mubr.bf16.mxu0 0
      %8970 = vmatmul.mubr.bf16.gmra.mxu0 %v8657
      %v8971 = vpop.f32.mrf.mxu0
      %v8972 = vadd.f32 0.0, %v8971
      %v8973 = vpop.f32.mrf.mxu0
      %v8974 = vadd.f32 0.0, %v8973
      %v8975 = vpop.f32.mrf.mxu0
      %v8976 = vadd.f32 0.0, %v8975
      %v8977 = vpop.f32.mrf.mxu0
      %v8978 = vadd.f32 0.0, %v8977
      %8979 = vmatprep.mubr.bf16.mxu0 0
      %8980 = vmatmul.mubr.bf16.gmra.mxu0 %v8659
      %v8981 = vpop.f32.mrf.mxu0
      %v8982 = vadd.f32 0.0, %v8981
      %v8983 = vpop.f32.mrf.mxu0
      %v8984 = vadd.f32 0.0, %v8983
      %v8985 = vpop.f32.mrf.mxu0
      %v8986 = vadd.f32 0.0, %v8985
      %v8987 = vpop.f32.mrf.mxu0
      %v8988 = vadd.f32 0.0, %v8987
      %8989 = vmatprep.mubr.bf16.mxu0 0
      %8990 = vmatmul.mubr.bf16.gmra.mxu0 %v8658
      %v8991 = vpop.f32.mrf.mxu0
      %v8992 = vadd.f32 0.0, %v8991
      %v8993 = vpop.f32.mrf.mxu0
      %v8994 = vadd.f32 0.0, %v8993
      %v8995 = vpop.f32.mrf.mxu0
      %v8996 = vpop.f32.mrf.mxu0
      %8997 = vdwg.mxu0
      %v9035 = vrot.slane %v8796, 1
      %v9036 = vrot.slane %v8799, 1
      %v9037 = vsel %vm1203, %v9035, %v9036
      %v9038 = vrot.slane %v8804, 1
      %v9039 = vsel %vm1203, %v9036, %v9038
      %v9040 = vrot.slane %v8807, 1
      %v9041 = vsel %vm1203, %v9038, %v9040
      %v9042 = vrot.slane %v8812, 1
      %v9043 = vsel %vm1203, %v9040, %v9042
      %v9044 = vrot.slane %v8816, 1
      %v9045 = vsel %vm1203, %v9042, %v9044
      %v9046 = vrot.slane %v8822, 1
      %v9047 = vsel %vm1203, %v9044, %v9046
      %v9048 = vrot.slane %v8826, 1
      %v9049 = vsel %vm1203, %v9046, %v9048
      %v9050 = vrot.slane %v8832, 1
      %v9051 = vsel %vm1203, %v9048, %v9050
      %v9052 = vrot.slane %v8836, 1
      %v9053 = vsel %vm1203, %v9050, %v9052
      %v9054 = vrot.slane %v8842, 1
      %v9055 = vsel %vm1203, %v9052, %v9054
      %v9056 = vrot.slane %v8846, 1
      %v9057 = vsel %vm1203, %v9054, %v9056
      %v9058 = vrot.slane %v8852, 1
      %v9059 = vsel %vm1203, %v9056, %v9058
      %v9060 = vrot.slane %v8856, 1
      %v9061 = vsel %vm1203, %v9058, %v9060
      %v9062 = vrot.slane %v8862, 1
      %v9063 = vsel %vm1203, %v9060, %v9062
      %v9064 = vrot.slane %v8866, 1
      %v9065 = vsel %vm1203, %v9062, %v9064
      %v9066 = vrot.slane %v8872, 1
      %v9067 = vsel %vm1203, %v9064, %v9066
      %v9068 = vrot.slane %v8876, 1
      %v9069 = vsel %vm1203, %v9066, %v9068
      %v9070 = vrot.slane %v8882, 1
      %v9071 = vsel %vm1203, %v9068, %v9070
      %v9072 = vrot.slane %v8886, 1
      %v9073 = vsel %vm1203, %v9070, %v9072
      %v9074 = vrot.slane %v8892, 1
      %v9075 = vsel %vm1203, %v9072, %v9074
      %v9076 = vrot.slane %v8896, 1
      %v9077 = vsel %vm1203, %v9074, %v9076
      %v9078 = vrot.slane %v8902, 1
      %v9079 = vsel %vm1203, %v9076, %v9078
      %v9080 = vrot.slane %v8906, 1
      %v9081 = vsel %vm1203, %v9078, %v9080
      %v9082 = vrot.slane %v8912, 1
      %v9083 = vsel %vm1203, %v9080, %v9082
      %v9084 = vrot.slane %v8916, 1
      %v9085 = vsel %vm1203, %v9082, %v9084
      %v9086 = vrot.slane %v8922, 1
      %v9087 = vsel %vm1203, %v9084, %v9086
      %v9088 = vrot.slane %v8926, 1
      %v9089 = vsel %vm1203, %v9086, %v9088
      %v9090 = vrot.slane %v8932, 1
      %v9091 = vsel %vm1203, %v9088, %v9090
      %v9092 = vrot.slane %v8936, 1
      %v9093 = vsel %vm1203, %v9090, %v9092
      %v9094 = vrot.slane %v8942, 1
      %v9095 = vsel %vm1203, %v9092, %v9094
      %v9096 = vrot.slane %v8946, 1
      %v9097 = vsel %vm1203, %v9094, %v9096
      %v9098 = vrot.slane %v8952, 1
      %v9099 = vsel %vm1203, %v9096, %v9098
      %v9100 = vrot.slane %v8956, 1
      %v9101 = vsel %vm1203, %v9098, %v9100
      %v9102 = vrot.slane %v8962, 1
      %v9103 = vsel %vm1203, %v9100, %v9102
      %v9104 = vrot.slane %v8966, 1
      %v9105 = vsel %vm1203, %v9102, %v9104
      %v9106 = vrot.slane %v8972, 1
      %v9107 = vsel %vm1203, %v9104, %v9106
      %9108 = vrot.lane.b32.xlu0 %v9037, 112
      %v9109 = vpop.permute.xlu0 %9108
      %9110 = vrot.lane.b32.xlu0 %v9039, 112
      %v9111 = vpop.permute.xlu0 %9110
      %9112 = vrot.lane.b32.xlu0 %v9041, 112
      %v9113 = vpop.permute.xlu0 %9112
      %9114 = vrot.lane.b32.xlu0 %v9043, 112
      %v9115 = vpop.permute.xlu0 %9114
      %9116 = vrot.lane.b32.xlu0 %v9045, 112
      %v9117 = vpop.permute.xlu0 %9116
      %9118 = vrot.lane.b32.xlu0 %v9047, 112
      %v9119 = vpop.permute.xlu0 %9118
      %9120 = vrot.lane.b32.xlu0 %v9049, 112
      %v9121 = vpop.permute.xlu0 %9120
      %9122 = vrot.lane.b32.xlu0 %v9051, 112
      %v9123 = vpop.permute.xlu0 %9122
      %9124 = vrot.lane.b32.xlu0 %v9053, 112
      %v9125 = vpop.permute.xlu0 %9124
      %9126 = vrot.lane.b32.xlu0 %v9055, 112
      %v9127 = vpop.permute.xlu0 %9126
      %9128 = vrot.lane.b32.xlu0 %v9057, 112
      %v9129 = vpop.permute.xlu0 %9128
      %9130 = vrot.lane.b32.xlu0 %v9059, 112
      %v9131 = vpop.permute.xlu0 %9130
      %9132 = vrot.lane.b32.xlu0 %v9061, 112
      %v9133 = vpop.permute.xlu0 %9132
      %9134 = vrot.lane.b32.xlu0 %v9063, 112
      %v9135 = vpop.permute.xlu0 %9134
      %9136 = vrot.lane.b32.xlu0 %v9065, 112
      %v9137 = vpop.permute.xlu0 %9136
      %9138 = vrot.lane.b32.xlu0 %v9067, 112
      %v9139 = vpop.permute.xlu0 %9138
      %9140 = vrot.lane.b32.xlu0 %v9069, 112
      %v9141 = vpop.permute.xlu0 %9140
      %9142 = vrot.lane.b32.xlu0 %v9071, 112
      %v9143 = vpop.permute.xlu0 %9142
      %9144 = vrot.lane.b32.xlu0 %v9073, 112
      %v9145 = vpop.permute.xlu0 %9144
      %9146 = vrot.lane.b32.xlu0 %v9075, 112
      %v9147 = vpop.permute.xlu0 %9146
      %9148 = vrot.lane.b32.xlu0 %v9077, 112
      %v9149 = vpop.permute.xlu0 %9148
      %9150 = vrot.lane.b32.xlu0 %v9079, 112
      %v9151 = vpop.permute.xlu0 %9150
      %9152 = vrot.lane.b32.xlu0 %v9081, 112
      %v9153 = vpop.permute.xlu0 %9152
      %9154 = vrot.lane.b32.xlu0 %v9083, 112
      %v9155 = vpop.permute.xlu0 %9154
      %9156 = vrot.lane.b32.xlu0 %v9085, 112
      %v9157 = vpop.permute.xlu0 %9156
      %9158 = vrot.lane.b32.xlu0 %v9087, 112
      %v9159 = vpop.permute.xlu0 %9158
      %9160 = vrot.lane.b32.xlu0 %v9089, 112
      %v9161 = vpop.permute.xlu0 %9160
      %9162 = vrot.lane.b32.xlu0 %v9091, 112
      %v9163 = vpop.permute.xlu0 %9162
      %9164 = vrot.lane.b32.xlu0 %v9093, 112
      %v9165 = vpop.permute.xlu0 %9164
      %9166 = vrot.lane.b32.xlu0 %v9095, 112
      %v9167 = vpop.permute.xlu0 %9166
      %9168 = vrot.lane.b32.xlu0 %v9097, 112
      %v9169 = vpop.permute.xlu0 %9168
      %9170 = vrot.lane.b32.xlu0 %v9099, 112
      %v9171 = vpop.permute.xlu0 %9170
      %9172 = vrot.lane.b32.xlu0 %v9101, 112
      %v9173 = vpop.permute.xlu0 %9172
      %9174 = vrot.lane.b32.xlu0 %v9103, 112
      %v9175 = vpop.permute.xlu0 %9174
      %9176 = vrot.lane.b32.xlu0 %v9105, 112
      %v9177 = vpop.permute.xlu0 %9176
      %9178 = vrot.lane.b32.xlu0 %v9107, 112
      %v9179 = vpop.permute.xlu0 %9178
      %v9216 = vadd.f32 %v8796, %v9109
      %v9217 = vadd.f32 %v8799, %v9111
      %v9218 = vadd.f32 %v8804, %v9113
      %v9219 = vadd.f32 %v8807, %v9115
      %v9220 = vadd.f32 %v8812, %v9117
      %v9221 = vadd.f32 %v8816, %v9119
      %v9222 = vadd.f32 %v8822, %v9121
      %v9223 = vadd.f32 %v8826, %v9123
      %v9224 = vadd.f32 %v8832, %v9125
      %v9225 = vadd.f32 %v8836, %v9127
      %v9226 = vadd.f32 %v8842, %v9129
      %v9227 = vadd.f32 %v8846, %v9131
      %v9228 = vadd.f32 %v8852, %v9133
      %v9229 = vadd.f32 %v8856, %v9135
      %v9230 = vadd.f32 %v8862, %v9137
      %v9231 = vadd.f32 %v8866, %v9139
      %v9232 = vadd.f32 %v8872, %v9141
      %v9233 = vadd.f32 %v8876, %v9143
      %v9234 = vadd.f32 %v8882, %v9145
      %v9235 = vadd.f32 %v8886, %v9147
      %v9236 = vadd.f32 %v8892, %v9149
      %v9237 = vadd.f32 %v8896, %v9151
      %v9238 = vadd.f32 %v8902, %v9153
      %v9239 = vadd.f32 %v8906, %v9155
      %v9240 = vadd.f32 %v8912, %v9157
      %v9241 = vadd.f32 %v8916, %v9159
      %v9242 = vadd.f32 %v8922, %v9161
      %v9243 = vadd.f32 %v8926, %v9163
      %v9244 = vadd.f32 %v8932, %v9165
      %v9245 = vadd.f32 %v8936, %v9167
      %v9246 = vadd.f32 %v8942, %v9169
      %v9247 = vadd.f32 %v8946, %v9171
      %v9248 = vadd.f32 %v8952, %v9173
      %v9249 = vadd.f32 %v8956, %v9175
      %v9250 = vadd.f32 %v8962, %v9177
      %v9251 = vadd.f32 %v8966, %v9179
      %v9252 = vrot.slane %v8796, 2
      %v9253 = vrot.slane %v8799, 2
      %v9254 = vsel %vm1475, %v9252, %v9253
      %v9255 = vrot.slane %v8804, 2
      %v9256 = vsel %vm1475, %v9253, %v9255
      %v9257 = vrot.slane %v8807, 2
      %v9258 = vsel %vm1475, %v9255, %v9257
      %v9259 = vrot.slane %v8812, 2
      %v9260 = vsel %vm1475, %v9257, %v9259
      %v9261 = vrot.slane %v8816, 2
      %v9262 = vsel %vm1475, %v9259, %v9261
      %v9263 = vrot.slane %v8822, 2
      %v9264 = vsel %vm1475, %v9261, %v9263
      %v9265 = vrot.slane %v8826, 2
      %v9266 = vsel %vm1475, %v9263, %v9265
      %v9267 = vrot.slane %v8832, 2
      %v9268 = vsel %vm1475, %v9265, %v9267
      %v9269 = vrot.slane %v8836, 2
      %v9270 = vsel %vm1475, %v9267, %v9269
      %v9271 = vrot.slane %v8842, 2
      %v9272 = vsel %vm1475, %v9269, %v9271
      %v9273 = vrot.slane %v8846, 2
      %v9274 = vsel %vm1475, %v9271, %v9273
      %v9275 = vrot.slane %v8852, 2
      %v9276 = vsel %vm1475, %v9273, %v9275
      %v9277 = vrot.slane %v8856, 2
      %v9278 = vsel %vm1475, %v9275, %v9277
      %v9279 = vrot.slane %v8862, 2
      %v9280 = vsel %vm1475, %v9277, %v9279
      %v9281 = vrot.slane %v8866, 2
      %v9282 = vsel %vm1475, %v9279, %v9281
      %v9283 = vrot.slane %v8872, 2
      %v9284 = vsel %vm1475, %v9281, %v9283
      %v9285 = vrot.slane %v8876, 2
      %v9286 = vsel %vm1475, %v9283, %v9285
      %v9287 = vrot.slane %v8882, 2
      %v9288 = vsel %vm1475, %v9285, %v9287
      %v9289 = vrot.slane %v8886, 2
      %v9290 = vsel %vm1475, %v9287, %v9289
      %v9291 = vrot.slane %v8892, 2
      %v9292 = vsel %vm1475, %v9289, %v9291
      %v9293 = vrot.slane %v8896, 2
      %v9294 = vsel %vm1475, %v9291, %v9293
      %v9295 = vrot.slane %v8902, 2
      %v9296 = vsel %vm1475, %v9293, %v9295
      %v9297 = vrot.slane %v8906, 2
      %v9298 = vsel %vm1475, %v9295, %v9297
      %v9299 = vrot.slane %v8912, 2
      %v9300 = vsel %vm1475, %v9297, %v9299
      %v9301 = vrot.slane %v8916, 2
      %v9302 = vsel %vm1475, %v9299, %v9301
      %v9303 = vrot.slane %v8922, 2
      %v9304 = vsel %vm1475, %v9301, %v9303
      %v9305 = vrot.slane %v8926, 2
      %v9306 = vsel %vm1475, %v9303, %v9305
      %v9307 = vrot.slane %v8932, 2
      %v9308 = vsel %vm1475, %v9305, %v9307
      %v9309 = vrot.slane %v8936, 2
      %v9310 = vsel %vm1475, %v9307, %v9309
      %v9311 = vrot.slane %v8942, 2
      %v9312 = vsel %vm1475, %v9309, %v9311
      %v9313 = vrot.slane %v8946, 2
      %v9314 = vsel %vm1475, %v9311, %v9313
      %v9315 = vrot.slane %v8952, 2
      %v9316 = vsel %vm1475, %v9313, %v9315
      %v9317 = vrot.slane %v8956, 2
      %v9318 = vsel %vm1475, %v9315, %v9317
      %v9319 = vrot.slane %v8962, 2
      %v9320 = vsel %vm1475, %v9317, %v9319
      %v9321 = vrot.slane %v8966, 2
      %v9322 = vsel %vm1475, %v9319, %v9321
      %v9323 = vrot.slane %v8972, 2
      %v9324 = vsel %vm1475, %v9321, %v9323
      %9325 = vrot.lane.b32.xlu0 %v9254, 96
      %v9326 = vpop.permute.xlu0 %9325
      %9327 = vrot.lane.b32.xlu0 %v9256, 96
      %v9328 = vpop.permute.xlu0 %9327
      %9329 = vrot.lane.b32.xlu0 %v9258, 96
      %v9330 = vpop.permute.xlu0 %9329
      %9331 = vrot.lane.b32.xlu0 %v9260, 96
      %v9332 = vpop.permute.xlu0 %9331
      %9333 = vrot.lane.b32.xlu0 %v9262, 96
      %v9334 = vpop.permute.xlu0 %9333
      %9335 = vrot.lane.b32.xlu0 %v9264, 96
      %v9336 = vpop.permute.xlu0 %9335
      %9337 = vrot.lane.b32.xlu0 %v9266, 96
      %v9338 = vpop.permute.xlu0 %9337
      %9339 = vrot.lane.b32.xlu0 %v9268, 96
      %v9340 = vpop.permute.xlu0 %9339
      %9341 = vrot.lane.b32.xlu0 %v9270, 96
      %v9342 = vpop.permute.xlu0 %9341
      %9343 = vrot.lane.b32.xlu0 %v9272, 96
      %v9344 = vpop.permute.xlu0 %9343
      %9345 = vrot.lane.b32.xlu0 %v9274, 96
      %v9346 = vpop.permute.xlu0 %9345
      %9347 = vrot.lane.b32.xlu0 %v9276, 96
      %v9348 = vpop.permute.xlu0 %9347
      %9349 = vrot.lane.b32.xlu0 %v9278, 96
      %v9350 = vpop.permute.xlu0 %9349
      %9351 = vrot.lane.b32.xlu0 %v9280, 96
      %v9352 = vpop.permute.xlu0 %9351
      %9353 = vrot.lane.b32.xlu0 %v9282, 96
      %v9354 = vpop.permute.xlu0 %9353
      %9355 = vrot.lane.b32.xlu0 %v9284, 96
      %v9356 = vpop.permute.xlu0 %9355
      %9357 = vrot.lane.b32.xlu0 %v9286, 96
      %v9358 = vpop.permute.xlu0 %9357
      %9359 = vrot.lane.b32.xlu0 %v9288, 96
      %v9360 = vpop.permute.xlu0 %9359
      %9361 = vrot.lane.b32.xlu0 %v9290, 96
      %v9362 = vpop.permute.xlu0 %9361
      %9363 = vrot.lane.b32.xlu0 %v9292, 96
      %v9364 = vpop.permute.xlu0 %9363
      %9365 = vrot.lane.b32.xlu0 %v9294, 96
      %v9366 = vpop.permute.xlu0 %9365
      %9367 = vrot.lane.b32.xlu0 %v9296, 96
      %v9368 = vpop.permute.xlu0 %9367
      %9369 = vrot.lane.b32.xlu0 %v9298, 96
      %v9370 = vpop.permute.xlu0 %9369
      %9371 = vrot.lane.b32.xlu0 %v9300, 96
      %v9372 = vpop.permute.xlu0 %9371
      %9373 = vrot.lane.b32.xlu0 %v9302, 96
      %v9374 = vpop.permute.xlu0 %9373
      %9375 = vrot.lane.b32.xlu0 %v9304, 96
      %v9376 = vpop.permute.xlu0 %9375
      %9377 = vrot.lane.b32.xlu0 %v9306, 96
      %v9378 = vpop.permute.xlu0 %9377
      %9379 = vrot.lane.b32.xlu0 %v9308, 96
      %v9380 = vpop.permute.xlu0 %9379
      %9381 = vrot.lane.b32.xlu0 %v9310, 96
      %v9382 = vpop.permute.xlu0 %9381
      %9383 = vrot.lane.b32.xlu0 %v9312, 96
      %v9384 = vpop.permute.xlu0 %9383
      %9385 = vrot.lane.b32.xlu0 %v9314, 96
      %v9386 = vpop.permute.xlu0 %9385
      %9387 = vrot.lane.b32.xlu0 %v9316, 96
      %v9388 = vpop.permute.xlu0 %9387
      %9389 = vrot.lane.b32.xlu0 %v9318, 96
      %v9390 = vpop.permute.xlu0 %9389
      %9391 = vrot.lane.b32.xlu0 %v9320, 96
      %v9392 = vpop.permute.xlu0 %9391
      %9393 = vrot.lane.b32.xlu0 %v9322, 96
      %v9394 = vpop.permute.xlu0 %9393
      %9395 = vrot.lane.b32.xlu0 %v9324, 96
      %v9396 = vpop.permute.xlu0 %9395
      %v9433 = vadd.f32 %v9216, %v9326
      %v9434 = vadd.f32 %v9217, %v9328
      %v9435 = vadd.f32 %v9218, %v9330
      %v9436 = vadd.f32 %v9219, %v9332
      %v9437 = vadd.f32 %v9220, %v9334
      %v9438 = vadd.f32 %v9221, %v9336
      %v9439 = vadd.f32 %v9222, %v9338
      %v9440 = vadd.f32 %v9223, %v9340
      %v9441 = vadd.f32 %v9224, %v9342
      %v9442 = vadd.f32 %v9225, %v9344
      %v9443 = vadd.f32 %v9226, %v9346
      %v9444 = vadd.f32 %v9227, %v9348
      %v9445 = vadd.f32 %v9228, %v9350
      %v9446 = vadd.f32 %v9229, %v9352
      %v9447 = vadd.f32 %v9230, %v9354
      %v9448 = vadd.f32 %v9231, %v9356
      %v9449 = vadd.f32 %v9232, %v9358
      %v9450 = vadd.f32 %v9233, %v9360
      %v9451 = vadd.f32 %v9234, %v9362
      %v9452 = vadd.f32 %v9235, %v9364
      %v9453 = vadd.f32 %v9236, %v9366
      %v9454 = vadd.f32 %v9237, %v9368
      %v9455 = vadd.f32 %v9238, %v9370
      %v9456 = vadd.f32 %v9239, %v9372
      %v9457 = vadd.f32 %v9240, %v9374
      %v9458 = vadd.f32 %v9241, %v9376
      %v9459 = vadd.f32 %v9242, %v9378
      %v9460 = vadd.f32 %v9243, %v9380
      %v9461 = vadd.f32 %v9244, %v9382
      %v9462 = vadd.f32 %v9245, %v9384
      %v9463 = vadd.f32 %v9246, %v9386
      %v9464 = vadd.f32 %v9247, %v9388
      %v9465 = vadd.f32 %v9248, %v9390
      %v9466 = vadd.f32 %v9249, %v9392
      %v9467 = vadd.f32 %v9250, %v9394
      %v9468 = vadd.f32 %v9251, %v9396
      %v9471 = vrot.slane %v8976, 2
      %v9472 = vsel %vm1475, %v9323, %v9471
      %v9473 = vrot.slane %v8982, 2
      %v9474 = vsel %vm1475, %v9471, %v9473
      %9475 = vrot.lane.b32.xlu0 %v9258, 80
      %v9476 = vpop.permute.xlu0 %9475
      %9477 = vrot.lane.b32.xlu0 %v9260, 80
      %v9478 = vpop.permute.xlu0 %9477
      %9479 = vrot.lane.b32.xlu0 %v9262, 80
      %v9480 = vpop.permute.xlu0 %9479
      %9481 = vrot.lane.b32.xlu0 %v9264, 80
      %v9482 = vpop.permute.xlu0 %9481
      %9483 = vrot.lane.b32.xlu0 %v9266, 80
      %v9484 = vpop.permute.xlu0 %9483
      %9485 = vrot.lane.b32.xlu0 %v9268, 80
      %v9486 = vpop.permute.xlu0 %9485
      %9487 = vrot.lane.b32.xlu0 %v9270, 80
      %v9488 = vpop.permute.xlu0 %9487
      %9489 = vrot.lane.b32.xlu0 %v9272, 80
      %v9490 = vpop.permute.xlu0 %9489
      %9491 = vrot.lane.b32.xlu0 %v9274, 80
      %v9492 = vpop.permute.xlu0 %9491
      %9493 = vrot.lane.b32.xlu0 %v9276, 80
      %v9494 = vpop.permute.xlu0 %9493
      %9495 = vrot.lane.b32.xlu0 %v9278, 80
      %v9496 = vpop.permute.xlu0 %9495
      %9497 = vrot.lane.b32.xlu0 %v9280, 80
      %v9498 = vpop.permute.xlu0 %9497
      %9499 = vrot.lane.b32.xlu0 %v9282, 80
      %v9500 = vpop.permute.xlu0 %9499
      %9501 = vrot.lane.b32.xlu0 %v9284, 80
      %v9502 = vpop.permute.xlu0 %9501
      %9503 = vrot.lane.b32.xlu0 %v9286, 80
      %v9504 = vpop.permute.xlu0 %9503
      %9505 = vrot.lane.b32.xlu0 %v9288, 80
      %v9506 = vpop.permute.xlu0 %9505
      %9507 = vrot.lane.b32.xlu0 %v9290, 80
      %v9508 = vpop.permute.xlu0 %9507
      %9509 = vrot.lane.b32.xlu0 %v9292, 80
      %v9510 = vpop.permute.xlu0 %9509
      %9511 = vrot.lane.b32.xlu0 %v9294, 80
      %v9512 = vpop.permute.xlu0 %9511
      %9513 = vrot.lane.b32.xlu0 %v9296, 80
      %v9514 = vpop.permute.xlu0 %9513
      %9515 = vrot.lane.b32.xlu0 %v9298, 80
      %v9516 = vpop.permute.xlu0 %9515
      %9517 = vrot.lane.b32.xlu0 %v9300, 80
      %v9518 = vpop.permute.xlu0 %9517
      %9519 = vrot.lane.b32.xlu0 %v9302, 80
      %v9520 = vpop.permute.xlu0 %9519
      %9521 = vrot.lane.b32.xlu0 %v9304, 80
      %v9522 = vpop.permute.xlu0 %9521
      %9523 = vrot.lane.b32.xlu0 %v9306, 80
      %v9524 = vpop.permute.xlu0 %9523
      %9525 = vrot.lane.b32.xlu0 %v9308, 80
      %v9526 = vpop.permute.xlu0 %9525
      %9527 = vrot.lane.b32.xlu0 %v9310, 80
      %v9528 = vpop.permute.xlu0 %9527
      %9529 = vrot.lane.b32.xlu0 %v9312, 80
      %v9530 = vpop.permute.xlu0 %9529
      %9531 = vrot.lane.b32.xlu0 %v9314, 80
      %v9532 = vpop.permute.xlu0 %9531
      %9533 = vrot.lane.b32.xlu0 %v9316, 80
      %v9534 = vpop.permute.xlu0 %9533
      %9535 = vrot.lane.b32.xlu0 %v9318, 80
      %v9536 = vpop.permute.xlu0 %9535
      %9537 = vrot.lane.b32.xlu0 %v9320, 80
      %v9538 = vpop.permute.xlu0 %9537
      %9539 = vrot.lane.b32.xlu0 %v9322, 80
      %v9540 = vpop.permute.xlu0 %9539
      %9541 = vrot.lane.b32.xlu0 %v9324, 80
      %v9542 = vpop.permute.xlu0 %9541
      %9543 = vrot.lane.b32.xlu0 %v9472, 80
      %v9544 = vpop.permute.xlu0 %9543
      %9545 = vrot.lane.b32.xlu0 %v9474, 80
      %v9546 = vpop.permute.xlu0 %9545
      %v9583 = vadd.f32 %v9433, %v9476
      %v9584 = vadd.f32 %v9434, %v9478
      %v9585 = vadd.f32 %v9435, %v9480
      %v9586 = vadd.f32 %v9436, %v9482
      %v9587 = vadd.f32 %v9437, %v9484
      %v9588 = vadd.f32 %v9438, %v9486
      %v9589 = vadd.f32 %v9439, %v9488
      %v9590 = vadd.f32 %v9440, %v9490
      %v9591 = vadd.f32 %v9441, %v9492
      %v9592 = vadd.f32 %v9442, %v9494
      %v9593 = vadd.f32 %v9443, %v9496
      %v9594 = vadd.f32 %v9444, %v9498
      %v9595 = vadd.f32 %v9445, %v9500
      %v9596 = vadd.f32 %v9446, %v9502
      %v9597 = vadd.f32 %v9447, %v9504
      %v9598 = vadd.f32 %v9448, %v9506
      %v9599 = vadd.f32 %v9449, %v9508
      %v9600 = vadd.f32 %v9450, %v9510
      %v9601 = vadd.f32 %v9451, %v9512
      %v9602 = vadd.f32 %v9452, %v9514
      %v9603 = vadd.f32 %v9453, %v9516
      %v9604 = vadd.f32 %v9454, %v9518
      %v9605 = vadd.f32 %v9455, %v9520
      %v9606 = vadd.f32 %v9456, %v9522
      %v9607 = vadd.f32 %v9457, %v9524
      %v9608 = vadd.f32 %v9458, %v9526
      %v9609 = vadd.f32 %v9459, %v9528
      %v9610 = vadd.f32 %v9460, %v9530
      %v9611 = vadd.f32 %v9461, %v9532
      %v9612 = vadd.f32 %v9462, %v9534
      %v9613 = vadd.f32 %v9463, %v9536
      %v9614 = vadd.f32 %v9464, %v9538
      %v9615 = vadd.f32 %v9465, %v9540
      %v9616 = vadd.f32 %v9466, %v9542
      %v9617 = vadd.f32 %v9467, %v9544
      %v9618 = vadd.f32 %v9468, %v9546
      %v9619 = vrot.slane %v8804, 3
      %v9620 = vrot.slane %v8807, 3
      %v9621 = vsel %vm1933, %v9619, %v9620
      %v9622 = vrot.slane %v8812, 3
      %v9623 = vsel %vm1933, %v9620, %v9622
      %v9624 = vrot.slane %v8816, 3
      %v9625 = vsel %vm1933, %v9622, %v9624
      %v9626 = vrot.slane %v8822, 3
      %v9627 = vsel %vm1933, %v9624, %v9626
      %v9628 = vrot.slane %v8826, 3
      %v9629 = vsel %vm1933, %v9626, %v9628
      %v9630 = vrot.slane %v8832, 3
      %v9631 = vsel %vm1933, %v9628, %v9630
      %v9632 = vrot.slane %v8836, 3
      %v9633 = vsel %vm1933, %v9630, %v9632
      %v9634 = vrot.slane %v8842, 3
      %v9635 = vsel %vm1933, %v9632, %v9634
      %v9636 = vrot.slane %v8846, 3
      %v9637 = vsel %vm1933, %v9634, %v9636
      %v9638 = vrot.slane %v8852, 3
      %v9639 = vsel %vm1933, %v9636, %v9638
      %v9640 = vrot.slane %v8856, 3
      %v9641 = vsel %vm1933, %v9638, %v9640
      %v9642 = vrot.slane %v8862, 3
      %v9643 = vsel %vm1933, %v9640, %v9642
      %v9644 = vrot.slane %v8866, 3
      %v9645 = vsel %vm1933, %v9642, %v9644
      %v9646 = vrot.slane %v8872, 3
      %v9647 = vsel %vm1933, %v9644, %v9646
      %v9648 = vrot.slane %v8876, 3
      %v9649 = vsel %vm1933, %v9646, %v9648
      %v9650 = vrot.slane %v8882, 3
      %v9651 = vsel %vm1933, %v9648, %v9650
      %v9652 = vrot.slane %v8886, 3
      %v9653 = vsel %vm1933, %v9650, %v9652
      %v9654 = vrot.slane %v8892, 3
      %v9655 = vsel %vm1933, %v9652, %v9654
      %v9656 = vrot.slane %v8896, 3
      %v9657 = vsel %vm1933, %v9654, %v9656
      %v9658 = vrot.slane %v8902, 3
      %v9659 = vsel %vm1933, %v9656, %v9658
      %v9660 = vrot.slane %v8906, 3
      %v9661 = vsel %vm1933, %v9658, %v9660
      %v9662 = vrot.slane %v8912, 3
      %v9663 = vsel %vm1933, %v9660, %v9662
      %v9664 = vrot.slane %v8916, 3
      %v9665 = vsel %vm1933, %v9662, %v9664
      %v9666 = vrot.slane %v8922, 3
      %v9667 = vsel %vm1933, %v9664, %v9666
      %v9668 = vrot.slane %v8926, 3
      %v9669 = vsel %vm1933, %v9666, %v9668
      %v9670 = vrot.slane %v8932, 3
      %v9671 = vsel %vm1933, %v9668, %v9670
      %v9672 = vrot.slane %v8936, 3
      %v9673 = vsel %vm1933, %v9670, %v9672
      %v9674 = vrot.slane %v8942, 3
      %v9675 = vsel %vm1933, %v9672, %v9674
      %v9676 = vrot.slane %v8946, 3
      %v9677 = vsel %vm1933, %v9674, %v9676
      %v9678 = vrot.slane %v8952, 3
      %v9679 = vsel %vm1933, %v9676, %v9678
      %v9680 = vrot.slane %v8956, 3
      %v9681 = vsel %vm1933, %v9678, %v9680
      %v9682 = vrot.slane %v8962, 3
      %v9683 = vsel %vm1933, %v9680, %v9682
      %v9684 = vrot.slane %v8966, 3
      %v9685 = vsel %vm1933, %v9682, %v9684
      %v9686 = vrot.slane %v8972, 3
      %v9687 = vsel %vm1933, %v9684, %v9686
      %v9688 = vrot.slane %v8976, 3
      %v9689 = vsel %vm1933, %v9686, %v9688
      %v9690 = vrot.slane %v8982, 3
      %v9691 = vsel %vm1933, %v9688, %v9690
      %9692 = vrot.lane.b32.xlu0 %v9621, 64
      %v9693 = vpop.permute.xlu0 %9692
      %9694 = vrot.lane.b32.xlu0 %v9623, 64
      %v9695 = vpop.permute.xlu0 %9694
      %9696 = vrot.lane.b32.xlu0 %v9625, 64
      %v9697 = vpop.permute.xlu0 %9696
      %9698 = vrot.lane.b32.xlu0 %v9627, 64
      %v9699 = vpop.permute.xlu0 %9698
      %9700 = vrot.lane.b32.xlu0 %v9629, 64
      %v9701 = vpop.permute.xlu0 %9700
      %9702 = vrot.lane.b32.xlu0 %v9631, 64
      %v9703 = vpop.permute.xlu0 %9702
      %9704 = vrot.lane.b32.xlu0 %v9633, 64
      %v9705 = vpop.permute.xlu0 %9704
      %9706 = vrot.lane.b32.xlu0 %v9635, 64
      %v9707 = vpop.permute.xlu0 %9706
      %9708 = vrot.lane.b32.xlu0 %v9637, 64
      %v9709 = vpop.permute.xlu0 %9708
      %9710 = vrot.lane.b32.xlu0 %v9639, 64
      %v9711 = vpop.permute.xlu0 %9710
      %9712 = vrot.lane.b32.xlu0 %v9641, 64
      %v9713 = vpop.permute.xlu0 %9712
      %9714 = vrot.lane.b32.xlu0 %v9643, 64
      %v9715 = vpop.permute.xlu0 %9714
      %9716 = vrot.lane.b32.xlu0 %v9645, 64
      %v9717 = vpop.permute.xlu0 %9716
      %9718 = vrot.lane.b32.xlu0 %v9647, 64
      %v9719 = vpop.permute.xlu0 %9718
      %9720 = vrot.lane.b32.xlu0 %v9649, 64
      %v9721 = vpop.permute.xlu0 %9720
      %9722 = vrot.lane.b32.xlu0 %v9651, 64
      %v9723 = vpop.permute.xlu0 %9722
      %9724 = vrot.lane.b32.xlu0 %v9653, 64
      %v9725 = vpop.permute.xlu0 %9724
      %9726 = vrot.lane.b32.xlu0 %v9655, 64
      %v9727 = vpop.permute.xlu0 %9726
      %9728 = vrot.lane.b32.xlu0 %v9657, 64
      %v9729 = vpop.permute.xlu0 %9728
      %9730 = vrot.lane.b32.xlu0 %v9659, 64
      %v9731 = vpop.permute.xlu0 %9730
      %9732 = vrot.lane.b32.xlu0 %v9661, 64
      %v9733 = vpop.permute.xlu0 %9732
      %9734 = vrot.lane.b32.xlu0 %v9663, 64
      %v9735 = vpop.permute.xlu0 %9734
      %9736 = vrot.lane.b32.xlu0 %v9665, 64
      %v9737 = vpop.permute.xlu0 %9736
      %9738 = vrot.lane.b32.xlu0 %v9667, 64
      %v9739 = vpop.permute.xlu0 %9738
      %9740 = vrot.lane.b32.xlu0 %v9669, 64
      %v9741 = vpop.permute.xlu0 %9740
      %9742 = vrot.lane.b32.xlu0 %v9671, 64
      %v9743 = vpop.permute.xlu0 %9742
      %9744 = vrot.lane.b32.xlu0 %v9673, 64
      %v9745 = vpop.permute.xlu0 %9744
      %9746 = vrot.lane.b32.xlu0 %v9675, 64
      %v9747 = vpop.permute.xlu0 %9746
      %9748 = vrot.lane.b32.xlu0 %v9677, 64
      %v9749 = vpop.permute.xlu0 %9748
      %9750 = vrot.lane.b32.xlu0 %v9679, 64
      %v9751 = vpop.permute.xlu0 %9750
      %9752 = vrot.lane.b32.xlu0 %v9681, 64
      %v9753 = vpop.permute.xlu0 %9752
      %9754 = vrot.lane.b32.xlu0 %v9683, 64
      %v9755 = vpop.permute.xlu0 %9754
      %9756 = vrot.lane.b32.xlu0 %v9685, 64
      %v9757 = vpop.permute.xlu0 %9756
      %9758 = vrot.lane.b32.xlu0 %v9687, 64
      %v9759 = vpop.permute.xlu0 %9758
      %9760 = vrot.lane.b32.xlu0 %v9689, 64
      %v9761 = vpop.permute.xlu0 %9760
      %9762 = vrot.lane.b32.xlu0 %v9691, 64
      %v9763 = vpop.permute.xlu0 %9762
      %v9800 = vadd.f32 %v9583, %v9693
      %v9801 = vadd.f32 %v9584, %v9695
      %v9802 = vadd.f32 %v9585, %v9697
      %v9803 = vadd.f32 %v9586, %v9699
      %v9804 = vadd.f32 %v9587, %v9701
      %v9805 = vadd.f32 %v9588, %v9703
      %v9806 = vadd.f32 %v9589, %v9705
      %v9807 = vadd.f32 %v9590, %v9707
      %v9808 = vadd.f32 %v9591, %v9709
      %v9809 = vadd.f32 %v9592, %v9711
      %v9810 = vadd.f32 %v9593, %v9713
      %v9811 = vadd.f32 %v9594, %v9715
      %v9812 = vadd.f32 %v9595, %v9717
      %v9813 = vadd.f32 %v9596, %v9719
      %v9814 = vadd.f32 %v9597, %v9721
      %v9815 = vadd.f32 %v9598, %v9723
      %v9816 = vadd.f32 %v9599, %v9725
      %v9817 = vadd.f32 %v9600, %v9727
      %v9818 = vadd.f32 %v9601, %v9729
      %v9819 = vadd.f32 %v9602, %v9731
      %v9820 = vadd.f32 %v9603, %v9733
      %v9821 = vadd.f32 %v9604, %v9735
      %v9822 = vadd.f32 %v9605, %v9737
      %v9823 = vadd.f32 %v9606, %v9739
      %v9824 = vadd.f32 %v9607, %v9741
      %v9825 = vadd.f32 %v9608, %v9743
      %v9826 = vadd.f32 %v9609, %v9745
      %v9827 = vadd.f32 %v9610, %v9747
      %v9828 = vadd.f32 %v9611, %v9749
      %v9829 = vadd.f32 %v9612, %v9751
      %v9830 = vadd.f32 %v9613, %v9753
      %v9831 = vadd.f32 %v9614, %v9755
      %v9832 = vadd.f32 %v9615, %v9757
      %v9833 = vadd.f32 %v9616, %v9759
      %v9834 = vadd.f32 %v9617, %v9761
      %v9835 = vadd.f32 %v9618, %v9763
      %v9836 = vrot.slane %v8804, 4
      %v9837 = vrot.slane %v8807, 4
      %v9838 = vsel %vm2205, %v9836, %v9837
      %v9839 = vrot.slane %v8812, 4
      %v9840 = vsel %vm2205, %v9837, %v9839
      %v9841 = vrot.slane %v8816, 4
      %v9842 = vsel %vm2205, %v9839, %v9841
      %v9843 = vrot.slane %v8822, 4
      %v9844 = vsel %vm2205, %v9841, %v9843
      %v9845 = vrot.slane %v8826, 4
      %v9846 = vsel %vm2205, %v9843, %v9845
      %v9847 = vrot.slane %v8832, 4
      %v9848 = vsel %vm2205, %v9845, %v9847
      %v9849 = vrot.slane %v8836, 4
      %v9850 = vsel %vm2205, %v9847, %v9849
      %v9851 = vrot.slane %v8842, 4
      %v9852 = vsel %vm2205, %v9849, %v9851
      %v9853 = vrot.slane %v8846, 4
      %v9854 = vsel %vm2205, %v9851, %v9853
      %v9855 = vrot.slane %v8852, 4
      %v9856 = vsel %vm2205, %v9853, %v9855
      %v9857 = vrot.slane %v8856, 4
      %v9858 = vsel %vm2205, %v9855, %v9857
      %v9859 = vrot.slane %v8862, 4
      %v9860 = vsel %vm2205, %v9857, %v9859
      %v9861 = vrot.slane %v8866, 4
      %v9862 = vsel %vm2205, %v9859, %v9861
      %v9863 = vrot.slane %v8872, 4
      %v9864 = vsel %vm2205, %v9861, %v9863
      %v9865 = vrot.slane %v8876, 4
      %v9866 = vsel %vm2205, %v9863, %v9865
      %v9867 = vrot.slane %v8882, 4
      %v9868 = vsel %vm2205, %v9865, %v9867
      %v9869 = vrot.slane %v8886, 4
      %v9870 = vsel %vm2205, %v9867, %v9869
      %v9871 = vrot.slane %v8892, 4
      %v9872 = vsel %vm2205, %v9869, %v9871
      %v9873 = vrot.slane %v8896, 4
      %v9874 = vsel %vm2205, %v9871, %v9873
      %v9875 = vrot.slane %v8902, 4
      %v9876 = vsel %vm2205, %v9873, %v9875
      %v9877 = vrot.slane %v8906, 4
      %v9878 = vsel %vm2205, %v9875, %v9877
      %v9879 = vrot.slane %v8912, 4
      %v9880 = vsel %vm2205, %v9877, %v9879
      %v9881 = vrot.slane %v8916, 4
      %v9882 = vsel %vm2205, %v9879, %v9881
      %v9883 = vrot.slane %v8922, 4
      %v9884 = vsel %vm2205, %v9881, %v9883
      %v9885 = vrot.slane %v8926, 4
      %v9886 = vsel %vm2205, %v9883, %v9885
      %v9887 = vrot.slane %v8932, 4
      %v9888 = vsel %vm2205, %v9885, %v9887
      %v9889 = vrot.slane %v8936, 4
      %v9890 = vsel %vm2205, %v9887, %v9889
      %v9891 = vrot.slane %v8942, 4
      %v9892 = vsel %vm2205, %v9889, %v9891
      %v9893 = vrot.slane %v8946, 4
      %v9894 = vsel %vm2205, %v9891, %v9893
      %v9895 = vrot.slane %v8952, 4
      %v9896 = vsel %vm2205, %v9893, %v9895
      %v9897 = vrot.slane %v8956, 4
      %v9898 = vsel %vm2205, %v9895, %v9897
      %v9899 = vrot.slane %v8962, 4
      %v9900 = vsel %vm2205, %v9897, %v9899
      %v9901 = vrot.slane %v8966, 4
      %v9902 = vsel %vm2205, %v9899, %v9901
      %v9903 = vrot.slane %v8972, 4
      %v9904 = vsel %vm2205, %v9901, %v9903
      %v9905 = vrot.slane %v8976, 4
      %v9906 = vsel %vm2205, %v9903, %v9905
      %v9907 = vrot.slane %v8982, 4
      %v9908 = vsel %vm2205, %v9905, %v9907
      %9909 = vrot.lane.b32.xlu0 %v9838, 48
      %v9910 = vpop.permute.xlu0 %9909
      %9911 = vrot.lane.b32.xlu0 %v9840, 48
      %v9912 = vpop.permute.xlu0 %9911
      %9913 = vrot.lane.b32.xlu0 %v9842, 48
      %v9914 = vpop.permute.xlu0 %9913
      %9915 = vrot.lane.b32.xlu0 %v9844, 48
      %v9916 = vpop.permute.xlu0 %9915
      %9917 = vrot.lane.b32.xlu0 %v9846, 48
      %v9918 = vpop.permute.xlu0 %9917
      %9919 = vrot.lane.b32.xlu0 %v9848, 48
      %v9920 = vpop.permute.xlu0 %9919
      %9921 = vrot.lane.b32.xlu0 %v9850, 48
      %v9922 = vpop.permute.xlu0 %9921
      %9923 = vrot.lane.b32.xlu0 %v9852, 48
      %v9924 = vpop.permute.xlu0 %9923
      %9925 = vrot.lane.b32.xlu0 %v9854, 48
      %v9926 = vpop.permute.xlu0 %9925
      %9927 = vrot.lane.b32.xlu0 %v9856, 48
      %v9928 = vpop.permute.xlu0 %9927
      %9929 = vrot.lane.b32.xlu0 %v9858, 48
      %v9930 = vpop.permute.xlu0 %9929
      %9931 = vrot.lane.b32.xlu0 %v9860, 48
      %v9932 = vpop.permute.xlu0 %9931
      %9933 = vrot.lane.b32.xlu0 %v9862, 48
      %v9934 = vpop.permute.xlu0 %9933
      %9935 = vrot.lane.b32.xlu0 %v9864, 48
      %v9936 = vpop.permute.xlu0 %9935
      %9937 = vrot.lane.b32.xlu0 %v9866, 48
      %v9938 = vpop.permute.xlu0 %9937
      %9939 = vrot.lane.b32.xlu0 %v9868, 48
      %v9940 = vpop.permute.xlu0 %9939
      %9941 = vrot.lane.b32.xlu0 %v9870, 48
      %v9942 = vpop.permute.xlu0 %9941
      %9943 = vrot.lane.b32.xlu0 %v9872, 48
      %v9944 = vpop.permute.xlu0 %9943
      %9945 = vrot.lane.b32.xlu0 %v9874, 48
      %v9946 = vpop.permute.xlu0 %9945
      %9947 = vrot.lane.b32.xlu0 %v9876, 48
      %v9948 = vpop.permute.xlu0 %9947
      %9949 = vrot.lane.b32.xlu0 %v9878, 48
      %v9950 = vpop.permute.xlu0 %9949
      %9951 = vrot.lane.b32.xlu0 %v9880, 48
      %v9952 = vpop.permute.xlu0 %9951
      %9953 = vrot.lane.b32.xlu0 %v9882, 48
      %v9954 = vpop.permute.xlu0 %9953
      %9955 = vrot.lane.b32.xlu0 %v9884, 48
      %v9956 = vpop.permute.xlu0 %9955
      %9957 = vrot.lane.b32.xlu0 %v9886, 48
      %v9958 = vpop.permute.xlu0 %9957
      %9959 = vrot.lane.b32.xlu0 %v9888, 48
      %v9960 = vpop.permute.xlu0 %9959
      %9961 = vrot.lane.b32.xlu0 %v9890, 48
      %v9962 = vpop.permute.xlu0 %9961
      %9963 = vrot.lane.b32.xlu0 %v9892, 48
      %v9964 = vpop.permute.xlu0 %9963
      %9965 = vrot.lane.b32.xlu0 %v9894, 48
      %v9966 = vpop.permute.xlu0 %9965
      %9967 = vrot.lane.b32.xlu0 %v9896, 48
      %v9968 = vpop.permute.xlu0 %9967
      %9969 = vrot.lane.b32.xlu0 %v9898, 48
      %v9970 = vpop.permute.xlu0 %9969
      %9971 = vrot.lane.b32.xlu0 %v9900, 48
      %v9972 = vpop.permute.xlu0 %9971
      %9973 = vrot.lane.b32.xlu0 %v9902, 48
      %v9974 = vpop.permute.xlu0 %9973
      %9975 = vrot.lane.b32.xlu0 %v9904, 48
      %v9976 = vpop.permute.xlu0 %9975
      %9977 = vrot.lane.b32.xlu0 %v9906, 48
      %v9978 = vpop.permute.xlu0 %9977
      %9979 = vrot.lane.b32.xlu0 %v9908, 48
      %v9980 = vpop.permute.xlu0 %9979
      %v10017 = vadd.f32 %v9800, %v9910
      %v10018 = vadd.f32 %v9801, %v9912
      %v10019 = vadd.f32 %v9802, %v9914
      %v10020 = vadd.f32 %v9803, %v9916
      %v10021 = vadd.f32 %v9804, %v9918
      %v10022 = vadd.f32 %v9805, %v9920
      %v10023 = vadd.f32 %v9806, %v9922
      %v10024 = vadd.f32 %v9807, %v9924
      %v10025 = vadd.f32 %v9808, %v9926
      %v10026 = vadd.f32 %v9809, %v9928
      %v10027 = vadd.f32 %v9810, %v9930
      %v10028 = vadd.f32 %v9811, %v9932
      %v10029 = vadd.f32 %v9812, %v9934
      %v10030 = vadd.f32 %v9813, %v9936
      %v10031 = vadd.f32 %v9814, %v9938
      %v10032 = vadd.f32 %v9815, %v9940
      %v10033 = vadd.f32 %v9816, %v9942
      %v10034 = vadd.f32 %v9817, %v9944
      %v10035 = vadd.f32 %v9818, %v9946
      %v10036 = vadd.f32 %v9819, %v9948
      %v10037 = vadd.f32 %v9820, %v9950
      %v10038 = vadd.f32 %v9821, %v9952
      %v10039 = vadd.f32 %v9822, %v9954
      %v10040 = vadd.f32 %v9823, %v9956
      %v10041 = vadd.f32 %v9824, %v9958
      %v10042 = vadd.f32 %v9825, %v9960
      %v10043 = vadd.f32 %v9826, %v9962
      %v10044 = vadd.f32 %v9827, %v9964
      %v10045 = vadd.f32 %v9828, %v9966
      %v10046 = vadd.f32 %v9829, %v9968
      %v10047 = vadd.f32 %v9830, %v9970
      %v10048 = vadd.f32 %v9831, %v9972
      %v10049 = vadd.f32 %v9832, %v9974
      %v10050 = vadd.f32 %v9833, %v9976
      %v10051 = vadd.f32 %v9834, %v9978
      %v10052 = vadd.f32 %v9835, %v9980
      %v10055 = vrot.slane %v8986, 4
      %v10056 = vsel %vm2205, %v9907, %v10055
      %v10057 = vrot.slane %v8992, 4
      %v10058 = vsel %vm2205, %v10055, %v10057
      %10059 = vrot.lane.b32.xlu0 %v9842, 32
      %v10060 = vpop.permute.xlu0 %10059
      %10061 = vrot.lane.b32.xlu0 %v9844, 32
      %v10062 = vpop.permute.xlu0 %10061
      %10063 = vrot.lane.b32.xlu0 %v9846, 32
      %v10064 = vpop.permute.xlu0 %10063
      %10065 = vrot.lane.b32.xlu0 %v9848, 32
      %v10066 = vpop.permute.xlu0 %10065
      %10067 = vrot.lane.b32.xlu0 %v9850, 32
      %v10068 = vpop.permute.xlu0 %10067
      %10069 = vrot.lane.b32.xlu0 %v9852, 32
      %v10070 = vpop.permute.xlu0 %10069
      %10071 = vrot.lane.b32.xlu0 %v9854, 32
      %v10072 = vpop.permute.xlu0 %10071
      %10073 = vrot.lane.b32.xlu0 %v9856, 32
      %v10074 = vpop.permute.xlu0 %10073
      %10075 = vrot.lane.b32.xlu0 %v9858, 32
      %v10076 = vpop.permute.xlu0 %10075
      %10077 = vrot.lane.b32.xlu0 %v9860, 32
      %v10078 = vpop.permute.xlu0 %10077
      %10079 = vrot.lane.b32.xlu0 %v9862, 32
      %v10080 = vpop.permute.xlu0 %10079
      %10081 = vrot.lane.b32.xlu0 %v9864, 32
      %v10082 = vpop.permute.xlu0 %10081
      %10083 = vrot.lane.b32.xlu0 %v9866, 32
      %v10084 = vpop.permute.xlu0 %10083
      %10085 = vrot.lane.b32.xlu0 %v9868, 32
      %v10086 = vpop.permute.xlu0 %10085
      %10087 = vrot.lane.b32.xlu0 %v9870, 32
      %v10088 = vpop.permute.xlu0 %10087
      %10089 = vrot.lane.b32.xlu0 %v9872, 32
      %v10090 = vpop.permute.xlu0 %10089
      %10091 = vrot.lane.b32.xlu0 %v9874, 32
      %v10092 = vpop.permute.xlu0 %10091
      %10093 = vrot.lane.b32.xlu0 %v9876, 32
      %v10094 = vpop.permute.xlu0 %10093
      %10095 = vrot.lane.b32.xlu0 %v9878, 32
      %v10096 = vpop.permute.xlu0 %10095
      %10097 = vrot.lane.b32.xlu0 %v9880, 32
      %v10098 = vpop.permute.xlu0 %10097
      %10099 = vrot.lane.b32.xlu0 %v9882, 32
      %v10100 = vpop.permute.xlu0 %10099
      %10101 = vrot.lane.b32.xlu0 %v9884, 32
      %v10102 = vpop.permute.xlu0 %10101
      %10103 = vrot.lane.b32.xlu0 %v9886, 32
      %v10104 = vpop.permute.xlu0 %10103
      %10105 = vrot.lane.b32.xlu0 %v9888, 32
      %v10106 = vpop.permute.xlu0 %10105
      %10107 = vrot.lane.b32.xlu0 %v9890, 32
      %v10108 = vpop.permute.xlu0 %10107
      %10109 = vrot.lane.b32.xlu0 %v9892, 32
      %v10110 = vpop.permute.xlu0 %10109
      %10111 = vrot.lane.b32.xlu0 %v9894, 32
      %v10112 = vpop.permute.xlu0 %10111
      %10113 = vrot.lane.b32.xlu0 %v9896, 32
      %v10114 = vpop.permute.xlu0 %10113
      %10115 = vrot.lane.b32.xlu0 %v9898, 32
      %v10116 = vpop.permute.xlu0 %10115
      %10117 = vrot.lane.b32.xlu0 %v9900, 32
      %v10118 = vpop.permute.xlu0 %10117
      %10119 = vrot.lane.b32.xlu0 %v9902, 32
      %v10120 = vpop.permute.xlu0 %10119
      %10121 = vrot.lane.b32.xlu0 %v9904, 32
      %v10122 = vpop.permute.xlu0 %10121
      %10123 = vrot.lane.b32.xlu0 %v9906, 32
      %v10124 = vpop.permute.xlu0 %10123
      %10125 = vrot.lane.b32.xlu0 %v9908, 32
      %v10126 = vpop.permute.xlu0 %10125
      %10127 = vrot.lane.b32.xlu0 %v10056, 32
      %v10128 = vpop.permute.xlu0 %10127
      %10129 = vrot.lane.b32.xlu0 %v10058, 32
      %v10130 = vpop.permute.xlu0 %10129
      %v10167 = vadd.f32 %v10017, %v10060
      %v10168 = vadd.f32 %v10018, %v10062
      %v10169 = vadd.f32 %v10019, %v10064
      %v10170 = vadd.f32 %v10020, %v10066
      %v10171 = vadd.f32 %v10021, %v10068
      %v10172 = vadd.f32 %v10022, %v10070
      %v10173 = vadd.f32 %v10023, %v10072
      %v10174 = vadd.f32 %v10024, %v10074
      %v10175 = vadd.f32 %v10025, %v10076
      %v10176 = vadd.f32 %v10026, %v10078
      %v10177 = vadd.f32 %v10027, %v10080
      %v10178 = vadd.f32 %v10028, %v10082
      %v10179 = vadd.f32 %v10029, %v10084
      %v10180 = vadd.f32 %v10030, %v10086
      %v10181 = vadd.f32 %v10031, %v10088
      %v10182 = vadd.f32 %v10032, %v10090
      %v10183 = vadd.f32 %v10033, %v10092
      %v10184 = vadd.f32 %v10034, %v10094
      %v10185 = vadd.f32 %v10035, %v10096
      %v10186 = vadd.f32 %v10036, %v10098
      %v10187 = vadd.f32 %v10037, %v10100
      %v10188 = vadd.f32 %v10038, %v10102
      %v10189 = vadd.f32 %v10039, %v10104
      %v10190 = vadd.f32 %v10040, %v10106
      %v10191 = vadd.f32 %v10041, %v10108
      %v10192 = vadd.f32 %v10042, %v10110
      %v10193 = vadd.f32 %v10043, %v10112
      %v10194 = vadd.f32 %v10044, %v10114
      %v10195 = vadd.f32 %v10045, %v10116
      %v10196 = vadd.f32 %v10046, %v10118
      %v10197 = vadd.f32 %v10047, %v10120
      %v10198 = vadd.f32 %v10048, %v10122
      %v10199 = vadd.f32 %v10049, %v10124
      %v10200 = vadd.f32 %v10050, %v10126
      %v10201 = vadd.f32 %v10051, %v10128
      %v10202 = vadd.f32 %v10052, %v10130
      %v10203 = vrot.slane %v8812, 5
      %v10204 = vrot.slane %v8816, 5
      %v10205 = vsel %vm2663, %v10203, %v10204
      %v10206 = vrot.slane %v8822, 5
      %v10207 = vsel %vm2663, %v10204, %v10206
      %v10208 = vrot.slane %v8826, 5
      %v10209 = vsel %vm2663, %v10206, %v10208
      %v10210 = vrot.slane %v8832, 5
      %v10211 = vsel %vm2663, %v10208, %v10210
      %v10212 = vrot.slane %v8836, 5
      %v10213 = vsel %vm2663, %v10210, %v10212
      %v10214 = vrot.slane %v8842, 5
      %v10215 = vsel %vm2663, %v10212, %v10214
      %v10216 = vrot.slane %v8846, 5
      %v10217 = vsel %vm2663, %v10214, %v10216
      %v10218 = vrot.slane %v8852, 5
      %v10219 = vsel %vm2663, %v10216, %v10218
      %v10220 = vrot.slane %v8856, 5
      %v10221 = vsel %vm2663, %v10218, %v10220
      %v10222 = vrot.slane %v8862, 5
      %v10223 = vsel %vm2663, %v10220, %v10222
      %v10224 = vrot.slane %v8866, 5
      %v10225 = vsel %vm2663, %v10222, %v10224
      %v10226 = vrot.slane %v8872, 5
      %v10227 = vsel %vm2663, %v10224, %v10226
      %v10228 = vrot.slane %v8876, 5
      %v10229 = vsel %vm2663, %v10226, %v10228
      %v10230 = vrot.slane %v8882, 5
      %v10231 = vsel %vm2663, %v10228, %v10230
      %v10232 = vrot.slane %v8886, 5
      %v10233 = vsel %vm2663, %v10230, %v10232
      %v10234 = vrot.slane %v8892, 5
      %v10235 = vsel %vm2663, %v10232, %v10234
      %v10236 = vrot.slane %v8896, 5
      %v10237 = vsel %vm2663, %v10234, %v10236
      %v10238 = vrot.slane %v8902, 5
      %v10239 = vsel %vm2663, %v10236, %v10238
      %v10240 = vrot.slane %v8906, 5
      %v10241 = vsel %vm2663, %v10238, %v10240
      %v10242 = vrot.slane %v8912, 5
      %v10243 = vsel %vm2663, %v10240, %v10242
      %v10244 = vrot.slane %v8916, 5
      %v10245 = vsel %vm2663, %v10242, %v10244
      %v10246 = vrot.slane %v8922, 5
      %v10247 = vsel %vm2663, %v10244, %v10246
      %v10248 = vrot.slane %v8926, 5
      %v10249 = vsel %vm2663, %v10246, %v10248
      %v10250 = vrot.slane %v8932, 5
      %v10251 = vsel %vm2663, %v10248, %v10250
      %v10252 = vrot.slane %v8936, 5
      %v10253 = vsel %vm2663, %v10250, %v10252
      %v10254 = vrot.slane %v8942, 5
      %v10255 = vsel %vm2663, %v10252, %v10254
      %v10256 = vrot.slane %v8946, 5
      %v10257 = vsel %vm2663, %v10254, %v10256
      %v10258 = vrot.slane %v8952, 5
      %v10259 = vsel %vm2663, %v10256, %v10258
      %v10260 = vrot.slane %v8956, 5
      %v10261 = vsel %vm2663, %v10258, %v10260
      %v10262 = vrot.slane %v8962, 5
      %v10263 = vsel %vm2663, %v10260, %v10262
      %v10264 = vrot.slane %v8966, 5
      %v10265 = vsel %vm2663, %v10262, %v10264
      %v10266 = vrot.slane %v8972, 5
      %v10267 = vsel %vm2663, %v10264, %v10266
      %v10268 = vrot.slane %v8976, 5
      %v10269 = vsel %vm2663, %v10266, %v10268
      %v10270 = vrot.slane %v8982, 5
      %v10271 = vsel %vm2663, %v10268, %v10270
      %v10272 = vrot.slane %v8986, 5
      %v10273 = vsel %vm2663, %v10270, %v10272
      %v10274 = vrot.slane %v8992, 5
      %v10275 = vsel %vm2663, %v10272, %v10274
      %10276 = vrot.lane.b32.xlu0 %v10205, 16
      %v10277 = vpop.permute.xlu0 %10276
      %10278 = vrot.lane.b32.xlu0 %v10207, 16
      %v10279 = vpop.permute.xlu0 %10278
      %10280 = vrot.lane.b32.xlu0 %v10209, 16
      %v10281 = vpop.permute.xlu0 %10280
      %10282 = vrot.lane.b32.xlu0 %v10211, 16
      %v10283 = vpop.permute.xlu0 %10282
      %10284 = vrot.lane.b32.xlu0 %v10213, 16
      %v10285 = vpop.permute.xlu0 %10284
      %10286 = vrot.lane.b32.xlu0 %v10215, 16
      %v10287 = vpop.permute.xlu0 %10286
      %10288 = vrot.lane.b32.xlu0 %v10217, 16
      %v10289 = vpop.permute.xlu0 %10288
      %10290 = vrot.lane.b32.xlu0 %v10219, 16
      %v10291 = vpop.permute.xlu0 %10290
      %10292 = vrot.lane.b32.xlu0 %v10221, 16
      %v10293 = vpop.permute.xlu0 %10292
      %10294 = vrot.lane.b32.xlu0 %v10223, 16
      %v10295 = vpop.permute.xlu0 %10294
      %10296 = vrot.lane.b32.xlu0 %v10225, 16
      %v10297 = vpop.permute.xlu0 %10296
      %10298 = vrot.lane.b32.xlu0 %v10227, 16
      %v10299 = vpop.permute.xlu0 %10298
      %10300 = vrot.lane.b32.xlu0 %v10229, 16
      %v10301 = vpop.permute.xlu0 %10300
      %10302 = vrot.lane.b32.xlu0 %v10231, 16
      %v10303 = vpop.permute.xlu0 %10302
      %10304 = vrot.lane.b32.xlu0 %v10233, 16
      %v10305 = vpop.permute.xlu0 %10304
      %10306 = vrot.lane.b32.xlu0 %v10235, 16
      %v10307 = vpop.permute.xlu0 %10306
      %10308 = vrot.lane.b32.xlu0 %v10237, 16
      %v10309 = vpop.permute.xlu0 %10308
      %10310 = vrot.lane.b32.xlu0 %v10239, 16
      %v10311 = vpop.permute.xlu0 %10310
      %10312 = vrot.lane.b32.xlu0 %v10241, 16
      %v10313 = vpop.permute.xlu0 %10312
      %10314 = vrot.lane.b32.xlu0 %v10243, 16
      %v10315 = vpop.permute.xlu0 %10314
      %10316 = vrot.lane.b32.xlu0 %v10245, 16
      %v10317 = vpop.permute.xlu0 %10316
      %10318 = vrot.lane.b32.xlu0 %v10247, 16
      %v10319 = vpop.permute.xlu0 %10318
      %10320 = vrot.lane.b32.xlu0 %v10249, 16
      %v10321 = vpop.permute.xlu0 %10320
      %10322 = vrot.lane.b32.xlu0 %v10251, 16
      %v10323 = vpop.permute.xlu0 %10322
      %10324 = vrot.lane.b32.xlu0 %v10253, 16
      %v10325 = vpop.permute.xlu0 %10324
      %10326 = vrot.lane.b32.xlu0 %v10255, 16
      %v10327 = vpop.permute.xlu0 %10326
      %10328 = vrot.lane.b32.xlu0 %v10257, 16
      %v10329 = vpop.permute.xlu0 %10328
      %10330 = vrot.lane.b32.xlu0 %v10259, 16
      %v10331 = vpop.permute.xlu0 %10330
      %10332 = vrot.lane.b32.xlu0 %v10261, 16
      %v10333 = vpop.permute.xlu0 %10332
      %10334 = vrot.lane.b32.xlu0 %v10263, 16
      %v10335 = vpop.permute.xlu0 %10334
      %10336 = vrot.lane.b32.xlu0 %v10265, 16
      %v10337 = vpop.permute.xlu0 %10336
      %10338 = vrot.lane.b32.xlu0 %v10267, 16
      %v10339 = vpop.permute.xlu0 %10338
      %10340 = vrot.lane.b32.xlu0 %v10269, 16
      %v10341 = vpop.permute.xlu0 %10340
      %10342 = vrot.lane.b32.xlu0 %v10271, 16
      %v10343 = vpop.permute.xlu0 %10342
      %10344 = vrot.lane.b32.xlu0 %v10273, 16
      %v10345 = vpop.permute.xlu0 %10344
      %10346 = vrot.lane.b32.xlu0 %v10275, 16
      %v10347 = vpop.permute.xlu0 %10346
      %v10384 = vadd.f32 %v10167, %v10277
      %v10385 = vadd.f32 %v10168, %v10279
      %v10386 = vadd.f32 %v10169, %v10281
      %v10387 = vadd.f32 %v10170, %v10283
      %v10388 = vadd.f32 %v10171, %v10285
      %v10389 = vadd.f32 %v10172, %v10287
      %v10390 = vadd.f32 %v10173, %v10289
      %v10391 = vadd.f32 %v10174, %v10291
      %v10392 = vadd.f32 %v10175, %v10293
      %v10393 = vadd.f32 %v10176, %v10295
      %v10394 = vadd.f32 %v10177, %v10297
      %v10395 = vadd.f32 %v10178, %v10299
      %v10396 = vadd.f32 %v10179, %v10301
      %v10397 = vadd.f32 %v10180, %v10303
      %v10398 = vadd.f32 %v10181, %v10305
      %v10399 = vadd.f32 %v10182, %v10307
      %v10400 = vadd.f32 %v10183, %v10309
      %v10401 = vadd.f32 %v10184, %v10311
      %v10402 = vadd.f32 %v10185, %v10313
      %v10403 = vadd.f32 %v10186, %v10315
      %v10404 = vadd.f32 %v10187, %v10317
      %v10405 = vadd.f32 %v10188, %v10319
      %v10406 = vadd.f32 %v10189, %v10321
      %v10407 = vadd.f32 %v10190, %v10323
      %v10408 = vadd.f32 %v10191, %v10325
      %v10409 = vadd.f32 %v10192, %v10327
      %v10410 = vadd.f32 %v10193, %v10329
      %v10411 = vadd.f32 %v10194, %v10331
      %v10412 = vadd.f32 %v10195, %v10333
      %v10413 = vadd.f32 %v10196, %v10335
      %v10414 = vadd.f32 %v10197, %v10337
      %v10415 = vadd.f32 %v10198, %v10339
      %v10416 = vadd.f32 %v10199, %v10341
      %v10417 = vadd.f32 %v10200, %v10343
      %v10418 = vadd.f32 %v10201, %v10345
      %v10419 = vadd.f32 %v10202, %v10347
      %v10457 = vrot.slane %v8814, 6
      %v10458 = vrot.slane %v8818, 6
      %v10459 = vsel %vm2981, %v10457, %v10458
      %v10460 = vrot.slane %v8824, 6
      %v10461 = vsel %vm2981, %v10458, %v10460
      %v10462 = vrot.slane %v8828, 6
      %v10463 = vsel %vm2981, %v10460, %v10462
      %v10464 = vrot.slane %v8834, 6
      %v10465 = vsel %vm2981, %v10462, %v10464
      %v10466 = vrot.slane %v8838, 6
      %v10467 = vsel %vm2981, %v10464, %v10466
      %v10468 = vrot.slane %v8844, 6
      %v10469 = vsel %vm2981, %v10466, %v10468
      %v10470 = vrot.slane %v8848, 6
      %v10471 = vsel %vm2981, %v10468, %v10470
      %v10472 = vrot.slane %v8854, 6
      %v10473 = vsel %vm2981, %v10470, %v10472
      %v10474 = vrot.slane %v8858, 6
      %v10475 = vsel %vm2981, %v10472, %v10474
      %v10476 = vrot.slane %v8864, 6
      %v10477 = vsel %vm2981, %v10474, %v10476
      %v10478 = vrot.slane %v8868, 6
      %v10479 = vsel %vm2981, %v10476, %v10478
      %v10480 = vrot.slane %v8874, 6
      %v10481 = vsel %vm2981, %v10478, %v10480
      %v10482 = vrot.slane %v8878, 6
      %v10483 = vsel %vm2981, %v10480, %v10482
      %v10484 = vrot.slane %v8884, 6
      %v10485 = vsel %vm2981, %v10482, %v10484
      %v10486 = vrot.slane %v8888, 6
      %v10487 = vsel %vm2981, %v10484, %v10486
      %v10488 = vrot.slane %v8894, 6
      %v10489 = vsel %vm2981, %v10486, %v10488
      %v10490 = vrot.slane %v8898, 6
      %v10491 = vsel %vm2981, %v10488, %v10490
      %v10492 = vrot.slane %v8904, 6
      %v10493 = vsel %vm2981, %v10490, %v10492
      %v10494 = vrot.slane %v8908, 6
      %v10495 = vsel %vm2981, %v10492, %v10494
      %v10496 = vrot.slane %v8914, 6
      %v10497 = vsel %vm2981, %v10494, %v10496
      %v10498 = vrot.slane %v8918, 6
      %v10499 = vsel %vm2981, %v10496, %v10498
      %v10500 = vrot.slane %v8924, 6
      %v10501 = vsel %vm2981, %v10498, %v10500
      %v10502 = vrot.slane %v8928, 6
      %v10503 = vsel %vm2981, %v10500, %v10502
      %v10504 = vrot.slane %v8934, 6
      %v10505 = vsel %vm2981, %v10502, %v10504
      %v10506 = vrot.slane %v8938, 6
      %v10507 = vsel %vm2981, %v10504, %v10506
      %v10508 = vrot.slane %v8944, 6
      %v10509 = vsel %vm2981, %v10506, %v10508
      %v10510 = vrot.slane %v8948, 6
      %v10511 = vsel %vm2981, %v10508, %v10510
      %v10512 = vrot.slane %v8954, 6
      %v10513 = vsel %vm2981, %v10510, %v10512
      %v10514 = vrot.slane %v8958, 6
      %v10515 = vsel %vm2981, %v10512, %v10514
      %v10516 = vrot.slane %v8964, 6
      %v10517 = vsel %vm2981, %v10514, %v10516
      %v10518 = vrot.slane %v8968, 6
      %v10519 = vsel %vm2981, %v10516, %v10518
      %v10520 = vrot.slane %v8974, 6
      %v10521 = vsel %vm2981, %v10518, %v10520
      %v10522 = vrot.slane %v8978, 6
      %v10523 = vsel %vm2981, %v10520, %v10522
      %v10524 = vrot.slane %v8984, 6
      %v10525 = vsel %vm2981, %v10522, %v10524
      %v10526 = vrot.slane %v8988, 6
      %v10527 = vsel %vm2981, %v10524, %v10526
      %v10528 = vrot.slane %v8994, 6
      %v10529 = vsel %vm2981, %v10526, %v10528
      %v10566 = vadd.f32 %v10384, %v10459
      %v10567 = vadd.f32 %v10385, %v10461
      %v10568 = vadd.f32 %v10386, %v10463
      %v10569 = vadd.f32 %v10387, %v10465
      %v10570 = vadd.f32 %v10388, %v10467
      %v10571 = vadd.f32 %v10389, %v10469
      %v10572 = vadd.f32 %v10390, %v10471
      %v10573 = vadd.f32 %v10391, %v10473
      %v10574 = vadd.f32 %v10392, %v10475
      %v10575 = vadd.f32 %v10393, %v10477
      %v10576 = vadd.f32 %v10394, %v10479
      %v10577 = vadd.f32 %v10395, %v10481
      %v10578 = vadd.f32 %v10396, %v10483
      %v10579 = vadd.f32 %v10397, %v10485
      %v10580 = vadd.f32 %v10398, %v10487
      %v10581 = vadd.f32 %v10399, %v10489
      %v10582 = vadd.f32 %v10400, %v10491
      %v10583 = vadd.f32 %v10401, %v10493
      %v10584 = vadd.f32 %v10402, %v10495
      %v10585 = vadd.f32 %v10403, %v10497
      %v10586 = vadd.f32 %v10404, %v10499
      %v10587 = vadd.f32 %v10405, %v10501
      %v10588 = vadd.f32 %v10406, %v10503
      %v10589 = vadd.f32 %v10407, %v10505
      %v10590 = vadd.f32 %v10408, %v10507
      %v10591 = vadd.f32 %v10409, %v10509
      %v10592 = vadd.f32 %v10410, %v10511
      %v10593 = vadd.f32 %v10411, %v10513
      %v10594 = vadd.f32 %v10412, %v10515
      %v10595 = vadd.f32 %v10413, %v10517
      %v10596 = vadd.f32 %v10414, %v10519
      %v10597 = vadd.f32 %v10415, %v10521
      %v10598 = vadd.f32 %v10416, %v10523
      %v10599 = vadd.f32 %v10417, %v10525
      %v10600 = vadd.f32 %v10418, %v10527
      %v10601 = vadd.f32 %v10419, %v10529
      %v10602 = vld [vmem:[%s8] sm:$0x1]
      %v10604 = vlaneseq
      %v10605 = vshrl.u32 %v10604, 7
      %v10606 = vsub.s32 0, %v10605
      %v10607 = vrot.slane %v10602, %v10606
      %v10609 = vadd.f32 %v10566, %v10607
      %v10610 = vadd.f32 %v10567, %v10607
      %v10611 = vadd.f32 %v10568, %v10607
      %v10612 = vadd.f32 %v10569, %v10607
      %v10613 = vadd.f32 %v10570, %v10607
      %v10614 = vadd.f32 %v10571, %v10607
      %v10615 = vadd.f32 %v10572, %v10607
      %v10616 = vadd.f32 %v10573, %v10607
      %v10617 = vadd.f32 %v10574, %v10607
      %v10618 = vadd.f32 %v10575, %v10607
      %v10619 = vadd.f32 %v10576, %v10607
      %v10620 = vadd.f32 %v10577, %v10607
      %v10621 = vadd.f32 %v10578, %v10607
      %v10622 = vadd.f32 %v10579, %v10607
      %v10623 = vadd.f32 %v10580, %v10607
      %v10624 = vadd.f32 %v10581, %v10607
      %v10625 = vadd.f32 %v10582, %v10607
      %v10626 = vadd.f32 %v10583, %v10607
      %v10627 = vadd.f32 %v10584, %v10607
      %v10628 = vadd.f32 %v10585, %v10607
      %v10629 = vadd.f32 %v10586, %v10607
      %v10630 = vadd.f32 %v10587, %v10607
      %v10631 = vadd.f32 %v10588, %v10607
      %v10632 = vadd.f32 %v10589, %v10607
      %v10633 = vadd.f32 %v10590, %v10607
      %v10634 = vadd.f32 %v10591, %v10607
      %v10635 = vadd.f32 %v10592, %v10607
      %v10636 = vadd.f32 %v10593, %v10607
      %v10637 = vadd.f32 %v10594, %v10607
      %v10638 = vadd.f32 %v10595, %v10607
      %v10639 = vadd.f32 %v10596, %v10607
      %v10640 = vadd.f32 %v10597, %v10607
      %v10641 = vadd.f32 %v10598, %v10607
      %v10642 = vadd.f32 %v10599, %v10607
      %v10643 = vadd.f32 %v10600, %v10607
      %v10644 = vadd.f32 %v10601, %v10607
      %v10645 = vmax.f32 %v10609, 0.0
      %v10646 = vmax.f32 %v10610, 0.0
      %v10647 = vmax.f32 %v10611, 0.0
      %v10648 = vmax.f32 %v10612, 0.0
      %v10649 = vmax.f32 %v10613, 0.0
      %v10650 = vmax.f32 %v10614, 0.0
      %v10651 = vmax.f32 %v10615, 0.0
      %v10652 = vmax.f32 %v10616, 0.0
      %v10653 = vmax.f32 %v10617, 0.0
      %v10654 = vmax.f32 %v10618, 0.0
      %v10655 = vmax.f32 %v10619, 0.0
      %v10656 = vmax.f32 %v10620, 0.0
      %v10657 = vmax.f32 %v10621, 0.0
      %v10658 = vmax.f32 %v10622, 0.0
      %v10659 = vmax.f32 %v10623, 0.0
      %v10660 = vmax.f32 %v10624, 0.0
      %v10661 = vmax.f32 %v10625, 0.0
      %v10662 = vmax.f32 %v10626, 0.0
      %v10663 = vmax.f32 %v10627, 0.0
      %v10664 = vmax.f32 %v10628, 0.0
      %v10665 = vmax.f32 %v10629, 0.0
      %v10666 = vmax.f32 %v10630, 0.0
      %v10667 = vmax.f32 %v10631, 0.0
      %v10668 = vmax.f32 %v10632, 0.0
      %v10669 = vmax.f32 %v10633, 0.0
      %v10670 = vmax.f32 %v10634, 0.0
      %v10671 = vmax.f32 %v10635, 0.0
      %v10672 = vmax.f32 %v10636, 0.0
      %v10673 = vmax.f32 %v10637, 0.0
      %v10674 = vmax.f32 %v10638, 0.0
      %v10675 = vmax.f32 %v10639, 0.0
      %v10676 = vmax.f32 %v10640, 0.0
      %v10677 = vmax.f32 %v10641, 0.0
      %v10678 = vmax.f32 %v10642, 0.0
      %v10679 = vmax.f32 %v10643, 0.0
      %v10680 = vmax.f32 %v10644, 0.0
      %v10681 = vld [vmem:[%s2] sm:$0xff]
      %v10682 = vld [vmem:[%s2 + $0x8] sm:$0xff]
      %v10683 = vld [vmem:[%s2 + $0x10] sm:$0xff]
      %v10684 = vld [vmem:[%s2 + $0x18] sm:$0xff]
      %v10685 = vld [vmem:[%s2 + $0x20] sm:$0xff]
      %v10686 = vld [vmem:[%s2 + $0x28] sm:$0xff]
      %v10687 = vld [vmem:[%s2 + $0x30] sm:$0xff]
      %v10688 = vld [vmem:[%s2 + $0x38] sm:$0xff]
      %v10689 = vld [vmem:[%s2 + $0x40] sm:$0xff]
      %v10690 = vld [vmem:[%s2 + $0x48] sm:$0xff]
      %v10691 = vld [vmem:[%s2 + $0x50] sm:$0xff]
      %v10692 = vld [vmem:[%s2 + $0x58] sm:$0xff]
      %v10693 = vld [vmem:[%s2 + $0x60] sm:$0xff]
      %v10694 = vld [vmem:[%s2 + $0x68] sm:$0xff]
      %v10695 = vld [vmem:[%s2 + $0x70] sm:$0xff]
      %v10696 = vld [vmem:[%s2 + $0x78] sm:$0xff]
      %v10697 = vld [vmem:[%s2 + $0x80] sm:$0xff]
      %v10698 = vld [vmem:[%s2 + $0x88] sm:$0xff]
      %v10699 = vld [vmem:[%s2 + $0x90] sm:$0xff]
      %v10700 = vld [vmem:[%s2 + $0x98] sm:$0xff]
      %v10701 = vld [vmem:[%s2 + $0xa0] sm:$0xff]
      %v10702 = vld [vmem:[%s2 + $0xa8] sm:$0xff]
      %v10703 = vld [vmem:[%s2 + $0xb0] sm:$0xff]
      %v10704 = vld [vmem:[%s2 + $0xb8] sm:$0xff]
      %v10705 = vld [vmem:[%s2 + $0xc0] sm:$0xff]
      %v10706 = vld [vmem:[%s2 + $0xc8] sm:$0xff]
      %v10707 = vld [vmem:[%s2 + $0xd0] sm:$0xff]
      %v10708 = vld [vmem:[%s2 + $0xd8] sm:$0xff]
      %v10709 = vld [vmem:[%s2 + $0xe0] sm:$0xff]
      %v10710 = vld [vmem:[%s2 + $0xe8] sm:$0xff]
      %v10711 = vld [vmem:[%s2 + $0xf0] sm:$0xff]
      %v10712 = vld [vmem:[%s2 + $0xf8] sm:$0xff]
      %v10713 = vld [vmem:[%s2 + $0x100] sm:$0xff]
      %v10714 = vld [vmem:[%s2 + $0x108] sm:$0xff]
      %v10715 = vld [vmem:[%s2 + $0x110] sm:$0xff]
      %v10716 = vld [vmem:[%s2 + $0x118] sm:$0xff]
      %v10717 = vstv %s425
      %v10718 = vadd.s32 %v10681, %v10717
      %v10719 = vadd.s32 %v10682, %v10717
      %v10720 = vadd.s32 %v10683, %v10717
      %v10721 = vadd.s32 %v10684, %v10717
      %v10722 = vadd.s32 %v10685, %v10717
      %v10723 = vadd.s32 %v10686, %v10717
      %v10724 = vadd.s32 %v10687, %v10717
      %v10725 = vadd.s32 %v10688, %v10717
      %v10726 = vadd.s32 %v10689, %v10717
      %v10727 = vadd.s32 %v10690, %v10717
      %v10728 = vadd.s32 %v10691, %v10717
      %v10729 = vadd.s32 %v10692, %v10717
      %v10730 = vadd.s32 %v10693, %v10717
      %v10731 = vadd.s32 %v10694, %v10717
      %v10732 = vadd.s32 %v10695, %v10717
      %v10733 = vadd.s32 %v10696, %v10717
      %v10734 = vadd.s32 %v10697, %v10717
      %v10735 = vadd.s32 %v10698, %v10717
      %v10736 = vadd.s32 %v10699, %v10717
      %v10737 = vadd.s32 %v10700, %v10717
      %v10738 = vadd.s32 %v10701, %v10717
      %v10739 = vadd.s32 %v10702, %v10717
      %v10740 = vadd.s32 %v10703, %v10717
      %v10741 = vadd.s32 %v10704, %v10717
      %v10742 = vadd.s32 %v10705, %v10717
      %v10743 = vadd.s32 %v10706, %v10717
      %v10744 = vadd.s32 %v10707, %v10717
      %v10745 = vadd.s32 %v10708, %v10717
      %v10746 = vadd.s32 %v10709, %v10717
      %v10747 = vadd.s32 %v10710, %v10717
      %v10748 = vadd.s32 %v10711, %v10717
      %v10749 = vadd.s32 %v10712, %v10717
      %v10750 = vadd.s32 %v10713, %v10717
      %v10751 = vadd.s32 %v10714, %v10717
      %v10752 = vadd.s32 %v10715, %v10717
      %v10753 = vadd.s32 %v10716, %v10717
      %v10754 = vld [vmem:[%s1] sm:$0xff]
      %v10755 = vld [vmem:[%s1 + $0x8] sm:$0xff]
      %v10756 = vld [vmem:[%s1 + $0x10] sm:$0xff]
      %v10757 = vld [vmem:[%s1 + $0x18] sm:$0xff]
      %v10758 = vld [vmem:[%s1 + $0x20] sm:$0xff]
      %v10759 = vld [vmem:[%s1 + $0x28] sm:$0xff]
      %v10760 = vld [vmem:[%s1 + $0x30] sm:$0xff]
      %v10761 = vld [vmem:[%s1 + $0x38] sm:$0xff]
      %v10762 = vld [vmem:[%s1 + $0x40] sm:$0xff]
      %v10763 = vld [vmem:[%s1 + $0x48] sm:$0xff]
      %v10764 = vld [vmem:[%s1 + $0x50] sm:$0xff]
      %v10765 = vld [vmem:[%s1 + $0x58] sm:$0xff]
      %v10766 = vld [vmem:[%s1 + $0x60] sm:$0xff]
      %v10767 = vld [vmem:[%s1 + $0x68] sm:$0xff]
      %v10768 = vld [vmem:[%s1 + $0x70] sm:$0xff]
      %v10769 = vld [vmem:[%s1 + $0x78] sm:$0xff]
      %v10770 = vld [vmem:[%s1 + $0x80] sm:$0xff]
      %v10771 = vld [vmem:[%s1 + $0x88] sm:$0xff]
      %v10772 = vld [vmem:[%s1 + $0x90] sm:$0xff]
      %v10773 = vld [vmem:[%s1 + $0x98] sm:$0xff]
      %v10774 = vld [vmem:[%s1 + $0xa0] sm:$0xff]
      %v10775 = vld [vmem:[%s1 + $0xa8] sm:$0xff]
      %v10776 = vld [vmem:[%s1 + $0xb0] sm:$0xff]
      %v10777 = vld [vmem:[%s1 + $0xb8] sm:$0xff]
      %v10778 = vld [vmem:[%s1 + $0xc0] sm:$0xff]
      %v10779 = vld [vmem:[%s1 + $0xc8] sm:$0xff]
      %v10780 = vld [vmem:[%s1 + $0xd0] sm:$0xff]
      %v10781 = vld [vmem:[%s1 + $0xd8] sm:$0xff]
      %v10782 = vld [vmem:[%s1 + $0xe0] sm:$0xff]
      %v10783 = vld [vmem:[%s1 + $0xe8] sm:$0xff]
      %v10784 = vld [vmem:[%s1 + $0xf0] sm:$0xff]
      %v10785 = vld [vmem:[%s1 + $0xf8] sm:$0xff]
      %v10786 = vld [vmem:[%s1 + $0x100] sm:$0xff]
      %v10787 = vld [vmem:[%s1 + $0x108] sm:$0xff]
      %v10788 = vld [vmem:[%s1 + $0x110] sm:$0xff]
      %v10789 = vld [vmem:[%s1 + $0x118] sm:$0xff]
      %vm10790 = vcmp.gt.s32.totalorder %v10754, 0
      %vm10791 = vcmp.gt.s32.totalorder %v10755, 0
      %vm10792 = vcmp.gt.s32.totalorder %v10756, 0
      %vm10793 = vcmp.gt.s32.totalorder %v10757, 0
      %vm10794 = vcmp.gt.s32.totalorder %v10758, 0
      %vm10795 = vcmp.gt.s32.totalorder %v10759, 0
      %vm10796 = vcmp.gt.s32.totalorder %v10760, 0
      %vm10797 = vcmp.gt.s32.totalorder %v10761, 0
      %vm10798 = vcmp.gt.s32.totalorder %v10762, 0
      %vm10799 = vcmp.gt.s32.totalorder %v10763, 0
      %vm10800 = vcmp.gt.s32.totalorder %v10764, 0
      %vm10801 = vcmp.gt.s32.totalorder %v10765, 0
      %vm10802 = vcmp.gt.s32.totalorder %v10766, 0
      %vm10803 = vcmp.gt.s32.totalorder %v10767, 0
      %vm10804 = vcmp.gt.s32.totalorder %v10768, 0
      %vm10805 = vcmp.gt.s32.totalorder %v10769, 0
      %vm10806 = vcmp.gt.s32.totalorder %v10770, 0
      %vm10807 = vcmp.gt.s32.totalorder %v10771, 0
      %vm10808 = vcmp.gt.s32.totalorder %v10772, 0
      %vm10809 = vcmp.gt.s32.totalorder %v10773, 0
      %vm10810 = vcmp.gt.s32.totalorder %v10774, 0
      %vm10811 = vcmp.gt.s32.totalorder %v10775, 0
      %vm10812 = vcmp.gt.s32.totalorder %v10776, 0
      %vm10813 = vcmp.gt.s32.totalorder %v10777, 0
      %vm10814 = vcmp.gt.s32.totalorder %v10778, 0
      %vm10815 = vcmp.gt.s32.totalorder %v10779, 0
      %vm10816 = vcmp.gt.s32.totalorder %v10780, 0
      %vm10817 = vcmp.gt.s32.totalorder %v10781, 0
      %vm10818 = vcmp.gt.s32.totalorder %v10782, 0
      %vm10819 = vcmp.gt.s32.totalorder %v10783, 0
      %vm10820 = vcmp.gt.s32.totalorder %v10784, 0
      %vm10821 = vcmp.gt.s32.totalorder %v10785, 0
      %vm10822 = vcmp.gt.s32.totalorder %v10786, 0
      %vm10823 = vcmp.gt.s32.totalorder %v10787, 0
      %vm10824 = vcmp.gt.s32.totalorder %v10788, 0
      %vm10825 = vcmp.gt.s32.totalorder %v10789, 0
      %vm10826 = vcmp.ge.s32.totalorder %v10718, 0
      %vm10827 = vcmp.ge.s32.totalorder %v10719, 0
      %vm10828 = vcmp.ge.s32.totalorder %v10720, 0
      %vm10829 = vcmp.ge.s32.totalorder %v10721, 0
      %vm10830 = vcmp.ge.s32.totalorder %v10722, 0
      %vm10831 = vcmp.ge.s32.totalorder %v10723, 0
      %vm10832 = vcmp.ge.s32.totalorder %v10724, 0
      %vm10833 = vcmp.ge.s32.totalorder %v10725, 0
      %vm10834 = vcmp.ge.s32.totalorder %v10726, 0
      %vm10835 = vcmp.ge.s32.totalorder %v10727, 0
      %vm10836 = vcmp.ge.s32.totalorder %v10728, 0
      %vm10837 = vcmp.ge.s32.totalorder %v10729, 0
      %vm10838 = vcmp.ge.s32.totalorder %v10730, 0
      %vm10839 = vcmp.ge.s32.totalorder %v10731, 0
      %vm10840 = vcmp.ge.s32.totalorder %v10732, 0
      %vm10841 = vcmp.ge.s32.totalorder %v10733, 0
      %vm10842 = vcmp.ge.s32.totalorder %v10734, 0
      %vm10843 = vcmp.ge.s32.totalorder %v10735, 0
      %vm10844 = vcmp.ge.s32.totalorder %v10736, 0
      %vm10845 = vcmp.ge.s32.totalorder %v10737, 0
      %vm10846 = vcmp.ge.s32.totalorder %v10738, 0
      %vm10847 = vcmp.ge.s32.totalorder %v10739, 0
      %vm10848 = vcmp.ge.s32.totalorder %v10740, 0
      %vm10849 = vcmp.ge.s32.totalorder %v10741, 0
      %vm10850 = vcmp.ge.s32.totalorder %v10742, 0
      %vm10851 = vcmp.ge.s32.totalorder %v10743, 0
      %vm10852 = vcmp.ge.s32.totalorder %v10744, 0
      %vm10853 = vcmp.ge.s32.totalorder %v10745, 0
      %vm10854 = vcmp.ge.s32.totalorder %v10746, 0
      %vm10855 = vcmp.ge.s32.totalorder %v10747, 0
      %vm10856 = vcmp.ge.s32.totalorder %v10748, 0
      %vm10857 = vcmp.ge.s32.totalorder %v10749, 0
      %vm10858 = vcmp.ge.s32.totalorder %v10750, 0
      %vm10859 = vcmp.ge.s32.totalorder %v10751, 0
      %vm10860 = vcmp.ge.s32.totalorder %v10752, 0
      %vm10861 = vcmp.ge.s32.totalorder %v10753, 0
      %vm10862 = vmand %vm10790, %vm10826
      %vm10863 = vmand %vm10791, %vm10827
      %vm10864 = vmand %vm10792, %vm10828
      %vm10865 = vmand %vm10793, %vm10829
      %vm10866 = vmand %vm10794, %vm10830
      %vm10867 = vmand %vm10795, %vm10831
      %vm10868 = vmand %vm10796, %vm10832
      %vm10869 = vmand %vm10797, %vm10833
      %vm10870 = vmand %vm10798, %vm10834
      %vm10871 = vmand %vm10799, %vm10835
      %vm10872 = vmand %vm10800, %vm10836
      %vm10873 = vmand %vm10801, %vm10837
      %vm10874 = vmand %vm10802, %vm10838
      %vm10875 = vmand %vm10803, %vm10839
      %vm10876 = vmand %vm10804, %vm10840
      %vm10877 = vmand %vm10805, %vm10841
      %vm10878 = vmand %vm10806, %vm10842
      %vm10879 = vmand %vm10807, %vm10843
      %vm10880 = vmand %vm10808, %vm10844
      %vm10881 = vmand %vm10809, %vm10845
      %vm10882 = vmand %vm10810, %vm10846
      %vm10883 = vmand %vm10811, %vm10847
      %vm10884 = vmand %vm10812, %vm10848
      %vm10885 = vmand %vm10813, %vm10849
      %vm10886 = vmand %vm10814, %vm10850
      %vm10887 = vmand %vm10815, %vm10851
      %vm10888 = vmand %vm10816, %vm10852
      %vm10889 = vmand %vm10817, %vm10853
      %vm10890 = vmand %vm10818, %vm10854
      %vm10891 = vmand %vm10819, %vm10855
      %vm10892 = vmand %vm10820, %vm10856
      %vm10893 = vmand %vm10821, %vm10857
      %vm10894 = vmand %vm10822, %vm10858
      %vm10895 = vmand %vm10823, %vm10859
      %vm10896 = vmand %vm10824, %vm10860
      %vm10897 = vmand %vm10825, %vm10861
      %vm10898 = vcmp.lt.s32.totalorder %v10718, 16
      %vm10899 = vcmp.lt.s32.totalorder %v10719, 16
      %vm10900 = vcmp.lt.s32.totalorder %v10720, 16
      %vm10901 = vcmp.lt.s32.totalorder %v10721, 16
      %vm10902 = vcmp.lt.s32.totalorder %v10722, 16
      %vm10903 = vcmp.lt.s32.totalorder %v10723, 16
      %vm10904 = vcmp.lt.s32.totalorder %v10724, 16
      %vm10905 = vcmp.lt.s32.totalorder %v10725, 16
      %vm10906 = vcmp.lt.s32.totalorder %v10726, 16
      %vm10907 = vcmp.lt.s32.totalorder %v10727, 16
      %vm10908 = vcmp.lt.s32.totalorder %v10728, 16
      %vm10909 = vcmp.lt.s32.totalorder %v10729, 16
      %vm10910 = vcmp.lt.s32.totalorder %v10730, 16
      %vm10911 = vcmp.lt.s32.totalorder %v10731, 16
      %vm10912 = vcmp.lt.s32.totalorder %v10732, 16
      %vm10913 = vcmp.lt.s32.totalorder %v10733, 16
      %vm10914 = vcmp.lt.s32.totalorder %v10734, 16
      %vm10915 = vcmp.lt.s32.totalorder %v10735, 16
      %vm10916 = vcmp.lt.s32.totalorder %v10736, 16
      %vm10917 = vcmp.lt.s32.totalorder %v10737, 16
      %vm10918 = vcmp.lt.s32.totalorder %v10738, 16
      %vm10919 = vcmp.lt.s32.totalorder %v10739, 16
      %vm10920 = vcmp.lt.s32.totalorder %v10740, 16
      %vm10921 = vcmp.lt.s32.totalorder %v10741, 16
      %vm10922 = vcmp.lt.s32.totalorder %v10742, 16
      %vm10923 = vcmp.lt.s32.totalorder %v10743, 16
      %vm10924 = vcmp.lt.s32.totalorder %v10744, 16
      %vm10925 = vcmp.lt.s32.totalorder %v10745, 16
      %vm10926 = vcmp.lt.s32.totalorder %v10746, 16
      %vm10927 = vcmp.lt.s32.totalorder %v10747, 16
      %vm10928 = vcmp.lt.s32.totalorder %v10748, 16
      %vm10929 = vcmp.lt.s32.totalorder %v10749, 16
      %vm10930 = vcmp.lt.s32.totalorder %v10750, 16
      %vm10931 = vcmp.lt.s32.totalorder %v10751, 16
      %vm10932 = vcmp.lt.s32.totalorder %v10752, 16
      %vm10933 = vcmp.lt.s32.totalorder %v10753, 16
      %vm10934 = vmand %vm10862, %vm10898
      %vm10935 = vmand %vm10863, %vm10899
      %vm10936 = vmand %vm10864, %vm10900
      %vm10937 = vmand %vm10865, %vm10901
      %vm10938 = vmand %vm10866, %vm10902
      %vm10939 = vmand %vm10867, %vm10903
      %vm10940 = vmand %vm10868, %vm10904
      %vm10941 = vmand %vm10869, %vm10905
      %vm10942 = vmand %vm10870, %vm10906
      %vm10943 = vmand %vm10871, %vm10907
      %vm10944 = vmand %vm10872, %vm10908
      %vm10945 = vmand %vm10873, %vm10909
      %vm10946 = vmand %vm10874, %vm10910
      %vm10947 = vmand %vm10875, %vm10911
      %vm10948 = vmand %vm10876, %vm10912
      %vm10949 = vmand %vm10877, %vm10913
      %vm10950 = vmand %vm10878, %vm10914
      %vm10951 = vmand %vm10879, %vm10915
      %vm10952 = vmand %vm10880, %vm10916
      %vm10953 = vmand %vm10881, %vm10917
      %vm10954 = vmand %vm10882, %vm10918
      %vm10955 = vmand %vm10883, %vm10919
      %vm10956 = vmand %vm10884, %vm10920
      %vm10957 = vmand %vm10885, %vm10921
      %vm10958 = vmand %vm10886, %vm10922
      %vm10959 = vmand %vm10887, %vm10923
      %vm10960 = vmand %vm10888, %vm10924
      %vm10961 = vmand %vm10889, %vm10925
      %vm10962 = vmand %vm10890, %vm10926
      %vm10963 = vmand %vm10891, %vm10927
      %vm10964 = vmand %vm10892, %vm10928
      %vm10965 = vmand %vm10893, %vm10929
      %vm10966 = vmand %vm10894, %vm10930
      %vm10967 = vmand %vm10895, %vm10931
      %vm10968 = vmand %vm10896, %vm10932
      %vm10969 = vmand %vm10897, %vm10933
      %v10970 = vsel %vm10934, 1, 0
      %v10971 = vsel %vm10935, 1, 0
      %v10972 = vsel %vm10936, 1, 0
      %v10973 = vsel %vm10937, 1, 0
      %v10974 = vsel %vm10938, 1, 0
      %v10975 = vsel %vm10939, 1, 0
      %v10976 = vsel %vm10940, 1, 0
      %v10977 = vsel %vm10941, 1, 0
      %v10978 = vsel %vm10942, 1, 0
      %v10979 = vsel %vm10943, 1, 0
      %v10980 = vsel %vm10944, 1, 0
      %v10981 = vsel %vm10945, 1, 0
      %v10982 = vsel %vm10946, 1, 0
      %v10983 = vsel %vm10947, 1, 0
      %v10984 = vsel %vm10948, 1, 0
      %v10985 = vsel %vm10949, 1, 0
      %v10986 = vsel %vm10950, 1, 0
      %v10987 = vsel %vm10951, 1, 0
      %v10988 = vsel %vm10952, 1, 0
      %v10989 = vsel %vm10953, 1, 0
      %v10990 = vsel %vm10954, 1, 0
      %v10991 = vsel %vm10955, 1, 0
      %v10992 = vsel %vm10956, 1, 0
      %v10993 = vsel %vm10957, 1, 0
      %v10994 = vsel %vm10958, 1, 0
      %v10995 = vsel %vm10959, 1, 0
      %v10996 = vsel %vm10960, 1, 0
      %v10997 = vsel %vm10961, 1, 0
      %v10998 = vsel %vm10962, 1, 0
      %v10999 = vsel %vm10963, 1, 0
      %v11000 = vsel %vm10964, 1, 0
      %v11001 = vsel %vm10965, 1, 0
      %v11002 = vsel %vm10966, 1, 0
      %v11003 = vsel %vm10967, 1, 0
      %v11004 = vsel %vm10968, 1, 0
      %v11005 = vsel %vm10969, 1, 0
      %11006 = vset.pattern.permute.xlu0 0
      %11007 = vperm.xlu0 %11006, %v10970
      %v11008 = vpop.permute.xlu0 %11007
      %11009 = vset.pattern.permute.xlu0 0
      %11010 = vperm.xlu0 %11009, %v10971
      %v11011 = vpop.permute.xlu0 %11010
      %11012 = vset.pattern.permute.xlu0 0
      %11013 = vperm.xlu0 %11012, %v10972
      %v11014 = vpop.permute.xlu0 %11013
      %11015 = vset.pattern.permute.xlu0 0
      %11016 = vperm.xlu0 %11015, %v10973
      %v11017 = vpop.permute.xlu0 %11016
      %11018 = vset.pattern.permute.xlu0 0
      %11019 = vperm.xlu0 %11018, %v10974
      %v11020 = vpop.permute.xlu0 %11019
      %11021 = vset.pattern.permute.xlu0 0
      %11022 = vperm.xlu0 %11021, %v10975
      %v11023 = vpop.permute.xlu0 %11022
      %11024 = vset.pattern.permute.xlu0 0
      %11025 = vperm.xlu0 %11024, %v10976
      %v11026 = vpop.permute.xlu0 %11025
      %11027 = vset.pattern.permute.xlu0 0
      %11028 = vperm.xlu0 %11027, %v10977
      %v11029 = vpop.permute.xlu0 %11028
      %11030 = vset.pattern.permute.xlu0 0
      %11031 = vperm.xlu0 %11030, %v10978
      %v11032 = vpop.permute.xlu0 %11031
      %11033 = vset.pattern.permute.xlu0 0
      %11034 = vperm.xlu0 %11033, %v10979
      %v11035 = vpop.permute.xlu0 %11034
      %11036 = vset.pattern.permute.xlu0 0
      %11037 = vperm.xlu0 %11036, %v10980
      %v11038 = vpop.permute.xlu0 %11037
      %11039 = vset.pattern.permute.xlu0 0
      %11040 = vperm.xlu0 %11039, %v10981
      %v11041 = vpop.permute.xlu0 %11040
      %11042 = vset.pattern.permute.xlu0 0
      %11043 = vperm.xlu0 %11042, %v10982
      %v11044 = vpop.permute.xlu0 %11043
      %11045 = vset.pattern.permute.xlu0 0
      %11046 = vperm.xlu0 %11045, %v10983
      %v11047 = vpop.permute.xlu0 %11046
      %11048 = vset.pattern.permute.xlu0 0
      %11049 = vperm.xlu0 %11048, %v10984
      %v11050 = vpop.permute.xlu0 %11049
      %11051 = vset.pattern.permute.xlu0 0
      %11052 = vperm.xlu0 %11051, %v10985
      %v11053 = vpop.permute.xlu0 %11052
      %11054 = vset.pattern.permute.xlu0 0
      %11055 = vperm.xlu0 %11054, %v10986
      %v11056 = vpop.permute.xlu0 %11055
      %11057 = vset.pattern.permute.xlu0 0
      %11058 = vperm.xlu0 %11057, %v10987
      %v11059 = vpop.permute.xlu0 %11058
      %11060 = vset.pattern.permute.xlu0 0
      %11061 = vperm.xlu0 %11060, %v10988
      %v11062 = vpop.permute.xlu0 %11061
      %11063 = vset.pattern.permute.xlu0 0
      %11064 = vperm.xlu0 %11063, %v10989
      %v11065 = vpop.permute.xlu0 %11064
      %11066 = vset.pattern.permute.xlu0 0
      %11067 = vperm.xlu0 %11066, %v10990
      %v11068 = vpop.permute.xlu0 %11067
      %11069 = vset.pattern.permute.xlu0 0
      %11070 = vperm.xlu0 %11069, %v10991
      %v11071 = vpop.permute.xlu0 %11070
      %11072 = vset.pattern.permute.xlu0 0
      %11073 = vperm.xlu0 %11072, %v10992
      %v11074 = vpop.permute.xlu0 %11073
      %11075 = vset.pattern.permute.xlu0 0
      %11076 = vperm.xlu0 %11075, %v10993
      %v11077 = vpop.permute.xlu0 %11076
      %11078 = vset.pattern.permute.xlu0 0
      %11079 = vperm.xlu0 %11078, %v10994
      %v11080 = vpop.permute.xlu0 %11079
      %11081 = vset.pattern.permute.xlu0 0
      %11082 = vperm.xlu0 %11081, %v10995
      %v11083 = vpop.permute.xlu0 %11082
      %11084 = vset.pattern.permute.xlu0 0
      %11085 = vperm.xlu0 %11084, %v10996
      %v11086 = vpop.permute.xlu0 %11085
      %11087 = vset.pattern.permute.xlu0 0
      %11088 = vperm.xlu0 %11087, %v10997
      %v11089 = vpop.permute.xlu0 %11088
      %11090 = vset.pattern.permute.xlu0 0
      %11091 = vperm.xlu0 %11090, %v10998
      %v11092 = vpop.permute.xlu0 %11091
      %11093 = vset.pattern.permute.xlu0 0
      %11094 = vperm.xlu0 %11093, %v10999
      %v11095 = vpop.permute.xlu0 %11094
      %11096 = vset.pattern.permute.xlu0 0
      %11097 = vperm.xlu0 %11096, %v11000
      %v11098 = vpop.permute.xlu0 %11097
      %11099 = vset.pattern.permute.xlu0 0
      %11100 = vperm.xlu0 %11099, %v11001
      %v11101 = vpop.permute.xlu0 %11100
      %11102 = vset.pattern.permute.xlu0 0
      %11103 = vperm.xlu0 %11102, %v11002
      %v11104 = vpop.permute.xlu0 %11103
      %11105 = vset.pattern.permute.xlu0 0
      %11106 = vperm.xlu0 %11105, %v11003
      %v11107 = vpop.permute.xlu0 %11106
      %11108 = vset.pattern.permute.xlu0 0
      %11109 = vperm.xlu0 %11108, %v11004
      %v11110 = vpop.permute.xlu0 %11109
      %11111 = vset.pattern.permute.xlu0 0
      %11112 = vperm.xlu0 %11111, %v11005
      %v11113 = vpop.permute.xlu0 %11112
      %vm11114 = vcmp.eq.s32.totalorder %v11008, 1
      %vm11115 = vcmp.eq.s32.totalorder %v11011, 1
      %vm11116 = vcmp.eq.s32.totalorder %v11014, 1
      %vm11117 = vcmp.eq.s32.totalorder %v11017, 1
      %vm11118 = vcmp.eq.s32.totalorder %v11020, 1
      %vm11119 = vcmp.eq.s32.totalorder %v11023, 1
      %vm11120 = vcmp.eq.s32.totalorder %v11026, 1
      %vm11121 = vcmp.eq.s32.totalorder %v11029, 1
      %vm11122 = vcmp.eq.s32.totalorder %v11032, 1
      %vm11123 = vcmp.eq.s32.totalorder %v11035, 1
      %vm11124 = vcmp.eq.s32.totalorder %v11038, 1
      %vm11125 = vcmp.eq.s32.totalorder %v11041, 1
      %vm11126 = vcmp.eq.s32.totalorder %v11044, 1
      %vm11127 = vcmp.eq.s32.totalorder %v11047, 1
      %vm11128 = vcmp.eq.s32.totalorder %v11050, 1
      %vm11129 = vcmp.eq.s32.totalorder %v11053, 1
      %vm11130 = vcmp.eq.s32.totalorder %v11056, 1
      %vm11131 = vcmp.eq.s32.totalorder %v11059, 1
      %vm11132 = vcmp.eq.s32.totalorder %v11062, 1
      %vm11133 = vcmp.eq.s32.totalorder %v11065, 1
      %vm11134 = vcmp.eq.s32.totalorder %v11068, 1
      %vm11135 = vcmp.eq.s32.totalorder %v11071, 1
      %vm11136 = vcmp.eq.s32.totalorder %v11074, 1
      %vm11137 = vcmp.eq.s32.totalorder %v11077, 1
      %vm11138 = vcmp.eq.s32.totalorder %v11080, 1
      %vm11139 = vcmp.eq.s32.totalorder %v11083, 1
      %vm11140 = vcmp.eq.s32.totalorder %v11086, 1
      %vm11141 = vcmp.eq.s32.totalorder %v11089, 1
      %vm11142 = vcmp.eq.s32.totalorder %v11092, 1
      %vm11143 = vcmp.eq.s32.totalorder %v11095, 1
      %vm11144 = vcmp.eq.s32.totalorder %v11098, 1
      %vm11145 = vcmp.eq.s32.totalorder %v11101, 1
      %vm11146 = vcmp.eq.s32.totalorder %v11104, 1
      %vm11147 = vcmp.eq.s32.totalorder %v11107, 1
      %vm11148 = vcmp.eq.s32.totalorder %v11110, 1
      %vm11149 = vcmp.eq.s32.totalorder %v11113, 1
      %v11150 = vsel %vm11114, %v10645, 0.0
      %v11151 = vsel %vm11115, %v10646, 0.0
      %v11152 = vsel %vm11116, %v10647, 0.0
      %v11153 = vsel %vm11117, %v10648, 0.0
      %v11154 = vsel %vm11118, %v10649, 0.0
      %v11155 = vsel %vm11119, %v10650, 0.0
      %v11156 = vsel %vm11120, %v10651, 0.0
      %v11157 = vsel %vm11121, %v10652, 0.0
      %v11158 = vsel %vm11122, %v10653, 0.0
      %v11159 = vsel %vm11123, %v10654, 0.0
      %v11160 = vsel %vm11124, %v10655, 0.0
      %v11161 = vsel %vm11125, %v10656, 0.0
      %v11162 = vsel %vm11126, %v10657, 0.0
      %v11163 = vsel %vm11127, %v10658, 0.0
      %v11164 = vsel %vm11128, %v10659, 0.0
      %v11165 = vsel %vm11129, %v10660, 0.0
      %v11166 = vsel %vm11130, %v10661, 0.0
      %v11167 = vsel %vm11131, %v10662, 0.0
      %v11168 = vsel %vm11132, %v10663, 0.0
      %v11169 = vsel %vm11133, %v10664, 0.0
      %v11170 = vsel %vm11134, %v10665, 0.0
      %v11171 = vsel %vm11135, %v10666, 0.0
      %v11172 = vsel %vm11136, %v10667, 0.0
      %v11173 = vsel %vm11137, %v10668, 0.0
      %v11174 = vsel %vm11138, %v10669, 0.0
      %v11175 = vsel %vm11139, %v10670, 0.0
      %v11176 = vsel %vm11140, %v10671, 0.0
      %v11177 = vsel %vm11141, %v10672, 0.0
      %v11178 = vsel %vm11142, %v10673, 0.0
      %v11179 = vsel %vm11143, %v10674, 0.0
      %v11180 = vsel %vm11144, %v10675, 0.0
      %v11181 = vsel %vm11145, %v10676, 0.0
      %v11182 = vsel %vm11146, %v10677, 0.0
      %v11183 = vsel %vm11147, %v10678, 0.0
      %v11184 = vsel %vm11148, %v10679, 0.0
      %v11185 = vsel %vm11149, %v10680, 0.0
      %v11186 = vpack.c.bf16 %v11151, %v11150
      %v11187 = vpack.c.bf16 %v11153, %v11152
      %v11188 = vpack.c.bf16 %v11155, %v11154
      %v11189 = vpack.c.bf16 %v11157, %v11156
      %v11190 = vpack.c.bf16 %v11159, %v11158
      %v11191 = vpack.c.bf16 %v11161, %v11160
      %v11192 = vpack.c.bf16 %v11163, %v11162
      %v11193 = vpack.c.bf16 %v11165, %v11164
      %v11194 = vpack.c.bf16 %v11167, %v11166
      %v11195 = vpack.c.bf16 %v11169, %v11168
      %v11196 = vpack.c.bf16 %v11171, %v11170
      %v11197 = vpack.c.bf16 %v11173, %v11172
      %v11198 = vpack.c.bf16 %v11175, %v11174
      %v11199 = vpack.c.bf16 %v11177, %v11176
      %v11200 = vpack.c.bf16 %v11179, %v11178
      %v11201 = vpack.c.bf16 %v11181, %v11180
      %v11202 = vpack.c.bf16 %v11183, %v11182
      %v11203 = vpack.c.bf16 %v11185, %v11184
      %v11222 = vunpack.c.l.b16 %v11186
      %v11223 = vunpack.c.h.b16 %v11186
      %v11224 = vunpack.c.l.b16 %v11187
      %v11225 = vunpack.c.h.b16 %v11187
      %v11226 = vunpack.c.l.b16 %v11188
      %v11227 = vunpack.c.h.b16 %v11188
      %v11228 = vunpack.c.l.b16 %v11189
      %v11229 = vunpack.c.h.b16 %v11189
      %v11230 = vunpack.c.l.b16 %v11190
      %v11231 = vunpack.c.h.b16 %v11190
      %v11232 = vunpack.c.l.b16 %v11191
      %v11233 = vunpack.c.h.b16 %v11191
      %v11234 = vunpack.c.l.b16 %v11192
      %v11235 = vunpack.c.h.b16 %v11192
      %v11236 = vunpack.c.l.b16 %v11193
      %v11237 = vunpack.c.h.b16 %v11193
      %v11238 = vunpack.c.l.b16 %v11194
      %v11239 = vunpack.c.h.b16 %v11194
      %v11240 = vunpack.c.l.b16 %v11195
      %v11241 = vunpack.c.h.b16 %v11195
      %v11242 = vunpack.c.l.b16 %v11196
      %v11243 = vunpack.c.h.b16 %v11196
      %v11244 = vunpack.c.l.b16 %v11197
      %v11245 = vunpack.c.h.b16 %v11197
      %v11246 = vunpack.c.l.b16 %v11198
      %v11247 = vunpack.c.h.b16 %v11198
      %v11248 = vunpack.c.l.b16 %v11199
      %v11249 = vunpack.c.h.b16 %v11199
      %v11250 = vunpack.c.l.b16 %v11200
      %v11251 = vunpack.c.h.b16 %v11200
      %v11252 = vunpack.c.l.b16 %v11201
      %v11253 = vunpack.c.h.b16 %v11201
      %v11254 = vunpack.c.l.b16 %v11202
      %v11255 = vunpack.c.h.b16 %v11202
      %v11256 = vunpack.c.l.b16 %v11203
      %v11257 = vunpack.c.h.b16 %v11203
      %v11258 = vpack.c.b16 %v11222, %v11222
      %v11259 = vpack.c.b16 %v11223, %v11223
      %v11260 = vpack.c.b16 %v11224, %v11224
      %v11261 = vpack.c.b16 %v11225, %v11225
      %v11262 = vpack.c.b16 %v11226, %v11226
      %v11263 = vpack.c.b16 %v11227, %v11227
      %v11264 = vpack.c.b16 %v11228, %v11228
      %v11265 = vpack.c.b16 %v11229, %v11229
      %v11266 = vpack.c.b16 %v11230, %v11230
      %v11267 = vpack.c.b16 %v11231, %v11231
      %v11268 = vpack.c.b16 %v11232, %v11232
      %v11269 = vpack.c.b16 %v11233, %v11233
      %v11270 = vpack.c.b16 %v11234, %v11234
      %v11271 = vpack.c.b16 %v11235, %v11235
      %v11272 = vpack.c.b16 %v11236, %v11236
      %v11273 = vpack.c.b16 %v11237, %v11237
      %v11274 = vpack.c.b16 %v11238, %v11238
      %v11275 = vpack.c.b16 %v11239, %v11239
      %v11276 = vpack.c.b16 %v11240, %v11240
      %v11277 = vpack.c.b16 %v11241, %v11241
      %v11278 = vpack.c.b16 %v11242, %v11242
      %v11279 = vpack.c.b16 %v11243, %v11243
      %v11280 = vpack.c.b16 %v11244, %v11244
      %v11281 = vpack.c.b16 %v11245, %v11245
      %v11282 = vpack.c.b16 %v11246, %v11246
      %v11283 = vpack.c.b16 %v11247, %v11247
      %v11284 = vpack.c.b16 %v11248, %v11248
      %v11285 = vpack.c.b16 %v11249, %v11249
      %v11286 = vpack.c.b16 %v11250, %v11250
      %v11287 = vpack.c.b16 %v11251, %v11251
      %v11288 = vpack.c.b16 %v11252, %v11252
      %v11289 = vpack.c.b16 %v11253, %v11253
      %v11290 = vpack.c.b16 %v11254, %v11254
      %v11291 = vpack.c.b16 %v11255, %v11255
      %v11292 = vpack.c.b16 %v11256, %v11256
      %v11293 = vpack.c.b16 %v11257, %v11257
      %vm11294 = vsmask.f32 3328
      %vm11295 = vsmask.f32 7440
      %vm11296 = vmor %vm11294, %vm11295
      %v11298 = vshll.u32 %v11258, 16
      %v11300 = vrot.slane %v11298, 5
      %v11301 = vshrl.u32 %v11258, 16
      %v11303 = vrot.slane %v11301, 4
      %v11304 = vor.u32 %v11303, %v11300
      %v11305 = vrot.slane %v11304, 4
      %v11307 = vshll.u32 %v11259, 16
      %v11309 = vrot.slane %v11307, 5
      %v11310 = vsel %vm11296, %v11305, %v11309
      %v11311 = vshrl.u32 %v11259, 16
      %v11313 = vrot.slane %v11311, 4
      %v11314 = vor.u32 %v11313, %v11309
      %v11315 = vrot.slane %v11314, 4
      %v11317 = vshll.u32 %v11260, 16
      %v11319 = vrot.slane %v11317, 5
      %v11320 = vsel %vm11296, %v11315, %v11319
      %v11321 = vshrl.u32 %v11260, 16
      %v11323 = vrot.slane %v11321, 4
      %v11324 = vor.u32 %v11323, %v11319
      %v11325 = vrot.slane %v11324, 4
      %v11327 = vshll.u32 %v11261, 16
      %v11329 = vrot.slane %v11327, 5
      %v11330 = vsel %vm11296, %v11325, %v11329
      %v11331 = vshrl.u32 %v11261, 16
      %v11333 = vrot.slane %v11331, 4
      %v11334 = vor.u32 %v11333, %v11329
      %v11335 = vrot.slane %v11334, 4
      %v11337 = vshll.u32 %v11262, 16
      %v11339 = vrot.slane %v11337, 5
      %v11340 = vsel %vm11296, %v11335, %v11339
      %v11341 = vshrl.u32 %v11262, 16
      %v11343 = vrot.slane %v11341, 4
      %v11344 = vor.u32 %v11343, %v11339
      %v11345 = vrot.slane %v11344, 4
      %v11347 = vshll.u32 %v11263, 16
      %v11349 = vrot.slane %v11347, 5
      %v11350 = vsel %vm11296, %v11345, %v11349
      %v11351 = vshrl.u32 %v11263, 16
      %v11353 = vrot.slane %v11351, 4
      %v11354 = vor.u32 %v11353, %v11349
      %v11355 = vrot.slane %v11354, 4
      %v11357 = vshll.u32 %v11264, 16
      %v11359 = vrot.slane %v11357, 5
      %v11360 = vsel %vm11296, %v11355, %v11359
      %v11361 = vshrl.u32 %v11264, 16
      %v11363 = vrot.slane %v11361, 4
      %v11364 = vor.u32 %v11363, %v11359
      %v11365 = vrot.slane %v11364, 4
      %v11367 = vshll.u32 %v11265, 16
      %v11369 = vrot.slane %v11367, 5
      %v11370 = vsel %vm11296, %v11365, %v11369
      %v11371 = vshrl.u32 %v11265, 16
      %v11373 = vrot.slane %v11371, 4
      %v11374 = vor.u32 %v11373, %v11369
      %v11375 = vrot.slane %v11374, 4
      %v11377 = vshll.u32 %v11266, 16
      %v11379 = vrot.slane %v11377, 5
      %v11380 = vsel %vm11296, %v11375, %v11379
      %v11381 = vshrl.u32 %v11266, 16
      %v11383 = vrot.slane %v11381, 4
      %v11384 = vor.u32 %v11383, %v11379
      %v11385 = vrot.slane %v11384, 4
      %v11387 = vshll.u32 %v11267, 16
      %v11389 = vrot.slane %v11387, 5
      %v11390 = vsel %vm11296, %v11385, %v11389
      %v11391 = vshrl.u32 %v11267, 16
      %v11393 = vrot.slane %v11391, 4
      %v11394 = vor.u32 %v11393, %v11389
      %v11395 = vrot.slane %v11394, 4
      %v11397 = vshll.u32 %v11268, 16
      %v11399 = vrot.slane %v11397, 5
      %v11400 = vsel %vm11296, %v11395, %v11399
      %v11401 = vshrl.u32 %v11268, 16
      %v11403 = vrot.slane %v11401, 4
      %v11404 = vor.u32 %v11403, %v11399
      %v11405 = vrot.slane %v11404, 4
      %v11407 = vshll.u32 %v11269, 16
      %v11409 = vrot.slane %v11407, 5
      %v11410 = vsel %vm11296, %v11405, %v11409
      %v11411 = vshrl.u32 %v11269, 16
      %v11413 = vrot.slane %v11411, 4
      %v11414 = vor.u32 %v11413, %v11409
      %v11415 = vrot.slane %v11414, 4
      %v11417 = vshll.u32 %v11270, 16
      %v11419 = vrot.slane %v11417, 5
      %v11420 = vsel %vm11296, %v11415, %v11419
      %v11421 = vshrl.u32 %v11270, 16
      %v11423 = vrot.slane %v11421, 4
      %v11424 = vor.u32 %v11423, %v11419
      %v11425 = vrot.slane %v11424, 4
      %v11427 = vshll.u32 %v11271, 16
      %v11429 = vrot.slane %v11427, 5
      %v11430 = vsel %vm11296, %v11425, %v11429
      %v11431 = vshrl.u32 %v11271, 16
      %v11433 = vrot.slane %v11431, 4
      %v11434 = vor.u32 %v11433, %v11429
      %v11435 = vrot.slane %v11434, 4
      %v11437 = vshll.u32 %v11272, 16
      %v11439 = vrot.slane %v11437, 5
      %v11440 = vsel %vm11296, %v11435, %v11439
      %v11441 = vshrl.u32 %v11272, 16
      %v11443 = vrot.slane %v11441, 4
      %v11444 = vor.u32 %v11443, %v11439
      %v11445 = vrot.slane %v11444, 4
      %v11447 = vshll.u32 %v11273, 16
      %v11449 = vrot.slane %v11447, 5
      %v11450 = vsel %vm11296, %v11445, %v11449
      %v11451 = vshrl.u32 %v11273, 16
      %v11453 = vrot.slane %v11451, 4
      %v11454 = vor.u32 %v11453, %v11449
      %v11455 = vrot.slane %v11454, 4
      %v11457 = vshll.u32 %v11274, 16
      %v11459 = vrot.slane %v11457, 5
      %v11460 = vsel %vm11296, %v11455, %v11459
      %v11461 = vshrl.u32 %v11274, 16
      %v11463 = vrot.slane %v11461, 4
      %v11464 = vor.u32 %v11463, %v11459
      %v11465 = vrot.slane %v11464, 4
      %v11467 = vshll.u32 %v11275, 16
      %v11469 = vrot.slane %v11467, 5
      %v11470 = vsel %vm11296, %v11465, %v11469
      %v11471 = vshrl.u32 %v11275, 16
      %v11473 = vrot.slane %v11471, 4
      %v11474 = vor.u32 %v11473, %v11469
      %v11475 = vrot.slane %v11474, 4
      %v11477 = vshll.u32 %v11276, 16
      %v11479 = vrot.slane %v11477, 5
      %v11480 = vsel %vm11296, %v11475, %v11479
      %v11481 = vshrl.u32 %v11276, 16
      %v11483 = vrot.slane %v11481, 4
      %v11484 = vor.u32 %v11483, %v11479
      %v11485 = vrot.slane %v11484, 4
      %v11487 = vshll.u32 %v11277, 16
      %v11489 = vrot.slane %v11487, 5
      %v11490 = vsel %vm11296, %v11485, %v11489
      %v11491 = vshrl.u32 %v11277, 16
      %v11493 = vrot.slane %v11491, 4
      %v11494 = vor.u32 %v11493, %v11489
      %v11495 = vrot.slane %v11494, 4
      %v11497 = vshll.u32 %v11278, 16
      %v11499 = vrot.slane %v11497, 5
      %v11500 = vsel %vm11296, %v11495, %v11499
      %v11501 = vshrl.u32 %v11278, 16
      %v11503 = vrot.slane %v11501, 4
      %v11504 = vor.u32 %v11503, %v11499
      %v11505 = vrot.slane %v11504, 4
      %v11507 = vshll.u32 %v11279, 16
      %v11509 = vrot.slane %v11507, 5
      %v11510 = vsel %vm11296, %v11505, %v11509
      %v11511 = vshrl.u32 %v11279, 16
      %v11513 = vrot.slane %v11511, 4
      %v11514 = vor.u32 %v11513, %v11509
      %v11515 = vrot.slane %v11514, 4
      %v11517 = vshll.u32 %v11280, 16
      %v11519 = vrot.slane %v11517, 5
      %v11520 = vsel %vm11296, %v11515, %v11519
      %v11521 = vshrl.u32 %v11280, 16
      %v11523 = vrot.slane %v11521, 4
      %v11524 = vor.u32 %v11523, %v11519
      %v11525 = vrot.slane %v11524, 4
      %v11527 = vshll.u32 %v11281, 16
      %v11529 = vrot.slane %v11527, 5
      %v11530 = vsel %vm11296, %v11525, %v11529
      %v11531 = vshrl.u32 %v11281, 16
      %v11533 = vrot.slane %v11531, 4
      %v11534 = vor.u32 %v11533, %v11529
      %v11535 = vrot.slane %v11534, 4
      %v11537 = vshll.u32 %v11282, 16
      %v11539 = vrot.slane %v11537, 5
      %v11540 = vsel %vm11296, %v11535, %v11539
      %v11541 = vshrl.u32 %v11282, 16
      %v11543 = vrot.slane %v11541, 4
      %v11544 = vor.u32 %v11543, %v11539
      %v11545 = vrot.slane %v11544, 4
      %v11547 = vshll.u32 %v11283, 16
      %v11549 = vrot.slane %v11547, 5
      %v11550 = vsel %vm11296, %v11545, %v11549
      %v11551 = vshrl.u32 %v11283, 16
      %v11553 = vrot.slane %v11551, 4
      %v11554 = vor.u32 %v11553, %v11549
      %v11555 = vrot.slane %v11554, 4
      %v11557 = vshll.u32 %v11284, 16
      %v11559 = vrot.slane %v11557, 5
      %v11560 = vsel %vm11296, %v11555, %v11559
      %v11561 = vshrl.u32 %v11284, 16
      %v11563 = vrot.slane %v11561, 4
      %v11564 = vor.u32 %v11563, %v11559
      %v11565 = vrot.slane %v11564, 4
      %v11567 = vshll.u32 %v11285, 16
      %v11569 = vrot.slane %v11567, 5
      %v11570 = vsel %vm11296, %v11565, %v11569
      %v11571 = vshrl.u32 %v11285, 16
      %v11573 = vrot.slane %v11571, 4
      %v11574 = vor.u32 %v11573, %v11569
      %v11575 = vrot.slane %v11574, 4
      %v11577 = vshll.u32 %v11286, 16
      %v11579 = vrot.slane %v11577, 5
      %v11580 = vsel %vm11296, %v11575, %v11579
      %v11581 = vshrl.u32 %v11286, 16
      %v11583 = vrot.slane %v11581, 4
      %v11584 = vor.u32 %v11583, %v11579
      %v11585 = vrot.slane %v11584, 4
      %v11587 = vshll.u32 %v11287, 16
      %v11589 = vrot.slane %v11587, 5
      %v11590 = vsel %vm11296, %v11585, %v11589
      %v11591 = vshrl.u32 %v11287, 16
      %v11593 = vrot.slane %v11591, 4
      %v11594 = vor.u32 %v11593, %v11589
      %v11595 = vrot.slane %v11594, 4
      %v11597 = vshll.u32 %v11288, 16
      %v11599 = vrot.slane %v11597, 5
      %v11600 = vsel %vm11296, %v11595, %v11599
      %v11601 = vshrl.u32 %v11288, 16
      %v11603 = vrot.slane %v11601, 4
      %v11604 = vor.u32 %v11603, %v11599
      %v11605 = vrot.slane %v11604, 4
      %v11607 = vshll.u32 %v11289, 16
      %v11609 = vrot.slane %v11607, 5
      %v11610 = vsel %vm11296, %v11605, %v11609
      %v11611 = vshrl.u32 %v11289, 16
      %v11613 = vrot.slane %v11611, 4
      %v11614 = vor.u32 %v11613, %v11609
      %v11615 = vrot.slane %v11614, 4
      %v11617 = vshll.u32 %v11290, 16
      %v11619 = vrot.slane %v11617, 5
      %v11620 = vsel %vm11296, %v11615, %v11619
      %v11621 = vshrl.u32 %v11290, 16
      %v11623 = vrot.slane %v11621, 4
      %v11624 = vor.u32 %v11623, %v11619
      %v11625 = vrot.slane %v11624, 4
      %v11627 = vshll.u32 %v11291, 16
      %v11629 = vrot.slane %v11627, 5
      %v11630 = vsel %vm11296, %v11625, %v11629
      %v11631 = vshrl.u32 %v11291, 16
      %v11633 = vrot.slane %v11631, 4
      %v11634 = vor.u32 %v11633, %v11629
      %v11635 = vrot.slane %v11634, 4
      %v11637 = vshll.u32 %v11292, 16
      %v11639 = vrot.slane %v11637, 5
      %v11640 = vsel %vm11296, %v11635, %v11639
      %v11641 = vshrl.u32 %v11292, 16
      %v11643 = vrot.slane %v11641, 4
      %v11644 = vor.u32 %v11643, %v11639
      %v11645 = vrot.slane %v11644, 4
      %v11647 = vshll.u32 %v11293, 16
      %v11649 = vrot.slane %v11647, 5
      %v11650 = vsel %vm11296, %v11645, %v11649
      %v11651 = vshrl.u32 %v11293, 16
      %v11653 = vrot.slane %v11651, 4
      %v11654 = vor.u32 %v11653, %v11649
      %v11655 = vrot.slane %v11654, 4
      %11656 = vrot.lane.b32.xlu0 %v11300, 96
      %v11657 = vpop.permute.xlu0 %11656
      %11658 = vrot.lane.b32.xlu0 %v11310, 96
      %v11659 = vpop.permute.xlu0 %11658
      %11660 = vrot.lane.b32.xlu0 %v11320, 96
      %v11661 = vpop.permute.xlu0 %11660
      %11662 = vrot.lane.b32.xlu0 %v11330, 96
      %v11663 = vpop.permute.xlu0 %11662
      %11664 = vrot.lane.b32.xlu0 %v11340, 96
      %v11665 = vpop.permute.xlu0 %11664
      %11666 = vrot.lane.b32.xlu0 %v11350, 96
      %v11667 = vpop.permute.xlu0 %11666
      %11668 = vrot.lane.b32.xlu0 %v11360, 96
      %v11669 = vpop.permute.xlu0 %11668
      %11670 = vrot.lane.b32.xlu0 %v11370, 96
      %v11671 = vpop.permute.xlu0 %11670
      %11672 = vrot.lane.b32.xlu0 %v11380, 96
      %v11673 = vpop.permute.xlu0 %11672
      %11674 = vrot.lane.b32.xlu0 %v11390, 96
      %v11675 = vpop.permute.xlu0 %11674
      %11676 = vrot.lane.b32.xlu0 %v11400, 96
      %v11677 = vpop.permute.xlu0 %11676
      %11678 = vrot.lane.b32.xlu0 %v11410, 96
      %v11679 = vpop.permute.xlu0 %11678
      %11680 = vrot.lane.b32.xlu0 %v11420, 96
      %v11681 = vpop.permute.xlu0 %11680
      %11682 = vrot.lane.b32.xlu0 %v11430, 96
      %v11683 = vpop.permute.xlu0 %11682
      %11684 = vrot.lane.b32.xlu0 %v11440, 96
      %v11685 = vpop.permute.xlu0 %11684
      %11686 = vrot.lane.b32.xlu0 %v11450, 96
      %v11687 = vpop.permute.xlu0 %11686
      %11688 = vrot.lane.b32.xlu0 %v11460, 96
      %v11689 = vpop.permute.xlu0 %11688
      %11690 = vrot.lane.b32.xlu0 %v11470, 96
      %v11691 = vpop.permute.xlu0 %11690
      %11692 = vrot.lane.b32.xlu0 %v11480, 96
      %v11693 = vpop.permute.xlu0 %11692
      %11694 = vrot.lane.b32.xlu0 %v11490, 96
      %v11695 = vpop.permute.xlu0 %11694
      %11696 = vrot.lane.b32.xlu0 %v11500, 96
      %v11697 = vpop.permute.xlu0 %11696
      %11698 = vrot.lane.b32.xlu0 %v11510, 96
      %v11699 = vpop.permute.xlu0 %11698
      %11700 = vrot.lane.b32.xlu0 %v11520, 96
      %v11701 = vpop.permute.xlu0 %11700
      %11702 = vrot.lane.b32.xlu0 %v11530, 96
      %v11703 = vpop.permute.xlu0 %11702
      %11704 = vrot.lane.b32.xlu0 %v11540, 96
      %v11705 = vpop.permute.xlu0 %11704
      %11706 = vrot.lane.b32.xlu0 %v11550, 96
      %v11707 = vpop.permute.xlu0 %11706
      %11708 = vrot.lane.b32.xlu0 %v11560, 96
      %v11709 = vpop.permute.xlu0 %11708
      %11710 = vrot.lane.b32.xlu0 %v11570, 96
      %v11711 = vpop.permute.xlu0 %11710
      %11712 = vrot.lane.b32.xlu0 %v11580, 96
      %v11713 = vpop.permute.xlu0 %11712
      %11714 = vrot.lane.b32.xlu0 %v11590, 96
      %v11715 = vpop.permute.xlu0 %11714
      %11716 = vrot.lane.b32.xlu0 %v11600, 96
      %v11717 = vpop.permute.xlu0 %11716
      %11718 = vrot.lane.b32.xlu0 %v11610, 96
      %v11719 = vpop.permute.xlu0 %11718
      %11720 = vrot.lane.b32.xlu0 %v11620, 96
      %v11721 = vpop.permute.xlu0 %11720
      %11722 = vrot.lane.b32.xlu0 %v11630, 96
      %v11723 = vpop.permute.xlu0 %11722
      %11724 = vrot.lane.b32.xlu0 %v11640, 96
      %v11725 = vpop.permute.xlu0 %11724
      %11726 = vrot.lane.b32.xlu0 %v11650, 96
      %v11727 = vpop.permute.xlu0 %11726
      %11728 = vrot.lane.b32.xlu0 %v11655, 96
      %v11729 = vpop.permute.xlu0 %11728
      %vm11767 = vcmask 913155
      %vm11768 = vsmask.f32 7950
      %vm11769 = vmand %vm11767, %vm11768
      %v11770 = vld [vmem:[#allocation2 + $0x18] sm:$0x8]
      %v11771 = vsel %vm11769, %v11657, %v11770
      %11772 = vst [vmem:[#allocation2 + $0x18] sm:$0x8] %v11771
      %vm11773 = vcmask 913152
      %11774 = vst.msk [vmem:[#allocation2 + $0x1c] sm:$0xf] %vm11773, %v11659
      %11775 = vst.msk [vmem:[#allocation2 + $0x20] sm:$0xf] %vm11773, %v11661
      %11776 = vst.msk [vmem:[#allocation2 + $0x24] sm:$0xf] %vm11773, %v11663
      %11777 = vst.msk [vmem:[#allocation2 + $0x28] sm:$0xf] %vm11773, %v11665
      %11778 = vst.msk [vmem:[#allocation2 + $0x2c] sm:$0xf] %vm11773, %v11667
      %11779 = vst.msk [vmem:[#allocation2 + $0x30] sm:$0xf] %vm11773, %v11669
      %11780 = vst.msk [vmem:[#allocation2 + $0x34] sm:$0xf] %vm11773, %v11671
      %11781 = vst.msk [vmem:[#allocation2 + $0x38] sm:$0xf] %vm11773, %v11673
      %11782 = vst.msk [vmem:[#allocation2 + $0x3c] sm:$0xf] %vm11773, %v11675
      %11783 = vst.msk [vmem:[#allocation2 + $0x40] sm:$0xf] %vm11773, %v11677
      %11784 = vst.msk [vmem:[#allocation2 + $0x44] sm:$0xf] %vm11773, %v11679
      %11785 = vst.msk [vmem:[#allocation2 + $0x48] sm:$0xf] %vm11773, %v11681
      %11786 = vst.msk [vmem:[#allocation2 + $0x4c] sm:$0xf] %vm11773, %v11683
      %11787 = vst.msk [vmem:[#allocation2 + $0x50] sm:$0xf] %vm11773, %v11685
      %11788 = vst.msk [vmem:[#allocation2 + $0x54] sm:$0xf] %vm11773, %v11687
      %11789 = vst.msk [vmem:[#allocation2 + $0x58] sm:$0xf] %vm11773, %v11689
      %11790 = vst.msk [vmem:[#allocation2 + $0x5c] sm:$0xf] %vm11773, %v11691
      %11791 = vst.msk [vmem:[#allocation2 + $0x60] sm:$0xf] %vm11773, %v11693
      %11792 = vst.msk [vmem:[#allocation2 + $0x64] sm:$0xf] %vm11773, %v11695
      %11793 = vst.msk [vmem:[#allocation2 + $0x68] sm:$0xf] %vm11773, %v11697
      %11794 = vst.msk [vmem:[#allocation2 + $0x6c] sm:$0xf] %vm11773, %v11699
      %11795 = vst.msk [vmem:[#allocation2 + $0x70] sm:$0xf] %vm11773, %v11701
      %11796 = vst.msk [vmem:[#allocation2 + $0x74] sm:$0xf] %vm11773, %v11703
      %11797 = vst.msk [vmem:[#allocation2 + $0x78] sm:$0xf] %vm11773, %v11705
      %11798 = vst.msk [vmem:[#allocation2 + $0x7c] sm:$0xf] %vm11773, %v11707
      %11799 = vst.msk [vmem:[#allocation2 + $0x80] sm:$0xf] %vm11773, %v11709
      %11800 = vst.msk [vmem:[#allocation2 + $0x84] sm:$0xf] %vm11773, %v11711
      %11801 = vst.msk [vmem:[#allocation2 + $0x88] sm:$0xf] %vm11773, %v11713
      %11802 = vst.msk [vmem:[#allocation2 + $0x8c] sm:$0xf] %vm11773, %v11715
      %11803 = vst.msk [vmem:[#allocation2 + $0x90] sm:$0xf] %vm11773, %v11717
      %11804 = vst.msk [vmem:[#allocation2 + $0x94] sm:$0xf] %vm11773, %v11719
      %11805 = vst.msk [vmem:[#allocation2 + $0x98] sm:$0xf] %vm11773, %v11721
      %11806 = vst.msk [vmem:[#allocation2 + $0x9c] sm:$0xf] %vm11773, %v11723
      %11807 = vst.msk [vmem:[#allocation2 + $0xa0] sm:$0xf] %vm11773, %v11725
      %11808 = vst.msk [vmem:[#allocation2 + $0xa4] sm:$0xf] %vm11773, %v11727
      %vm11809 = vcmask 913152
      %vm11810 = vmand %vm11809, %vm11294
      %v11811 = vld [vmem:[#allocation2 + $0xa8] sm:$0xf]
      %v11812 = vsel %vm11810, %v11729, %v11811
      %11813 = vst [vmem:[#allocation2 + $0xa8] sm:$0xf] %v11812
      %v11814 = vld [vmem:[#allocation2 + $0x18] sm:$0x8]
      %v11815 = vld [vmem:[#allocation2 + $0x1c] sm:$0xf]
      %v11816 = vld [vmem:[#allocation2 + $0x20] sm:$0xf]
      %v11817 = vld [vmem:[#allocation2 + $0x24] sm:$0xf]
      %v11818 = vld [vmem:[#allocation2 + $0x28] sm:$0xf]
      %v11819 = vld [vmem:[#allocation2 + $0x2c] sm:$0xf]
      %v11820 = vld [vmem:[#allocation2 + $0x30] sm:$0xf]
      %v11821 = vld [vmem:[#allocation2 + $0x34] sm:$0xf]
      %v11822 = vld [vmem:[#allocation2 + $0x38] sm:$0xf]
      %v11823 = vld [vmem:[#allocation2 + $0x3c] sm:$0xf]
      %v11824 = vld [vmem:[#allocation2 + $0x40] sm:$0xf]
      %v11825 = vld [vmem:[#allocation2 + $0x44] sm:$0xf]
      %v11826 = vld [vmem:[#allocation2 + $0x48] sm:$0xf]
      %v11827 = vld [vmem:[#allocation2 + $0x4c] sm:$0xf]
      %v11828 = vld [vmem:[#allocation2 + $0x50] sm:$0xf]
      %v11829 = vld [vmem:[#allocation2 + $0x54] sm:$0xf]
      %v11830 = vld [vmem:[#allocation2 + $0x58] sm:$0xf]
      %v11831 = vld [vmem:[#allocation2 + $0x5c] sm:$0xf]
      %v11832 = vld [vmem:[#allocation2 + $0x60] sm:$0xf]
      %v11833 = vld [vmem:[#allocation2 + $0x64] sm:$0xf]
      %v11834 = vld [vmem:[#allocation2 + $0x68] sm:$0xf]
      %v11835 = vld [vmem:[#allocation2 + $0x6c] sm:$0xf]
      %v11836 = vld [vmem:[#allocation2 + $0x70] sm:$0xf]
      %v11837 = vld [vmem:[#allocation2 + $0x74] sm:$0xf]
      %v11838 = vld [vmem:[#allocation2 + $0x78] sm:$0xf]
      %v11839 = vld [vmem:[#allocation2 + $0x7c] sm:$0xf]
      %v11840 = vld [vmem:[#allocation2 + $0x80] sm:$0xf]
      %v11841 = vld [vmem:[#allocation2 + $0x84] sm:$0xf]
      %v11842 = vld [vmem:[#allocation2 + $0x88] sm:$0xf]
      %v11843 = vld [vmem:[#allocation2 + $0x8c] sm:$0xf]
      %v11844 = vld [vmem:[#allocation2 + $0x90] sm:$0xf]
      %v11845 = vld [vmem:[#allocation2 + $0x94] sm:$0xf]
      %v11846 = vld [vmem:[#allocation2 + $0x98] sm:$0xf]
      %v11847 = vld [vmem:[#allocation2 + $0x9c] sm:$0xf]
      %v11848 = vld [vmem:[#allocation2 + $0xa0] sm:$0xf]
      %v11849 = vld [vmem:[#allocation2 + $0xa4] sm:$0xf]
      %v11850 = vld [vmem:[#allocation2 + $0xa8] sm:$0x7]
      %v11851 = vld [vmem:[%s9] sm:$0xf]
      %v11852 = vld [vmem:[%s9 + $0x4] sm:$0xf]
      %v11853 = vld [vmem:[%s9 + $0x8] sm:$0xf]
      %v11854 = vld [vmem:[%s9 + $0xc] sm:$0xf]
      %v11855 = vld [vmem:[%s9 + $0x10] sm:$0xf]
      %v11856 = vld [vmem:[%s9 + $0x14] sm:$0xf]
      %v11857 = vld [vmem:[%s9 + $0x18] sm:$0xf]
      %v11858 = vld [vmem:[%s9 + $0x1c] sm:$0xf]
      %v11859 = vld [vmem:[%s9 + $0x20] sm:$0xf]
      %v11860 = vld [vmem:[%s9 + $0x24] sm:$0xf]
      %v11861 = vld [vmem:[%s9 + $0x28] sm:$0xf]
      %v11862 = vld [vmem:[%s9 + $0x2c] sm:$0xf]
      %v11863 = vld [vmem:[%s9 + $0x30] sm:$0xf]
      %v11864 = vld [vmem:[%s9 + $0x34] sm:$0xf]
      %v11865 = vld [vmem:[%s9 + $0x38] sm:$0xf]
      %v11866 = vld [vmem:[%s9 + $0x3c] sm:$0xf]
      %v11867 = vld [vmem:[%s10] sm:$0x1]
      %v11869 = vlaneseq
      %v11870 = vshrl.u32 %v11869, 7
      %v11871 = vsub.s32 0, %v11870
      %v11872 = vrot.slane %v11867, %v11871
      %v11911 = vunpack.c.l.b16 %v11814
      %v11912 = vunpack.c.l.b16 %v11815
      %v11913 = vunpack.c.l.b16 %v11816
      %v11914 = vunpack.c.l.b16 %v11817
      %v11915 = vunpack.c.l.b16 %v11818
      %v11916 = vunpack.c.l.b16 %v11819
      %v11917 = vunpack.c.l.b16 %v11820
      %v11918 = vunpack.c.l.b16 %v11821
      %v11919 = vunpack.c.l.b16 %v11822
      %v11920 = vunpack.c.l.b16 %v11823
      %v11921 = vunpack.c.l.b16 %v11824
      %v11922 = vunpack.c.l.b16 %v11825
      %v11923 = vunpack.c.l.b16 %v11826
      %v11924 = vunpack.c.l.b16 %v11827
      %v11925 = vunpack.c.l.b16 %v11828
      %v11926 = vunpack.c.l.b16 %v11829
      %v11927 = vunpack.c.l.b16 %v11830
      %v11928 = vunpack.c.l.b16 %v11831
      %v11929 = vunpack.c.l.b16 %v11832
      %v11930 = vunpack.c.l.b16 %v11833
      %v11931 = vunpack.c.l.b16 %v11834
      %v11932 = vunpack.c.l.b16 %v11835
      %v11933 = vunpack.c.l.b16 %v11836
      %v11934 = vunpack.c.l.b16 %v11837
      %v11935 = vunpack.c.l.b16 %v11838
      %v11936 = vunpack.c.l.b16 %v11839
      %v11937 = vunpack.c.l.b16 %v11840
      %v11938 = vunpack.c.l.b16 %v11841
      %v11939 = vunpack.c.l.b16 %v11842
      %v11940 = vunpack.c.l.b16 %v11843
      %v11941 = vunpack.c.l.b16 %v11844
      %v11942 = vunpack.c.l.b16 %v11845
      %v11943 = vunpack.c.l.b16 %v11846
      %v11944 = vunpack.c.l.b16 %v11847
      %v11945 = vunpack.c.l.b16 %v11848
      %v11946 = vunpack.c.l.b16 %v11849
      %v11947 = vunpack.c.l.b16 %v11850
      %v11948 = vpack.c.b16 %v11912, %v11911
      %v11949 = vpack.c.b16 %v11914, %v11913
      %v11950 = vpack.c.b16 %v11916, %v11915
      %v11951 = vpack.c.b16 %v11918, %v11917
      %v11952 = vpack.c.b16 %v11920, %v11919
      %v11953 = vpack.c.b16 %v11922, %v11921
      %v11954 = vpack.c.b16 %v11924, %v11923
      %v11955 = vpack.c.b16 %v11926, %v11925
      %v11956 = vpack.c.b16 %v11928, %v11927
      %v11957 = vpack.c.b16 %v11930, %v11929
      %v11958 = vpack.c.b16 %v11932, %v11931
      %v11959 = vpack.c.b16 %v11934, %v11933
      %v11960 = vpack.c.b16 %v11936, %v11935
      %v11961 = vpack.c.b16 %v11938, %v11937
      %v11962 = vpack.c.b16 %v11940, %v11939
      %v11963 = vpack.c.b16 %v11942, %v11941
      %v11964 = vpack.c.b16 %v11944, %v11943
      %v11965 = vpack.c.b16 %v11946, %v11945
      %v11966 = vpack.c.b16 %v11947, %v11947
      %vm11967 = vcmask 1044480
      %v11968 = vrot.slane %v11948, 3
      %v11969 = vrot.slane %v11949, 3
      %v11970 = vsel %vm11967, %v11968, %v11969
      %v11971 = vrot.slane %v11950, 3
      %v11972 = vsel %vm11967, %v11969, %v11971
      %v11973 = vrot.slane %v11951, 3
      %v11974 = vsel %vm11967, %v11971, %v11973
      %v11975 = vrot.slane %v11952, 3
      %v11976 = vsel %vm11967, %v11973, %v11975
      %v11977 = vrot.slane %v11953, 3
      %v11978 = vsel %vm11967, %v11975, %v11977
      %v11979 = vrot.slane %v11954, 3
      %v11980 = vsel %vm11967, %v11977, %v11979
      %v11981 = vrot.slane %v11955, 3
      %v11982 = vsel %vm11967, %v11979, %v11981
      %v11983 = vrot.slane %v11956, 3
      %v11984 = vsel %vm11967, %v11981, %v11983
      %v11985 = vrot.slane %v11957, 3
      %v11986 = vsel %vm11967, %v11983, %v11985
      %v11987 = vrot.slane %v11958, 3
      %v11988 = vsel %vm11967, %v11985, %v11987
      %v11989 = vrot.slane %v11959, 3
      %v11990 = vsel %vm11967, %v11987, %v11989
      %v11991 = vrot.slane %v11960, 3
      %v11992 = vsel %vm11967, %v11989, %v11991
      %v11993 = vrot.slane %v11961, 3
      %v11994 = vsel %vm11967, %v11991, %v11993
      %v11995 = vrot.slane %v11962, 3
      %v11996 = vsel %vm11967, %v11993, %v11995
      %v11997 = vrot.slane %v11963, 3
      %v11998 = vsel %vm11967, %v11995, %v11997
      %v11999 = vrot.slane %v11964, 3
      %v12000 = vsel %vm11967, %v11997, %v11999
      %v12001 = vrot.slane %v11965, 3
      %v12002 = vsel %vm11967, %v11999, %v12001
      %v12003 = vrot.slane %v11966, 3
      %v12004 = vsel %vm11967, %v12001, %v12003
      %v12039 = vunpack.c.l.b16 %v11851
      %v12040 = vunpack.c.l.b16 %v11852
      %v12041 = vunpack.c.l.b16 %v11853
      %v12042 = vunpack.c.l.b16 %v11854
      %v12043 = vunpack.c.l.b16 %v11855
      %v12044 = vunpack.c.l.b16 %v11856
      %v12045 = vunpack.c.l.b16 %v11857
      %v12046 = vunpack.c.l.b16 %v11858
      %v12047 = vunpack.c.l.b16 %v11859
      %v12048 = vunpack.c.l.b16 %v11860
      %v12049 = vunpack.c.l.b16 %v11861
      %v12050 = vunpack.c.l.b16 %v11862
      %v12051 = vunpack.c.l.b16 %v11863
      %v12052 = vunpack.c.l.b16 %v11864
      %v12053 = vunpack.c.l.b16 %v11865
      %v12054 = vunpack.c.l.b16 %v11866
      %v12055 = vpack.c.b16 %v12040, %v12039
      %v12056 = vpack.c.b16 %v12042, %v12041
      %v12057 = vpack.c.b16 %v12044, %v12043
      %v12058 = vpack.c.b16 %v12046, %v12045
      %v12059 = vpack.c.b16 %v12048, %v12047
      %v12060 = vpack.c.b16 %v12050, %v12049
      %v12061 = vpack.c.b16 %v12052, %v12051
      %v12062 = vpack.c.b16 %v12054, %v12053
      %12071 = vmatprep.subr.bf16.mxu0 0
      %12072 = vmatpush1.bf16.msra.mxu0 %v12062
      %12073 = vmatprep.subr.bf16.mxu0 0
      %12074 = vmatpush1.bf16.msra.mxu0 %v12061
      %12075 = vmatprep.subr.bf16.mxu0 0
      %12076 = vmatpush1.bf16.msra.mxu0 %v12060
      %12077 = vmatprep.subr.bf16.mxu0 0
      %12078 = vmatpush1.bf16.msra.mxu0 %v12059
      %12079 = vmatprep.subr.bf16.mxu0 0
      %12080 = vmatpush1.bf16.msra.mxu0 %v12058
      %12081 = vmatprep.subr.bf16.mxu0 0
      %12082 = vmatpush1.bf16.msra.mxu0 %v12057
      %12083 = vmatprep.subr.bf16.mxu0 0
      %12084 = vmatpush1.bf16.msra.mxu0 %v12056
      %12085 = vmatprep.subr.bf16.mxu0 0
      %12086 = vmatpush1.bf16.msra.mxu0 %v12055
      %12087 = vmatprep.subr.bf16.mxu0 0
      %12088 = vmatpush2.bf16.msra.mxu0 0
      %12089 = vmatprep.subr.bf16.mxu0 0
      %12090 = vmatpush2.bf16.msra.mxu0 0
      %12091 = vmatprep.subr.bf16.mxu0 0
      %12092 = vmatpush2.bf16.msra.mxu0 0
      %12093 = vmatprep.subr.bf16.mxu0 0
      %12094 = vmatpush2.bf16.msra.mxu0 0
      %12095 = vmatprep.subr.bf16.mxu0 0
      %12096 = vmatpush2.bf16.msra.mxu0 0
      %12097 = vmatprep.subr.bf16.mxu0 0
      %12098 = vmatpush2.bf16.msra.mxu0 0
      %12099 = vmatprep.subr.bf16.mxu0 0
      %12100 = vmatpush2.bf16.msra.mxu0 0
      %12101 = vmatprep.subr.bf16.mxu0 0
      %12102 = vmatpush2.bf16.msra.mxu0 0
      %12103 = vmatprep.mubr.bf16.mxu0 0
      %12104 = vmatmul.mubr.bf16.gmra.mxu0 %v11970
      %v12105 = vpop.f32.mrf.mxu0
      %v12106 = vadd.f32 %v11872, %v12105
      %v12107 = vpop.f32.mrf.mxu0
      %v12108 = vpop.f32.mrf.mxu0
      %v12109 = vadd.f32 %v11872, %v12108
      %v12110 = vpop.f32.mrf.mxu0
      %12111 = vmatprep.mubr.bf16.mxu0 0
      %12112 = vmatmul.mubr.bf16.gmra.mxu0 %v11972
      %v12113 = vpop.f32.mrf.mxu0
      %v12114 = vadd.f32 %v11872, %v12113
      %v12115 = vpop.f32.mrf.mxu0
      %v12116 = vpop.f32.mrf.mxu0
      %v12117 = vadd.f32 %v11872, %v12116
      %v12118 = vpop.f32.mrf.mxu0
      %12119 = vmatprep.mubr.bf16.mxu0 0
      %12120 = vmatmul.mubr.bf16.gmra.mxu0 %v11974
      %v12121 = vpop.f32.mrf.mxu0
      %v12122 = vadd.f32 %v11872, %v12121
      %v12123 = vpop.f32.mrf.mxu0
      %v12124 = vpop.f32.mrf.mxu0
      %v12125 = vadd.f32 %v11872, %v12124
      %v12126 = vpop.f32.mrf.mxu0
      %12127 = vmatprep.mubr.bf16.mxu0 0
      %12128 = vmatmul.mubr.bf16.gmra.mxu0 %v11976
      %v12129 = vpop.f32.mrf.mxu0
      %v12130 = vadd.f32 %v11872, %v12129
      %v12131 = vpop.f32.mrf.mxu0
      %v12132 = vpop.f32.mrf.mxu0
      %v12133 = vadd.f32 %v11872, %v12132
      %v12134 = vpop.f32.mrf.mxu0
      %12135 = vmatprep.mubr.bf16.mxu0 0
      %12136 = vmatmul.mubr.bf16.gmra.mxu0 %v11978
      %v12137 = vpop.f32.mrf.mxu0
      %v12138 = vadd.f32 %v11872, %v12137
      %v12139 = vpop.f32.mrf.mxu0
      %v12140 = vpop.f32.mrf.mxu0
      %v12141 = vadd.f32 %v11872, %v12140
      %v12142 = vpop.f32.mrf.mxu0
      %12143 = vmatprep.mubr.bf16.mxu0 0
      %12144 = vmatmul.mubr.bf16.gmra.mxu0 %v11980
      %v12145 = vpop.f32.mrf.mxu0
      %v12146 = vadd.f32 %v11872, %v12145
      %v12147 = vpop.f32.mrf.mxu0
      %v12148 = vpop.f32.mrf.mxu0
      %v12149 = vadd.f32 %v11872, %v12148
      %v12150 = vpop.f32.mrf.mxu0
      %12151 = vmatprep.mubr.bf16.mxu0 0
      %12152 = vmatmul.mubr.bf16.gmra.mxu0 %v11982
      %v12153 = vpop.f32.mrf.mxu0
      %v12154 = vadd.f32 %v11872, %v12153
      %v12155 = vpop.f32.mrf.mxu0
      %v12156 = vpop.f32.mrf.mxu0
      %v12157 = vadd.f32 %v11872, %v12156
      %v12158 = vpop.f32.mrf.mxu0
      %12159 = vmatprep.mubr.bf16.mxu0 0
      %12160 = vmatmul.mubr.bf16.gmra.mxu0 %v11984
      %v12161 = vpop.f32.mrf.mxu0
      %v12162 = vadd.f32 %v11872, %v12161
      %v12163 = vpop.f32.mrf.mxu0
      %v12164 = vpop.f32.mrf.mxu0
      %v12165 = vadd.f32 %v11872, %v12164
      %v12166 = vpop.f32.mrf.mxu0
      %12167 = vmatprep.mubr.bf16.mxu0 0
      %12168 = vmatmul.mubr.bf16.gmra.mxu0 %v11986
      %v12169 = vpop.f32.mrf.mxu0
      %v12170 = vadd.f32 %v11872, %v12169
      %v12171 = vpop.f32.mrf.mxu0
      %v12172 = vpop.f32.mrf.mxu0
      %v12173 = vadd.f32 %v11872, %v12172
      %v12174 = vpop.f32.mrf.mxu0
      %12175 = vmatprep.mubr.bf16.mxu0 0
      %12176 = vmatmul.mubr.bf16.gmra.mxu0 %v11988
      %v12177 = vpop.f32.mrf.mxu0
      %v12178 = vadd.f32 %v11872, %v12177
      %v12179 = vpop.f32.mrf.mxu0
      %v12180 = vpop.f32.mrf.mxu0
      %v12181 = vadd.f32 %v11872, %v12180
      %v12182 = vpop.f32.mrf.mxu0
      %12183 = vmatprep.mubr.bf16.mxu0 0
      %12184 = vmatmul.mubr.bf16.gmra.mxu0 %v11990
      %v12185 = vpop.f32.mrf.mxu0
      %v12186 = vadd.f32 %v11872, %v12185
      %v12187 = vpop.f32.mrf.mxu0
      %v12188 = vpop.f32.mrf.mxu0
      %v12189 = vadd.f32 %v11872, %v12188
      %v12190 = vpop.f32.mrf.mxu0
      %12191 = vmatprep.mubr.bf16.mxu0 0
      %12192 = vmatmul.mubr.bf16.gmra.mxu0 %v11992
      %v12193 = vpop.f32.mrf.mxu0
      %v12194 = vadd.f32 %v11872, %v12193
      %v12195 = vpop.f32.mrf.mxu0
      %v12196 = vpop.f32.mrf.mxu0
      %v12197 = vadd.f32 %v11872, %v12196
      %v12198 = vpop.f32.mrf.mxu0
      %12199 = vmatprep.mubr.bf16.mxu0 0
      %12200 = vmatmul.mubr.bf16.gmra.mxu0 %v11994
      %v12201 = vpop.f32.mrf.mxu0
      %v12202 = vadd.f32 %v11872, %v12201
      %v12203 = vpop.f32.mrf.mxu0
      %v12204 = vpop.f32.mrf.mxu0
      %v12205 = vadd.f32 %v11872, %v12204
      %v12206 = vpop.f32.mrf.mxu0
      %12207 = vmatprep.mubr.bf16.mxu0 0
      %12208 = vmatmul.mubr.bf16.gmra.mxu0 %v11996
      %v12209 = vpop.f32.mrf.mxu0
      %v12210 = vadd.f32 %v11872, %v12209
      %v12211 = vpop.f32.mrf.mxu0
      %v12212 = vpop.f32.mrf.mxu0
      %v12213 = vadd.f32 %v11872, %v12212
      %v12214 = vpop.f32.mrf.mxu0
      %12215 = vmatprep.mubr.bf16.mxu0 0
      %12216 = vmatmul.mubr.bf16.gmra.mxu0 %v11998
      %v12217 = vpop.f32.mrf.mxu0
      %v12218 = vadd.f32 %v11872, %v12217
      %v12219 = vpop.f32.mrf.mxu0
      %v12220 = vpop.f32.mrf.mxu0
      %v12221 = vadd.f32 %v11872, %v12220
      %v12222 = vpop.f32.mrf.mxu0
      %12223 = vmatprep.mubr.bf16.mxu0 0
      %12224 = vmatmul.mubr.bf16.gmra.mxu0 %v12000
      %v12225 = vpop.f32.mrf.mxu0
      %v12226 = vadd.f32 %v11872, %v12225
      %v12227 = vpop.f32.mrf.mxu0
      %v12228 = vpop.f32.mrf.mxu0
      %v12229 = vadd.f32 %v11872, %v12228
      %v12230 = vpop.f32.mrf.mxu0
      %12231 = vmatprep.mubr.bf16.mxu0 0
      %12232 = vmatmul.mubr.bf16.gmra.mxu0 %v12002
      %v12233 = vpop.f32.mrf.mxu0
      %v12234 = vadd.f32 %v11872, %v12233
      %v12235 = vpop.f32.mrf.mxu0
      %v12236 = vpop.f32.mrf.mxu0
      %v12237 = vadd.f32 %v11872, %v12236
      %v12238 = vpop.f32.mrf.mxu0
      %12239 = vmatprep.mubr.bf16.mxu0 0
      %12240 = vmatmul.mubr.bf16.gmra.mxu0 %v12004
      %v12241 = vpop.f32.mrf.mxu0
      %v12242 = vadd.f32 %v11872, %v12241
      %v12243 = vpop.f32.mrf.mxu0
      %v12244 = vpop.f32.mrf.mxu0
      %v12245 = vadd.f32 %v11872, %v12244
      %v12246 = vpop.f32.mrf.mxu0
      %12247 = vdwg.mxu0
      %v12248 = vunpack.c.l.bf16 %v11814
      %v12249 = vunpack.c.l.bf16 %v11815
      %v12250 = vunpack.c.l.bf16 %v11816
      %v12251 = vunpack.c.l.bf16 %v11817
      %v12252 = vunpack.c.l.bf16 %v11818
      %v12253 = vunpack.c.l.bf16 %v11819
      %v12254 = vunpack.c.l.bf16 %v11820
      %v12255 = vunpack.c.l.bf16 %v11821
      %v12256 = vunpack.c.l.bf16 %v11822
      %v12257 = vunpack.c.l.bf16 %v11823
      %v12258 = vunpack.c.l.bf16 %v11824
      %v12259 = vunpack.c.l.bf16 %v11825
      %v12260 = vunpack.c.l.bf16 %v11826
      %v12261 = vunpack.c.l.bf16 %v11827
      %v12262 = vunpack.c.l.bf16 %v11828
      %v12263 = vunpack.c.l.bf16 %v11829
      %v12264 = vunpack.c.l.bf16 %v11830
      %v12265 = vunpack.c.l.bf16 %v11831
      %v12266 = vunpack.c.l.bf16 %v11832
      %v12267 = vunpack.c.l.bf16 %v11833
      %v12268 = vunpack.c.l.bf16 %v11834
      %v12269 = vunpack.c.l.bf16 %v11835
      %v12270 = vunpack.c.l.bf16 %v11836
      %v12271 = vunpack.c.l.bf16 %v11837
      %v12272 = vunpack.c.l.bf16 %v11838
      %v12273 = vunpack.c.l.bf16 %v11839
      %v12274 = vunpack.c.l.bf16 %v11840
      %v12275 = vunpack.c.l.bf16 %v11841
      %v12276 = vunpack.c.l.bf16 %v11842
      %v12277 = vunpack.c.l.bf16 %v11843
      %v12278 = vunpack.c.l.bf16 %v11844
      %v12279 = vunpack.c.l.bf16 %v11845
      %v12280 = vunpack.c.l.bf16 %v11846
      %v12281 = vunpack.c.l.bf16 %v11847
      %v12282 = vunpack.c.l.bf16 %v11848
      %v12283 = vunpack.c.l.bf16 %v11849
      %v12284 = vunpack.c.l.bf16 %v11850
      %v12322 = vrot.slane %v12248, 6
      %v12323 = vrot.slane %v12249, 6
      %v12324 = vsel %vm2981, %v12322, %v12323
      %v12325 = vrot.slane %v12250, 6
      %v12326 = vsel %vm2981, %v12323, %v12325
      %v12327 = vrot.slane %v12251, 6
      %v12328 = vsel %vm2981, %v12325, %v12327
      %v12329 = vrot.slane %v12252, 6
      %v12330 = vsel %vm2981, %v12327, %v12329
      %v12331 = vrot.slane %v12253, 6
      %v12332 = vsel %vm2981, %v12329, %v12331
      %v12333 = vrot.slane %v12254, 6
      %v12334 = vsel %vm2981, %v12331, %v12333
      %v12335 = vrot.slane %v12255, 6
      %v12336 = vsel %vm2981, %v12333, %v12335
      %v12337 = vrot.slane %v12256, 6
      %v12338 = vsel %vm2981, %v12335, %v12337
      %v12339 = vrot.slane %v12257, 6
      %v12340 = vsel %vm2981, %v12337, %v12339
      %v12341 = vrot.slane %v12258, 6
      %v12342 = vsel %vm2981, %v12339, %v12341
      %v12343 = vrot.slane %v12259, 6
      %v12344 = vsel %vm2981, %v12341, %v12343
      %v12345 = vrot.slane %v12260, 6
      %v12346 = vsel %vm2981, %v12343, %v12345
      %v12347 = vrot.slane %v12261, 6
      %v12348 = vsel %vm2981, %v12345, %v12347
      %v12349 = vrot.slane %v12262, 6
      %v12350 = vsel %vm2981, %v12347, %v12349
      %v12351 = vrot.slane %v12263, 6
      %v12352 = vsel %vm2981, %v12349, %v12351
      %v12353 = vrot.slane %v12264, 6
      %v12354 = vsel %vm2981, %v12351, %v12353
      %v12355 = vrot.slane %v12265, 6
      %v12356 = vsel %vm2981, %v12353, %v12355
      %v12357 = vrot.slane %v12266, 6
      %v12358 = vsel %vm2981, %v12355, %v12357
      %v12359 = vrot.slane %v12267, 6
      %v12360 = vsel %vm2981, %v12357, %v12359
      %v12361 = vrot.slane %v12268, 6
      %v12362 = vsel %vm2981, %v12359, %v12361
      %v12363 = vrot.slane %v12269, 6
      %v12364 = vsel %vm2981, %v12361, %v12363
      %v12365 = vrot.slane %v12270, 6
      %v12366 = vsel %vm2981, %v12363, %v12365
      %v12367 = vrot.slane %v12271, 6
      %v12368 = vsel %vm2981, %v12365, %v12367
      %v12369 = vrot.slane %v12272, 6
      %v12370 = vsel %vm2981, %v12367, %v12369
      %v12371 = vrot.slane %v12273, 6
      %v12372 = vsel %vm2981, %v12369, %v12371
      %v12373 = vrot.slane %v12274, 6
      %v12374 = vsel %vm2981, %v12371, %v12373
      %v12375 = vrot.slane %v12275, 6
      %v12376 = vsel %vm2981, %v12373, %v12375
      %v12377 = vrot.slane %v12276, 6
      %v12378 = vsel %vm2981, %v12375, %v12377
      %v12379 = vrot.slane %v12277, 6
      %v12380 = vsel %vm2981, %v12377, %v12379
      %v12381 = vrot.slane %v12278, 6
      %v12382 = vsel %vm2981, %v12379, %v12381
      %v12383 = vrot.slane %v12279, 6
      %v12384 = vsel %vm2981, %v12381, %v12383
      %v12385 = vrot.slane %v12280, 6
      %v12386 = vsel %vm2981, %v12383, %v12385
      %v12387 = vrot.slane %v12281, 6
      %v12388 = vsel %vm2981, %v12385, %v12387
      %v12389 = vrot.slane %v12282, 6
      %v12390 = vsel %vm2981, %v12387, %v12389
      %v12391 = vrot.slane %v12283, 6
      %v12392 = vsel %vm2981, %v12389, %v12391
      %v12393 = vrot.slane %v12284, 6
      %v12394 = vsel %vm2981, %v12391, %v12393
      %v12431 = vadd.f32 %v12106, %v12324
      %v12432 = vadd.f32 %v12109, %v12326
      %v12433 = vadd.f32 %v12114, %v12328
      %v12434 = vadd.f32 %v12117, %v12330
      %v12435 = vadd.f32 %v12122, %v12332
      %v12436 = vadd.f32 %v12125, %v12334
      %v12437 = vadd.f32 %v12130, %v12336
      %v12438 = vadd.f32 %v12133, %v12338
      %v12439 = vadd.f32 %v12138, %v12340
      %v12440 = vadd.f32 %v12141, %v12342
      %v12441 = vadd.f32 %v12146, %v12344
      %v12442 = vadd.f32 %v12149, %v12346
      %v12443 = vadd.f32 %v12154, %v12348
      %v12444 = vadd.f32 %v12157, %v12350
      %v12445 = vadd.f32 %v12162, %v12352
      %v12446 = vadd.f32 %v12165, %v12354
      %v12447 = vadd.f32 %v12170, %v12356
      %v12448 = vadd.f32 %v12173, %v12358
      %v12449 = vadd.f32 %v12178, %v12360
      %v12450 = vadd.f32 %v12181, %v12362
      %v12451 = vadd.f32 %v12186, %v12364
      %v12452 = vadd.f32 %v12189, %v12366
      %v12453 = vadd.f32 %v12194, %v12368
      %v12454 = vadd.f32 %v12197, %v12370
      %v12455 = vadd.f32 %v12202, %v12372
      %v12456 = vadd.f32 %v12205, %v12374
      %v12457 = vadd.f32 %v12210, %v12376
      %v12458 = vadd.f32 %v12213, %v12378
      %v12459 = vadd.f32 %v12218, %v12380
      %v12460 = vadd.f32 %v12221, %v12382
      %v12461 = vadd.f32 %v12226, %v12384
      %v12462 = vadd.f32 %v12229, %v12386
      %v12463 = vadd.f32 %v12234, %v12388
      %v12464 = vadd.f32 %v12237, %v12390
      %v12465 = vadd.f32 %v12242, %v12392
      %v12466 = vadd.f32 %v12245, %v12394
      %vm12467 = vcmask 523264
      %12468 = vst.msk [vmem:[%s422] sm:$0xff] %vm12467, %v12431
      %12469 = vst.msk [vmem:[%s422 + $0x8] sm:$0xff] %vm12467, %v12432
      %12470 = vst.msk [vmem:[%s422 + $0x10] sm:$0xff] %vm12467, %v12433
      %12471 = vst.msk [vmem:[%s422 + $0x18] sm:$0xff] %vm12467, %v12434
      %12472 = vst.msk [vmem:[%s422 + $0x20] sm:$0xff] %vm12467, %v12435
      %12473 = vst.msk [vmem:[%s422 + $0x28] sm:$0xff] %vm12467, %v12436
      %12474 = vst.msk [vmem:[%s422 + $0x30] sm:$0xff] %vm12467, %v12437
      %12475 = vst.msk [vmem:[%s422 + $0x38] sm:$0xff] %vm12467, %v12438
      %12476 = vst.msk [vmem:[%s422 + $0x40] sm:$0xff] %vm12467, %v12439
      %12477 = vst.msk [vmem:[%s422 + $0x48] sm:$0xff] %vm12467, %v12440
      %12478 = vst.msk [vmem:[%s422 + $0x50] sm:$0xff] %vm12467, %v12441
      %12479 = vst.msk [vmem:[%s422 + $0x58] sm:$0xff] %vm12467, %v12442
      %12480 = vst.msk [vmem:[%s422 + $0x60] sm:$0xff] %vm12467, %v12443
      %12481 = vst.msk [vmem:[%s422 + $0x68] sm:$0xff] %vm12467, %v12444
      %12482 = vst.msk [vmem:[%s422 + $0x70] sm:$0xff] %vm12467, %v12445
      %12483 = vst.msk [vmem:[%s422 + $0x78] sm:$0xff] %vm12467, %v12446
      %12484 = vst.msk [vmem:[%s422 + $0x80] sm:$0xff] %vm12467, %v12447
      %12485 = vst.msk [vmem:[%s422 + $0x88] sm:$0xff] %vm12467, %v12448
      %12486 = vst.msk [vmem:[%s422 + $0x90] sm:$0xff] %vm12467, %v12449
      %12487 = vst.msk [vmem:[%s422 + $0x98] sm:$0xff] %vm12467, %v12450
      %12488 = vst.msk [vmem:[%s422 + $0xa0] sm:$0xff] %vm12467, %v12451
      %12489 = vst.msk [vmem:[%s422 + $0xa8] sm:$0xff] %vm12467, %v12452
      %12490 = vst.msk [vmem:[%s422 + $0xb0] sm:$0xff] %vm12467, %v12453
      %12491 = vst.msk [vmem:[%s422 + $0xb8] sm:$0xff] %vm12467, %v12454
      %12492 = vst.msk [vmem:[%s422 + $0xc0] sm:$0xff] %vm12467, %v12455
      %12493 = vst.msk [vmem:[%s422 + $0xc8] sm:$0xff] %vm12467, %v12456
      %12494 = vst.msk [vmem:[%s422 + $0xd0] sm:$0xff] %vm12467, %v12457
      %12495 = vst.msk [vmem:[%s422 + $0xd8] sm:$0xff] %vm12467, %v12458
      %12496 = vst.msk [vmem:[%s422 + $0xe0] sm:$0xff] %vm12467, %v12459
      %12497 = vst.msk [vmem:[%s422 + $0xe8] sm:$0xff] %vm12467, %v12460
      %12498 = vst.msk [vmem:[%s422 + $0xf0] sm:$0xff] %vm12467, %v12461
      %12499 = vst.msk [vmem:[%s422 + $0xf8] sm:$0xff] %vm12467, %v12462
      %12500 = vst.msk [vmem:[%s422 + $0x100] sm:$0xff] %vm12467, %v12463
      %12501 = vst.msk [vmem:[%s422 + $0x108] sm:$0xff] %vm12467, %v12464
      %12502 = vst.msk [vmem:[%s422 + $0x110] sm:$0xff] %vm12467, %v12465
      %12503 = vst.msk [vmem:[%s422 + $0x118] sm:$0xff] %vm12467, %v12466
      %s12504 = smul.u32 36, %s27
      %p12505 = scmp.lt.s32.totalorder %s26, 1
      %s12506 = scalar_select %p12505, %s26, 1
      %p12507 = scmp.lt.s32.totalorder %s12504, 35
      %s12508 = scalar_select %p12507, %s12504, 35
      %s12509 = smul.addr %s12506, 36
      %s12510 = sadd.s32 %s12508, %s12509
      %s12511 = smul.addr %s12510, 8
      %s12512 = scalar_lea.vmem %s11, %s12511
      // Predicated region
      $region65: #{residual_dense_block_nchw.1} parent=63 // pred_check
        %p12513 = pneg %p292
      $region66: #{residual_dense_block_nchw.1} parent=63 // pred_check_branch
        %12515 = sbr.rel (%p12513) target = $region68
      $region67: #{residual_dense_block_nchw.1} parent=63 // pred_region
        %s12516 = smul.u32 36, %s27
      $region68: #{residual_dense_block_nchw.1} parent=63 // pred_fallthru
        _
    $region64: #{residual_dense_block_nchw.1} parent=5 // pred_fallthru
      _
    %p12517 = scmp.le.s32.totalorder 2, %s17
    // Predicated region
    $region69: #{residual_dense_block_nchw.1} parent=5 // pred_check
      %p12518 = pneg %p12517
    $region70: #{residual_dense_block_nchw.1} parent=5 // pred_check_branch
      %12520 = sbr.rel (%p12518) target = $region72
    $region71: #{residual_dense_block_nchw.1} parent=5 // pred_region
      %s12521 = ssub.s32 %s17, 2
      // Predicated region
      $region73: #{residual_dense_block_nchw.1} parent=71 // pred_check
        %p12522 = pneg %p298
      $region74: #{residual_dense_block_nchw.1} parent=71 // pred_check_branch
        %12524 = sbr.rel (%p12522) target = $region76
      $region75: #{residual_dense_block_nchw.1} parent=71 // pred_region
        %s12525 = smul.u32 36, %s29
        %p12526 = scmp.lt.s32.totalorder %s28, 1
        %s12527 = scalar_select %p12526, %s28, 1
        %p12528 = scmp.lt.s32.totalorder %s12525, 35
        %s12529 = scalar_select %p12528, %s12525, 35
        %s12530 = smul.addr %s12527, 36
        %s12531 = sadd.s32 %s12529, %s12530
        %s12532 = smul.addr %s12531, 8
        %s12533 = scalar_lea.vmem %s11, %s12532
      $region76: #{residual_dense_block_nchw.1} parent=71 // pred_fallthru
        _
    $region72: #{residual_dense_block_nchw.1} parent=5 // pred_fallthru
      _
  $region6: #{residual_dense_block_nchw.1} parent=0 // loop_footer
    %s21 = sadd.s32 1, %s17
  $region7: #{residual_dense_block_nchw.1} parent=0 // loop_footer_branch
    %16 = sbr.rel target = $region3
  $region8: #{residual_dense_block_nchw.1} parent=0 // loop_exit
    _

</llo_original>
